<compile_context>
chip_gen: v6e
topology: v6e:2x2x1
jax: 0.10.0
libtpu: 0.0.40
codegen_flags: <defaults>
</compile_context>

<pallas_src>
import random

import jax
import jax.numpy as jnp
from jax import lax
from jax.experimental import pallas as pl
from jax.experimental.pallas import tpu as pltpu

# ----------------------------- model sizes ---------------------------------
SEQ_LEN    = 8     # encoder input length  (data.shape[0])
TARGET_LEN = 8     # decoder output length (target.shape[0])
BATCH      = 16    # batch per sequence group (full bf16 sublane tile)
NUM_SEQ    = 2     # independent sequence groups -> grid axis (parallel)
IN_VOCAB   = 16    # encoder input vocabulary
OUT_VOCAB  = 16    # decoder.output_size
EMB        = 32    # embedding dim (folded away host-side, never seen in-kernel)
HIDDEN     = 32    # encoder.hidden_size == decoder.hidden_size

G = 3 * HIDDEN          # GRU gate width (r|z|n) = 96
C = 128                 # packed slab lane width (G + OUT_VOCAB = 112, padded to 128)

# Row offsets inside the packed bf16 weight slab (all multiples of the bf16
# sublane tile of 16, so every static row slice is tile-aligned).
R_DTOK = 0                     # [OUT_VOCAB, C] : [dec_emb@dec_wih_e | dec_emb@wout_e | 0]
R_ETBL = R_DTOK + OUT_VOCAB    # [IN_VOCAB,  C] : [enc_emb@enc_wih + enc_bih | 0]
R_EWHH = R_ETBL + IN_VOCAB     # [HIDDEN,    C] : [enc_whh   | 0]
R_DH   = R_EWHH + HIDDEN       # [HIDDEN,    C] : [dec_whh   | wout_h | 0]
R_CTX  = R_DH + HIDDEN         # [HIDDEN,    C] : [dec_wih_c | wout_c | 0]
W_ROWS = R_CTX + HIDDEN        # = 128

# Rows inside the small f32 bias slab [8, C].
B_ENC_BHH = 0                  # [enc_bhh | 0]
B_DEC_BHH = 1                  # [dec_bhh | 0]
B_CTX     = 2                  # [dec_bih | bout | 0]


# ------------------------------- kernel ------------------------------------
def simseq_kernel(tf_ref, data_ref, target_ref, w_ref, b_ref, out_ref, tok_ref):
    f32, bf16 = jnp.float32, jnp.bfloat16
    H, B, V = HIDDEN, BATCH, OUT_VOCAB

    # ---- hoist all weight views / bias broadcasts out of the unrolled loops
    w_dtok = w_ref[R_DTOK:R_DTOK + V, :]           # [V,   C] bf16
    w_etbl = w_ref[R_ETBL:R_ETBL + IN_VOCAB, :]    # [Vin, C] bf16
    w_ewhh = w_ref[R_EWHH:R_EWHH + H, :]           # [H,   C] bf16
    w_dh   = w_ref[R_DH:R_DH + H, :]               # [H,   C] bf16
    w_ctx  = w_ref[R_CTX:R_CTX + H, :]             # [H,   C] bf16

    # Token table rows in f32 for the VPU select-tree lookup (no MXU on the
    # decoder's serial token path).  Exact: f32(bf16 row) == one-hot @ bf16 row.
    w_dtok_f32 = w_dtok.astype(f32)                              # [V, C]
    dtok_rows = [w_dtok_f32[v:v + 1, :] for v in range(V)]       # V x [1, C]

    bias = b_ref[...]                                            # [8, C] f32
    enc_bhh = jnp.broadcast_to(bias[B_ENC_BHH:B_ENC_BHH + 1, :], (B, C))
    dec_bhh = jnp.broadcast_to(bias[B_DEC_BHH:B_DEC_BHH + 1, :], (B, C))
    ctx_b   = jnp.broadcast_to(bias[B_CTX:B_CTX + 1, :], (B, C))

    def gates(xp, hp, h):
        # PyTorch GRU gate order r|z|n; elementwise math stays in f32 (v5e).
        r = jax.nn.sigmoid(xp[:, 0:H] + hp[:, 0:H])
        z = jax.nn.sigmoid(xp[:, H:2 * H] + hp[:, H:2 * H])
        n = jnp.tanh(xp[:, 2 * H:G] + r * hp[:, 2 * H:G])
        return (1.0 - z) * n + z * h

    # ------------------------------ encoder ---------------------------------
    # One batched one-hot + one [S*B,Vin]@[Vin,C] matmul covers every step's
    # input projection (enc_bih is folded into the table); the recurrence
    # below has a single h@Whh matmul per step on the serial path.
    tok_all = data_ref[0]                                        # [S*B, 1] i32
    iota_in = lax.broadcasted_iota(jnp.int32, (SEQ_LEN * B, IN_VOCAB), 1)
    xp_all = jnp.dot((tok_all == iota_in).astype(bf16), w_etbl,
                     preferred_element_type=f32)                 # [S*B, C] f32

    # Teacher-forced token projections for every decoder step, batched in one
    # matmul before the recurrences (completely off the serial chain).
    tgt_all = target_ref[0]                                      # [T*B, 1] i32
    iota_tv = lax.broadcasted_iota(jnp.int32, (TARGET_LEN * B, V), 1)
    tgt_tokp_all = jnp.dot((tgt_all == iota_tv).astype(bf16), w_dtok,
                           preferred_element_type=f32)           # [T*B, C] f32

    h = jnp.zeros((B, H), f32)
    for t in range(SEQ_LEN):                 # static trip count -> full unroll
        xp = xp_all[t * B:(t + 1) * B, :]
        hp = jnp.dot(h.astype(bf16), w_ewhh, preferred_element_type=f32) + enc_bhh
        h = gates(xp, hp, h)
    context = h                                                  # [B, H]

    # -------------------- context projections (computed once) ---------------
    ctx_bf = context.astype(bf16)
    # [context@dec_wih_c + dec_bih | context@wout_c + bout | 0]
    ctx_full = jnp.dot(ctx_bf, w_ctx, preferred_element_type=f32) + ctx_b    # [B, C]
    # hp for decoder step 0 (h_0 = context): cols :G = context@dec_whh + dec_bhh
    hp = jnp.dot(ctx_bf, w_dh, preferred_element_type=f32) + dec_bhh         # [B, C]

    # ------------------------------ decoder ---------------------------------
    iota_out = lax.broadcasted_iota(jnp.int32, (B, V), 1)
    # torch.zeros(batch_size) -> first input token is 0 -> table row 0.
    tokp = jnp.broadcast_to(dtok_rows[0], (B, C))                # [B, C] f32

    logits_steps = []
    tok_steps = []
    for t in range(TARGET_LEN):              # static trip count -> full unroll
        xp = tokp + ctx_full          # cols :G -> GRU input, cols G:G+V -> logit part
        h_new = gates(xp, hp, h)
        # single MXU op on the serial chain: [h_new@dec_whh + dec_bhh | h_new@wout_h]
        fused = jnp.dot(h_new.astype(bf16), w_dh,
                        preferred_element_type=f32) + dec_bhh    # [B, C]
        logits = xp[:, G:G + V] + fused[:, G:G + V]              # [B, V]
        logits_steps.append(logits)

        def _teacher(_, t=t):
            # next input token = target[t]; projection already precomputed.
            return (tgt_tokp_all[t * B:(t + 1) * B, :],
                    tgt_all[t * B:(t + 1) * B, :])

        def _greedy(_, logits=logits):
            # exact first-index argmax over lanes (matches torch.argmax ties)
            maxv = jnp.max(logits, axis=1, keepdims=True)
            idx = jnp.min(jnp.where(logits == maxv, iota_out, V),
                          axis=1, keepdims=True)                 # [B, 1] i32
            # 16-way VPU select tree: tokp[b] = w_dtok[idx[b]]
            sel = [jnp.where(idx == v, dtok_rows[v], 0.0) for v in range(V)]
            while len(sel) > 1:
                sel = [sel[i] + sel[i + 1] for i in range(0, len(sel), 2)]
            return sel[0], idx

        tokp, tok = lax.cond(tf_ref[t] == 1, _teacher, _greedy, 0)
        tok_steps.append(tok)
        h, hp = h_new, fused

    # Lane-dense stores: one unmasked [B, T*V] = [16,128] store for logits,
    # one [B, T] store for the chosen-token path.
    out_ref[0] = jnp.concatenate(logits_steps, axis=1)           # [B, T*V]
    tok_ref[0] = jnp.concatenate(tok_steps, axis=1)              # [B, T]


# ------------------------------ parameters ----------------------------------
def init_params(key):
    ks = jax.random.split(key, 15)

    def w(k, shape, scale=0.3):
        return scale * jax.random.normal(k, shape, dtype=jnp.float32)

    return {
        "enc_emb":   w(ks[0],  (IN_VOCAB, EMB)),
        "enc_wih":   w(ks[1],  (EMB, G)),
        "enc_whh":   w(ks[2],  (HIDDEN, G)),
        "enc_bih":   w(ks[3],  (1, G), 0.1),
        "enc_bhh":   w(ks[4],  (1, G), 0.1),
        "dec_emb":   w(ks[5],  (OUT_VOCAB, EMB)),
        "dec_wih_e": w(ks[6],  (EMB, G)),
        "dec_wih_c": w(ks[7],  (HIDDEN, G)),
        "dec_whh":   w(ks[8],  (HIDDEN, G)),
        "dec_bih":   w(ks[9],  (1, G), 0.1),
        "dec_bhh":   w(ks[10], (1, G), 0.1),
        "wout_e":    w(ks[11], (EMB, OUT_VOCAB)),
        "wout_h":    w(ks[12], (HIDDEN, OUT_VOCAB)),
        "wout_c":    w(ks[13], (HIDDEN, OUT_VOCAB)),
        "bout":      w(ks[14], (1, OUT_VOCAB), 0.1),
    }


def fold_params(p):
    """Fold one-hot -> embedding -> input-projection chains into per-token
    lookup tables (f32, host-side)."""
    return {
        "enc_tbl":     p["enc_emb"] @ p["enc_wih"] + p["enc_bih"],   # [IN_VOCAB,  G]
        "dec_gru_tbl": p["dec_emb"] @ p["dec_wih_e"],                # [OUT_VOCAB, G]
        "dec_out_tbl": p["dec_emb"] @ p["wout_e"],                   # [OUT_VOCAB, V]
        "enc_whh":   p["enc_whh"],  "dec_whh":  p["dec_whh"],
        "dec_wih_c": p["dec_wih_c"], "wout_h":  p["wout_h"], "wout_c": p["wout_c"],
        "enc_bhh":   p["enc_bhh"],  "dec_bhh":  p["dec_bhh"],
        "dec_bih":   p["dec_bih"],  "bout":     p["bout"],
    }


def pack_slabs(f):
    """Pack folded params into one bf16 matmul slab [128,128] and one f32
    bias slab [8,128] (lane width padded to a full vreg)."""
    def pad_to_c(m):
        return jnp.concatenate(
            [m, jnp.zeros((m.shape[0], C - m.shape[1]), jnp.float32)], axis=1)

    w = jnp.concatenate([
        pad_to_c(jnp.concatenate([f["dec_gru_tbl"], f["dec_out_tbl"]], axis=1)),  # R_DTOK
        pad_to_c(f["enc_tbl"]),                                                   # R_ETBL
        pad_to_c(f["enc_whh"]),                                                   # R_EWHH
        pad_to_c(jnp.concatenate([f["dec_whh"], f["wout_h"]], axis=1)),           # R_DH
        pad_to_c(jnp.concatenate([f["dec_wih_c"], f["wout_c"]], axis=1)),         # R_CTX
    ], axis=0).astype(jnp.bfloat16)                                               # [128, C]
    assert w.shape == (W_ROWS, C)

    b = jnp.zeros((8, C), jnp.float32)
    b = b.at[B_ENC_BHH, :G].set(f["enc_bhh"][0])
    b = b.at[B_DEC_BHH, :G].set(f["dec_bhh"][0])
    b = b.at[B_CTX, :G].set(f["dec_bih"][0])
    b = b.at[B_CTX, G:G + OUT_VOCAB].set(f["bout"][0])
    return w, b


# ------------------------------- wrapper ------------------------------------
def simseq_forward(data, target, tf_flags, w_slab, b_slab):
    """data/target: [seq_len, total_batch] int; total_batch = NUM_SEQ*BATCH.
    Returns (logits [T, total_batch, V] f32, chosen tokens [T, total_batch] i32)."""
    S, NTOT = data.shape
    T = target.shape[0]
    assert S == SEQ_LEN and T == TARGET_LEN and NTOT % BATCH == 0
    nseq = NTOT // BATCH

    # [S, nseq, B] -> per-group time-major [nseq, S*B, 1]
    d3 = (data.astype(jnp.int32).reshape(S, nseq, BATCH)
          .transpose(1, 0, 2).reshape(nseq, S * BATCH, 1))
    t3 = (target.astype(jnp.int32).reshape(T, nseq, BATCH)
          .transpose(1, 0, 2).reshape(nseq, T * BATCH, 1))

    grid_spec = pltpu.PrefetchScalarGridSpec(
        num_scalar_prefetch=1,                # tf flags -> SMEM, shared by all groups
        grid=(nseq,),
        in_specs=[
            pl.BlockSpec((1, S * BATCH, 1), lambda g, tf: (g, 0, 0)),
            pl.BlockSpec((1, T * BATCH, 1), lambda g, tf: (g, 0, 0)),
            pl.BlockSpec((W_ROWS, C),       lambda g, tf: (0, 0)),   # resident slab
            pl.BlockSpec((8, C),            lambda g, tf: (0, 0)),   # resident biases
        ],
        out_specs=(
            pl.BlockSpec((1, BATCH, T * OUT_VOCAB), lambda g, tf: (g, 0, 0)),
            pl.BlockSpec((1, BATCH, T),             lambda g, tf: (g, 0, 0)),
        ),
    )

    out_packed, tok_packed = pl.pallas_call(
        simseq_kernel,
        grid_spec=grid_spec,
        out_shape=(jax.ShapeDtypeStruct((nseq, BATCH, T * OUT_VOCAB), jnp.float32),
                   jax.ShapeDtypeStruct((nseq, BATCH, T), jnp.int32)),
        compiler_params=pltpu.CompilerParams(dimension_semantics=("parallel",)),
    )(tf_flags.astype(jnp.int32), d3, t3, w_slab, b_slab)

    out = (out_packed.reshape(nseq, BATCH, T, OUT_VOCAB)
           .transpose(2, 0, 1, 3).reshape(T, NTOT, OUT_VOCAB))
    tok = tok_packed.transpose(2, 0, 1).reshape(T, NTOT)
    return out, tok


# ----------------------- pure-JAX reference (for checking) ------------------
def reference_forward(data, target, tf_flags, folded, forced_next_tokens=None):
    """Independent loop / argmax / add structure; same bf16-operand matmuls.
    If forced_next_tokens is given, use it as the next decoder input (the
    token path itself is validated separately and exactly)."""
    f32, bf16 = jnp.float32, jnp.bfloat16
    H = HIDDEN
    NB = data.shape[1]

    def mm(x, w):
        return jnp.dot(x.astype(bf16), w.astype(bf16), preferred_element_type=f32)

    def gru(xp, hp, h):
        r = jax.nn.sigmoid(xp[:, :H] + hp[:, :H])
        z = jax.nn.sigmoid(xp[:, H:2 * H] + hp[:, H:2 * H])
        n = jnp.tanh(xp[:, 2 * H:] + r * hp[:, 2 * H:])
        return (1.0 - z) * n + z * h

    h = jnp.zeros((NB, H), f32)
    for t in range(SEQ_LEN):
        xp = mm(jax.nn.one_hot(data[t], IN_VOCAB, dtype=f32), folded["enc_tbl"])
        hp = mm(h, folded["enc_whh"]) + folded["enc_bhh"]
        h = gru(xp, hp, h)
    context, hid = h, h

    ctx_gru = mm(context, folded["dec_wih_c"]) + folded["dec_bih"]
    ctx_out = mm(context, folded["wout_c"]) + folded["bout"]

    tok = jnp.zeros((NB,), jnp.int32)
    outs = []
    for t in range(TARGET_LEN):
        e1h = jax.nn.one_hot(tok, OUT_VOCAB, dtype=f32)
        xp = mm(e1h, folded["dec_gru_tbl"]) + ctx_gru
        hp = mm(hid, folded["dec_whh"]) + folded["dec_bhh"]
        hid = gru(xp, hp, hid)
        logits = mm(e1h, folded["dec_out_tbl"]) + mm(hid, folded["wout_h"]) + ctx_out
        outs.append(logits)
        if forced_next_tokens is not None:
            tok = forced_next_tokens[t]
        else:
            nxt = jnp.argmax(logits, axis=1).astype(jnp.int32)
            tok = jnp.where(tf_flags[t] == 1, target[t].astype(jnp.int32), nxt)
    return jnp.stack(outs, axis=0)


# --------------------------------- main --------------------------------------
if __name__ == "__main__":
    key = jax.random.PRNGKey(0)
    kp, kd, kt = jax.random.split(key, 3)
    params = init_params(kp)
    folded = fold_params(params)
    w_slab, b_slab = pack_slabs(folded)

    NTOT = NUM_SEQ * BATCH
    data = jax.random.randint(kd, (SEQ_LEN, NTOT), 0, IN_VOCAB, dtype=jnp.int32)
    target = jax.random.randint(kt, (TARGET_LEN, NTOT), 0, OUT_VOCAB,
                                dtype=jnp.int32)

    # Teacher-forcing coin flips (ratio = 0.5), drawn host-side with a fixed
    # seed (stand-in for Python's random.random() in the PyTorch forward) and
    # passed to the kernel as an int mask in SMEM (scalar prefetch).
    # TODO(synk): the original module draws one random.random() per step inside
    # forward(); here the flips are sampled host-side per call and shared.
    random.seed(0)
    tf_flags = jnp.asarray(
        [1 if random.random() < 0.5 else 0 for _ in range(TARGET_LEN)],
        dtype=jnp.int32)

    out, tok_out = simseq_forward(data, target, tf_flags, w_slab, b_slab)
    out = jax.block_until_ready(out)
    tok_out = jax.block_until_ready(tok_out)                     # [T, NTOT]
    assert out.shape == (TARGET_LEN, NTOT, OUT_VOCAB)

    # ---- check 1: token path (argmax + teacher forcing), exact -------------
    greedy = jnp.argmax(out, axis=-1).astype(jnp.int32)          # [T, NTOT]
    expected_tok = jnp.where(tf_flags[:, None] == 1, target, greedy)
    assert bool(jnp.all(tok_out == expected_tok)), "token-path mismatch"

    # ---- check 2: logits vs independent reference on that token path -------
    ref = reference_forward(data, target, tf_flags, folded,
                            forced_next_tokens=tok_out)
    max_diff = float(jnp.max(jnp.abs(out - ref)))
    assert bool(jnp.allclose(out, ref, atol=2e-3, rtol=2e-3)), \
        f"mismatch vs reference, max abs diff = {max_diff}"

    print("KERNEL_OK")
</pallas_src>

<mosaic_0001>
module attributes {stable_mosaic.version = 11 : i64} {
  func.func @simseq_kernel(%arg0: i32, %arg1: memref<8xi32, #tpu.memory_space<smem>>, %arg2: memref<1x128x1xi32, #tpu.memory_space<vmem>>, %arg3: memref<1x128x1xi32, #tpu.memory_space<vmem>>, %arg4: memref<128x128xbf16, #tpu.memory_space<vmem>>, %arg5: memref<8x128xf32, #tpu.memory_space<vmem>>, %arg6: memref<1x16x128xf32, #tpu.memory_space<vmem>>, %arg7: memref<1x16x8xi32, #tpu.memory_space<vmem>>) attributes {dimension_semantics = [#tpu.dimension_semantics<parallel>], iteration_bounds = array<i64: 2>, scalar_prefetch = 1 : i64, scratch_operands = 0 : i64, tpu.core_type = #tpu.core_type<tc>, window_params = [{transform_indices = @transform_0, window_bounds = array<i64: 1, 128, 1>}, {transform_indices = @transform_1, window_bounds = array<i64: 1, 128, 1>}, {pipeline_mode = #tpu.pipeline_mode<synchronous>, transform_indices = @transform_2, window_bounds = array<i64: 128, 128>}, {pipeline_mode = #tpu.pipeline_mode<synchronous>, transform_indices = @transform_3, window_bounds = array<i64: 8, 128>}, {transform_indices = @transform_4, window_bounds = array<i64: 1, 16, 128>}, {transform_indices = @transform_5, window_bounds = array<i64: 1, 16, 8>}]} {
    %c0 = arith.constant 0 : index
    %c0_0 = arith.constant 0 : index
    %0 = vector.load %arg4[%c0, %c0_0] : memref<128x128xbf16, #tpu.memory_space<vmem>>, vector<16x128xbf16>
    %c16 = arith.constant 16 : index
    %c0_1 = arith.constant 0 : index
    %1 = vector.load %arg4[%c16, %c0_1] : memref<128x128xbf16, #tpu.memory_space<vmem>>, vector<16x128xbf16>
    %c32 = arith.constant 32 : index
    %c0_2 = arith.constant 0 : index
    %2 = vector.load %arg4[%c32, %c0_2] : memref<128x128xbf16, #tpu.memory_space<vmem>>, vector<32x128xbf16>
    %c64 = arith.constant 64 : index
    %c0_3 = arith.constant 0 : index
    %3 = vector.load %arg4[%c64, %c0_3] : memref<128x128xbf16, #tpu.memory_space<vmem>>, vector<32x128xbf16>
    %c96 = arith.constant 96 : index
    %c0_4 = arith.constant 0 : index
    %4 = vector.load %arg4[%c96, %c0_4] : memref<128x128xbf16, #tpu.memory_space<vmem>>, vector<32x128xbf16>
    %5 = arith.extf %0 : vector<16x128xbf16> to vector<16x128xf32>
    %6 = vector.extract_strided_slice %5 {offsets = [0, 0], sizes = [1, 128], strides = [1, 1]} : vector<16x128xf32> to vector<1x128xf32>
    %7 = vector.extract_strided_slice %5 {offsets = [1, 0], sizes = [1, 128], strides = [1, 1]} : vector<16x128xf32> to vector<1x128xf32>
    %8 = vector.extract_strided_slice %5 {offsets = [2, 0], sizes = [1, 128], strides = [1, 1]} : vector<16x128xf32> to vector<1x128xf32>
    %9 = vector.extract_strided_slice %5 {offsets = [3, 0], sizes = [1, 128], strides = [1, 1]} : vector<16x128xf32> to vector<1x128xf32>
    %10 = vector.extract_strided_slice %5 {offsets = [4, 0], sizes = [1, 128], strides = [1, 1]} : vector<16x128xf32> to vector<1x128xf32>
    %11 = vector.extract_strided_slice %5 {offsets = [5, 0], sizes = [1, 128], strides = [1, 1]} : vector<16x128xf32> to vector<1x128xf32>
    %12 = vector.extract_strided_slice %5 {offsets = [6, 0], sizes = [1, 128], strides = [1, 1]} : vector<16x128xf32> to vector<1x128xf32>
    %13 = vector.extract_strided_slice %5 {offsets = [7, 0], sizes = [1, 128], strides = [1, 1]} : vector<16x128xf32> to vector<1x128xf32>
    %14 = vector.extract_strided_slice %5 {offsets = [8, 0], sizes = [1, 128], strides = [1, 1]} : vector<16x128xf32> to vector<1x128xf32>
    %15 = vector.extract_strided_slice %5 {offsets = [9, 0], sizes = [1, 128], strides = [1, 1]} : vector<16x128xf32> to vector<1x128xf32>
    %16 = vector.extract_strided_slice %5 {offsets = [10, 0], sizes = [1, 128], strides = [1, 1]} : vector<16x128xf32> to vector<1x128xf32>
    %17 = vector.extract_strided_slice %5 {offsets = [11, 0], sizes = [1, 128], strides = [1, 1]} : vector<16x128xf32> to vector<1x128xf32>
    %18 = vector.extract_strided_slice %5 {offsets = [12, 0], sizes = [1, 128], strides = [1, 1]} : vector<16x128xf32> to vector<1x128xf32>
    %19 = vector.extract_strided_slice %5 {offsets = [13, 0], sizes = [1, 128], strides = [1, 1]} : vector<16x128xf32> to vector<1x128xf32>
    %20 = vector.extract_strided_slice %5 {offsets = [14, 0], sizes = [1, 128], strides = [1, 1]} : vector<16x128xf32> to vector<1x128xf32>
    %21 = vector.extract_strided_slice %5 {offsets = [15, 0], sizes = [1, 128], strides = [1, 1]} : vector<16x128xf32> to vector<1x128xf32>
    %c0_5 = arith.constant 0 : index
    %c0_6 = arith.constant 0 : index
    %22 = vector.load %arg5[%c0_5, %c0_6] : memref<8x128xf32, #tpu.memory_space<vmem>>, vector<8x128xf32>
    %23 = vector.extract_strided_slice %22 {offsets = [0, 0], sizes = [1, 128], strides = [1, 1]} : vector<8x128xf32> to vector<1x128xf32>
    %24 = vector.shape_cast %23 : vector<1x128xf32> to vector<1x128xf32>
    %25 = vector.broadcast %24 : vector<1x128xf32> to vector<16x128xf32>
    %26 = vector.extract_strided_slice %22 {offsets = [1, 0], sizes = [1, 128], strides = [1, 1]} : vector<8x128xf32> to vector<1x128xf32>
    %27 = vector.shape_cast %26 : vector<1x128xf32> to vector<1x128xf32>
    %28 = vector.broadcast %27 : vector<1x128xf32> to vector<16x128xf32>
    %29 = vector.extract_strided_slice %22 {offsets = [2, 0], sizes = [1, 128], strides = [1, 1]} : vector<8x128xf32> to vector<1x128xf32>
    %30 = vector.shape_cast %29 : vector<1x128xf32> to vector<1x128xf32>
    %31 = vector.broadcast %30 : vector<1x128xf32> to vector<16x128xf32>
    %c0_7 = arith.constant 0 : index
    %c0_8 = arith.constant 0 : index
    %c0_9 = arith.constant 0 : index
    %32 = vector.load %arg2[%c0_7, %c0_8, %c0_9] : memref<1x128x1xi32, #tpu.memory_space<vmem>>, vector<1x128x1xi32>
    %33 = vector.shape_cast %32 : vector<1x128x1xi32> to vector<128x1xi32>
    %34 = tpu.iota {dimensions = array<i32: 1>} : vector<128x16xi32>
    %35 = vector.broadcast %33 : vector<128x1xi32> to vector<128x16xi32>
    %36 = arith.cmpi eq, %35, %34 : vector<128x16xi32>
    %37 = arith.extui %36 : vector<128x16xi1> to vector<128x16xi32>
    %38 = arith.sitofp %37 : vector<128x16xi32> to vector<128x16xf32>
    %39 = arith.truncf %38 : vector<128x16xf32> to vector<128x16xbf16>
    %cst = arith.constant dense<0.000000e+00> : vector<128x128xf32>
    %40 = tpu.matmul %39, %1, %cst {dimension_numbers = #tpu.dot_dimension_numbers<[1], [0], [0], [1], [0, 0, 1, 1], [], []>} : vector<128x16xbf16>, vector<16x128xbf16>, vector<128x128xf32> -> vector<128x128xf32>
    %c0_10 = arith.constant 0 : index
    %c0_11 = arith.constant 0 : index
    %c0_12 = arith.constant 0 : index
    %41 = vector.load %arg3[%c0_10, %c0_11, %c0_12] : memref<1x128x1xi32, #tpu.memory_space<vmem>>, vector<1x128x1xi32>
    %42 = vector.shape_cast %41 : vector<1x128x1xi32> to vector<128x1xi32>
    %43 = tpu.iota {dimensions = array<i32: 1>} : vector<128x16xi32>
    %44 = vector.broadcast %42 : vector<128x1xi32> to vector<128x16xi32>
    %45 = arith.cmpi eq, %44, %43 : vector<128x16xi32>
    %46 = arith.extui %45 : vector<128x16xi1> to vector<128x16xi32>
    %47 = arith.sitofp %46 : vector<128x16xi32> to vector<128x16xf32>
    %48 = arith.truncf %47 : vector<128x16xf32> to vector<128x16xbf16>
    %cst_13 = arith.constant dense<0.000000e+00> : vector<128x128xf32>
    %49 = tpu.matmul %48, %0, %cst_13 {dimension_numbers = #tpu.dot_dimension_numbers<[1], [0], [0], [1], [0, 0, 1, 1], [], []>} : vector<128x16xbf16>, vector<16x128xbf16>, vector<128x128xf32> -> vector<128x128xf32>
    %cst_14 = arith.constant 0.000000e+00 : f32
    %50 = vector.broadcast %cst_14 : f32 to vector<16x32xf32>
    %51 = vector.extract_strided_slice %40 {offsets = [0, 0], sizes = [16, 128], strides = [1, 1]} : vector<128x128xf32> to vector<16x128xf32>
    %52 = arith.truncf %50 : vector<16x32xf32> to vector<16x32xbf16>
    %cst_15 = arith.constant dense<0.000000e+00> : vector<16x128xf32>
    %53 = tpu.matmul %52, %2, %cst_15 {dimension_numbers = #tpu.dot_dimension_numbers<[1], [0], [0], [1], [0, 0, 1, 1], [], []>} : vector<16x32xbf16>, vector<32x128xbf16>, vector<16x128xf32> -> vector<16x128xf32>
    %54 = arith.addf %53, %25 : vector<16x128xf32>
    %55 = vector.extract_strided_slice %51 {offsets = [0, 0], sizes = [16, 32], strides = [1, 1]} : vector<16x128xf32> to vector<16x32xf32>
    %56 = vector.extract_strided_slice %54 {offsets = [0, 0], sizes = [16, 32], strides = [1, 1]} : vector<16x128xf32> to vector<16x32xf32>
    %57 = arith.addf %55, %56 : vector<16x32xf32>
    %58 = arith.negf %57 : vector<16x32xf32>
    %59 = math.exp %58 : vector<16x32xf32>
    %cst_16 = arith.constant 1.000000e+00 : f32
    %60 = vector.broadcast %cst_16 : f32 to vector<16x32xf32>
    %61 = arith.addf %60, %59 : vector<16x32xf32>
    %62 = arith.divf %60, %61 : vector<16x32xf32>
    %63 = vector.extract_strided_slice %51 {offsets = [0, 32], sizes = [16, 32], strides = [1, 1]} : vector<16x128xf32> to vector<16x32xf32>
    %64 = vector.extract_strided_slice %54 {offsets = [0, 32], sizes = [16, 32], strides = [1, 1]} : vector<16x128xf32> to vector<16x32xf32>
    %65 = arith.addf %63, %64 : vector<16x32xf32>
    %66 = arith.negf %65 : vector<16x32xf32>
    %67 = math.exp %66 : vector<16x32xf32>
    %cst_17 = arith.constant 1.000000e+00 : f32
    %68 = vector.broadcast %cst_17 : f32 to vector<16x32xf32>
    %69 = arith.addf %68, %67 : vector<16x32xf32>
    %70 = arith.divf %68, %69 : vector<16x32xf32>
    %71 = vector.extract_strided_slice %51 {offsets = [0, 64], sizes = [16, 32], strides = [1, 1]} : vector<16x128xf32> to vector<16x32xf32>
    %72 = vector.extract_strided_slice %54 {offsets = [0, 64], sizes = [16, 32], strides = [1, 1]} : vector<16x128xf32> to vector<16x32xf32>
    %73 = arith.mulf %62, %72 : vector<16x32xf32>
    %74 = arith.addf %71, %73 : vector<16x32xf32>
    %75 = math.tanh %74 : vector<16x32xf32>
    %cst_18 = arith.constant 1.000000e+00 : f32
    %76 = vector.broadcast %cst_18 : f32 to vector<16x32xf32>
    %77 = arith.subf %76, %70 : vector<16x32xf32>
    %78 = arith.mulf %77, %75 : vector<16x32xf32>
    %79 = arith.mulf %70, %50 : vector<16x32xf32>
    %80 = arith.addf %78, %79 : vector<16x32xf32>
    %81 = vector.extract_strided_slice %40 {offsets = [16, 0], sizes = [16, 128], strides = [1, 1]} : vector<128x128xf32> to vector<16x128xf32>
    %82 = arith.truncf %80 : vector<16x32xf32> to vector<16x32xbf16>
    %cst_19 = arith.constant dense<0.000000e+00> : vector<16x128xf32>
    %83 = tpu.matmul %82, %2, %cst_19 {dimension_numbers = #tpu.dot_dimension_numbers<[1], [0], [0], [1], [0, 0, 1, 1], [], []>} : vector<16x32xbf16>, vector<32x128xbf16>, vector<16x128xf32> -> vector<16x128xf32>
    %84 = arith.addf %83, %25 : vector<16x128xf32>
    %85 = vector.extract_strided_slice %81 {offsets = [0, 0], sizes = [16, 32], strides = [1, 1]} : vector<16x128xf32> to vector<16x32xf32>
    %86 = vector.extract_strided_slice %84 {offsets = [0, 0], sizes = [16, 32], strides = [1, 1]} : vector<16x128xf32> to vector<16x32xf32>
    %87 = arith.addf %85, %86 : vector<16x32xf32>
    %88 = arith.negf %87 : vector<16x32xf32>
    %89 = math.exp %88 : vector<16x32xf32>
    %cst_20 = arith.constant 1.000000e+00 : f32
    %90 = vector.broadcast %cst_20 : f32 to vector<16x32xf32>
    %91 = arith.addf %90, %89 : vector<16x32xf32>
    %92 = arith.divf %90, %91 : vector<16x32xf32>
    %93 = vector.extract_strided_slice %81 {offsets = [0, 32], sizes = [16, 32], strides = [1, 1]} : vector<16x128xf32> to vector<16x32xf32>
    %94 = vector.extract_strided_slice %84 {offsets = [0, 32], sizes = [16, 32], strides = [1, 1]} : vector<16x128xf32> to vector<16x32xf32>
    %95 = arith.addf %93, %94 : vector<16x32xf32>
    %96 = arith.negf %95 : vector<16x32xf32>
    %97 = math.exp %96 : vector<16x32xf32>
    %cst_21 = arith.constant 1.000000e+00 : f32
    %98 = vector.broadcast %cst_21 : f32 to vector<16x32xf32>
    %99 = arith.addf %98, %97 : vector<16x32xf32>
    %100 = arith.divf %98, %99 : vector<16x32xf32>
    %101 = vector.extract_strided_slice %81 {offsets = [0, 64], sizes = [16, 32], strides = [1, 1]} : vector<16x128xf32> to vector<16x32xf32>
    %102 = vector.extract_strided_slice %84 {offsets = [0, 64], sizes = [16, 32], strides = [1, 1]} : vector<16x128xf32> to vector<16x32xf32>
    %103 = arith.mulf %92, %102 : vector<16x32xf32>
    %104 = arith.addf %101, %103 : vector<16x32xf32>
    %105 = math.tanh %104 : vector<16x32xf32>
    %cst_22 = arith.constant 1.000000e+00 : f32
    %106 = vector.broadcast %cst_22 : f32 to vector<16x32xf32>
    %107 = arith.subf %106, %100 : vector<16x32xf32>
    %108 = arith.mulf %107, %105 : vector<16x32xf32>
    %109 = arith.mulf %100, %80 : vector<16x32xf32>
    %110 = arith.addf %108, %109 : vector<16x32xf32>
    %111 = vector.extract_strided_slice %40 {offsets = [32, 0], sizes = [16, 128], strides = [1, 1]} : vector<128x128xf32> to vector<16x128xf32>
    %112 = arith.truncf %110 : vector<16x32xf32> to vector<16x32xbf16>
    %cst_23 = arith.constant dense<0.000000e+00> : vector<16x128xf32>
    %113 = tpu.matmul %112, %2, %cst_23 {dimension_numbers = #tpu.dot_dimension_numbers<[1], [0], [0], [1], [0, 0, 1, 1], [], []>} : vector<16x32xbf16>, vector<32x128xbf16>, vector<16x128xf32> -> vector<16x128xf32>
    %114 = arith.addf %113, %25 : vector<16x128xf32>
    %115 = vector.extract_strided_slice %111 {offsets = [0, 0], sizes = [16, 32], strides = [1, 1]} : vector<16x128xf32> to vector<16x32xf32>
    %116 = vector.extract_strided_slice %114 {offsets = [0, 0], sizes = [16, 32], strides = [1, 1]} : vector<16x128xf32> to vector<16x32xf32>
    %117 = arith.addf %115, %116 : vector<16x32xf32>
    %118 = arith.negf %117 : vector<16x32xf32>
    %119 = math.exp %118 : vector<16x32xf32>
    %cst_24 = arith.constant 1.000000e+00 : f32
    %120 = vector.broadcast %cst_24 : f32 to vector<16x32xf32>
    %121 = arith.addf %120, %119 : vector<16x32xf32>
    %122 = arith.divf %120, %121 : vector<16x32xf32>
    %123 = vector.extract_strided_slice %111 {offsets = [0, 32], sizes = [16, 32], strides = [1, 1]} : vector<16x128xf32> to vector<16x32xf32>
    %124 = vector.extract_strided_slice %114 {offsets = [0, 32], sizes = [16, 32], strides = [1, 1]} : vector<16x128xf32> to vector<16x32xf32>
    %125 = arith.addf %123, %124 : vector<16x32xf32>
    %126 = arith.negf %125 : vector<16x32xf32>
    %127 = math.exp %126 : vector<16x32xf32>
    %cst_25 = arith.constant 1.000000e+00 : f32
    %128 = vector.broadcast %cst_25 : f32 to vector<16x32xf32>
    %129 = arith.addf %128, %127 : vector<16x32xf32>
    %130 = arith.divf %128, %129 : vector<16x32xf32>
    %131 = vector.extract_strided_slice %111 {offsets = [0, 64], sizes = [16, 32], strides = [1, 1]} : vector<16x128xf32> to vector<16x32xf32>
    %132 = vector.extract_strided_slice %114 {offsets = [0, 64], sizes = [16, 32], strides = [1, 1]} : vector<16x128xf32> to vector<16x32xf32>
    %133 = arith.mulf %122, %132 : vector<16x32xf32>
    %134 = arith.addf %131, %133 : vector<16x32xf32>
    %135 = math.tanh %134 : vector<16x32xf32>
    %cst_26 = arith.constant 1.000000e+00 : f32
    %136 = vector.broadcast %cst_26 : f32 to vector<16x32xf32>
    %137 = arith.subf %136, %130 : vector<16x32xf32>
    %138 = arith.mulf %137, %135 : vector<16x32xf32>
    %139 = arith.mulf %130, %110 : vector<16x32xf32>
    %140 = arith.addf %138, %139 : vector<16x32xf32>
    %141 = vector.extract_strided_slice %40 {offsets = [48, 0], sizes = [16, 128], strides = [1, 1]} : vector<128x128xf32> to vector<16x128xf32>
    %142 = arith.truncf %140 : vector<16x32xf32> to vector<16x32xbf16>
    %cst_27 = arith.constant dense<0.000000e+00> : vector<16x128xf32>
    %143 = tpu.matmul %142, %2, %cst_27 {dimension_numbers = #tpu.dot_dimension_numbers<[1], [0], [0], [1], [0, 0, 1, 1], [], []>} : vector<16x32xbf16>, vector<32x128xbf16>, vector<16x128xf32> -> vector<16x128xf32>
    %144 = arith.addf %143, %25 : vector<16x128xf32>
    %145 = vector.extract_strided_slice %141 {offsets = [0, 0], sizes = [16, 32], strides = [1, 1]} : vector<16x128xf32> to vector<16x32xf32>
    %146 = vector.extract_strided_slice %144 {offsets = [0, 0], sizes = [16, 32], strides = [1, 1]} : vector<16x128xf32> to vector<16x32xf32>
    %147 = arith.addf %145, %146 : vector<16x32xf32>
    %148 = arith.negf %147 : vector<16x32xf32>
    %149 = math.exp %148 : vector<16x32xf32>
    %cst_28 = arith.constant 1.000000e+00 : f32
    %150 = vector.broadcast %cst_28 : f32 to vector<16x32xf32>
    %151 = arith.addf %150, %149 : vector<16x32xf32>
    %152 = arith.divf %150, %151 : vector<16x32xf32>
    %153 = vector.extract_strided_slice %141 {offsets = [0, 32], sizes = [16, 32], strides = [1, 1]} : vector<16x128xf32> to vector<16x32xf32>
    %154 = vector.extract_strided_slice %144 {offsets = [0, 32], sizes = [16, 32], strides = [1, 1]} : vector<16x128xf32> to vector<16x32xf32>
    %155 = arith.addf %153, %154 : vector<16x32xf32>
    %156 = arith.negf %155 : vector<16x32xf32>
    %157 = math.exp %156 : vector<16x32xf32>
    %cst_29 = arith.constant 1.000000e+00 : f32
    %158 = vector.broadcast %cst_29 : f32 to vector<16x32xf32>
    %159 = arith.addf %158, %157 : vector<16x32xf32>
    %160 = arith.divf %158, %159 : vector<16x32xf32>
    %161 = vector.extract_strided_slice %141 {offsets = [0, 64], sizes = [16, 32], strides = [1, 1]} : vector<16x128xf32> to vector<16x32xf32>
    %162 = vector.extract_strided_slice %144 {offsets = [0, 64], sizes = [16, 32], strides = [1, 1]} : vector<16x128xf32> to vector<16x32xf32>
    %163 = arith.mulf %152, %162 : vector<16x32xf32>
    %164 = arith.addf %161, %163 : vector<16x32xf32>
    %165 = math.tanh %164 : vector<16x32xf32>
    %cst_30 = arith.constant 1.000000e+00 : f32
    %166 = vector.broadcast %cst_30 : f32 to vector<16x32xf32>
    %167 = arith.subf %166, %160 : vector<16x32xf32>
    %168 = arith.mulf %167, %165 : vector<16x32xf32>
    %169 = arith.mulf %160, %140 : vector<16x32xf32>
    %170 = arith.addf %168, %169 : vector<16x32xf32>
    %171 = vector.extract_strided_slice %40 {offsets = [64, 0], sizes = [16, 128], strides = [1, 1]} : vector<128x128xf32> to vector<16x128xf32>
    %172 = arith.truncf %170 : vector<16x32xf32> to vector<16x32xbf16>
    %cst_31 = arith.constant dense<0.000000e+00> : vector<16x128xf32>
    %173 = tpu.matmul %172, %2, %cst_31 {dimension_numbers = #tpu.dot_dimension_numbers<[1], [0], [0], [1], [0, 0, 1, 1], [], []>} : vector<16x32xbf16>, vector<32x128xbf16>, vector<16x128xf32> -> vector<16x128xf32>
    %174 = arith.addf %173, %25 : vector<16x128xf32>
    %175 = vector.extract_strided_slice %171 {offsets = [0, 0], sizes = [16, 32], strides = [1, 1]} : vector<16x128xf32> to vector<16x32xf32>
    %176 = vector.extract_strided_slice %174 {offsets = [0, 0], sizes = [16, 32], strides = [1, 1]} : vector<16x128xf32> to vector<16x32xf32>
    %177 = arith.addf %175, %176 : vector<16x32xf32>
    %178 = arith.negf %177 : vector<16x32xf32>
    %179 = math.exp %178 : vector<16x32xf32>
    %cst_32 = arith.constant 1.000000e+00 : f32
    %180 = vector.broadcast %cst_32 : f32 to vector<16x32xf32>
    %181 = arith.addf %180, %179 : vector<16x32xf32>
    %182 = arith.divf %180, %181 : vector<16x32xf32>
    %183 = vector.extract_strided_slice %171 {offsets = [0, 32], sizes = [16, 32], strides = [1, 1]} : vector<16x128xf32> to vector<16x32xf32>
    %184 = vector.extract_strided_slice %174 {offsets = [0, 32], sizes = [16, 32], strides = [1, 1]} : vector<16x128xf32> to vector<16x32xf32>
    %185 = arith.addf %183, %184 : vector<16x32xf32>
    %186 = arith.negf %185 : vector<16x32xf32>
    %187 = math.exp %186 : vector<16x32xf32>
    %cst_33 = arith.constant 1.000000e+00 : f32
    %188 = vector.broadcast %cst_33 : f32 to vector<16x32xf32>
    %189 = arith.addf %188, %187 : vector<16x32xf32>
    %190 = arith.divf %188, %189 : vector<16x32xf32>
    %191 = vector.extract_strided_slice %171 {offsets = [0, 64], sizes = [16, 32], strides = [1, 1]} : vector<16x128xf32> to vector<16x32xf32>
    %192 = vector.extract_strided_slice %174 {offsets = [0, 64], sizes = [16, 32], strides = [1, 1]} : vector<16x128xf32> to vector<16x32xf32>
    %193 = arith.mulf %182, %192 : vector<16x32xf32>
    %194 = arith.addf %191, %193 : vector<16x32xf32>
    %195 = math.tanh %194 : vector<16x32xf32>
    %cst_34 = arith.constant 1.000000e+00 : f32
    %196 = vector.broadcast %cst_34 : f32 to vector<16x32xf32>
    %197 = arith.subf %196, %190 : vector<16x32xf32>
    %198 = arith.mulf %197, %195 : vector<16x32xf32>
    %199 = arith.mulf %190, %170 : vector<16x32xf32>
    %200 = arith.addf %198, %199 : vector<16x32xf32>
    %201 = vector.extract_strided_slice %40 {offsets = [80, 0], sizes = [16, 128], strides = [1, 1]} : vector<128x128xf32> to vector<16x128xf32>
    %202 = arith.truncf %200 : vector<16x32xf32> to vector<16x32xbf16>
    %cst_35 = arith.constant dense<0.000000e+00> : vector<16x128xf32>
    %203 = tpu.matmul %202, %2, %cst_35 {dimension_numbers = #tpu.dot_dimension_numbers<[1], [0], [0], [1], [0, 0, 1, 1], [], []>} : vector<16x32xbf16>, vector<32x128xbf16>, vector<16x128xf32> -> vector<16x128xf32>
    %204 = arith.addf %203, %25 : vector<16x128xf32>
    %205 = vector.extract_strided_slice %201 {offsets = [0, 0], sizes = [16, 32], strides = [1, 1]} : vector<16x128xf32> to vector<16x32xf32>
    %206 = vector.extract_strided_slice %204 {offsets = [0, 0], sizes = [16, 32], strides = [1, 1]} : vector<16x128xf32> to vector<16x32xf32>
    %207 = arith.addf %205, %206 : vector<16x32xf32>
    %208 = arith.negf %207 : vector<16x32xf32>
    %209 = math.exp %208 : vector<16x32xf32>
    %cst_36 = arith.constant 1.000000e+00 : f32
    %210 = vector.broadcast %cst_36 : f32 to vector<16x32xf32>
    %211 = arith.addf %210, %209 : vector<16x32xf32>
    %212 = arith.divf %210, %211 : vector<16x32xf32>
    %213 = vector.extract_strided_slice %201 {offsets = [0, 32], sizes = [16, 32], strides = [1, 1]} : vector<16x128xf32> to vector<16x32xf32>
    %214 = vector.extract_strided_slice %204 {offsets = [0, 32], sizes = [16, 32], strides = [1, 1]} : vector<16x128xf32> to vector<16x32xf32>
    %215 = arith.addf %213, %214 : vector<16x32xf32>
    %216 = arith.negf %215 : vector<16x32xf32>
    %217 = math.exp %216 : vector<16x32xf32>
    %cst_37 = arith.constant 1.000000e+00 : f32
    %218 = vector.broadcast %cst_37 : f32 to vector<16x32xf32>
    %219 = arith.addf %218, %217 : vector<16x32xf32>
    %220 = arith.divf %218, %219 : vector<16x32xf32>
    %221 = vector.extract_strided_slice %201 {offsets = [0, 64], sizes = [16, 32], strides = [1, 1]} : vector<16x128xf32> to vector<16x32xf32>
    %222 = vector.extract_strided_slice %204 {offsets = [0, 64], sizes = [16, 32], strides = [1, 1]} : vector<16x128xf32> to vector<16x32xf32>
    %223 = arith.mulf %212, %222 : vector<16x32xf32>
    %224 = arith.addf %221, %223 : vector<16x32xf32>
    %225 = math.tanh %224 : vector<16x32xf32>
    %cst_38 = arith.constant 1.000000e+00 : f32
    %226 = vector.broadcast %cst_38 : f32 to vector<16x32xf32>
    %227 = arith.subf %226, %220 : vector<16x32xf32>
    %228 = arith.mulf %227, %225 : vector<16x32xf32>
    %229 = arith.mulf %220, %200 : vector<16x32xf32>
    %230 = arith.addf %228, %229 : vector<16x32xf32>
    %231 = vector.extract_strided_slice %40 {offsets = [96, 0], sizes = [16, 128], strides = [1, 1]} : vector<128x128xf32> to vector<16x128xf32>
    %232 = arith.truncf %230 : vector<16x32xf32> to vector<16x32xbf16>
    %cst_39 = arith.constant dense<0.000000e+00> : vector<16x128xf32>
    %233 = tpu.matmul %232, %2, %cst_39 {dimension_numbers = #tpu.dot_dimension_numbers<[1], [0], [0], [1], [0, 0, 1, 1], [], []>} : vector<16x32xbf16>, vector<32x128xbf16>, vector<16x128xf32> -> vector<16x128xf32>
    %234 = arith.addf %233, %25 : vector<16x128xf32>
    %235 = vector.extract_strided_slice %231 {offsets = [0, 0], sizes = [16, 32], strides = [1, 1]} : vector<16x128xf32> to vector<16x32xf32>
    %236 = vector.extract_strided_slice %234 {offsets = [0, 0], sizes = [16, 32], strides = [1, 1]} : vector<16x128xf32> to vector<16x32xf32>
    %237 = arith.addf %235, %236 : vector<16x32xf32>
    %238 = arith.negf %237 : vector<16x32xf32>
    %239 = math.exp %238 : vector<16x32xf32>
    %cst_40 = arith.constant 1.000000e+00 : f32
    %240 = vector.broadcast %cst_40 : f32 to vector<16x32xf32>
    %241 = arith.addf %240, %239 : vector<16x32xf32>
    %242 = arith.divf %240, %241 : vector<16x32xf32>
    %243 = vector.extract_strided_slice %231 {offsets = [0, 32], sizes = [16, 32], strides = [1, 1]} : vector<16x128xf32> to vector<16x32xf32>
    %244 = vector.extract_strided_slice %234 {offsets = [0, 32], sizes = [16, 32], strides = [1, 1]} : vector<16x128xf32> to vector<16x32xf32>
    %245 = arith.addf %243, %244 : vector<16x32xf32>
    %246 = arith.negf %245 : vector<16x32xf32>
    %247 = math.exp %246 : vector<16x32xf32>
    %cst_41 = arith.constant 1.000000e+00 : f32
    %248 = vector.broadcast %cst_41 : f32 to vector<16x32xf32>
    %249 = arith.addf %248, %247 : vector<16x32xf32>
    %250 = arith.divf %248, %249 : vector<16x32xf32>
    %251 = vector.extract_strided_slice %231 {offsets = [0, 64], sizes = [16, 32], strides = [1, 1]} : vector<16x128xf32> to vector<16x32xf32>
    %252 = vector.extract_strided_slice %234 {offsets = [0, 64], sizes = [16, 32], strides = [1, 1]} : vector<16x128xf32> to vector<16x32xf32>
    %253 = arith.mulf %242, %252 : vector<16x32xf32>
    %254 = arith.addf %251, %253 : vector<16x32xf32>
    %255 = math.tanh %254 : vector<16x32xf32>
    %cst_42 = arith.constant 1.000000e+00 : f32
    %256 = vector.broadcast %cst_42 : f32 to vector<16x32xf32>
    %257 = arith.subf %256, %250 : vector<16x32xf32>
    %258 = arith.mulf %257, %255 : vector<16x32xf32>
    %259 = arith.mulf %250, %230 : vector<16x32xf32>
    %260 = arith.addf %258, %259 : vector<16x32xf32>
    %261 = vector.extract_strided_slice %40 {offsets = [112, 0], sizes = [16, 128], strides = [1, 1]} : vector<128x128xf32> to vector<16x128xf32>
    %262 = arith.truncf %260 : vector<16x32xf32> to vector<16x32xbf16>
    %cst_43 = arith.constant dense<0.000000e+00> : vector<16x128xf32>
    %263 = tpu.matmul %262, %2, %cst_43 {dimension_numbers = #tpu.dot_dimension_numbers<[1], [0], [0], [1], [0, 0, 1, 1], [], []>} : vector<16x32xbf16>, vector<32x128xbf16>, vector<16x128xf32> -> vector<16x128xf32>
    %264 = arith.addf %263, %25 : vector<16x128xf32>
    %265 = vector.extract_strided_slice %261 {offsets = [0, 0], sizes = [16, 32], strides = [1, 1]} : vector<16x128xf32> to vector<16x32xf32>
    %266 = vector.extract_strided_slice %264 {offsets = [0, 0], sizes = [16, 32], strides = [1, 1]} : vector<16x128xf32> to vector<16x32xf32>
    %267 = arith.addf %265, %266 : vector<16x32xf32>
    %268 = arith.negf %267 : vector<16x32xf32>
    %269 = math.exp %268 : vector<16x32xf32>
    %cst_44 = arith.constant 1.000000e+00 : f32
    %270 = vector.broadcast %cst_44 : f32 to vector<16x32xf32>
    %271 = arith.addf %270, %269 : vector<16x32xf32>
    %272 = arith.divf %270, %271 : vector<16x32xf32>
    %273 = vector.extract_strided_slice %261 {offsets = [0, 32], sizes = [16, 32], strides = [1, 1]} : vector<16x128xf32> to vector<16x32xf32>
    %274 = vector.extract_strided_slice %264 {offsets = [0, 32], sizes = [16, 32], strides = [1, 1]} : vector<16x128xf32> to vector<16x32xf32>
    %275 = arith.addf %273, %274 : vector<16x32xf32>
    %276 = arith.negf %275 : vector<16x32xf32>
    %277 = math.exp %276 : vector<16x32xf32>
    %cst_45 = arith.constant 1.000000e+00 : f32
    %278 = vector.broadcast %cst_45 : f32 to vector<16x32xf32>
    %279 = arith.addf %278, %277 : vector<16x32xf32>
    %280 = arith.divf %278, %279 : vector<16x32xf32>
    %281 = vector.extract_strided_slice %261 {offsets = [0, 64], sizes = [16, 32], strides = [1, 1]} : vector<16x128xf32> to vector<16x32xf32>
    %282 = vector.extract_strided_slice %264 {offsets = [0, 64], sizes = [16, 32], strides = [1, 1]} : vector<16x128xf32> to vector<16x32xf32>
    %283 = arith.mulf %272, %282 : vector<16x32xf32>
    %284 = arith.addf %281, %283 : vector<16x32xf32>
    %285 = math.tanh %284 : vector<16x32xf32>
    %cst_46 = arith.constant 1.000000e+00 : f32
    %286 = vector.broadcast %cst_46 : f32 to vector<16x32xf32>
    %287 = arith.subf %286, %280 : vector<16x32xf32>
    %288 = arith.mulf %287, %285 : vector<16x32xf32>
    %289 = arith.mulf %280, %260 : vector<16x32xf32>
    %290 = arith.addf %288, %289 : vector<16x32xf32>
    %291 = arith.truncf %290 : vector<16x32xf32> to vector<16x32xbf16>
    %cst_47 = arith.constant dense<0.000000e+00> : vector<16x128xf32>
    %292 = tpu.matmul %291, %4, %cst_47 {dimension_numbers = #tpu.dot_dimension_numbers<[1], [0], [0], [1], [0, 0, 1, 1], [], []>} : vector<16x32xbf16>, vector<32x128xbf16>, vector<16x128xf32> -> vector<16x128xf32>
    %293 = arith.addf %292, %31 : vector<16x128xf32>
    %cst_48 = arith.constant dense<0.000000e+00> : vector<16x128xf32>
    %294 = tpu.matmul %291, %3, %cst_48 {dimension_numbers = #tpu.dot_dimension_numbers<[1], [0], [0], [1], [0, 0, 1, 1], [], []>} : vector<16x32xbf16>, vector<32x128xbf16>, vector<16x128xf32> -> vector<16x128xf32>
    %295 = arith.addf %294, %28 : vector<16x128xf32>
    %296 = tpu.iota {dimensions = array<i32: 1>} : vector<16x16xi32>
    %297 = vector.shape_cast %6 : vector<1x128xf32> to vector<1x128xf32>
    %298 = vector.broadcast %297 : vector<1x128xf32> to vector<16x128xf32>
    %299 = arith.addf %298, %293 : vector<16x128xf32>
    %300 = vector.extract_strided_slice %299 {offsets = [0, 0], sizes = [16, 32], strides = [1, 1]} : vector<16x128xf32> to vector<16x32xf32>
    %301 = vector.extract_strided_slice %295 {offsets = [0, 0], sizes = [16, 32], strides = [1, 1]} : vector<16x128xf32> to vector<16x32xf32>
    %302 = arith.addf %300, %301 : vector<16x32xf32>
    %303 = arith.negf %302 : vector<16x32xf32>
    %304 = math.exp %303 : vector<16x32xf32>
    %cst_49 = arith.constant 1.000000e+00 : f32
    %305 = vector.broadcast %cst_49 : f32 to vector<16x32xf32>
    %306 = arith.addf %305, %304 : vector<16x32xf32>
    %307 = arith.divf %305, %306 : vector<16x32xf32>
    %308 = vector.extract_strided_slice %299 {offsets = [0, 32], sizes = [16, 32], strides = [1, 1]} : vector<16x128xf32> to vector<16x32xf32>
    %309 = vector.extract_strided_slice %295 {offsets = [0, 32], sizes = [16, 32], strides = [1, 1]} : vector<16x128xf32> to vector<16x32xf32>
    %310 = arith.addf %308, %309 : vector<16x32xf32>
    %311 = arith.negf %310 : vector<16x32xf32>
    %312 = math.exp %311 : vector<16x32xf32>
    %cst_50 = arith.constant 1.000000e+00 : f32
    %313 = vector.broadcast %cst_50 : f32 to vector<16x32xf32>
    %314 = arith.addf %313, %312 : vector<16x32xf32>
    %315 = arith.divf %313, %314 : vector<16x32xf32>
    %316 = vector.extract_strided_slice %299 {offsets = [0, 64], sizes = [16, 32], strides = [1, 1]} : vector<16x128xf32> to vector<16x32xf32>
    %317 = vector.extract_strided_slice %295 {offsets = [0, 64], sizes = [16, 32], strides = [1, 1]} : vector<16x128xf32> to vector<16x32xf32>
    %318 = arith.mulf %307, %317 : vector<16x32xf32>
    %319 = arith.addf %316, %318 : vector<16x32xf32>
    %320 = math.tanh %319 : vector<16x32xf32>
    %cst_51 = arith.constant 1.000000e+00 : f32
    %321 = vector.broadcast %cst_51 : f32 to vector<16x32xf32>
    %322 = arith.subf %321, %315 : vector<16x32xf32>
    %323 = arith.mulf %322, %320 : vector<16x32xf32>
    %324 = arith.mulf %315, %290 : vector<16x32xf32>
    %325 = arith.addf %323, %324 : vector<16x32xf32>
    %326 = arith.truncf %325 : vector<16x32xf32> to vector<16x32xbf16>
    %cst_52 = arith.constant dense<0.000000e+00> : vector<16x128xf32>
    %327 = tpu.matmul %326, %3, %cst_52 {dimension_numbers = #tpu.dot_dimension_numbers<[1], [0], [0], [1], [0, 0, 1, 1], [], []>} : vector<16x32xbf16>, vector<32x128xbf16>, vector<16x128xf32> -> vector<16x128xf32>
    %328 = arith.addf %327, %28 : vector<16x128xf32>
    %329 = vector.extract_strided_slice %299 {offsets = [0, 96], sizes = [16, 16], strides = [1, 1]} : vector<16x128xf32> to vector<16x16xf32>
    %330 = vector.extract_strided_slice %328 {offsets = [0, 96], sizes = [16, 16], strides = [1, 1]} : vector<16x128xf32> to vector<16x16xf32>
    %331 = arith.addf %329, %330 : vector<16x16xf32>
    %c0_53 = arith.constant 0 : index
    %332 = memref.load %arg1[%c0_53] : memref<8xi32, #tpu.memory_space<smem>>
    %c1_i32 = arith.constant 1 : i32
    %333 = arith.cmpi eq, %332, %c1_i32 : i32
    %334 = arith.extui %333 : i1 to i32
    %c0_i32 = arith.constant 0 : i32
    %335 = arith.cmpi ne, %334, %c0_i32 : i32
    %336:2 = scf.if %335 -> (vector<16x128xf32>, vector<16x1xi32>) {
      %611 = vector.extract_strided_slice %49 {offsets = [0, 0], sizes = [16, 128], strides = [1, 1]} : vector<128x128xf32> to vector<16x128xf32>
      %612 = vector.extract_strided_slice %42 {offsets = [0, 0], sizes = [16, 1], strides = [1, 1]} : vector<128x1xi32> to vector<16x1xi32>
      scf.yield %611, %612 : vector<16x128xf32>, vector<16x1xi32>
    } else {
      %cst_102 = arith.constant dense<0xFF800000> : vector<16xf32>
      %611 = vector.multi_reduction <maximumf>, %331, %cst_102 [1] : vector<16x16xf32> to vector<16xf32>
      %612 = vector.shape_cast %611 : vector<16xf32> to vector<16x1xf32>
      %613 = vector.broadcast %612 : vector<16x1xf32> to vector<16x16xf32>
      %614 = arith.cmpf oeq, %331, %613 : vector<16x16xf32>
      %c16_i32 = arith.constant 16 : i32
      %615 = vector.broadcast %c16_i32 : i32 to vector<16x16xi32>
      %616 = arith.select %614, %296, %615 : vector<16x16xi1>, vector<16x16xi32>
      %cst_103 = arith.constant dense<2147483647> : vector<16xi32>
      %617 = vector.multi_reduction <minsi>, %616, %cst_103 [1] : vector<16x16xi32> to vector<16xi32>
      %618 = vector.shape_cast %617 : vector<16xi32> to vector<16x1xi32>
      %c0_i32_104 = arith.constant 0 : i32
      %619 = vector.broadcast %c0_i32_104 : i32 to vector<16x1xi32>
      %620 = arith.cmpi eq, %618, %619 : vector<16x1xi32>
      %cst_105 = arith.constant 0.000000e+00 : f32
      %621 = vector.shape_cast %620 : vector<16x1xi1> to vector<16x1xi1>
      %622 = vector.broadcast %621 : vector<16x1xi1> to vector<16x128xi1>
      %623 = vector.shape_cast %6 : vector<1x128xf32> to vector<1x128xf32>
      %624 = vector.broadcast %623 : vector<1x128xf32> to vector<16x128xf32>
      %625 = vector.broadcast %cst_105 : f32 to vector<16x128xf32>
      %626 = arith.select %622, %624, %625 : vector<16x128xi1>, vector<16x128xf32>
      %c1_i32_106 = arith.constant 1 : i32
      %627 = vector.broadcast %c1_i32_106 : i32 to vector<16x1xi32>
      %628 = arith.cmpi eq, %618, %627 : vector<16x1xi32>
      %cst_107 = arith.constant 0.000000e+00 : f32
      %629 = vector.shape_cast %628 : vector<16x1xi1> to vector<16x1xi1>
      %630 = vector.broadcast %629 : vector<16x1xi1> to vector<16x128xi1>
      %631 = vector.shape_cast %7 : vector<1x128xf32> to vector<1x128xf32>
      %632 = vector.broadcast %631 : vector<1x128xf32> to vector<16x128xf32>
      %633 = vector.broadcast %cst_107 : f32 to vector<16x128xf32>
      %634 = arith.select %630, %632, %633 : vector<16x128xi1>, vector<16x128xf32>
      %c2_i32 = arith.constant 2 : i32
      %635 = vector.broadcast %c2_i32 : i32 to vector<16x1xi32>
      %636 = arith.cmpi eq, %618, %635 : vector<16x1xi32>
      %cst_108 = arith.constant 0.000000e+00 : f32
      %637 = vector.shape_cast %636 : vector<16x1xi1> to vector<16x1xi1>
      %638 = vector.broadcast %637 : vector<16x1xi1> to vector<16x128xi1>
      %639 = vector.shape_cast %8 : vector<1x128xf32> to vector<1x128xf32>
      %640 = vector.broadcast %639 : vector<1x128xf32> to vector<16x128xf32>
      %641 = vector.broadcast %cst_108 : f32 to vector<16x128xf32>
      %642 = arith.select %638, %640, %641 : vector<16x128xi1>, vector<16x128xf32>
      %c3_i32 = arith.constant 3 : i32
      %643 = vector.broadcast %c3_i32 : i32 to vector<16x1xi32>
      %644 = arith.cmpi eq, %618, %643 : vector<16x1xi32>
      %cst_109 = arith.constant 0.000000e+00 : f32
      %645 = vector.shape_cast %644 : vector<16x1xi1> to vector<16x1xi1>
      %646 = vector.broadcast %645 : vector<16x1xi1> to vector<16x128xi1>
      %647 = vector.shape_cast %9 : vector<1x128xf32> to vector<1x128xf32>
      %648 = vector.broadcast %647 : vector<1x128xf32> to vector<16x128xf32>
      %649 = vector.broadcast %cst_109 : f32 to vector<16x128xf32>
      %650 = arith.select %646, %648, %649 : vector<16x128xi1>, vector<16x128xf32>
      %c4_i32 = arith.constant 4 : i32
      %651 = vector.broadcast %c4_i32 : i32 to vector<16x1xi32>
      %652 = arith.cmpi eq, %618, %651 : vector<16x1xi32>
      %cst_110 = arith.constant 0.000000e+00 : f32
      %653 = vector.shape_cast %652 : vector<16x1xi1> to vector<16x1xi1>
      %654 = vector.broadcast %653 : vector<16x1xi1> to vector<16x128xi1>
      %655 = vector.shape_cast %10 : vector<1x128xf32> to vector<1x128xf32>
      %656 = vector.broadcast %655 : vector<1x128xf32> to vector<16x128xf32>
      %657 = vector.broadcast %cst_110 : f32 to vector<16x128xf32>
      %658 = arith.select %654, %656, %657 : vector<16x128xi1>, vector<16x128xf32>
      %c5_i32 = arith.constant 5 : i32
      %659 = vector.broadcast %c5_i32 : i32 to vector<16x1xi32>
      %660 = arith.cmpi eq, %618, %659 : vector<16x1xi32>
      %cst_111 = arith.constant 0.000000e+00 : f32
      %661 = vector.shape_cast %660 : vector<16x1xi1> to vector<16x1xi1>
      %662 = vector.broadcast %661 : vector<16x1xi1> to vector<16x128xi1>
      %663 = vector.shape_cast %11 : vector<1x128xf32> to vector<1x128xf32>
      %664 = vector.broadcast %663 : vector<1x128xf32> to vector<16x128xf32>
      %665 = vector.broadcast %cst_111 : f32 to vector<16x128xf32>
      %666 = arith.select %662, %664, %665 : vector<16x128xi1>, vector<16x128xf32>
      %c6_i32 = arith.constant 6 : i32
      %667 = vector.broadcast %c6_i32 : i32 to vector<16x1xi32>
      %668 = arith.cmpi eq, %618, %667 : vector<16x1xi32>
      %cst_112 = arith.constant 0.000000e+00 : f32
      %669 = vector.shape_cast %668 : vector<16x1xi1> to vector<16x1xi1>
      %670 = vector.broadcast %669 : vector<16x1xi1> to vector<16x128xi1>
      %671 = vector.shape_cast %12 : vector<1x128xf32> to vector<1x128xf32>
      %672 = vector.broadcast %671 : vector<1x128xf32> to vector<16x128xf32>
      %673 = vector.broadcast %cst_112 : f32 to vector<16x128xf32>
      %674 = arith.select %670, %672, %673 : vector<16x128xi1>, vector<16x128xf32>
      %c7_i32 = arith.constant 7 : i32
      %675 = vector.broadcast %c7_i32 : i32 to vector<16x1xi32>
      %676 = arith.cmpi eq, %618, %675 : vector<16x1xi32>
      %cst_113 = arith.constant 0.000000e+00 : f32
      %677 = vector.shape_cast %676 : vector<16x1xi1> to vector<16x1xi1>
      %678 = vector.broadcast %677 : vector<16x1xi1> to vector<16x128xi1>
      %679 = vector.shape_cast %13 : vector<1x128xf32> to vector<1x128xf32>
      %680 = vector.broadcast %679 : vector<1x128xf32> to vector<16x128xf32>
      %681 = vector.broadcast %cst_113 : f32 to vector<16x128xf32>
      %682 = arith.select %678, %680, %681 : vector<16x128xi1>, vector<16x128xf32>
      %c8_i32 = arith.constant 8 : i32
      %683 = vector.broadcast %c8_i32 : i32 to vector<16x1xi32>
      %684 = arith.cmpi eq, %618, %683 : vector<16x1xi32>
      %cst_114 = arith.constant 0.000000e+00 : f32
      %685 = vector.shape_cast %684 : vector<16x1xi1> to vector<16x1xi1>
      %686 = vector.broadcast %685 : vector<16x1xi1> to vector<16x128xi1>
      %687 = vector.shape_cast %14 : vector<1x128xf32> to vector<1x128xf32>
      %688 = vector.broadcast %687 : vector<1x128xf32> to vector<16x128xf32>
      %689 = vector.broadcast %cst_114 : f32 to vector<16x128xf32>
      %690 = arith.select %686, %688, %689 : vector<16x128xi1>, vector<16x128xf32>
      %c9_i32 = arith.constant 9 : i32
      %691 = vector.broadcast %c9_i32 : i32 to vector<16x1xi32>
      %692 = arith.cmpi eq, %618, %691 : vector<16x1xi32>
      %cst_115 = arith.constant 0.000000e+00 : f32
      %693 = vector.shape_cast %692 : vector<16x1xi1> to vector<16x1xi1>
      %694 = vector.broadcast %693 : vector<16x1xi1> to vector<16x128xi1>
      %695 = vector.shape_cast %15 : vector<1x128xf32> to vector<1x128xf32>
      %696 = vector.broadcast %695 : vector<1x128xf32> to vector<16x128xf32>
      %697 = vector.broadcast %cst_115 : f32 to vector<16x128xf32>
      %698 = arith.select %694, %696, %697 : vector<16x128xi1>, vector<16x128xf32>
      %c10_i32 = arith.constant 10 : i32
      %699 = vector.broadcast %c10_i32 : i32 to vector<16x1xi32>
      %700 = arith.cmpi eq, %618, %699 : vector<16x1xi32>
      %cst_116 = arith.constant 0.000000e+00 : f32
      %701 = vector.shape_cast %700 : vector<16x1xi1> to vector<16x1xi1>
      %702 = vector.broadcast %701 : vector<16x1xi1> to vector<16x128xi1>
      %703 = vector.shape_cast %16 : vector<1x128xf32> to vector<1x128xf32>
      %704 = vector.broadcast %703 : vector<1x128xf32> to vector<16x128xf32>
      %705 = vector.broadcast %cst_116 : f32 to vector<16x128xf32>
      %706 = arith.select %702, %704, %705 : vector<16x128xi1>, vector<16x128xf32>
      %c11_i32 = arith.constant 11 : i32
      %707 = vector.broadcast %c11_i32 : i32 to vector<16x1xi32>
      %708 = arith.cmpi eq, %618, %707 : vector<16x1xi32>
      %cst_117 = arith.constant 0.000000e+00 : f32
      %709 = vector.shape_cast %708 : vector<16x1xi1> to vector<16x1xi1>
      %710 = vector.broadcast %709 : vector<16x1xi1> to vector<16x128xi1>
      %711 = vector.shape_cast %17 : vector<1x128xf32> to vector<1x128xf32>
      %712 = vector.broadcast %711 : vector<1x128xf32> to vector<16x128xf32>
      %713 = vector.broadcast %cst_117 : f32 to vector<16x128xf32>
      %714 = arith.select %710, %712, %713 : vector<16x128xi1>, vector<16x128xf32>
      %c12_i32 = arith.constant 12 : i32
      %715 = vector.broadcast %c12_i32 : i32 to vector<16x1xi32>
      %716 = arith.cmpi eq, %618, %715 : vector<16x1xi32>
      %cst_118 = arith.constant 0.000000e+00 : f32
      %717 = vector.shape_cast %716 : vector<16x1xi1> to vector<16x1xi1>
      %718 = vector.broadcast %717 : vector<16x1xi1> to vector<16x128xi1>
      %719 = vector.shape_cast %18 : vector<1x128xf32> to vector<1x128xf32>
      %720 = vector.broadcast %719 : vector<1x128xf32> to vector<16x128xf32>
      %721 = vector.broadcast %cst_118 : f32 to vector<16x128xf32>
      %722 = arith.select %718, %720, %721 : vector<16x128xi1>, vector<16x128xf32>
      %c13_i32 = arith.constant 13 : i32
      %723 = vector.broadcast %c13_i32 : i32 to vector<16x1xi32>
      %724 = arith.cmpi eq, %618, %723 : vector<16x1xi32>
      %cst_119 = arith.constant 0.000000e+00 : f32
      %725 = vector.shape_cast %724 : vector<16x1xi1> to vector<16x1xi1>
      %726 = vector.broadcast %725 : vector<16x1xi1> to vector<16x128xi1>
      %727 = vector.shape_cast %19 : vector<1x128xf32> to vector<1x128xf32>
      %728 = vector.broadcast %727 : vector<1x128xf32> to vector<16x128xf32>
      %729 = vector.broadcast %cst_119 : f32 to vector<16x128xf32>
      %730 = arith.select %726, %728, %729 : vector<16x128xi1>, vector<16x128xf32>
      %c14_i32 = arith.constant 14 : i32
      %731 = vector.broadcast %c14_i32 : i32 to vector<16x1xi32>
      %732 = arith.cmpi eq, %618, %731 : vector<16x1xi32>
      %cst_120 = arith.constant 0.000000e+00 : f32
      %733 = vector.shape_cast %732 : vector<16x1xi1> to vector<16x1xi1>
      %734 = vector.broadcast %733 : vector<16x1xi1> to vector<16x128xi1>
      %735 = vector.shape_cast %20 : vector<1x128xf32> to vector<1x128xf32>
      %736 = vector.broadcast %735 : vector<1x128xf32> to vector<16x128xf32>
      %737 = vector.broadcast %cst_120 : f32 to vector<16x128xf32>
      %738 = arith.select %734, %736, %737 : vector<16x128xi1>, vector<16x128xf32>
      %c15_i32 = arith.constant 15 : i32
      %739 = vector.broadcast %c15_i32 : i32 to vector<16x1xi32>
      %740 = arith.cmpi eq, %618, %739 : vector<16x1xi32>
      %cst_121 = arith.constant 0.000000e+00 : f32
      %741 = vector.shape_cast %740 : vector<16x1xi1> to vector<16x1xi1>
      %742 = vector.broadcast %741 : vector<16x1xi1> to vector<16x128xi1>
      %743 = vector.shape_cast %21 : vector<1x128xf32> to vector<1x128xf32>
      %744 = vector.broadcast %743 : vector<1x128xf32> to vector<16x128xf32>
      %745 = vector.broadcast %cst_121 : f32 to vector<16x128xf32>
      %746 = arith.select %742, %744, %745 : vector<16x128xi1>, vector<16x128xf32>
      %747 = arith.addf %626, %634 : vector<16x128xf32>
      %748 = arith.addf %642, %650 : vector<16x128xf32>
      %749 = arith.addf %658, %666 : vector<16x128xf32>
      %750 = arith.addf %674, %682 : vector<16x128xf32>
      %751 = arith.addf %690, %698 : vector<16x128xf32>
      %752 = arith.addf %706, %714 : vector<16x128xf32>
      %753 = arith.addf %722, %730 : vector<16x128xf32>
      %754 = arith.addf %738, %746 : vector<16x128xf32>
      %755 = arith.addf %747, %748 : vector<16x128xf32>
      %756 = arith.addf %749, %750 : vector<16x128xf32>
      %757 = arith.addf %751, %752 : vector<16x128xf32>
      %758 = arith.addf %753, %754 : vector<16x128xf32>
      %759 = arith.addf %755, %756 : vector<16x128xf32>
      %760 = arith.addf %757, %758 : vector<16x128xf32>
      %761 = arith.addf %759, %760 : vector<16x128xf32>
      scf.yield %761, %618 : vector<16x128xf32>, vector<16x1xi32>
    }
    %337 = arith.addf %336#0, %293 : vector<16x128xf32>
    %338 = vector.extract_strided_slice %337 {offsets = [0, 0], sizes = [16, 32], strides = [1, 1]} : vector<16x128xf32> to vector<16x32xf32>
    %339 = vector.extract_strided_slice %328 {offsets = [0, 0], sizes = [16, 32], strides = [1, 1]} : vector<16x128xf32> to vector<16x32xf32>
    %340 = arith.addf %338, %339 : vector<16x32xf32>
    %341 = arith.negf %340 : vector<16x32xf32>
    %342 = math.exp %341 : vector<16x32xf32>
    %cst_54 = arith.constant 1.000000e+00 : f32
    %343 = vector.broadcast %cst_54 : f32 to vector<16x32xf32>
    %344 = arith.addf %343, %342 : vector<16x32xf32>
    %345 = arith.divf %343, %344 : vector<16x32xf32>
    %346 = vector.extract_strided_slice %337 {offsets = [0, 32], sizes = [16, 32], strides = [1, 1]} : vector<16x128xf32> to vector<16x32xf32>
    %347 = vector.extract_strided_slice %328 {offsets = [0, 32], sizes = [16, 32], strides = [1, 1]} : vector<16x128xf32> to vector<16x32xf32>
    %348 = arith.addf %346, %347 : vector<16x32xf32>
    %349 = arith.negf %348 : vector<16x32xf32>
    %350 = math.exp %349 : vector<16x32xf32>
    %cst_55 = arith.constant 1.000000e+00 : f32
    %351 = vector.broadcast %cst_55 : f32 to vector<16x32xf32>
    %352 = arith.addf %351, %350 : vector<16x32xf32>
    %353 = arith.divf %351, %352 : vector<16x32xf32>
    %354 = vector.extract_strided_slice %337 {offsets = [0, 64], sizes = [16, 32], strides = [1, 1]} : vector<16x128xf32> to vector<16x32xf32>
    %355 = vector.extract_strided_slice %328 {offsets = [0, 64], sizes = [16, 32], strides = [1, 1]} : vector<16x128xf32> to vector<16x32xf32>
    %356 = arith.mulf %345, %355 : vector<16x32xf32>
    %357 = arith.addf %354, %356 : vector<16x32xf32>
    %358 = math.tanh %357 : vector<16x32xf32>
    %cst_56 = arith.constant 1.000000e+00 : f32
    %359 = vector.broadcast %cst_56 : f32 to vector<16x32xf32>
    %360 = arith.subf %359, %353 : vector<16x32xf32>
    %361 = arith.mulf %360, %358 : vector<16x32xf32>
    %362 = arith.mulf %353, %325 : vector<16x32xf32>
    %363 = arith.addf %361, %362 : vector<16x32xf32>
    %364 = arith.truncf %363 : vector<16x32xf32> to vector<16x32xbf16>
    %cst_57 = arith.constant dense<0.000000e+00> : vector<16x128xf32>
    %365 = tpu.matmul %364, %3, %cst_57 {dimension_numbers = #tpu.dot_dimension_numbers<[1], [0], [0], [1], [0, 0, 1, 1], [], []>} : vector<16x32xbf16>, vector<32x128xbf16>, vector<16x128xf32> -> vector<16x128xf32>
    %366 = arith.addf %365, %28 : vector<16x128xf32>
    %367 = vector.extract_strided_slice %337 {offsets = [0, 96], sizes = [16, 16], strides = [1, 1]} : vector<16x128xf32> to vector<16x16xf32>
    %368 = vector.extract_strided_slice %366 {offsets = [0, 96], sizes = [16, 16], strides = [1, 1]} : vector<16x128xf32> to vector<16x16xf32>
    %369 = arith.addf %367, %368 : vector<16x16xf32>
    %c1 = arith.constant 1 : index
    %370 = memref.load %arg1[%c1] : memref<8xi32, #tpu.memory_space<smem>>
    %c1_i32_58 = arith.constant 1 : i32
    %371 = arith.cmpi eq, %370, %c1_i32_58 : i32
    %372 = arith.extui %371 : i1 to i32
    %c0_i32_59 = arith.constant 0 : i32
    %373 = arith.cmpi ne, %372, %c0_i32_59 : i32
    %374:2 = scf.if %373 -> (vector<16x128xf32>, vector<16x1xi32>) {
      %611 = vector.extract_strided_slice %49 {offsets = [16, 0], sizes = [16, 128], strides = [1, 1]} : vector<128x128xf32> to vector<16x128xf32>
      %612 = vector.extract_strided_slice %42 {offsets = [16, 0], sizes = [16, 1], strides = [1, 1]} : vector<128x1xi32> to vector<16x1xi32>
      scf.yield %611, %612 : vector<16x128xf32>, vector<16x1xi32>
    } else {
      %cst_102 = arith.constant dense<0xFF800000> : vector<16xf32>
      %611 = vector.multi_reduction <maximumf>, %369, %cst_102 [1] : vector<16x16xf32> to vector<16xf32>
      %612 = vector.shape_cast %611 : vector<16xf32> to vector<16x1xf32>
      %613 = vector.broadcast %612 : vector<16x1xf32> to vector<16x16xf32>
      %614 = arith.cmpf oeq, %369, %613 : vector<16x16xf32>
      %c16_i32 = arith.constant 16 : i32
      %615 = vector.broadcast %c16_i32 : i32 to vector<16x16xi32>
      %616 = arith.select %614, %296, %615 : vector<16x16xi1>, vector<16x16xi32>
      %cst_103 = arith.constant dense<2147483647> : vector<16xi32>
      %617 = vector.multi_reduction <minsi>, %616, %cst_103 [1] : vector<16x16xi32> to vector<16xi32>
      %618 = vector.shape_cast %617 : vector<16xi32> to vector<16x1xi32>
      %c0_i32_104 = arith.constant 0 : i32
      %619 = vector.broadcast %c0_i32_104 : i32 to vector<16x1xi32>
      %620 = arith.cmpi eq, %618, %619 : vector<16x1xi32>
      %cst_105 = arith.constant 0.000000e+00 : f32
      %621 = vector.shape_cast %620 : vector<16x1xi1> to vector<16x1xi1>
      %622 = vector.broadcast %621 : vector<16x1xi1> to vector<16x128xi1>
      %623 = vector.shape_cast %6 : vector<1x128xf32> to vector<1x128xf32>
      %624 = vector.broadcast %623 : vector<1x128xf32> to vector<16x128xf32>
      %625 = vector.broadcast %cst_105 : f32 to vector<16x128xf32>
      %626 = arith.select %622, %624, %625 : vector<16x128xi1>, vector<16x128xf32>
      %c1_i32_106 = arith.constant 1 : i32
      %627 = vector.broadcast %c1_i32_106 : i32 to vector<16x1xi32>
      %628 = arith.cmpi eq, %618, %627 : vector<16x1xi32>
      %cst_107 = arith.constant 0.000000e+00 : f32
      %629 = vector.shape_cast %628 : vector<16x1xi1> to vector<16x1xi1>
      %630 = vector.broadcast %629 : vector<16x1xi1> to vector<16x128xi1>
      %631 = vector.shape_cast %7 : vector<1x128xf32> to vector<1x128xf32>
      %632 = vector.broadcast %631 : vector<1x128xf32> to vector<16x128xf32>
      %633 = vector.broadcast %cst_107 : f32 to vector<16x128xf32>
      %634 = arith.select %630, %632, %633 : vector<16x128xi1>, vector<16x128xf32>
      %c2_i32 = arith.constant 2 : i32
      %635 = vector.broadcast %c2_i32 : i32 to vector<16x1xi32>
      %636 = arith.cmpi eq, %618, %635 : vector<16x1xi32>
      %cst_108 = arith.constant 0.000000e+00 : f32
      %637 = vector.shape_cast %636 : vector<16x1xi1> to vector<16x1xi1>
      %638 = vector.broadcast %637 : vector<16x1xi1> to vector<16x128xi1>
      %639 = vector.shape_cast %8 : vector<1x128xf32> to vector<1x128xf32>
      %640 = vector.broadcast %639 : vector<1x128xf32> to vector<16x128xf32>
      %641 = vector.broadcast %cst_108 : f32 to vector<16x128xf32>
      %642 = arith.select %638, %640, %641 : vector<16x128xi1>, vector<16x128xf32>
      %c3_i32 = arith.constant 3 : i32
      %643 = vector.broadcast %c3_i32 : i32 to vector<16x1xi32>
      %644 = arith.cmpi eq, %618, %643 : vector<16x1xi32>
      %cst_109 = arith.constant 0.000000e+00 : f32
      %645 = vector.shape_cast %644 : vector<16x1xi1> to vector<16x1xi1>
      %646 = vector.broadcast %645 : vector<16x1xi1> to vector<16x128xi1>
      %647 = vector.shape_cast %9 : vector<1x128xf32> to vector<1x128xf32>
      %648 = vector.broadcast %647 : vector<1x128xf32> to vector<16x128xf32>
      %649 = vector.broadcast %cst_109 : f32 to vector<16x128xf32>
      %650 = arith.select %646, %648, %649 : vector<16x128xi1>, vector<16x128xf32>
      %c4_i32 = arith.constant 4 : i32
      %651 = vector.broadcast %c4_i32 : i32 to vector<16x1xi32>
      %652 = arith.cmpi eq, %618, %651 : vector<16x1xi32>
      %cst_110 = arith.constant 0.000000e+00 : f32
      %653 = vector.shape_cast %652 : vector<16x1xi1> to vector<16x1xi1>
      %654 = vector.broadcast %653 : vector<16x1xi1> to vector<16x128xi1>
      %655 = vector.shape_cast %10 : vector<1x128xf32> to vector<1x128xf32>
      %656 = vector.broadcast %655 : vector<1x128xf32> to vector<16x128xf32>
      %657 = vector.broadcast %cst_110 : f32 to vector<16x128xf32>
      %658 = arith.select %654, %656, %657 : vector<16x128xi1>, vector<16x128xf32>
      %c5_i32 = arith.constant 5 : i32
      %659 = vector.broadcast %c5_i32 : i32 to vector<16x1xi32>
      %660 = arith.cmpi eq, %618, %659 : vector<16x1xi32>
      %cst_111 = arith.constant 0.000000e+00 : f32
      %661 = vector.shape_cast %660 : vector<16x1xi1> to vector<16x1xi1>
      %662 = vector.broadcast %661 : vector<16x1xi1> to vector<16x128xi1>
      %663 = vector.shape_cast %11 : vector<1x128xf32> to vector<1x128xf32>
      %664 = vector.broadcast %663 : vector<1x128xf32> to vector<16x128xf32>
      %665 = vector.broadcast %cst_111 : f32 to vector<16x128xf32>
      %666 = arith.select %662, %664, %665 : vector<16x128xi1>, vector<16x128xf32>
      %c6_i32 = arith.constant 6 : i32
      %667 = vector.broadcast %c6_i32 : i32 to vector<16x1xi32>
      %668 = arith.cmpi eq, %618, %667 : vector<16x1xi32>
      %cst_112 = arith.constant 0.000000e+00 : f32
      %669 = vector.shape_cast %668 : vector<16x1xi1> to vector<16x1xi1>
      %670 = vector.broadcast %669 : vector<16x1xi1> to vector<16x128xi1>
      %671 = vector.shape_cast %12 : vector<1x128xf32> to vector<1x128xf32>
      %672 = vector.broadcast %671 : vector<1x128xf32> to vector<16x128xf32>
      %673 = vector.broadcast %cst_112 : f32 to vector<16x128xf32>
      %674 = arith.select %670, %672, %673 : vector<16x128xi1>, vector<16x128xf32>
      %c7_i32 = arith.constant 7 : i32
      %675 = vector.broadcast %c7_i32 : i32 to vector<16x1xi32>
      %676 = arith.cmpi eq, %618, %675 : vector<16x1xi32>
      %cst_113 = arith.constant 0.000000e+00 : f32
      %677 = vector.shape_cast %676 : vector<16x1xi1> to vector<16x1xi1>
      %678 = vector.broadcast %677 : vector<16x1xi1> to vector<16x128xi1>
      %679 = vector.shape_cast %13 : vector<1x128xf32> to vector<1x128xf32>
      %680 = vector.broadcast %679 : vector<1x128xf32> to vector<16x128xf32>
      %681 = vector.broadcast %cst_113 : f32 to vector<16x128xf32>
      %682 = arith.select %678, %680, %681 : vector<16x128xi1>, vector<16x128xf32>
      %c8_i32 = arith.constant 8 : i32
      %683 = vector.broadcast %c8_i32 : i32 to vector<16x1xi32>
      %684 = arith.cmpi eq, %618, %683 : vector<16x1xi32>
      %cst_114 = arith.constant 0.000000e+00 : f32
      %685 = vector.shape_cast %684 : vector<16x1xi1> to vector<16x1xi1>
      %686 = vector.broadcast %685 : vector<16x1xi1> to vector<16x128xi1>
      %687 = vector.shape_cast %14 : vector<1x128xf32> to vector<1x128xf32>
      %688 = vector.broadcast %687 : vector<1x128xf32> to vector<16x128xf32>
      %689 = vector.broadcast %cst_114 : f32 to vector<16x128xf32>
      %690 = arith.select %686, %688, %689 : vector<16x128xi1>, vector<16x128xf32>
      %c9_i32 = arith.constant 9 : i32
      %691 = vector.broadcast %c9_i32 : i32 to vector<16x1xi32>
      %692 = arith.cmpi eq, %618, %691 : vector<16x1xi32>
      %cst_115 = arith.constant 0.000000e+00 : f32
      %693 = vector.shape_cast %692 : vector<16x1xi1> to vector<16x1xi1>
      %694 = vector.broadcast %693 : vector<16x1xi1> to vector<16x128xi1>
      %695 = vector.shape_cast %15 : vector<1x128xf32> to vector<1x128xf32>
      %696 = vector.broadcast %695 : vector<1x128xf32> to vector<16x128xf32>
      %697 = vector.broadcast %cst_115 : f32 to vector<16x128xf32>
      %698 = arith.select %694, %696, %697 : vector<16x128xi1>, vector<16x128xf32>
      %c10_i32 = arith.constant 10 : i32
      %699 = vector.broadcast %c10_i32 : i32 to vector<16x1xi32>
      %700 = arith.cmpi eq, %618, %699 : vector<16x1xi32>
      %cst_116 = arith.constant 0.000000e+00 : f32
      %701 = vector.shape_cast %700 : vector<16x1xi1> to vector<16x1xi1>
      %702 = vector.broadcast %701 : vector<16x1xi1> to vector<16x128xi1>
      %703 = vector.shape_cast %16 : vector<1x128xf32> to vector<1x128xf32>
      %704 = vector.broadcast %703 : vector<1x128xf32> to vector<16x128xf32>
      %705 = vector.broadcast %cst_116 : f32 to vector<16x128xf32>
      %706 = arith.select %702, %704, %705 : vector<16x128xi1>, vector<16x128xf32>
      %c11_i32 = arith.constant 11 : i32
      %707 = vector.broadcast %c11_i32 : i32 to vector<16x1xi32>
      %708 = arith.cmpi eq, %618, %707 : vector<16x1xi32>
      %cst_117 = arith.constant 0.000000e+00 : f32
      %709 = vector.shape_cast %708 : vector<16x1xi1> to vector<16x1xi1>
      %710 = vector.broadcast %709 : vector<16x1xi1> to vector<16x128xi1>
      %711 = vector.shape_cast %17 : vector<1x128xf32> to vector<1x128xf32>
      %712 = vector.broadcast %711 : vector<1x128xf32> to vector<16x128xf32>
      %713 = vector.broadcast %cst_117 : f32 to vector<16x128xf32>
      %714 = arith.select %710, %712, %713 : vector<16x128xi1>, vector<16x128xf32>
      %c12_i32 = arith.constant 12 : i32
      %715 = vector.broadcast %c12_i32 : i32 to vector<16x1xi32>
      %716 = arith.cmpi eq, %618, %715 : vector<16x1xi32>
      %cst_118 = arith.constant 0.000000e+00 : f32
      %717 = vector.shape_cast %716 : vector<16x1xi1> to vector<16x1xi1>
      %718 = vector.broadcast %717 : vector<16x1xi1> to vector<16x128xi1>
      %719 = vector.shape_cast %18 : vector<1x128xf32> to vector<1x128xf32>
      %720 = vector.broadcast %719 : vector<1x128xf32> to vector<16x128xf32>
      %721 = vector.broadcast %cst_118 : f32 to vector<16x128xf32>
      %722 = arith.select %718, %720, %721 : vector<16x128xi1>, vector<16x128xf32>
      %c13_i32 = arith.constant 13 : i32
      %723 = vector.broadcast %c13_i32 : i32 to vector<16x1xi32>
      %724 = arith.cmpi eq, %618, %723 : vector<16x1xi32>
      %cst_119 = arith.constant 0.000000e+00 : f32
      %725 = vector.shape_cast %724 : vector<16x1xi1> to vector<16x1xi1>
      %726 = vector.broadcast %725 : vector<16x1xi1> to vector<16x128xi1>
      %727 = vector.shape_cast %19 : vector<1x128xf32> to vector<1x128xf32>
      %728 = vector.broadcast %727 : vector<1x128xf32> to vector<16x128xf32>
      %729 = vector.broadcast %cst_119 : f32 to vector<16x128xf32>
      %730 = arith.select %726, %728, %729 : vector<16x128xi1>, vector<16x128xf32>
      %c14_i32 = arith.constant 14 : i32
      %731 = vector.broadcast %c14_i32 : i32 to vector<16x1xi32>
      %732 = arith.cmpi eq, %618, %731 : vector<16x1xi32>
      %cst_120 = arith.constant 0.000000e+00 : f32
      %733 = vector.shape_cast %732 : vector<16x1xi1> to vector<16x1xi1>
      %734 = vector.broadcast %733 : vector<16x1xi1> to vector<16x128xi1>
      %735 = vector.shape_cast %20 : vector<1x128xf32> to vector<1x128xf32>
      %736 = vector.broadcast %735 : vector<1x128xf32> to vector<16x128xf32>
      %737 = vector.broadcast %cst_120 : f32 to vector<16x128xf32>
      %738 = arith.select %734, %736, %737 : vector<16x128xi1>, vector<16x128xf32>
      %c15_i32 = arith.constant 15 : i32
      %739 = vector.broadcast %c15_i32 : i32 to vector<16x1xi32>
      %740 = arith.cmpi eq, %618, %739 : vector<16x1xi32>
      %cst_121 = arith.constant 0.000000e+00 : f32
      %741 = vector.shape_cast %740 : vector<16x1xi1> to vector<16x1xi1>
      %742 = vector.broadcast %741 : vector<16x1xi1> to vector<16x128xi1>
      %743 = vector.shape_cast %21 : vector<1x128xf32> to vector<1x128xf32>
      %744 = vector.broadcast %743 : vector<1x128xf32> to vector<16x128xf32>
      %745 = vector.broadcast %cst_121 : f32 to vector<16x128xf32>
      %746 = arith.select %742, %744, %745 : vector<16x128xi1>, vector<16x128xf32>
      %747 = arith.addf %626, %634 : vector<16x128xf32>
      %748 = arith.addf %642, %650 : vector<16x128xf32>
      %749 = arith.addf %658, %666 : vector<16x128xf32>
      %750 = arith.addf %674, %682 : vector<16x128xf32>
      %751 = arith.addf %690, %698 : vector<16x128xf32>
      %752 = arith.addf %706, %714 : vector<16x128xf32>
      %753 = arith.addf %722, %730 : vector<16x128xf32>
      %754 = arith.addf %738, %746 : vector<16x128xf32>
      %755 = arith.addf %747, %748 : vector<16x128xf32>
      %756 = arith.addf %749, %750 : vector<16x128xf32>
      %757 = arith.addf %751, %752 : vector<16x128xf32>
      %758 = arith.addf %753, %754 : vector<16x128xf32>
      %759 = arith.addf %755, %756 : vector<16x128xf32>
      %760 = arith.addf %757, %758 : vector<16x128xf32>
      %761 = arith.addf %759, %760 : vector<16x128xf32>
      scf.yield %761, %618 : vector<16x128xf32>, vector<16x1xi32>
    }
    %375 = arith.addf %374#0, %293 : vector<16x128xf32>
    %376 = vector.extract_strided_slice %375 {offsets = [0, 0], sizes = [16, 32], strides = [1, 1]} : vector<16x128xf32> to vector<16x32xf32>
    %377 = vector.extract_strided_slice %366 {offsets = [0, 0], sizes = [16, 32], strides = [1, 1]} : vector<16x128xf32> to vector<16x32xf32>
    %378 = arith.addf %376, %377 : vector<16x32xf32>
    %379 = arith.negf %378 : vector<16x32xf32>
    %380 = math.exp %379 : vector<16x32xf32>
    %cst_60 = arith.constant 1.000000e+00 : f32
    %381 = vector.broadcast %cst_60 : f32 to vector<16x32xf32>
    %382 = arith.addf %381, %380 : vector<16x32xf32>
    %383 = arith.divf %381, %382 : vector<16x32xf32>
    %384 = vector.extract_strided_slice %375 {offsets = [0, 32], sizes = [16, 32], strides = [1, 1]} : vector<16x128xf32> to vector<16x32xf32>
    %385 = vector.extract_strided_slice %366 {offsets = [0, 32], sizes = [16, 32], strides = [1, 1]} : vector<16x128xf32> to vector<16x32xf32>
    %386 = arith.addf %384, %385 : vector<16x32xf32>
    %387 = arith.negf %386 : vector<16x32xf32>
    %388 = math.exp %387 : vector<16x32xf32>
    %cst_61 = arith.constant 1.000000e+00 : f32
    %389 = vector.broadcast %cst_61 : f32 to vector<16x32xf32>
    %390 = arith.addf %389, %388 : vector<16x32xf32>
    %391 = arith.divf %389, %390 : vector<16x32xf32>
    %392 = vector.extract_strided_slice %375 {offsets = [0, 64], sizes = [16, 32], strides = [1, 1]} : vector<16x128xf32> to vector<16x32xf32>
    %393 = vector.extract_strided_slice %366 {offsets = [0, 64], sizes = [16, 32], strides = [1, 1]} : vector<16x128xf32> to vector<16x32xf32>
    %394 = arith.mulf %383, %393 : vector<16x32xf32>
    %395 = arith.addf %392, %394 : vector<16x32xf32>
    %396 = math.tanh %395 : vector<16x32xf32>
    %cst_62 = arith.constant 1.000000e+00 : f32
    %397 = vector.broadcast %cst_62 : f32 to vector<16x32xf32>
    %398 = arith.subf %397, %391 : vector<16x32xf32>
    %399 = arith.mulf %398, %396 : vector<16x32xf32>
    %400 = arith.mulf %391, %363 : vector<16x32xf32>
    %401 = arith.addf %399, %400 : vector<16x32xf32>
    %402 = arith.truncf %401 : vector<16x32xf32> to vector<16x32xbf16>
    %cst_63 = arith.constant dense<0.000000e+00> : vector<16x128xf32>
    %403 = tpu.matmul %402, %3, %cst_63 {dimension_numbers = #tpu.dot_dimension_numbers<[1], [0], [0], [1], [0, 0, 1, 1], [], []>} : vector<16x32xbf16>, vector<32x128xbf16>, vector<16x128xf32> -> vector<16x128xf32>
    %404 = arith.addf %403, %28 : vector<16x128xf32>
    %405 = vector.extract_strided_slice %375 {offsets = [0, 96], sizes = [16, 16], strides = [1, 1]} : vector<16x128xf32> to vector<16x16xf32>
    %406 = vector.extract_strided_slice %404 {offsets = [0, 96], sizes = [16, 16], strides = [1, 1]} : vector<16x128xf32> to vector<16x16xf32>
    %407 = arith.addf %405, %406 : vector<16x16xf32>
    %c2 = arith.constant 2 : index
    %408 = memref.load %arg1[%c2] : memref<8xi32, #tpu.memory_space<smem>>
    %c1_i32_64 = arith.constant 1 : i32
    %409 = arith.cmpi eq, %408, %c1_i32_64 : i32
    %410 = arith.extui %409 : i1 to i32
    %c0_i32_65 = arith.constant 0 : i32
    %411 = arith.cmpi ne, %410, %c0_i32_65 : i32
    %412:2 = scf.if %411 -> (vector<16x128xf32>, vector<16x1xi32>) {
      %611 = vector.extract_strided_slice %49 {offsets = [32, 0], sizes = [16, 128], strides = [1, 1]} : vector<128x128xf32> to vector<16x128xf32>
      %612 = vector.extract_strided_slice %42 {offsets = [32, 0], sizes = [16, 1], strides = [1, 1]} : vector<128x1xi32> to vector<16x1xi32>
      scf.yield %611, %612 : vector<16x128xf32>, vector<16x1xi32>
    } else {
      %cst_102 = arith.constant dense<0xFF800000> : vector<16xf32>
      %611 = vector.multi_reduction <maximumf>, %407, %cst_102 [1] : vector<16x16xf32> to vector<16xf32>
      %612 = vector.shape_cast %611 : vector<16xf32> to vector<16x1xf32>
      %613 = vector.broadcast %612 : vector<16x1xf32> to vector<16x16xf32>
      %614 = arith.cmpf oeq, %407, %613 : vector<16x16xf32>
      %c16_i32 = arith.constant 16 : i32
      %615 = vector.broadcast %c16_i32 : i32 to vector<16x16xi32>
      %616 = arith.select %614, %296, %615 : vector<16x16xi1>, vector<16x16xi32>
      %cst_103 = arith.constant dense<2147483647> : vector<16xi32>
      %617 = vector.multi_reduction <minsi>, %616, %cst_103 [1] : vector<16x16xi32> to vector<16xi32>
      %618 = vector.shape_cast %617 : vector<16xi32> to vector<16x1xi32>
      %c0_i32_104 = arith.constant 0 : i32
      %619 = vector.broadcast %c0_i32_104 : i32 to vector<16x1xi32>
      %620 = arith.cmpi eq, %618, %619 : vector<16x1xi32>
      %cst_105 = arith.constant 0.000000e+00 : f32
      %621 = vector.shape_cast %620 : vector<16x1xi1> to vector<16x1xi1>
      %622 = vector.broadcast %621 : vector<16x1xi1> to vector<16x128xi1>
      %623 = vector.shape_cast %6 : vector<1x128xf32> to vector<1x128xf32>
      %624 = vector.broadcast %623 : vector<1x128xf32> to vector<16x128xf32>
      %625 = vector.broadcast %cst_105 : f32 to vector<16x128xf32>
      %626 = arith.select %622, %624, %625 : vector<16x128xi1>, vector<16x128xf32>
      %c1_i32_106 = arith.constant 1 : i32
      %627 = vector.broadcast %c1_i32_106 : i32 to vector<16x1xi32>
      %628 = arith.cmpi eq, %618, %627 : vector<16x1xi32>
      %cst_107 = arith.constant 0.000000e+00 : f32
      %629 = vector.shape_cast %628 : vector<16x1xi1> to vector<16x1xi1>
      %630 = vector.broadcast %629 : vector<16x1xi1> to vector<16x128xi1>
      %631 = vector.shape_cast %7 : vector<1x128xf32> to vector<1x128xf32>
      %632 = vector.broadcast %631 : vector<1x128xf32> to vector<16x128xf32>
      %633 = vector.broadcast %cst_107 : f32 to vector<16x128xf32>
      %634 = arith.select %630, %632, %633 : vector<16x128xi1>, vector<16x128xf32>
      %c2_i32 = arith.constant 2 : i32
      %635 = vector.broadcast %c2_i32 : i32 to vector<16x1xi32>
      %636 = arith.cmpi eq, %618, %635 : vector<16x1xi32>
      %cst_108 = arith.constant 0.000000e+00 : f32
      %637 = vector.shape_cast %636 : vector<16x1xi1> to vector<16x1xi1>
      %638 = vector.broadcast %637 : vector<16x1xi1> to vector<16x128xi1>
      %639 = vector.shape_cast %8 : vector<1x128xf32> to vector<1x128xf32>
      %640 = vector.broadcast %639 : vector<1x128xf32> to vector<16x128xf32>
      %641 = vector.broadcast %cst_108 : f32 to vector<16x128xf32>
      %642 = arith.select %638, %640, %641 : vector<16x128xi1>, vector<16x128xf32>
      %c3_i32 = arith.constant 3 : i32
      %643 = vector.broadcast %c3_i32 : i32 to vector<16x1xi32>
      %644 = arith.cmpi eq, %618, %643 : vector<16x1xi32>
      %cst_109 = arith.constant 0.000000e+00 : f32
      %645 = vector.shape_cast %644 : vector<16x1xi1> to vector<16x1xi1>
      %646 = vector.broadcast %645 : vector<16x1xi1> to vector<16x128xi1>
      %647 = vector.shape_cast %9 : vector<1x128xf32> to vector<1x128xf32>
      %648 = vector.broadcast %647 : vector<1x128xf32> to vector<16x128xf32>
      %649 = vector.broadcast %cst_109 : f32 to vector<16x128xf32>
      %650 = arith.select %646, %648, %649 : vector<16x128xi1>, vector<16x128xf32>
      %c4_i32 = arith.constant 4 : i32
      %651 = vector.broadcast %c4_i32 : i32 to vector<16x1xi32>
      %652 = arith.cmpi eq, %618, %651 : vector<16x1xi32>
      %cst_110 = arith.constant 0.000000e+00 : f32
      %653 = vector.shape_cast %652 : vector<16x1xi1> to vector<16x1xi1>
      %654 = vector.broadcast %653 : vector<16x1xi1> to vector<16x128xi1>
      %655 = vector.shape_cast %10 : vector<1x128xf32> to vector<1x128xf32>
      %656 = vector.broadcast %655 : vector<1x128xf32> to vector<16x128xf32>
      %657 = vector.broadcast %cst_110 : f32 to vector<16x128xf32>
      %658 = arith.select %654, %656, %657 : vector<16x128xi1>, vector<16x128xf32>
      %c5_i32 = arith.constant 5 : i32
      %659 = vector.broadcast %c5_i32 : i32 to vector<16x1xi32>
      %660 = arith.cmpi eq, %618, %659 : vector<16x1xi32>
      %cst_111 = arith.constant 0.000000e+00 : f32
      %661 = vector.shape_cast %660 : vector<16x1xi1> to vector<16x1xi1>
      %662 = vector.broadcast %661 : vector<16x1xi1> to vector<16x128xi1>
      %663 = vector.shape_cast %11 : vector<1x128xf32> to vector<1x128xf32>
      %664 = vector.broadcast %663 : vector<1x128xf32> to vector<16x128xf32>
      %665 = vector.broadcast %cst_111 : f32 to vector<16x128xf32>
      %666 = arith.select %662, %664, %665 : vector<16x128xi1>, vector<16x128xf32>
      %c6_i32 = arith.constant 6 : i32
      %667 = vector.broadcast %c6_i32 : i32 to vector<16x1xi32>
      %668 = arith.cmpi eq, %618, %667 : vector<16x1xi32>
      %cst_112 = arith.constant 0.000000e+00 : f32
      %669 = vector.shape_cast %668 : vector<16x1xi1> to vector<16x1xi1>
      %670 = vector.broadcast %669 : vector<16x1xi1> to vector<16x128xi1>
      %671 = vector.shape_cast %12 : vector<1x128xf32> to vector<1x128xf32>
      %672 = vector.broadcast %671 : vector<1x128xf32> to vector<16x128xf32>
      %673 = vector.broadcast %cst_112 : f32 to vector<16x128xf32>
      %674 = arith.select %670, %672, %673 : vector<16x128xi1>, vector<16x128xf32>
      %c7_i32 = arith.constant 7 : i32
      %675 = vector.broadcast %c7_i32 : i32 to vector<16x1xi32>
      %676 = arith.cmpi eq, %618, %675 : vector<16x1xi32>
      %cst_113 = arith.constant 0.000000e+00 : f32
      %677 = vector.shape_cast %676 : vector<16x1xi1> to vector<16x1xi1>
      %678 = vector.broadcast %677 : vector<16x1xi1> to vector<16x128xi1>
      %679 = vector.shape_cast %13 : vector<1x128xf32> to vector<1x128xf32>
      %680 = vector.broadcast %679 : vector<1x128xf32> to vector<16x128xf32>
      %681 = vector.broadcast %cst_113 : f32 to vector<16x128xf32>
      %682 = arith.select %678, %680, %681 : vector<16x128xi1>, vector<16x128xf32>
      %c8_i32 = arith.constant 8 : i32
      %683 = vector.broadcast %c8_i32 : i32 to vector<16x1xi32>
      %684 = arith.cmpi eq, %618, %683 : vector<16x1xi32>
      %cst_114 = arith.constant 0.000000e+00 : f32
      %685 = vector.shape_cast %684 : vector<16x1xi1> to vector<16x1xi1>
      %686 = vector.broadcast %685 : vector<16x1xi1> to vector<16x128xi1>
      %687 = vector.shape_cast %14 : vector<1x128xf32> to vector<1x128xf32>
      %688 = vector.broadcast %687 : vector<1x128xf32> to vector<16x128xf32>
      %689 = vector.broadcast %cst_114 : f32 to vector<16x128xf32>
      %690 = arith.select %686, %688, %689 : vector<16x128xi1>, vector<16x128xf32>
      %c9_i32 = arith.constant 9 : i32
      %691 = vector.broadcast %c9_i32 : i32 to vector<16x1xi32>
      %692 = arith.cmpi eq, %618, %691 : vector<16x1xi32>
      %cst_115 = arith.constant 0.000000e+00 : f32
      %693 = vector.shape_cast %692 : vector<16x1xi1> to vector<16x1xi1>
      %694 = vector.broadcast %693 : vector<16x1xi1> to vector<16x128xi1>
      %695 = vector.shape_cast %15 : vector<1x128xf32> to vector<1x128xf32>
      %696 = vector.broadcast %695 : vector<1x128xf32> to vector<16x128xf32>
      %697 = vector.broadcast %cst_115 : f32 to vector<16x128xf32>
      %698 = arith.select %694, %696, %697 : vector<16x128xi1>, vector<16x128xf32>
      %c10_i32 = arith.constant 10 : i32
      %699 = vector.broadcast %c10_i32 : i32 to vector<16x1xi32>
      %700 = arith.cmpi eq, %618, %699 : vector<16x1xi32>
      %cst_116 = arith.constant 0.000000e+00 : f32
      %701 = vector.shape_cast %700 : vector<16x1xi1> to vector<16x1xi1>
      %702 = vector.broadcast %701 : vector<16x1xi1> to vector<16x128xi1>
      %703 = vector.shape_cast %16 : vector<1x128xf32> to vector<1x128xf32>
      %704 = vector.broadcast %703 : vector<1x128xf32> to vector<16x128xf32>
      %705 = vector.broadcast %cst_116 : f32 to vector<16x128xf32>
      %706 = arith.select %702, %704, %705 : vector<16x128xi1>, vector<16x128xf32>
      %c11_i32 = arith.constant 11 : i32
      %707 = vector.broadcast %c11_i32 : i32 to vector<16x1xi32>
      %708 = arith.cmpi eq, %618, %707 : vector<16x1xi32>
      %cst_117 = arith.constant 0.000000e+00 : f32
      %709 = vector.shape_cast %708 : vector<16x1xi1> to vector<16x1xi1>
      %710 = vector.broadcast %709 : vector<16x1xi1> to vector<16x128xi1>
      %711 = vector.shape_cast %17 : vector<1x128xf32> to vector<1x128xf32>
      %712 = vector.broadcast %711 : vector<1x128xf32> to vector<16x128xf32>
      %713 = vector.broadcast %cst_117 : f32 to vector<16x128xf32>
      %714 = arith.select %710, %712, %713 : vector<16x128xi1>, vector<16x128xf32>
      %c12_i32 = arith.constant 12 : i32
      %715 = vector.broadcast %c12_i32 : i32 to vector<16x1xi32>
      %716 = arith.cmpi eq, %618, %715 : vector<16x1xi32>
      %cst_118 = arith.constant 0.000000e+00 : f32
      %717 = vector.shape_cast %716 : vector<16x1xi1> to vector<16x1xi1>
      %718 = vector.broadcast %717 : vector<16x1xi1> to vector<16x128xi1>
      %719 = vector.shape_cast %18 : vector<1x128xf32> to vector<1x128xf32>
      %720 = vector.broadcast %719 : vector<1x128xf32> to vector<16x128xf32>
      %721 = vector.broadcast %cst_118 : f32 to vector<16x128xf32>
      %722 = arith.select %718, %720, %721 : vector<16x128xi1>, vector<16x128xf32>
      %c13_i32 = arith.constant 13 : i32
      %723 = vector.broadcast %c13_i32 : i32 to vector<16x1xi32>
      %724 = arith.cmpi eq, %618, %723 : vector<16x1xi32>
      %cst_119 = arith.constant 0.000000e+00 : f32
      %725 = vector.shape_cast %724 : vector<16x1xi1> to vector<16x1xi1>
      %726 = vector.broadcast %725 : vector<16x1xi1> to vector<16x128xi1>
      %727 = vector.shape_cast %19 : vector<1x128xf32> to vector<1x128xf32>
      %728 = vector.broadcast %727 : vector<1x128xf32> to vector<16x128xf32>
      %729 = vector.broadcast %cst_119 : f32 to vector<16x128xf32>
      %730 = arith.select %726, %728, %729 : vector<16x128xi1>, vector<16x128xf32>
      %c14_i32 = arith.constant 14 : i32
      %731 = vector.broadcast %c14_i32 : i32 to vector<16x1xi32>
      %732 = arith.cmpi eq, %618, %731 : vector<16x1xi32>
      %cst_120 = arith.constant 0.000000e+00 : f32
      %733 = vector.shape_cast %732 : vector<16x1xi1> to vector<16x1xi1>
      %734 = vector.broadcast %733 : vector<16x1xi1> to vector<16x128xi1>
      %735 = vector.shape_cast %20 : vector<1x128xf32> to vector<1x128xf32>
      %736 = vector.broadcast %735 : vector<1x128xf32> to vector<16x128xf32>
      %737 = vector.broadcast %cst_120 : f32 to vector<16x128xf32>
      %738 = arith.select %734, %736, %737 : vector<16x128xi1>, vector<16x128xf32>
      %c15_i32 = arith.constant 15 : i32
      %739 = vector.broadcast %c15_i32 : i32 to vector<16x1xi32>
      %740 = arith.cmpi eq, %618, %739 : vector<16x1xi32>
      %cst_121 = arith.constant 0.000000e+00 : f32
      %741 = vector.shape_cast %740 : vector<16x1xi1> to vector<16x1xi1>
      %742 = vector.broadcast %741 : vector<16x1xi1> to vector<16x128xi1>
      %743 = vector.shape_cast %21 : vector<1x128xf32> to vector<1x128xf32>
      %744 = vector.broadcast %743 : vector<1x128xf32> to vector<16x128xf32>
      %745 = vector.broadcast %cst_121 : f32 to vector<16x128xf32>
      %746 = arith.select %742, %744, %745 : vector<16x128xi1>, vector<16x128xf32>
      %747 = arith.addf %626, %634 : vector<16x128xf32>
      %748 = arith.addf %642, %650 : vector<16x128xf32>
      %749 = arith.addf %658, %666 : vector<16x128xf32>
      %750 = arith.addf %674, %682 : vector<16x128xf32>
      %751 = arith.addf %690, %698 : vector<16x128xf32>
      %752 = arith.addf %706, %714 : vector<16x128xf32>
      %753 = arith.addf %722, %730 : vector<16x128xf32>
      %754 = arith.addf %738, %746 : vector<16x128xf32>
      %755 = arith.addf %747, %748 : vector<16x128xf32>
      %756 = arith.addf %749, %750 : vector<16x128xf32>
      %757 = arith.addf %751, %752 : vector<16x128xf32>
      %758 = arith.addf %753, %754 : vector<16x128xf32>
      %759 = arith.addf %755, %756 : vector<16x128xf32>
      %760 = arith.addf %757, %758 : vector<16x128xf32>
      %761 = arith.addf %759, %760 : vector<16x128xf32>
      scf.yield %761, %618 : vector<16x128xf32>, vector<16x1xi32>
    }
    %413 = arith.addf %412#0, %293 : vector<16x128xf32>
    %414 = vector.extract_strided_slice %413 {offsets = [0, 0], sizes = [16, 32], strides = [1, 1]} : vector<16x128xf32> to vector<16x32xf32>
    %415 = vector.extract_strided_slice %404 {offsets = [0, 0], sizes = [16, 32], strides = [1, 1]} : vector<16x128xf32> to vector<16x32xf32>
    %416 = arith.addf %414, %415 : vector<16x32xf32>
    %417 = arith.negf %416 : vector<16x32xf32>
    %418 = math.exp %417 : vector<16x32xf32>
    %cst_66 = arith.constant 1.000000e+00 : f32
    %419 = vector.broadcast %cst_66 : f32 to vector<16x32xf32>
    %420 = arith.addf %419, %418 : vector<16x32xf32>
    %421 = arith.divf %419, %420 : vector<16x32xf32>
    %422 = vector.extract_strided_slice %413 {offsets = [0, 32], sizes = [16, 32], strides = [1, 1]} : vector<16x128xf32> to vector<16x32xf32>
    %423 = vector.extract_strided_slice %404 {offsets = [0, 32], sizes = [16, 32], strides = [1, 1]} : vector<16x128xf32> to vector<16x32xf32>
    %424 = arith.addf %422, %423 : vector<16x32xf32>
    %425 = arith.negf %424 : vector<16x32xf32>
    %426 = math.exp %425 : vector<16x32xf32>
    %cst_67 = arith.constant 1.000000e+00 : f32
    %427 = vector.broadcast %cst_67 : f32 to vector<16x32xf32>
    %428 = arith.addf %427, %426 : vector<16x32xf32>
    %429 = arith.divf %427, %428 : vector<16x32xf32>
    %430 = vector.extract_strided_slice %413 {offsets = [0, 64], sizes = [16, 32], strides = [1, 1]} : vector<16x128xf32> to vector<16x32xf32>
    %431 = vector.extract_strided_slice %404 {offsets = [0, 64], sizes = [16, 32], strides = [1, 1]} : vector<16x128xf32> to vector<16x32xf32>
    %432 = arith.mulf %421, %431 : vector<16x32xf32>
    %433 = arith.addf %430, %432 : vector<16x32xf32>
    %434 = math.tanh %433 : vector<16x32xf32>
    %cst_68 = arith.constant 1.000000e+00 : f32
    %435 = vector.broadcast %cst_68 : f32 to vector<16x32xf32>
    %436 = arith.subf %435, %429 : vector<16x32xf32>
    %437 = arith.mulf %436, %434 : vector<16x32xf32>
    %438 = arith.mulf %429, %401 : vector<16x32xf32>
    %439 = arith.addf %437, %438 : vector<16x32xf32>
    %440 = arith.truncf %439 : vector<16x32xf32> to vector<16x32xbf16>
    %cst_69 = arith.constant dense<0.000000e+00> : vector<16x128xf32>
    %441 = tpu.matmul %440, %3, %cst_69 {dimension_numbers = #tpu.dot_dimension_numbers<[1], [0], [0], [1], [0, 0, 1, 1], [], []>} : vector<16x32xbf16>, vector<32x128xbf16>, vector<16x128xf32> -> vector<16x128xf32>
    %442 = arith.addf %441, %28 : vector<16x128xf32>
    %443 = vector.extract_strided_slice %413 {offsets = [0, 96], sizes = [16, 16], strides = [1, 1]} : vector<16x128xf32> to vector<16x16xf32>
    %444 = vector.extract_strided_slice %442 {offsets = [0, 96], sizes = [16, 16], strides = [1, 1]} : vector<16x128xf32> to vector<16x16xf32>
    %445 = arith.addf %443, %444 : vector<16x16xf32>
    %c3 = arith.constant 3 : index
    %446 = memref.load %arg1[%c3] : memref<8xi32, #tpu.memory_space<smem>>
    %c1_i32_70 = arith.constant 1 : i32
    %447 = arith.cmpi eq, %446, %c1_i32_70 : i32
    %448 = arith.extui %447 : i1 to i32
    %c0_i32_71 = arith.constant 0 : i32
    %449 = arith.cmpi ne, %448, %c0_i32_71 : i32
    %450:2 = scf.if %449 -> (vector<16x128xf32>, vector<16x1xi32>) {
      %611 = vector.extract_strided_slice %49 {offsets = [48, 0], sizes = [16, 128], strides = [1, 1]} : vector<128x128xf32> to vector<16x128xf32>
      %612 = vector.extract_strided_slice %42 {offsets = [48, 0], sizes = [16, 1], strides = [1, 1]} : vector<128x1xi32> to vector<16x1xi32>
      scf.yield %611, %612 : vector<16x128xf32>, vector<16x1xi32>
    } else {
      %cst_102 = arith.constant dense<0xFF800000> : vector<16xf32>
      %611 = vector.multi_reduction <maximumf>, %445, %cst_102 [1] : vector<16x16xf32> to vector<16xf32>
      %612 = vector.shape_cast %611 : vector<16xf32> to vector<16x1xf32>
      %613 = vector.broadcast %612 : vector<16x1xf32> to vector<16x16xf32>
      %614 = arith.cmpf oeq, %445, %613 : vector<16x16xf32>
      %c16_i32 = arith.constant 16 : i32
      %615 = vector.broadcast %c16_i32 : i32 to vector<16x16xi32>
      %616 = arith.select %614, %296, %615 : vector<16x16xi1>, vector<16x16xi32>
      %cst_103 = arith.constant dense<2147483647> : vector<16xi32>
      %617 = vector.multi_reduction <minsi>, %616, %cst_103 [1] : vector<16x16xi32> to vector<16xi32>
      %618 = vector.shape_cast %617 : vector<16xi32> to vector<16x1xi32>
      %c0_i32_104 = arith.constant 0 : i32
      %619 = vector.broadcast %c0_i32_104 : i32 to vector<16x1xi32>
      %620 = arith.cmpi eq, %618, %619 : vector<16x1xi32>
      %cst_105 = arith.constant 0.000000e+00 : f32
      %621 = vector.shape_cast %620 : vector<16x1xi1> to vector<16x1xi1>
      %622 = vector.broadcast %621 : vector<16x1xi1> to vector<16x128xi1>
      %623 = vector.shape_cast %6 : vector<1x128xf32> to vector<1x128xf32>
      %624 = vector.broadcast %623 : vector<1x128xf32> to vector<16x128xf32>
      %625 = vector.broadcast %cst_105 : f32 to vector<16x128xf32>
      %626 = arith.select %622, %624, %625 : vector<16x128xi1>, vector<16x128xf32>
      %c1_i32_106 = arith.constant 1 : i32
      %627 = vector.broadcast %c1_i32_106 : i32 to vector<16x1xi32>
      %628 = arith.cmpi eq, %618, %627 : vector<16x1xi32>
      %cst_107 = arith.constant 0.000000e+00 : f32
      %629 = vector.shape_cast %628 : vector<16x1xi1> to vector<16x1xi1>
      %630 = vector.broadcast %629 : vector<16x1xi1> to vector<16x128xi1>
      %631 = vector.shape_cast %7 : vector<1x128xf32> to vector<1x128xf32>
      %632 = vector.broadcast %631 : vector<1x128xf32> to vector<16x128xf32>
      %633 = vector.broadcast %cst_107 : f32 to vector<16x128xf32>
      %634 = arith.select %630, %632, %633 : vector<16x128xi1>, vector<16x128xf32>
      %c2_i32 = arith.constant 2 : i32
      %635 = vector.broadcast %c2_i32 : i32 to vector<16x1xi32>
      %636 = arith.cmpi eq, %618, %635 : vector<16x1xi32>
      %cst_108 = arith.constant 0.000000e+00 : f32
      %637 = vector.shape_cast %636 : vector<16x1xi1> to vector<16x1xi1>
      %638 = vector.broadcast %637 : vector<16x1xi1> to vector<16x128xi1>
      %639 = vector.shape_cast %8 : vector<1x128xf32> to vector<1x128xf32>
      %640 = vector.broadcast %639 : vector<1x128xf32> to vector<16x128xf32>
      %641 = vector.broadcast %cst_108 : f32 to vector<16x128xf32>
      %642 = arith.select %638, %640, %641 : vector<16x128xi1>, vector<16x128xf32>
      %c3_i32 = arith.constant 3 : i32
      %643 = vector.broadcast %c3_i32 : i32 to vector<16x1xi32>
      %644 = arith.cmpi eq, %618, %643 : vector<16x1xi32>
      %cst_109 = arith.constant 0.000000e+00 : f32
      %645 = vector.shape_cast %644 : vector<16x1xi1> to vector<16x1xi1>
      %646 = vector.broadcast %645 : vector<16x1xi1> to vector<16x128xi1>
      %647 = vector.shape_cast %9 : vector<1x128xf32> to vector<1x128xf32>
      %648 = vector.broadcast %647 : vector<1x128xf32> to vector<16x128xf32>
      %649 = vector.broadcast %cst_109 : f32 to vector<16x128xf32>
      %650 = arith.select %646, %648, %649 : vector<16x128xi1>, vector<16x128xf32>
      %c4_i32 = arith.constant 4 : i32
      %651 = vector.broadcast %c4_i32 : i32 to vector<16x1xi32>
      %652 = arith.cmpi eq, %618, %651 : vector<16x1xi32>
      %cst_110 = arith.constant 0.000000e+00 : f32
      %653 = vector.shape_cast %652 : vector<16x1xi1> to vector<16x1xi1>
      %654 = vector.broadcast %653 : vector<16x1xi1> to vector<16x128xi1>
      %655 = vector.shape_cast %10 : vector<1x128xf32> to vector<1x128xf32>
      %656 = vector.broadcast %655 : vector<1x128xf32> to vector<16x128xf32>
      %657 = vector.broadcast %cst_110 : f32 to vector<16x128xf32>
      %658 = arith.select %654, %656, %657 : vector<16x128xi1>, vector<16x128xf32>
      %c5_i32 = arith.constant 5 : i32
      %659 = vector.broadcast %c5_i32 : i32 to vector<16x1xi32>
      %660 = arith.cmpi eq, %618, %659 : vector<16x1xi32>
      %cst_111 = arith.constant 0.000000e+00 : f32
      %661 = vector.shape_cast %660 : vector<16x1xi1> to vector<16x1xi1>
      %662 = vector.broadcast %661 : vector<16x1xi1> to vector<16x128xi1>
      %663 = vector.shape_cast %11 : vector<1x128xf32> to vector<1x128xf32>
      %664 = vector.broadcast %663 : vector<1x128xf32> to vector<16x128xf32>
      %665 = vector.broadcast %cst_111 : f32 to vector<16x128xf32>
      %666 = arith.select %662, %664, %665 : vector<16x128xi1>, vector<16x128xf32>
      %c6_i32 = arith.constant 6 : i32
      %667 = vector.broadcast %c6_i32 : i32 to vector<16x1xi32>
      %668 = arith.cmpi eq, %618, %667 : vector<16x1xi32>
      %cst_112 = arith.constant 0.000000e+00 : f32
      %669 = vector.shape_cast %668 : vector<16x1xi1> to vector<16x1xi1>
      %670 = vector.broadcast %669 : vector<16x1xi1> to vector<16x128xi1>
      %671 = vector.shape_cast %12 : vector<1x128xf32> to vector<1x128xf32>
      %672 = vector.broadcast %671 : vector<1x128xf32> to vector<16x128xf32>
      %673 = vector.broadcast %cst_112 : f32 to vector<16x128xf32>
      %674 = arith.select %670, %672, %673 : vector<16x128xi1>, vector<16x128xf32>
      %c7_i32 = arith.constant 7 : i32
      %675 = vector.broadcast %c7_i32 : i32 to vector<16x1xi32>
      %676 = arith.cmpi eq, %618, %675 : vector<16x1xi32>
      %cst_113 = arith.constant 0.000000e+00 : f32
      %677 = vector.shape_cast %676 : vector<16x1xi1> to vector<16x1xi1>
      %678 = vector.broadcast %677 : vector<16x1xi1> to vector<16x128xi1>
      %679 = vector.shape_cast %13 : vector<1x128xf32> to vector<1x128xf32>
      %680 = vector.broadcast %679 : vector<1x128xf32> to vector<16x128xf32>
      %681 = vector.broadcast %cst_113 : f32 to vector<16x128xf32>
      %682 = arith.select %678, %680, %681 : vector<16x128xi1>, vector<16x128xf32>
      %c8_i32 = arith.constant 8 : i32
      %683 = vector.broadcast %c8_i32 : i32 to vector<16x1xi32>
      %684 = arith.cmpi eq, %618, %683 : vector<16x1xi32>
      %cst_114 = arith.constant 0.000000e+00 : f32
      %685 = vector.shape_cast %684 : vector<16x1xi1> to vector<16x1xi1>
      %686 = vector.broadcast %685 : vector<16x1xi1> to vector<16x128xi1>
      %687 = vector.shape_cast %14 : vector<1x128xf32> to vector<1x128xf32>
      %688 = vector.broadcast %687 : vector<1x128xf32> to vector<16x128xf32>
      %689 = vector.broadcast %cst_114 : f32 to vector<16x128xf32>
      %690 = arith.select %686, %688, %689 : vector<16x128xi1>, vector<16x128xf32>
      %c9_i32 = arith.constant 9 : i32
      %691 = vector.broadcast %c9_i32 : i32 to vector<16x1xi32>
      %692 = arith.cmpi eq, %618, %691 : vector<16x1xi32>
      %cst_115 = arith.constant 0.000000e+00 : f32
      %693 = vector.shape_cast %692 : vector<16x1xi1> to vector<16x1xi1>
      %694 = vector.broadcast %693 : vector<16x1xi1> to vector<16x128xi1>
      %695 = vector.shape_cast %15 : vector<1x128xf32> to vector<1x128xf32>
      %696 = vector.broadcast %695 : vector<1x128xf32> to vector<16x128xf32>
      %697 = vector.broadcast %cst_115 : f32 to vector<16x128xf32>
      %698 = arith.select %694, %696, %697 : vector<16x128xi1>, vector<16x128xf32>
      %c10_i32 = arith.constant 10 : i32
      %699 = vector.broadcast %c10_i32 : i32 to vector<16x1xi32>
      %700 = arith.cmpi eq, %618, %699 : vector<16x1xi32>
      %cst_116 = arith.constant 0.000000e+00 : f32
      %701 = vector.shape_cast %700 : vector<16x1xi1> to vector<16x1xi1>
      %702 = vector.broadcast %701 : vector<16x1xi1> to vector<16x128xi1>
      %703 = vector.shape_cast %16 : vector<1x128xf32> to vector<1x128xf32>
      %704 = vector.broadcast %703 : vector<1x128xf32> to vector<16x128xf32>
      %705 = vector.broadcast %cst_116 : f32 to vector<16x128xf32>
      %706 = arith.select %702, %704, %705 : vector<16x128xi1>, vector<16x128xf32>
      %c11_i32 = arith.constant 11 : i32
      %707 = vector.broadcast %c11_i32 : i32 to vector<16x1xi32>
      %708 = arith.cmpi eq, %618, %707 : vector<16x1xi32>
      %cst_117 = arith.constant 0.000000e+00 : f32
      %709 = vector.shape_cast %708 : vector<16x1xi1> to vector<16x1xi1>
      %710 = vector.broadcast %709 : vector<16x1xi1> to vector<16x128xi1>
      %711 = vector.shape_cast %17 : vector<1x128xf32> to vector<1x128xf32>
      %712 = vector.broadcast %711 : vector<1x128xf32> to vector<16x128xf32>
      %713 = vector.broadcast %cst_117 : f32 to vector<16x128xf32>
      %714 = arith.select %710, %712, %713 : vector<16x128xi1>, vector<16x128xf32>
      %c12_i32 = arith.constant 12 : i32
      %715 = vector.broadcast %c12_i32 : i32 to vector<16x1xi32>
      %716 = arith.cmpi eq, %618, %715 : vector<16x1xi32>
      %cst_118 = arith.constant 0.000000e+00 : f32
      %717 = vector.shape_cast %716 : vector<16x1xi1> to vector<16x1xi1>
      %718 = vector.broadcast %717 : vector<16x1xi1> to vector<16x128xi1>
      %719 = vector.shape_cast %18 : vector<1x128xf32> to vector<1x128xf32>
      %720 = vector.broadcast %719 : vector<1x128xf32> to vector<16x128xf32>
      %721 = vector.broadcast %cst_118 : f32 to vector<16x128xf32>
      %722 = arith.select %718, %720, %721 : vector<16x128xi1>, vector<16x128xf32>
      %c13_i32 = arith.constant 13 : i32
      %723 = vector.broadcast %c13_i32 : i32 to vector<16x1xi32>
      %724 = arith.cmpi eq, %618, %723 : vector<16x1xi32>
      %cst_119 = arith.constant 0.000000e+00 : f32
      %725 = vector.shape_cast %724 : vector<16x1xi1> to vector<16x1xi1>
      %726 = vector.broadcast %725 : vector<16x1xi1> to vector<16x128xi1>
      %727 = vector.shape_cast %19 : vector<1x128xf32> to vector<1x128xf32>
      %728 = vector.broadcast %727 : vector<1x128xf32> to vector<16x128xf32>
      %729 = vector.broadcast %cst_119 : f32 to vector<16x128xf32>
      %730 = arith.select %726, %728, %729 : vector<16x128xi1>, vector<16x128xf32>
      %c14_i32 = arith.constant 14 : i32
      %731 = vector.broadcast %c14_i32 : i32 to vector<16x1xi32>
      %732 = arith.cmpi eq, %618, %731 : vector<16x1xi32>
      %cst_120 = arith.constant 0.000000e+00 : f32
      %733 = vector.shape_cast %732 : vector<16x1xi1> to vector<16x1xi1>
      %734 = vector.broadcast %733 : vector<16x1xi1> to vector<16x128xi1>
      %735 = vector.shape_cast %20 : vector<1x128xf32> to vector<1x128xf32>
      %736 = vector.broadcast %735 : vector<1x128xf32> to vector<16x128xf32>
      %737 = vector.broadcast %cst_120 : f32 to vector<16x128xf32>
      %738 = arith.select %734, %736, %737 : vector<16x128xi1>, vector<16x128xf32>
      %c15_i32 = arith.constant 15 : i32
      %739 = vector.broadcast %c15_i32 : i32 to vector<16x1xi32>
      %740 = arith.cmpi eq, %618, %739 : vector<16x1xi32>
      %cst_121 = arith.constant 0.000000e+00 : f32
      %741 = vector.shape_cast %740 : vector<16x1xi1> to vector<16x1xi1>
      %742 = vector.broadcast %741 : vector<16x1xi1> to vector<16x128xi1>
      %743 = vector.shape_cast %21 : vector<1x128xf32> to vector<1x128xf32>
      %744 = vector.broadcast %743 : vector<1x128xf32> to vector<16x128xf32>
      %745 = vector.broadcast %cst_121 : f32 to vector<16x128xf32>
      %746 = arith.select %742, %744, %745 : vector<16x128xi1>, vector<16x128xf32>
      %747 = arith.addf %626, %634 : vector<16x128xf32>
      %748 = arith.addf %642, %650 : vector<16x128xf32>
      %749 = arith.addf %658, %666 : vector<16x128xf32>
      %750 = arith.addf %674, %682 : vector<16x128xf32>
      %751 = arith.addf %690, %698 : vector<16x128xf32>
      %752 = arith.addf %706, %714 : vector<16x128xf32>
      %753 = arith.addf %722, %730 : vector<16x128xf32>
      %754 = arith.addf %738, %746 : vector<16x128xf32>
      %755 = arith.addf %747, %748 : vector<16x128xf32>
      %756 = arith.addf %749, %750 : vector<16x128xf32>
      %757 = arith.addf %751, %752 : vector<16x128xf32>
      %758 = arith.addf %753, %754 : vector<16x128xf32>
      %759 = arith.addf %755, %756 : vector<16x128xf32>
      %760 = arith.addf %757, %758 : vector<16x128xf32>
      %761 = arith.addf %759, %760 : vector<16x128xf32>
      scf.yield %761, %618 : vector<16x128xf32>, vector<16x1xi32>
    }
    %451 = arith.addf %450#0, %293 : vector<16x128xf32>
    %452 = vector.extract_strided_slice %451 {offsets = [0, 0], sizes = [16, 32], strides = [1, 1]} : vector<16x128xf32> to vector<16x32xf32>
    %453 = vector.extract_strided_slice %442 {offsets = [0, 0], sizes = [16, 32], strides = [1, 1]} : vector<16x128xf32> to vector<16x32xf32>
    %454 = arith.addf %452, %453 : vector<16x32xf32>
    %455 = arith.negf %454 : vector<16x32xf32>
    %456 = math.exp %455 : vector<16x32xf32>
    %cst_72 = arith.constant 1.000000e+00 : f32
    %457 = vector.broadcast %cst_72 : f32 to vector<16x32xf32>
    %458 = arith.addf %457, %456 : vector<16x32xf32>
    %459 = arith.divf %457, %458 : vector<16x32xf32>
    %460 = vector.extract_strided_slice %451 {offsets = [0, 32], sizes = [16, 32], strides = [1, 1]} : vector<16x128xf32> to vector<16x32xf32>
    %461 = vector.extract_strided_slice %442 {offsets = [0, 32], sizes = [16, 32], strides = [1, 1]} : vector<16x128xf32> to vector<16x32xf32>
    %462 = arith.addf %460, %461 : vector<16x32xf32>
    %463 = arith.negf %462 : vector<16x32xf32>
    %464 = math.exp %463 : vector<16x32xf32>
    %cst_73 = arith.constant 1.000000e+00 : f32
    %465 = vector.broadcast %cst_73 : f32 to vector<16x32xf32>
    %466 = arith.addf %465, %464 : vector<16x32xf32>
    %467 = arith.divf %465, %466 : vector<16x32xf32>
    %468 = vector.extract_strided_slice %451 {offsets = [0, 64], sizes = [16, 32], strides = [1, 1]} : vector<16x128xf32> to vector<16x32xf32>
    %469 = vector.extract_strided_slice %442 {offsets = [0, 64], sizes = [16, 32], strides = [1, 1]} : vector<16x128xf32> to vector<16x32xf32>
    %470 = arith.mulf %459, %469 : vector<16x32xf32>
    %471 = arith.addf %468, %470 : vector<16x32xf32>
    %472 = math.tanh %471 : vector<16x32xf32>
    %cst_74 = arith.constant 1.000000e+00 : f32
    %473 = vector.broadcast %cst_74 : f32 to vector<16x32xf32>
    %474 = arith.subf %473, %467 : vector<16x32xf32>
    %475 = arith.mulf %474, %472 : vector<16x32xf32>
    %476 = arith.mulf %467, %439 : vector<16x32xf32>
    %477 = arith.addf %475, %476 : vector<16x32xf32>
    %478 = arith.truncf %477 : vector<16x32xf32> to vector<16x32xbf16>
    %cst_75 = arith.constant dense<0.000000e+00> : vector<16x128xf32>
    %479 = tpu.matmul %478, %3, %cst_75 {dimension_numbers = #tpu.dot_dimension_numbers<[1], [0], [0], [1], [0, 0, 1, 1], [], []>} : vector<16x32xbf16>, vector<32x128xbf16>, vector<16x128xf32> -> vector<16x128xf32>
    %480 = arith.addf %479, %28 : vector<16x128xf32>
    %481 = vector.extract_strided_slice %451 {offsets = [0, 96], sizes = [16, 16], strides = [1, 1]} : vector<16x128xf32> to vector<16x16xf32>
    %482 = vector.extract_strided_slice %480 {offsets = [0, 96], sizes = [16, 16], strides = [1, 1]} : vector<16x128xf32> to vector<16x16xf32>
    %483 = arith.addf %481, %482 : vector<16x16xf32>
    %c4 = arith.constant 4 : index
    %484 = memref.load %arg1[%c4] : memref<8xi32, #tpu.memory_space<smem>>
    %c1_i32_76 = arith.constant 1 : i32
    %485 = arith.cmpi eq, %484, %c1_i32_76 : i32
    %486 = arith.extui %485 : i1 to i32
    %c0_i32_77 = arith.constant 0 : i32
    %487 = arith.cmpi ne, %486, %c0_i32_77 : i32
    %488:2 = scf.if %487 -> (vector<16x128xf32>, vector<16x1xi32>) {
      %611 = vector.extract_strided_slice %49 {offsets = [64, 0], sizes = [16, 128], strides = [1, 1]} : vector<128x128xf32> to vector<16x128xf32>
      %612 = vector.extract_strided_slice %42 {offsets = [64, 0], sizes = [16, 1], strides = [1, 1]} : vector<128x1xi32> to vector<16x1xi32>
      scf.yield %611, %612 : vector<16x128xf32>, vector<16x1xi32>
    } else {
      %cst_102 = arith.constant dense<0xFF800000> : vector<16xf32>
      %611 = vector.multi_reduction <maximumf>, %483, %cst_102 [1] : vector<16x16xf32> to vector<16xf32>
      %612 = vector.shape_cast %611 : vector<16xf32> to vector<16x1xf32>
      %613 = vector.broadcast %612 : vector<16x1xf32> to vector<16x16xf32>
      %614 = arith.cmpf oeq, %483, %613 : vector<16x16xf32>
      %c16_i32 = arith.constant 16 : i32
      %615 = vector.broadcast %c16_i32 : i32 to vector<16x16xi32>
      %616 = arith.select %614, %296, %615 : vector<16x16xi1>, vector<16x16xi32>
      %cst_103 = arith.constant dense<2147483647> : vector<16xi32>
      %617 = vector.multi_reduction <minsi>, %616, %cst_103 [1] : vector<16x16xi32> to vector<16xi32>
      %618 = vector.shape_cast %617 : vector<16xi32> to vector<16x1xi32>
      %c0_i32_104 = arith.constant 0 : i32
      %619 = vector.broadcast %c0_i32_104 : i32 to vector<16x1xi32>
      %620 = arith.cmpi eq, %618, %619 : vector<16x1xi32>
      %cst_105 = arith.constant 0.000000e+00 : f32
      %621 = vector.shape_cast %620 : vector<16x1xi1> to vector<16x1xi1>
      %622 = vector.broadcast %621 : vector<16x1xi1> to vector<16x128xi1>
      %623 = vector.shape_cast %6 : vector<1x128xf32> to vector<1x128xf32>
      %624 = vector.broadcast %623 : vector<1x128xf32> to vector<16x128xf32>
      %625 = vector.broadcast %cst_105 : f32 to vector<16x128xf32>
      %626 = arith.select %622, %624, %625 : vector<16x128xi1>, vector<16x128xf32>
      %c1_i32_106 = arith.constant 1 : i32
      %627 = vector.broadcast %c1_i32_106 : i32 to vector<16x1xi32>
      %628 = arith.cmpi eq, %618, %627 : vector<16x1xi32>
      %cst_107 = arith.constant 0.000000e+00 : f32
      %629 = vector.shape_cast %628 : vector<16x1xi1> to vector<16x1xi1>
      %630 = vector.broadcast %629 : vector<16x1xi1> to vector<16x128xi1>
      %631 = vector.shape_cast %7 : vector<1x128xf32> to vector<1x128xf32>
      %632 = vector.broadcast %631 : vector<1x128xf32> to vector<16x128xf32>
      %633 = vector.broadcast %cst_107 : f32 to vector<16x128xf32>
      %634 = arith.select %630, %632, %633 : vector<16x128xi1>, vector<16x128xf32>
      %c2_i32 = arith.constant 2 : i32
      %635 = vector.broadcast %c2_i32 : i32 to vector<16x1xi32>
      %636 = arith.cmpi eq, %618, %635 : vector<16x1xi32>
      %cst_108 = arith.constant 0.000000e+00 : f32
      %637 = vector.shape_cast %636 : vector<16x1xi1> to vector<16x1xi1>
      %638 = vector.broadcast %637 : vector<16x1xi1> to vector<16x128xi1>
      %639 = vector.shape_cast %8 : vector<1x128xf32> to vector<1x128xf32>
      %640 = vector.broadcast %639 : vector<1x128xf32> to vector<16x128xf32>
      %641 = vector.broadcast %cst_108 : f32 to vector<16x128xf32>
      %642 = arith.select %638, %640, %641 : vector<16x128xi1>, vector<16x128xf32>
      %c3_i32 = arith.constant 3 : i32
      %643 = vector.broadcast %c3_i32 : i32 to vector<16x1xi32>
      %644 = arith.cmpi eq, %618, %643 : vector<16x1xi32>
      %cst_109 = arith.constant 0.000000e+00 : f32
      %645 = vector.shape_cast %644 : vector<16x1xi1> to vector<16x1xi1>
      %646 = vector.broadcast %645 : vector<16x1xi1> to vector<16x128xi1>
      %647 = vector.shape_cast %9 : vector<1x128xf32> to vector<1x128xf32>
      %648 = vector.broadcast %647 : vector<1x128xf32> to vector<16x128xf32>
      %649 = vector.broadcast %cst_109 : f32 to vector<16x128xf32>
      %650 = arith.select %646, %648, %649 : vector<16x128xi1>, vector<16x128xf32>
      %c4_i32 = arith.constant 4 : i32
      %651 = vector.broadcast %c4_i32 : i32 to vector<16x1xi32>
      %652 = arith.cmpi eq, %618, %651 : vector<16x1xi32>
      %cst_110 = arith.constant 0.000000e+00 : f32
      %653 = vector.shape_cast %652 : vector<16x1xi1> to vector<16x1xi1>
      %654 = vector.broadcast %653 : vector<16x1xi1> to vector<16x128xi1>
      %655 = vector.shape_cast %10 : vector<1x128xf32> to vector<1x128xf32>
      %656 = vector.broadcast %655 : vector<1x128xf32> to vector<16x128xf32>
      %657 = vector.broadcast %cst_110 : f32 to vector<16x128xf32>
      %658 = arith.select %654, %656, %657 : vector<16x128xi1>, vector<16x128xf32>
      %c5_i32 = arith.constant 5 : i32
      %659 = vector.broadcast %c5_i32 : i32 to vector<16x1xi32>
      %660 = arith.cmpi eq, %618, %659 : vector<16x1xi32>
      %cst_111 = arith.constant 0.000000e+00 : f32
      %661 = vector.shape_cast %660 : vector<16x1xi1> to vector<16x1xi1>
      %662 = vector.broadcast %661 : vector<16x1xi1> to vector<16x128xi1>
      %663 = vector.shape_cast %11 : vector<1x128xf32> to vector<1x128xf32>
      %664 = vector.broadcast %663 : vector<1x128xf32> to vector<16x128xf32>
      %665 = vector.broadcast %cst_111 : f32 to vector<16x128xf32>
      %666 = arith.select %662, %664, %665 : vector<16x128xi1>, vector<16x128xf32>
      %c6_i32 = arith.constant 6 : i32
      %667 = vector.broadcast %c6_i32 : i32 to vector<16x1xi32>
      %668 = arith.cmpi eq, %618, %667 : vector<16x1xi32>
      %cst_112 = arith.constant 0.000000e+00 : f32
      %669 = vector.shape_cast %668 : vector<16x1xi1> to vector<16x1xi1>
      %670 = vector.broadcast %669 : vector<16x1xi1> to vector<16x128xi1>
      %671 = vector.shape_cast %12 : vector<1x128xf32> to vector<1x128xf32>
      %672 = vector.broadcast %671 : vector<1x128xf32> to vector<16x128xf32>
      %673 = vector.broadcast %cst_112 : f32 to vector<16x128xf32>
      %674 = arith.select %670, %672, %673 : vector<16x128xi1>, vector<16x128xf32>
      %c7_i32 = arith.constant 7 : i32
      %675 = vector.broadcast %c7_i32 : i32 to vector<16x1xi32>
      %676 = arith.cmpi eq, %618, %675 : vector<16x1xi32>
      %cst_113 = arith.constant 0.000000e+00 : f32
      %677 = vector.shape_cast %676 : vector<16x1xi1> to vector<16x1xi1>
      %678 = vector.broadcast %677 : vector<16x1xi1> to vector<16x128xi1>
      %679 = vector.shape_cast %13 : vector<1x128xf32> to vector<1x128xf32>
      %680 = vector.broadcast %679 : vector<1x128xf32> to vector<16x128xf32>
      %681 = vector.broadcast %cst_113 : f32 to vector<16x128xf32>
      %682 = arith.select %678, %680, %681 : vector<16x128xi1>, vector<16x128xf32>
      %c8_i32 = arith.constant 8 : i32
      %683 = vector.broadcast %c8_i32 : i32 to vector<16x1xi32>
      %684 = arith.cmpi eq, %618, %683 : vector<16x1xi32>
      %cst_114 = arith.constant 0.000000e+00 : f32
      %685 = vector.shape_cast %684 : vector<16x1xi1> to vector<16x1xi1>
      %686 = vector.broadcast %685 : vector<16x1xi1> to vector<16x128xi1>
      %687 = vector.shape_cast %14 : vector<1x128xf32> to vector<1x128xf32>
      %688 = vector.broadcast %687 : vector<1x128xf32> to vector<16x128xf32>
      %689 = vector.broadcast %cst_114 : f32 to vector<16x128xf32>
      %690 = arith.select %686, %688, %689 : vector<16x128xi1>, vector<16x128xf32>
      %c9_i32 = arith.constant 9 : i32
      %691 = vector.broadcast %c9_i32 : i32 to vector<16x1xi32>
      %692 = arith.cmpi eq, %618, %691 : vector<16x1xi32>
      %cst_115 = arith.constant 0.000000e+00 : f32
      %693 = vector.shape_cast %692 : vector<16x1xi1> to vector<16x1xi1>
      %694 = vector.broadcast %693 : vector<16x1xi1> to vector<16x128xi1>
      %695 = vector.shape_cast %15 : vector<1x128xf32> to vector<1x128xf32>
      %696 = vector.broadcast %695 : vector<1x128xf32> to vector<16x128xf32>
      %697 = vector.broadcast %cst_115 : f32 to vector<16x128xf32>
      %698 = arith.select %694, %696, %697 : vector<16x128xi1>, vector<16x128xf32>
      %c10_i32 = arith.constant 10 : i32
      %699 = vector.broadcast %c10_i32 : i32 to vector<16x1xi32>
      %700 = arith.cmpi eq, %618, %699 : vector<16x1xi32>
      %cst_116 = arith.constant 0.000000e+00 : f32
      %701 = vector.shape_cast %700 : vector<16x1xi1> to vector<16x1xi1>
      %702 = vector.broadcast %701 : vector<16x1xi1> to vector<16x128xi1>
      %703 = vector.shape_cast %16 : vector<1x128xf32> to vector<1x128xf32>
      %704 = vector.broadcast %703 : vector<1x128xf32> to vector<16x128xf32>
      %705 = vector.broadcast %cst_116 : f32 to vector<16x128xf32>
      %706 = arith.select %702, %704, %705 : vector<16x128xi1>, vector<16x128xf32>
      %c11_i32 = arith.constant 11 : i32
      %707 = vector.broadcast %c11_i32 : i32 to vector<16x1xi32>
      %708 = arith.cmpi eq, %618, %707 : vector<16x1xi32>
      %cst_117 = arith.constant 0.000000e+00 : f32
      %709 = vector.shape_cast %708 : vector<16x1xi1> to vector<16x1xi1>
      %710 = vector.broadcast %709 : vector<16x1xi1> to vector<16x128xi1>
      %711 = vector.shape_cast %17 : vector<1x128xf32> to vector<1x128xf32>
      %712 = vector.broadcast %711 : vector<1x128xf32> to vector<16x128xf32>
      %713 = vector.broadcast %cst_117 : f32 to vector<16x128xf32>
      %714 = arith.select %710, %712, %713 : vector<16x128xi1>, vector<16x128xf32>
      %c12_i32 = arith.constant 12 : i32
      %715 = vector.broadcast %c12_i32 : i32 to vector<16x1xi32>
      %716 = arith.cmpi eq, %618, %715 : vector<16x1xi32>
      %cst_118 = arith.constant 0.000000e+00 : f32
      %717 = vector.shape_cast %716 : vector<16x1xi1> to vector<16x1xi1>
      %718 = vector.broadcast %717 : vector<16x1xi1> to vector<16x128xi1>
      %719 = vector.shape_cast %18 : vector<1x128xf32> to vector<1x128xf32>
      %720 = vector.broadcast %719 : vector<1x128xf32> to vector<16x128xf32>
      %721 = vector.broadcast %cst_118 : f32 to vector<16x128xf32>
      %722 = arith.select %718, %720, %721 : vector<16x128xi1>, vector<16x128xf32>
      %c13_i32 = arith.constant 13 : i32
      %723 = vector.broadcast %c13_i32 : i32 to vector<16x1xi32>
      %724 = arith.cmpi eq, %618, %723 : vector<16x1xi32>
      %cst_119 = arith.constant 0.000000e+00 : f32
      %725 = vector.shape_cast %724 : vector<16x1xi1> to vector<16x1xi1>
      %726 = vector.broadcast %725 : vector<16x1xi1> to vector<16x128xi1>
      %727 = vector.shape_cast %19 : vector<1x128xf32> to vector<1x128xf32>
      %728 = vector.broadcast %727 : vector<1x128xf32> to vector<16x128xf32>
      %729 = vector.broadcast %cst_119 : f32 to vector<16x128xf32>
      %730 = arith.select %726, %728, %729 : vector<16x128xi1>, vector<16x128xf32>
      %c14_i32 = arith.constant 14 : i32
      %731 = vector.broadcast %c14_i32 : i32 to vector<16x1xi32>
      %732 = arith.cmpi eq, %618, %731 : vector<16x1xi32>
      %cst_120 = arith.constant 0.000000e+00 : f32
      %733 = vector.shape_cast %732 : vector<16x1xi1> to vector<16x1xi1>
      %734 = vector.broadcast %733 : vector<16x1xi1> to vector<16x128xi1>
      %735 = vector.shape_cast %20 : vector<1x128xf32> to vector<1x128xf32>
      %736 = vector.broadcast %735 : vector<1x128xf32> to vector<16x128xf32>
      %737 = vector.broadcast %cst_120 : f32 to vector<16x128xf32>
      %738 = arith.select %734, %736, %737 : vector<16x128xi1>, vector<16x128xf32>
      %c15_i32 = arith.constant 15 : i32
      %739 = vector.broadcast %c15_i32 : i32 to vector<16x1xi32>
      %740 = arith.cmpi eq, %618, %739 : vector<16x1xi32>
      %cst_121 = arith.constant 0.000000e+00 : f32
      %741 = vector.shape_cast %740 : vector<16x1xi1> to vector<16x1xi1>
      %742 = vector.broadcast %741 : vector<16x1xi1> to vector<16x128xi1>
      %743 = vector.shape_cast %21 : vector<1x128xf32> to vector<1x128xf32>
      %744 = vector.broadcast %743 : vector<1x128xf32> to vector<16x128xf32>
      %745 = vector.broadcast %cst_121 : f32 to vector<16x128xf32>
      %746 = arith.select %742, %744, %745 : vector<16x128xi1>, vector<16x128xf32>
      %747 = arith.addf %626, %634 : vector<16x128xf32>
      %748 = arith.addf %642, %650 : vector<16x128xf32>
      %749 = arith.addf %658, %666 : vector<16x128xf32>
      %750 = arith.addf %674, %682 : vector<16x128xf32>
      %751 = arith.addf %690, %698 : vector<16x128xf32>
      %752 = arith.addf %706, %714 : vector<16x128xf32>
      %753 = arith.addf %722, %730 : vector<16x128xf32>
      %754 = arith.addf %738, %746 : vector<16x128xf32>
      %755 = arith.addf %747, %748 : vector<16x128xf32>
      %756 = arith.addf %749, %750 : vector<16x128xf32>
      %757 = arith.addf %751, %752 : vector<16x128xf32>
      %758 = arith.addf %753, %754 : vector<16x128xf32>
      %759 = arith.addf %755, %756 : vector<16x128xf32>
      %760 = arith.addf %757, %758 : vector<16x128xf32>
      %761 = arith.addf %759, %760 : vector<16x128xf32>
      scf.yield %761, %618 : vector<16x128xf32>, vector<16x1xi32>
    }
    %489 = arith.addf %488#0, %293 : vector<16x128xf32>
    %490 = vector.extract_strided_slice %489 {offsets = [0, 0], sizes = [16, 32], strides = [1, 1]} : vector<16x128xf32> to vector<16x32xf32>
    %491 = vector.extract_strided_slice %480 {offsets = [0, 0], sizes = [16, 32], strides = [1, 1]} : vector<16x128xf32> to vector<16x32xf32>
    %492 = arith.addf %490, %491 : vector<16x32xf32>
    %493 = arith.negf %492 : vector<16x32xf32>
    %494 = math.exp %493 : vector<16x32xf32>
    %cst_78 = arith.constant 1.000000e+00 : f32
    %495 = vector.broadcast %cst_78 : f32 to vector<16x32xf32>
    %496 = arith.addf %495, %494 : vector<16x32xf32>
    %497 = arith.divf %495, %496 : vector<16x32xf32>
    %498 = vector.extract_strided_slice %489 {offsets = [0, 32], sizes = [16, 32], strides = [1, 1]} : vector<16x128xf32> to vector<16x32xf32>
    %499 = vector.extract_strided_slice %480 {offsets = [0, 32], sizes = [16, 32], strides = [1, 1]} : vector<16x128xf32> to vector<16x32xf32>
    %500 = arith.addf %498, %499 : vector<16x32xf32>
    %501 = arith.negf %500 : vector<16x32xf32>
    %502 = math.exp %501 : vector<16x32xf32>
    %cst_79 = arith.constant 1.000000e+00 : f32
    %503 = vector.broadcast %cst_79 : f32 to vector<16x32xf32>
    %504 = arith.addf %503, %502 : vector<16x32xf32>
    %505 = arith.divf %503, %504 : vector<16x32xf32>
    %506 = vector.extract_strided_slice %489 {offsets = [0, 64], sizes = [16, 32], strides = [1, 1]} : vector<16x128xf32> to vector<16x32xf32>
    %507 = vector.extract_strided_slice %480 {offsets = [0, 64], sizes = [16, 32], strides = [1, 1]} : vector<16x128xf32> to vector<16x32xf32>
    %508 = arith.mulf %497, %507 : vector<16x32xf32>
    %509 = arith.addf %506, %508 : vector<16x32xf32>
    %510 = math.tanh %509 : vector<16x32xf32>
    %cst_80 = arith.constant 1.000000e+00 : f32
    %511 = vector.broadcast %cst_80 : f32 to vector<16x32xf32>
    %512 = arith.subf %511, %505 : vector<16x32xf32>
    %513 = arith.mulf %512, %510 : vector<16x32xf32>
    %514 = arith.mulf %505, %477 : vector<16x32xf32>
    %515 = arith.addf %513, %514 : vector<16x32xf32>
    %516 = arith.truncf %515 : vector<16x32xf32> to vector<16x32xbf16>
    %cst_81 = arith.constant dense<0.000000e+00> : vector<16x128xf32>
    %517 = tpu.matmul %516, %3, %cst_81 {dimension_numbers = #tpu.dot_dimension_numbers<[1], [0], [0], [1], [0, 0, 1, 1], [], []>} : vector<16x32xbf16>, vector<32x128xbf16>, vector<16x128xf32> -> vector<16x128xf32>
    %518 = arith.addf %517, %28 : vector<16x128xf32>
    %519 = vector.extract_strided_slice %489 {offsets = [0, 96], sizes = [16, 16], strides = [1, 1]} : vector<16x128xf32> to vector<16x16xf32>
    %520 = vector.extract_strided_slice %518 {offsets = [0, 96], sizes = [16, 16], strides = [1, 1]} : vector<16x128xf32> to vector<16x16xf32>
    %521 = arith.addf %519, %520 : vector<16x16xf32>
    %c5 = arith.constant 5 : index
    %522 = memref.load %arg1[%c5] : memref<8xi32, #tpu.memory_space<smem>>
    %c1_i32_82 = arith.constant 1 : i32
    %523 = arith.cmpi eq, %522, %c1_i32_82 : i32
    %524 = arith.extui %523 : i1 to i32
    %c0_i32_83 = arith.constant 0 : i32
    %525 = arith.cmpi ne, %524, %c0_i32_83 : i32
    %526:2 = scf.if %525 -> (vector<16x128xf32>, vector<16x1xi32>) {
      %611 = vector.extract_strided_slice %49 {offsets = [80, 0], sizes = [16, 128], strides = [1, 1]} : vector<128x128xf32> to vector<16x128xf32>
      %612 = vector.extract_strided_slice %42 {offsets = [80, 0], sizes = [16, 1], strides = [1, 1]} : vector<128x1xi32> to vector<16x1xi32>
      scf.yield %611, %612 : vector<16x128xf32>, vector<16x1xi32>
    } else {
      %cst_102 = arith.constant dense<0xFF800000> : vector<16xf32>
      %611 = vector.multi_reduction <maximumf>, %521, %cst_102 [1] : vector<16x16xf32> to vector<16xf32>
      %612 = vector.shape_cast %611 : vector<16xf32> to vector<16x1xf32>
      %613 = vector.broadcast %612 : vector<16x1xf32> to vector<16x16xf32>
      %614 = arith.cmpf oeq, %521, %613 : vector<16x16xf32>
      %c16_i32 = arith.constant 16 : i32
      %615 = vector.broadcast %c16_i32 : i32 to vector<16x16xi32>
      %616 = arith.select %614, %296, %615 : vector<16x16xi1>, vector<16x16xi32>
      %cst_103 = arith.constant dense<2147483647> : vector<16xi32>
      %617 = vector.multi_reduction <minsi>, %616, %cst_103 [1] : vector<16x16xi32> to vector<16xi32>
      %618 = vector.shape_cast %617 : vector<16xi32> to vector<16x1xi32>
      %c0_i32_104 = arith.constant 0 : i32
      %619 = vector.broadcast %c0_i32_104 : i32 to vector<16x1xi32>
      %620 = arith.cmpi eq, %618, %619 : vector<16x1xi32>
      %cst_105 = arith.constant 0.000000e+00 : f32
      %621 = vector.shape_cast %620 : vector<16x1xi1> to vector<16x1xi1>
      %622 = vector.broadcast %621 : vector<16x1xi1> to vector<16x128xi1>
      %623 = vector.shape_cast %6 : vector<1x128xf32> to vector<1x128xf32>
      %624 = vector.broadcast %623 : vector<1x128xf32> to vector<16x128xf32>
      %625 = vector.broadcast %cst_105 : f32 to vector<16x128xf32>
      %626 = arith.select %622, %624, %625 : vector<16x128xi1>, vector<16x128xf32>
      %c1_i32_106 = arith.constant 1 : i32
      %627 = vector.broadcast %c1_i32_106 : i32 to vector<16x1xi32>
      %628 = arith.cmpi eq, %618, %627 : vector<16x1xi32>
      %cst_107 = arith.constant 0.000000e+00 : f32
      %629 = vector.shape_cast %628 : vector<16x1xi1> to vector<16x1xi1>
      %630 = vector.broadcast %629 : vector<16x1xi1> to vector<16x128xi1>
      %631 = vector.shape_cast %7 : vector<1x128xf32> to vector<1x128xf32>
      %632 = vector.broadcast %631 : vector<1x128xf32> to vector<16x128xf32>
      %633 = vector.broadcast %cst_107 : f32 to vector<16x128xf32>
      %634 = arith.select %630, %632, %633 : vector<16x128xi1>, vector<16x128xf32>
      %c2_i32 = arith.constant 2 : i32
      %635 = vector.broadcast %c2_i32 : i32 to vector<16x1xi32>
      %636 = arith.cmpi eq, %618, %635 : vector<16x1xi32>
      %cst_108 = arith.constant 0.000000e+00 : f32
      %637 = vector.shape_cast %636 : vector<16x1xi1> to vector<16x1xi1>
      %638 = vector.broadcast %637 : vector<16x1xi1> to vector<16x128xi1>
      %639 = vector.shape_cast %8 : vector<1x128xf32> to vector<1x128xf32>
      %640 = vector.broadcast %639 : vector<1x128xf32> to vector<16x128xf32>
      %641 = vector.broadcast %cst_108 : f32 to vector<16x128xf32>
      %642 = arith.select %638, %640, %641 : vector<16x128xi1>, vector<16x128xf32>
      %c3_i32 = arith.constant 3 : i32
      %643 = vector.broadcast %c3_i32 : i32 to vector<16x1xi32>
      %644 = arith.cmpi eq, %618, %643 : vector<16x1xi32>
      %cst_109 = arith.constant 0.000000e+00 : f32
      %645 = vector.shape_cast %644 : vector<16x1xi1> to vector<16x1xi1>
      %646 = vector.broadcast %645 : vector<16x1xi1> to vector<16x128xi1>
      %647 = vector.shape_cast %9 : vector<1x128xf32> to vector<1x128xf32>
      %648 = vector.broadcast %647 : vector<1x128xf32> to vector<16x128xf32>
      %649 = vector.broadcast %cst_109 : f32 to vector<16x128xf32>
      %650 = arith.select %646, %648, %649 : vector<16x128xi1>, vector<16x128xf32>
      %c4_i32 = arith.constant 4 : i32
      %651 = vector.broadcast %c4_i32 : i32 to vector<16x1xi32>
      %652 = arith.cmpi eq, %618, %651 : vector<16x1xi32>
      %cst_110 = arith.constant 0.000000e+00 : f32
      %653 = vector.shape_cast %652 : vector<16x1xi1> to vector<16x1xi1>
      %654 = vector.broadcast %653 : vector<16x1xi1> to vector<16x128xi1>
      %655 = vector.shape_cast %10 : vector<1x128xf32> to vector<1x128xf32>
      %656 = vector.broadcast %655 : vector<1x128xf32> to vector<16x128xf32>
      %657 = vector.broadcast %cst_110 : f32 to vector<16x128xf32>
      %658 = arith.select %654, %656, %657 : vector<16x128xi1>, vector<16x128xf32>
      %c5_i32 = arith.constant 5 : i32
      %659 = vector.broadcast %c5_i32 : i32 to vector<16x1xi32>
      %660 = arith.cmpi eq, %618, %659 : vector<16x1xi32>
      %cst_111 = arith.constant 0.000000e+00 : f32
      %661 = vector.shape_cast %660 : vector<16x1xi1> to vector<16x1xi1>
      %662 = vector.broadcast %661 : vector<16x1xi1> to vector<16x128xi1>
      %663 = vector.shape_cast %11 : vector<1x128xf32> to vector<1x128xf32>
      %664 = vector.broadcast %663 : vector<1x128xf32> to vector<16x128xf32>
      %665 = vector.broadcast %cst_111 : f32 to vector<16x128xf32>
      %666 = arith.select %662, %664, %665 : vector<16x128xi1>, vector<16x128xf32>
      %c6_i32 = arith.constant 6 : i32
      %667 = vector.broadcast %c6_i32 : i32 to vector<16x1xi32>
      %668 = arith.cmpi eq, %618, %667 : vector<16x1xi32>
      %cst_112 = arith.constant 0.000000e+00 : f32
      %669 = vector.shape_cast %668 : vector<16x1xi1> to vector<16x1xi1>
      %670 = vector.broadcast %669 : vector<16x1xi1> to vector<16x128xi1>
      %671 = vector.shape_cast %12 : vector<1x128xf32> to vector<1x128xf32>
      %672 = vector.broadcast %671 : vector<1x128xf32> to vector<16x128xf32>
      %673 = vector.broadcast %cst_112 : f32 to vector<16x128xf32>
      %674 = arith.select %670, %672, %673 : vector<16x128xi1>, vector<16x128xf32>
      %c7_i32 = arith.constant 7 : i32
      %675 = vector.broadcast %c7_i32 : i32 to vector<16x1xi32>
      %676 = arith.cmpi eq, %618, %675 : vector<16x1xi32>
      %cst_113 = arith.constant 0.000000e+00 : f32
      %677 = vector.shape_cast %676 : vector<16x1xi1> to vector<16x1xi1>
      %678 = vector.broadcast %677 : vector<16x1xi1> to vector<16x128xi1>
      %679 = vector.shape_cast %13 : vector<1x128xf32> to vector<1x128xf32>
      %680 = vector.broadcast %679 : vector<1x128xf32> to vector<16x128xf32>
      %681 = vector.broadcast %cst_113 : f32 to vector<16x128xf32>
      %682 = arith.select %678, %680, %681 : vector<16x128xi1>, vector<16x128xf32>
      %c8_i32 = arith.constant 8 : i32
      %683 = vector.broadcast %c8_i32 : i32 to vector<16x1xi32>
      %684 = arith.cmpi eq, %618, %683 : vector<16x1xi32>
      %cst_114 = arith.constant 0.000000e+00 : f32
      %685 = vector.shape_cast %684 : vector<16x1xi1> to vector<16x1xi1>
      %686 = vector.broadcast %685 : vector<16x1xi1> to vector<16x128xi1>
      %687 = vector.shape_cast %14 : vector<1x128xf32> to vector<1x128xf32>
      %688 = vector.broadcast %687 : vector<1x128xf32> to vector<16x128xf32>
      %689 = vector.broadcast %cst_114 : f32 to vector<16x128xf32>
      %690 = arith.select %686, %688, %689 : vector<16x128xi1>, vector<16x128xf32>
      %c9_i32 = arith.constant 9 : i32
      %691 = vector.broadcast %c9_i32 : i32 to vector<16x1xi32>
      %692 = arith.cmpi eq, %618, %691 : vector<16x1xi32>
      %cst_115 = arith.constant 0.000000e+00 : f32
      %693 = vector.shape_cast %692 : vector<16x1xi1> to vector<16x1xi1>
      %694 = vector.broadcast %693 : vector<16x1xi1> to vector<16x128xi1>
      %695 = vector.shape_cast %15 : vector<1x128xf32> to vector<1x128xf32>
      %696 = vector.broadcast %695 : vector<1x128xf32> to vector<16x128xf32>
      %697 = vector.broadcast %cst_115 : f32 to vector<16x128xf32>
      %698 = arith.select %694, %696, %697 : vector<16x128xi1>, vector<16x128xf32>
      %c10_i32 = arith.constant 10 : i32
      %699 = vector.broadcast %c10_i32 : i32 to vector<16x1xi32>
      %700 = arith.cmpi eq, %618, %699 : vector<16x1xi32>
      %cst_116 = arith.constant 0.000000e+00 : f32
      %701 = vector.shape_cast %700 : vector<16x1xi1> to vector<16x1xi1>
      %702 = vector.broadcast %701 : vector<16x1xi1> to vector<16x128xi1>
      %703 = vector.shape_cast %16 : vector<1x128xf32> to vector<1x128xf32>
      %704 = vector.broadcast %703 : vector<1x128xf32> to vector<16x128xf32>
      %705 = vector.broadcast %cst_116 : f32 to vector<16x128xf32>
      %706 = arith.select %702, %704, %705 : vector<16x128xi1>, vector<16x128xf32>
      %c11_i32 = arith.constant 11 : i32
      %707 = vector.broadcast %c11_i32 : i32 to vector<16x1xi32>
      %708 = arith.cmpi eq, %618, %707 : vector<16x1xi32>
      %cst_117 = arith.constant 0.000000e+00 : f32
      %709 = vector.shape_cast %708 : vector<16x1xi1> to vector<16x1xi1>
      %710 = vector.broadcast %709 : vector<16x1xi1> to vector<16x128xi1>
      %711 = vector.shape_cast %17 : vector<1x128xf32> to vector<1x128xf32>
      %712 = vector.broadcast %711 : vector<1x128xf32> to vector<16x128xf32>
      %713 = vector.broadcast %cst_117 : f32 to vector<16x128xf32>
      %714 = arith.select %710, %712, %713 : vector<16x128xi1>, vector<16x128xf32>
      %c12_i32 = arith.constant 12 : i32
      %715 = vector.broadcast %c12_i32 : i32 to vector<16x1xi32>
      %716 = arith.cmpi eq, %618, %715 : vector<16x1xi32>
      %cst_118 = arith.constant 0.000000e+00 : f32
      %717 = vector.shape_cast %716 : vector<16x1xi1> to vector<16x1xi1>
      %718 = vector.broadcast %717 : vector<16x1xi1> to vector<16x128xi1>
      %719 = vector.shape_cast %18 : vector<1x128xf32> to vector<1x128xf32>
      %720 = vector.broadcast %719 : vector<1x128xf32> to vector<16x128xf32>
      %721 = vector.broadcast %cst_118 : f32 to vector<16x128xf32>
      %722 = arith.select %718, %720, %721 : vector<16x128xi1>, vector<16x128xf32>
      %c13_i32 = arith.constant 13 : i32
      %723 = vector.broadcast %c13_i32 : i32 to vector<16x1xi32>
      %724 = arith.cmpi eq, %618, %723 : vector<16x1xi32>
      %cst_119 = arith.constant 0.000000e+00 : f32
      %725 = vector.shape_cast %724 : vector<16x1xi1> to vector<16x1xi1>
      %726 = vector.broadcast %725 : vector<16x1xi1> to vector<16x128xi1>
      %727 = vector.shape_cast %19 : vector<1x128xf32> to vector<1x128xf32>
      %728 = vector.broadcast %727 : vector<1x128xf32> to vector<16x128xf32>
      %729 = vector.broadcast %cst_119 : f32 to vector<16x128xf32>
      %730 = arith.select %726, %728, %729 : vector<16x128xi1>, vector<16x128xf32>
      %c14_i32 = arith.constant 14 : i32
      %731 = vector.broadcast %c14_i32 : i32 to vector<16x1xi32>
      %732 = arith.cmpi eq, %618, %731 : vector<16x1xi32>
      %cst_120 = arith.constant 0.000000e+00 : f32
      %733 = vector.shape_cast %732 : vector<16x1xi1> to vector<16x1xi1>
      %734 = vector.broadcast %733 : vector<16x1xi1> to vector<16x128xi1>
      %735 = vector.shape_cast %20 : vector<1x128xf32> to vector<1x128xf32>
      %736 = vector.broadcast %735 : vector<1x128xf32> to vector<16x128xf32>
      %737 = vector.broadcast %cst_120 : f32 to vector<16x128xf32>
      %738 = arith.select %734, %736, %737 : vector<16x128xi1>, vector<16x128xf32>
      %c15_i32 = arith.constant 15 : i32
      %739 = vector.broadcast %c15_i32 : i32 to vector<16x1xi32>
      %740 = arith.cmpi eq, %618, %739 : vector<16x1xi32>
      %cst_121 = arith.constant 0.000000e+00 : f32
      %741 = vector.shape_cast %740 : vector<16x1xi1> to vector<16x1xi1>
      %742 = vector.broadcast %741 : vector<16x1xi1> to vector<16x128xi1>
      %743 = vector.shape_cast %21 : vector<1x128xf32> to vector<1x128xf32>
      %744 = vector.broadcast %743 : vector<1x128xf32> to vector<16x128xf32>
      %745 = vector.broadcast %cst_121 : f32 to vector<16x128xf32>
      %746 = arith.select %742, %744, %745 : vector<16x128xi1>, vector<16x128xf32>
      %747 = arith.addf %626, %634 : vector<16x128xf32>
      %748 = arith.addf %642, %650 : vector<16x128xf32>
      %749 = arith.addf %658, %666 : vector<16x128xf32>
      %750 = arith.addf %674, %682 : vector<16x128xf32>
      %751 = arith.addf %690, %698 : vector<16x128xf32>
      %752 = arith.addf %706, %714 : vector<16x128xf32>
      %753 = arith.addf %722, %730 : vector<16x128xf32>
      %754 = arith.addf %738, %746 : vector<16x128xf32>
      %755 = arith.addf %747, %748 : vector<16x128xf32>
      %756 = arith.addf %749, %750 : vector<16x128xf32>
      %757 = arith.addf %751, %752 : vector<16x128xf32>
      %758 = arith.addf %753, %754 : vector<16x128xf32>
      %759 = arith.addf %755, %756 : vector<16x128xf32>
      %760 = arith.addf %757, %758 : vector<16x128xf32>
      %761 = arith.addf %759, %760 : vector<16x128xf32>
      scf.yield %761, %618 : vector<16x128xf32>, vector<16x1xi32>
    }
    %527 = arith.addf %526#0, %293 : vector<16x128xf32>
    %528 = vector.extract_strided_slice %527 {offsets = [0, 0], sizes = [16, 32], strides = [1, 1]} : vector<16x128xf32> to vector<16x32xf32>
    %529 = vector.extract_strided_slice %518 {offsets = [0, 0], sizes = [16, 32], strides = [1, 1]} : vector<16x128xf32> to vector<16x32xf32>
    %530 = arith.addf %528, %529 : vector<16x32xf32>
    %531 = arith.negf %530 : vector<16x32xf32>
    %532 = math.exp %531 : vector<16x32xf32>
    %cst_84 = arith.constant 1.000000e+00 : f32
    %533 = vector.broadcast %cst_84 : f32 to vector<16x32xf32>
    %534 = arith.addf %533, %532 : vector<16x32xf32>
    %535 = arith.divf %533, %534 : vector<16x32xf32>
    %536 = vector.extract_strided_slice %527 {offsets = [0, 32], sizes = [16, 32], strides = [1, 1]} : vector<16x128xf32> to vector<16x32xf32>
    %537 = vector.extract_strided_slice %518 {offsets = [0, 32], sizes = [16, 32], strides = [1, 1]} : vector<16x128xf32> to vector<16x32xf32>
    %538 = arith.addf %536, %537 : vector<16x32xf32>
    %539 = arith.negf %538 : vector<16x32xf32>
    %540 = math.exp %539 : vector<16x32xf32>
    %cst_85 = arith.constant 1.000000e+00 : f32
    %541 = vector.broadcast %cst_85 : f32 to vector<16x32xf32>
    %542 = arith.addf %541, %540 : vector<16x32xf32>
    %543 = arith.divf %541, %542 : vector<16x32xf32>
    %544 = vector.extract_strided_slice %527 {offsets = [0, 64], sizes = [16, 32], strides = [1, 1]} : vector<16x128xf32> to vector<16x32xf32>
    %545 = vector.extract_strided_slice %518 {offsets = [0, 64], sizes = [16, 32], strides = [1, 1]} : vector<16x128xf32> to vector<16x32xf32>
    %546 = arith.mulf %535, %545 : vector<16x32xf32>
    %547 = arith.addf %544, %546 : vector<16x32xf32>
    %548 = math.tanh %547 : vector<16x32xf32>
    %cst_86 = arith.constant 1.000000e+00 : f32
    %549 = vector.broadcast %cst_86 : f32 to vector<16x32xf32>
    %550 = arith.subf %549, %543 : vector<16x32xf32>
    %551 = arith.mulf %550, %548 : vector<16x32xf32>
    %552 = arith.mulf %543, %515 : vector<16x32xf32>
    %553 = arith.addf %551, %552 : vector<16x32xf32>
    %554 = arith.truncf %553 : vector<16x32xf32> to vector<16x32xbf16>
    %cst_87 = arith.constant dense<0.000000e+00> : vector<16x128xf32>
    %555 = tpu.matmul %554, %3, %cst_87 {dimension_numbers = #tpu.dot_dimension_numbers<[1], [0], [0], [1], [0, 0, 1, 1], [], []>} : vector<16x32xbf16>, vector<32x128xbf16>, vector<16x128xf32> -> vector<16x128xf32>
    %556 = arith.addf %555, %28 : vector<16x128xf32>
    %557 = vector.extract_strided_slice %527 {offsets = [0, 96], sizes = [16, 16], strides = [1, 1]} : vector<16x128xf32> to vector<16x16xf32>
    %558 = vector.extract_strided_slice %556 {offsets = [0, 96], sizes = [16, 16], strides = [1, 1]} : vector<16x128xf32> to vector<16x16xf32>
    %559 = arith.addf %557, %558 : vector<16x16xf32>
    %c6 = arith.constant 6 : index
    %560 = memref.load %arg1[%c6] : memref<8xi32, #tpu.memory_space<smem>>
    %c1_i32_88 = arith.constant 1 : i32
    %561 = arith.cmpi eq, %560, %c1_i32_88 : i32
    %562 = arith.extui %561 : i1 to i32
    %c0_i32_89 = arith.constant 0 : i32
    %563 = arith.cmpi ne, %562, %c0_i32_89 : i32
    %564:2 = scf.if %563 -> (vector<16x128xf32>, vector<16x1xi32>) {
      %611 = vector.extract_strided_slice %49 {offsets = [96, 0], sizes = [16, 128], strides = [1, 1]} : vector<128x128xf32> to vector<16x128xf32>
      %612 = vector.extract_strided_slice %42 {offsets = [96, 0], sizes = [16, 1], strides = [1, 1]} : vector<128x1xi32> to vector<16x1xi32>
      scf.yield %611, %612 : vector<16x128xf32>, vector<16x1xi32>
    } else {
      %cst_102 = arith.constant dense<0xFF800000> : vector<16xf32>
      %611 = vector.multi_reduction <maximumf>, %559, %cst_102 [1] : vector<16x16xf32> to vector<16xf32>
      %612 = vector.shape_cast %611 : vector<16xf32> to vector<16x1xf32>
      %613 = vector.broadcast %612 : vector<16x1xf32> to vector<16x16xf32>
      %614 = arith.cmpf oeq, %559, %613 : vector<16x16xf32>
      %c16_i32 = arith.constant 16 : i32
      %615 = vector.broadcast %c16_i32 : i32 to vector<16x16xi32>
      %616 = arith.select %614, %296, %615 : vector<16x16xi1>, vector<16x16xi32>
      %cst_103 = arith.constant dense<2147483647> : vector<16xi32>
      %617 = vector.multi_reduction <minsi>, %616, %cst_103 [1] : vector<16x16xi32> to vector<16xi32>
      %618 = vector.shape_cast %617 : vector<16xi32> to vector<16x1xi32>
      %c0_i32_104 = arith.constant 0 : i32
      %619 = vector.broadcast %c0_i32_104 : i32 to vector<16x1xi32>
      %620 = arith.cmpi eq, %618, %619 : vector<16x1xi32>
      %cst_105 = arith.constant 0.000000e+00 : f32
      %621 = vector.shape_cast %620 : vector<16x1xi1> to vector<16x1xi1>
      %622 = vector.broadcast %621 : vector<16x1xi1> to vector<16x128xi1>
      %623 = vector.shape_cast %6 : vector<1x128xf32> to vector<1x128xf32>
      %624 = vector.broadcast %623 : vector<1x128xf32> to vector<16x128xf32>
      %625 = vector.broadcast %cst_105 : f32 to vector<16x128xf32>
      %626 = arith.select %622, %624, %625 : vector<16x128xi1>, vector<16x128xf32>
      %c1_i32_106 = arith.constant 1 : i32
      %627 = vector.broadcast %c1_i32_106 : i32 to vector<16x1xi32>
      %628 = arith.cmpi eq, %618, %627 : vector<16x1xi32>
      %cst_107 = arith.constant 0.000000e+00 : f32
      %629 = vector.shape_cast %628 : vector<16x1xi1> to vector<16x1xi1>
      %630 = vector.broadcast %629 : vector<16x1xi1> to vector<16x128xi1>
      %631 = vector.shape_cast %7 : vector<1x128xf32> to vector<1x128xf32>
      %632 = vector.broadcast %631 : vector<1x128xf32> to vector<16x128xf32>
      %633 = vector.broadcast %cst_107 : f32 to vector<16x128xf32>
      %634 = arith.select %630, %632, %633 : vector<16x128xi1>, vector<16x128xf32>
      %c2_i32 = arith.constant 2 : i32
      %635 = vector.broadcast %c2_i32 : i32 to vector<16x1xi32>
      %636 = arith.cmpi eq, %618, %635 : vector<16x1xi32>
      %cst_108 = arith.constant 0.000000e+00 : f32
      %637 = vector.shape_cast %636 : vector<16x1xi1> to vector<16x1xi1>
      %638 = vector.broadcast %637 : vector<16x1xi1> to vector<16x128xi1>
      %639 = vector.shape_cast %8 : vector<1x128xf32> to vector<1x128xf32>
      %640 = vector.broadcast %639 : vector<1x128xf32> to vector<16x128xf32>
      %641 = vector.broadcast %cst_108 : f32 to vector<16x128xf32>
      %642 = arith.select %638, %640, %641 : vector<16x128xi1>, vector<16x128xf32>
      %c3_i32 = arith.constant 3 : i32
      %643 = vector.broadcast %c3_i32 : i32 to vector<16x1xi32>
      %644 = arith.cmpi eq, %618, %643 : vector<16x1xi32>
      %cst_109 = arith.constant 0.000000e+00 : f32
      %645 = vector.shape_cast %644 : vector<16x1xi1> to vector<16x1xi1>
      %646 = vector.broadcast %645 : vector<16x1xi1> to vector<16x128xi1>
      %647 = vector.shape_cast %9 : vector<1x128xf32> to vector<1x128xf32>
      %648 = vector.broadcast %647 : vector<1x128xf32> to vector<16x128xf32>
      %649 = vector.broadcast %cst_109 : f32 to vector<16x128xf32>
      %650 = arith.select %646, %648, %649 : vector<16x128xi1>, vector<16x128xf32>
      %c4_i32 = arith.constant 4 : i32
      %651 = vector.broadcast %c4_i32 : i32 to vector<16x1xi32>
      %652 = arith.cmpi eq, %618, %651 : vector<16x1xi32>
      %cst_110 = arith.constant 0.000000e+00 : f32
      %653 = vector.shape_cast %652 : vector<16x1xi1> to vector<16x1xi1>
      %654 = vector.broadcast %653 : vector<16x1xi1> to vector<16x128xi1>
      %655 = vector.shape_cast %10 : vector<1x128xf32> to vector<1x128xf32>
      %656 = vector.broadcast %655 : vector<1x128xf32> to vector<16x128xf32>
      %657 = vector.broadcast %cst_110 : f32 to vector<16x128xf32>
      %658 = arith.select %654, %656, %657 : vector<16x128xi1>, vector<16x128xf32>
      %c5_i32 = arith.constant 5 : i32
      %659 = vector.broadcast %c5_i32 : i32 to vector<16x1xi32>
      %660 = arith.cmpi eq, %618, %659 : vector<16x1xi32>
      %cst_111 = arith.constant 0.000000e+00 : f32
      %661 = vector.shape_cast %660 : vector<16x1xi1> to vector<16x1xi1>
      %662 = vector.broadcast %661 : vector<16x1xi1> to vector<16x128xi1>
      %663 = vector.shape_cast %11 : vector<1x128xf32> to vector<1x128xf32>
      %664 = vector.broadcast %663 : vector<1x128xf32> to vector<16x128xf32>
      %665 = vector.broadcast %cst_111 : f32 to vector<16x128xf32>
      %666 = arith.select %662, %664, %665 : vector<16x128xi1>, vector<16x128xf32>
      %c6_i32 = arith.constant 6 : i32
      %667 = vector.broadcast %c6_i32 : i32 to vector<16x1xi32>
      %668 = arith.cmpi eq, %618, %667 : vector<16x1xi32>
      %cst_112 = arith.constant 0.000000e+00 : f32
      %669 = vector.shape_cast %668 : vector<16x1xi1> to vector<16x1xi1>
      %670 = vector.broadcast %669 : vector<16x1xi1> to vector<16x128xi1>
      %671 = vector.shape_cast %12 : vector<1x128xf32> to vector<1x128xf32>
      %672 = vector.broadcast %671 : vector<1x128xf32> to vector<16x128xf32>
      %673 = vector.broadcast %cst_112 : f32 to vector<16x128xf32>
      %674 = arith.select %670, %672, %673 : vector<16x128xi1>, vector<16x128xf32>
      %c7_i32 = arith.constant 7 : i32
      %675 = vector.broadcast %c7_i32 : i32 to vector<16x1xi32>
      %676 = arith.cmpi eq, %618, %675 : vector<16x1xi32>
      %cst_113 = arith.constant 0.000000e+00 : f32
      %677 = vector.shape_cast %676 : vector<16x1xi1> to vector<16x1xi1>
      %678 = vector.broadcast %677 : vector<16x1xi1> to vector<16x128xi1>
      %679 = vector.shape_cast %13 : vector<1x128xf32> to vector<1x128xf32>
      %680 = vector.broadcast %679 : vector<1x128xf32> to vector<16x128xf32>
      %681 = vector.broadcast %cst_113 : f32 to vector<16x128xf32>
      %682 = arith.select %678, %680, %681 : vector<16x128xi1>, vector<16x128xf32>
      %c8_i32 = arith.constant 8 : i32
      %683 = vector.broadcast %c8_i32 : i32 to vector<16x1xi32>
      %684 = arith.cmpi eq, %618, %683 : vector<16x1xi32>
      %cst_114 = arith.constant 0.000000e+00 : f32
      %685 = vector.shape_cast %684 : vector<16x1xi1> to vector<16x1xi1>
      %686 = vector.broadcast %685 : vector<16x1xi1> to vector<16x128xi1>
      %687 = vector.shape_cast %14 : vector<1x128xf32> to vector<1x128xf32>
      %688 = vector.broadcast %687 : vector<1x128xf32> to vector<16x128xf32>
      %689 = vector.broadcast %cst_114 : f32 to vector<16x128xf32>
      %690 = arith.select %686, %688, %689 : vector<16x128xi1>, vector<16x128xf32>
      %c9_i32 = arith.constant 9 : i32
      %691 = vector.broadcast %c9_i32 : i32 to vector<16x1xi32>
      %692 = arith.cmpi eq, %618, %691 : vector<16x1xi32>
      %cst_115 = arith.constant 0.000000e+00 : f32
      %693 = vector.shape_cast %692 : vector<16x1xi1> to vector<16x1xi1>
      %694 = vector.broadcast %693 : vector<16x1xi1> to vector<16x128xi1>
      %695 = vector.shape_cast %15 : vector<1x128xf32> to vector<1x128xf32>
      %696 = vector.broadcast %695 : vector<1x128xf32> to vector<16x128xf32>
      %697 = vector.broadcast %cst_115 : f32 to vector<16x128xf32>
      %698 = arith.select %694, %696, %697 : vector<16x128xi1>, vector<16x128xf32>
      %c10_i32 = arith.constant 10 : i32
      %699 = vector.broadcast %c10_i32 : i32 to vector<16x1xi32>
      %700 = arith.cmpi eq, %618, %699 : vector<16x1xi32>
      %cst_116 = arith.constant 0.000000e+00 : f32
      %701 = vector.shape_cast %700 : vector<16x1xi1> to vector<16x1xi1>
      %702 = vector.broadcast %701 : vector<16x1xi1> to vector<16x128xi1>
      %703 = vector.shape_cast %16 : vector<1x128xf32> to vector<1x128xf32>
      %704 = vector.broadcast %703 : vector<1x128xf32> to vector<16x128xf32>
      %705 = vector.broadcast %cst_116 : f32 to vector<16x128xf32>
      %706 = arith.select %702, %704, %705 : vector<16x128xi1>, vector<16x128xf32>
      %c11_i32 = arith.constant 11 : i32
      %707 = vector.broadcast %c11_i32 : i32 to vector<16x1xi32>
      %708 = arith.cmpi eq, %618, %707 : vector<16x1xi32>
      %cst_117 = arith.constant 0.000000e+00 : f32
      %709 = vector.shape_cast %708 : vector<16x1xi1> to vector<16x1xi1>
      %710 = vector.broadcast %709 : vector<16x1xi1> to vector<16x128xi1>
      %711 = vector.shape_cast %17 : vector<1x128xf32> to vector<1x128xf32>
      %712 = vector.broadcast %711 : vector<1x128xf32> to vector<16x128xf32>
      %713 = vector.broadcast %cst_117 : f32 to vector<16x128xf32>
      %714 = arith.select %710, %712, %713 : vector<16x128xi1>, vector<16x128xf32>
      %c12_i32 = arith.constant 12 : i32
      %715 = vector.broadcast %c12_i32 : i32 to vector<16x1xi32>
      %716 = arith.cmpi eq, %618, %715 : vector<16x1xi32>
      %cst_118 = arith.constant 0.000000e+00 : f32
      %717 = vector.shape_cast %716 : vector<16x1xi1> to vector<16x1xi1>
      %718 = vector.broadcast %717 : vector<16x1xi1> to vector<16x128xi1>
      %719 = vector.shape_cast %18 : vector<1x128xf32> to vector<1x128xf32>
      %720 = vector.broadcast %719 : vector<1x128xf32> to vector<16x128xf32>
      %721 = vector.broadcast %cst_118 : f32 to vector<16x128xf32>
      %722 = arith.select %718, %720, %721 : vector<16x128xi1>, vector<16x128xf32>
      %c13_i32 = arith.constant 13 : i32
      %723 = vector.broadcast %c13_i32 : i32 to vector<16x1xi32>
      %724 = arith.cmpi eq, %618, %723 : vector<16x1xi32>
      %cst_119 = arith.constant 0.000000e+00 : f32
      %725 = vector.shape_cast %724 : vector<16x1xi1> to vector<16x1xi1>
      %726 = vector.broadcast %725 : vector<16x1xi1> to vector<16x128xi1>
      %727 = vector.shape_cast %19 : vector<1x128xf32> to vector<1x128xf32>
      %728 = vector.broadcast %727 : vector<1x128xf32> to vector<16x128xf32>
      %729 = vector.broadcast %cst_119 : f32 to vector<16x128xf32>
      %730 = arith.select %726, %728, %729 : vector<16x128xi1>, vector<16x128xf32>
      %c14_i32 = arith.constant 14 : i32
      %731 = vector.broadcast %c14_i32 : i32 to vector<16x1xi32>
      %732 = arith.cmpi eq, %618, %731 : vector<16x1xi32>
      %cst_120 = arith.constant 0.000000e+00 : f32
      %733 = vector.shape_cast %732 : vector<16x1xi1> to vector<16x1xi1>
      %734 = vector.broadcast %733 : vector<16x1xi1> to vector<16x128xi1>
      %735 = vector.shape_cast %20 : vector<1x128xf32> to vector<1x128xf32>
      %736 = vector.broadcast %735 : vector<1x128xf32> to vector<16x128xf32>
      %737 = vector.broadcast %cst_120 : f32 to vector<16x128xf32>
      %738 = arith.select %734, %736, %737 : vector<16x128xi1>, vector<16x128xf32>
      %c15_i32 = arith.constant 15 : i32
      %739 = vector.broadcast %c15_i32 : i32 to vector<16x1xi32>
      %740 = arith.cmpi eq, %618, %739 : vector<16x1xi32>
      %cst_121 = arith.constant 0.000000e+00 : f32
      %741 = vector.shape_cast %740 : vector<16x1xi1> to vector<16x1xi1>
      %742 = vector.broadcast %741 : vector<16x1xi1> to vector<16x128xi1>
      %743 = vector.shape_cast %21 : vector<1x128xf32> to vector<1x128xf32>
      %744 = vector.broadcast %743 : vector<1x128xf32> to vector<16x128xf32>
      %745 = vector.broadcast %cst_121 : f32 to vector<16x128xf32>
      %746 = arith.select %742, %744, %745 : vector<16x128xi1>, vector<16x128xf32>
      %747 = arith.addf %626, %634 : vector<16x128xf32>
      %748 = arith.addf %642, %650 : vector<16x128xf32>
      %749 = arith.addf %658, %666 : vector<16x128xf32>
      %750 = arith.addf %674, %682 : vector<16x128xf32>
      %751 = arith.addf %690, %698 : vector<16x128xf32>
      %752 = arith.addf %706, %714 : vector<16x128xf32>
      %753 = arith.addf %722, %730 : vector<16x128xf32>
      %754 = arith.addf %738, %746 : vector<16x128xf32>
      %755 = arith.addf %747, %748 : vector<16x128xf32>
      %756 = arith.addf %749, %750 : vector<16x128xf32>
      %757 = arith.addf %751, %752 : vector<16x128xf32>
      %758 = arith.addf %753, %754 : vector<16x128xf32>
      %759 = arith.addf %755, %756 : vector<16x128xf32>
      %760 = arith.addf %757, %758 : vector<16x128xf32>
      %761 = arith.addf %759, %760 : vector<16x128xf32>
      scf.yield %761, %618 : vector<16x128xf32>, vector<16x1xi32>
    }
    %565 = arith.addf %564#0, %293 : vector<16x128xf32>
    %566 = vector.extract_strided_slice %565 {offsets = [0, 0], sizes = [16, 32], strides = [1, 1]} : vector<16x128xf32> to vector<16x32xf32>
    %567 = vector.extract_strided_slice %556 {offsets = [0, 0], sizes = [16, 32], strides = [1, 1]} : vector<16x128xf32> to vector<16x32xf32>
    %568 = arith.addf %566, %567 : vector<16x32xf32>
    %569 = arith.negf %568 : vector<16x32xf32>
    %570 = math.exp %569 : vector<16x32xf32>
    %cst_90 = arith.constant 1.000000e+00 : f32
    %571 = vector.broadcast %cst_90 : f32 to vector<16x32xf32>
    %572 = arith.addf %571, %570 : vector<16x32xf32>
    %573 = arith.divf %571, %572 : vector<16x32xf32>
    %574 = vector.extract_strided_slice %565 {offsets = [0, 32], sizes = [16, 32], strides = [1, 1]} : vector<16x128xf32> to vector<16x32xf32>
    %575 = vector.extract_strided_slice %556 {offsets = [0, 32], sizes = [16, 32], strides = [1, 1]} : vector<16x128xf32> to vector<16x32xf32>
    %576 = arith.addf %574, %575 : vector<16x32xf32>
    %577 = arith.negf %576 : vector<16x32xf32>
    %578 = math.exp %577 : vector<16x32xf32>
    %cst_91 = arith.constant 1.000000e+00 : f32
    %579 = vector.broadcast %cst_91 : f32 to vector<16x32xf32>
    %580 = arith.addf %579, %578 : vector<16x32xf32>
    %581 = arith.divf %579, %580 : vector<16x32xf32>
    %582 = vector.extract_strided_slice %565 {offsets = [0, 64], sizes = [16, 32], strides = [1, 1]} : vector<16x128xf32> to vector<16x32xf32>
    %583 = vector.extract_strided_slice %556 {offsets = [0, 64], sizes = [16, 32], strides = [1, 1]} : vector<16x128xf32> to vector<16x32xf32>
    %584 = arith.mulf %573, %583 : vector<16x32xf32>
    %585 = arith.addf %582, %584 : vector<16x32xf32>
    %586 = math.tanh %585 : vector<16x32xf32>
    %cst_92 = arith.constant 1.000000e+00 : f32
    %587 = vector.broadcast %cst_92 : f32 to vector<16x32xf32>
    %588 = arith.subf %587, %581 : vector<16x32xf32>
    %589 = arith.mulf %588, %586 : vector<16x32xf32>
    %590 = arith.mulf %581, %553 : vector<16x32xf32>
    %591 = arith.addf %589, %590 : vector<16x32xf32>
    %592 = arith.truncf %591 : vector<16x32xf32> to vector<16x32xbf16>
    %cst_93 = arith.constant dense<0.000000e+00> : vector<16x128xf32>
    %593 = tpu.matmul %592, %3, %cst_93 {dimension_numbers = #tpu.dot_dimension_numbers<[1], [0], [0], [1], [0, 0, 1, 1], [], []>} : vector<16x32xbf16>, vector<32x128xbf16>, vector<16x128xf32> -> vector<16x128xf32>
    %594 = arith.addf %593, %28 : vector<16x128xf32>
    %595 = vector.extract_strided_slice %565 {offsets = [0, 96], sizes = [16, 16], strides = [1, 1]} : vector<16x128xf32> to vector<16x16xf32>
    %596 = vector.extract_strided_slice %594 {offsets = [0, 96], sizes = [16, 16], strides = [1, 1]} : vector<16x128xf32> to vector<16x16xf32>
    %597 = arith.addf %595, %596 : vector<16x16xf32>
    %c7 = arith.constant 7 : index
    %598 = memref.load %arg1[%c7] : memref<8xi32, #tpu.memory_space<smem>>
    %c1_i32_94 = arith.constant 1 : i32
    %599 = arith.cmpi eq, %598, %c1_i32_94 : i32
    %600 = arith.extui %599 : i1 to i32
    %c0_i32_95 = arith.constant 0 : i32
    %601 = arith.cmpi ne, %600, %c0_i32_95 : i32
    %602 = scf.if %601 -> (vector<16x1xi32>) {
      %611 = vector.extract_strided_slice %42 {offsets = [112, 0], sizes = [16, 1], strides = [1, 1]} : vector<128x1xi32> to vector<16x1xi32>
      scf.yield %611 : vector<16x1xi32>
    } else {
      %cst_102 = arith.constant dense<0xFF800000> : vector<16xf32>
      %611 = vector.multi_reduction <maximumf>, %597, %cst_102 [1] : vector<16x16xf32> to vector<16xf32>
      %612 = vector.shape_cast %611 : vector<16xf32> to vector<16x1xf32>
      %613 = vector.broadcast %612 : vector<16x1xf32> to vector<16x16xf32>
      %614 = arith.cmpf oeq, %597, %613 : vector<16x16xf32>
      %c16_i32 = arith.constant 16 : i32
      %615 = vector.broadcast %c16_i32 : i32 to vector<16x16xi32>
      %616 = arith.select %614, %296, %615 : vector<16x16xi1>, vector<16x16xi32>
      %cst_103 = arith.constant dense<2147483647> : vector<16xi32>
      %617 = vector.multi_reduction <minsi>, %616, %cst_103 [1] : vector<16x16xi32> to vector<16xi32>
      %618 = vector.shape_cast %617 : vector<16xi32> to vector<16x1xi32>
      scf.yield %618 : vector<16x1xi32>
    }
    %603 = tpu.concatenate %331, %369, %407, %445, %483, %521, %559, %597 in 1 : vector<16x16xf32>, vector<16x16xf32>, vector<16x16xf32>, vector<16x16xf32>, vector<16x16xf32>, vector<16x16xf32>, vector<16x16xf32>, vector<16x16xf32> -> vector<16x128xf32>
    %c0_96 = arith.constant 0 : index
    %c0_97 = arith.constant 0 : index
    %c0_98 = arith.constant 0 : index
    %604 = vector.load %arg6[%c0_96, %c0_97, %c0_98] : memref<1x16x128xf32, #tpu.memory_space<vmem>>, vector<1x16x128xf32>
    %605 = vector.shape_cast %604 : vector<1x16x128xf32> to vector<16x128xf32>
    %606 = vector.shape_cast %603 : vector<16x128xf32> to vector<1x16x128xf32>
    tpu.vector_store %arg6[%c0_96, %c0_97, %c0_98], %606 {strides = array<i32>} : memref<1x16x128xf32, #tpu.memory_space<vmem>>, vector<1x16x128xf32>,
    %607 = tpu.concatenate %336#1, %374#1, %412#1, %450#1, %488#1, %526#1, %564#1, %602 in 1 : vector<16x1xi32>, vector<16x1xi32>, vector<16x1xi32>, vector<16x1xi32>, vector<16x1xi32>, vector<16x1xi32>, vector<16x1xi32>, vector<16x1xi32> -> vector<16x8xi32>
    %c0_99 = arith.constant 0 : index
    %c0_100 = arith.constant 0 : index
    %c0_101 = arith.constant 0 : index
    %608 = vector.load %arg7[%c0_99, %c0_100, %c0_101] : memref<1x16x8xi32, #tpu.memory_space<vmem>>, vector<1x16x8xi32>
    %609 = vector.shape_cast %608 : vector<1x16x8xi32> to vector<16x8xi32>
    %610 = vector.shape_cast %607 : vector<16x8xi32> to vector<1x16x8xi32>
    tpu.vector_store %arg7[%c0_99, %c0_100, %c0_101], %610 {strides = array<i32>} : memref<1x16x8xi32, #tpu.memory_space<vmem>>, vector<1x16x8xi32>,
    return
  }
  func.func @transform_0(%arg0: i32, %arg1: memref<8xi32, #tpu.memory_space<smem>>) -> (i32, i32, i32) {
    %c0_i32 = arith.constant 0 : i32
    %c0_i32_0 = arith.constant 0 : i32
    %c0_i32_1 = arith.constant 0 : i32
    return %arg0, %c0_i32, %c0_i32_0 : i32, i32, i32
  }
  func.func @transform_1(%arg0: i32, %arg1: memref<8xi32, #tpu.memory_space<smem>>) -> (i32, i32, i32) {
    %c0_i32 = arith.constant 0 : i32
    %c0_i32_0 = arith.constant 0 : i32
    %c0_i32_1 = arith.constant 0 : i32
    return %arg0, %c0_i32, %c0_i32_0 : i32, i32, i32
  }
  func.func @transform_2(%arg0: i32, %arg1: memref<8xi32, #tpu.memory_space<smem>>) -> (i32, i32) {
    %c0_i32 = arith.constant 0 : i32
    %c0_i32_0 = arith.constant 0 : i32
    %c0_i32_1 = arith.constant 0 : i32
    return %c0_i32, %c0_i32_0 : i32, i32
  }
  func.func @transform_3(%arg0: i32, %arg1: memref<8xi32, #tpu.memory_space<smem>>) -> (i32, i32) {
    %c0_i32 = arith.constant 0 : i32
    %c0_i32_0 = arith.constant 0 : i32
    %c0_i32_1 = arith.constant 0 : i32
    return %c0_i32, %c0_i32_0 : i32, i32
  }
  func.func @transform_4(%arg0: i32, %arg1: memref<8xi32, #tpu.memory_space<smem>>) -> (i32, i32, i32) {
    %c0_i32 = arith.constant 0 : i32
    %c0_i32_0 = arith.constant 0 : i32
    %c0_i32_1 = arith.constant 0 : i32
    return %arg0, %c0_i32, %c0_i32_0 : i32, i32, i32
  }
  func.func @transform_5(%arg0: i32, %arg1: memref<8xi32, #tpu.memory_space<smem>>) -> (i32, i32, i32) {
    %c0_i32 = arith.constant 0 : i32
    %c0_i32_0 = arith.constant 0 : i32
    %c0_i32_1 = arith.constant 0 : i32
    return %arg0, %c0_i32, %c0_i32_0 : i32, i32, i32
  }
}

</mosaic_0001>

<llo_original>
// kernel: tpu_custom_call.1
$region0: #{tpu_custom_call.1}
  #allocation0 [shape = 'u32[]', space=smem, size = 0x4, offset = 0x4, fixed_abs, tag = 'smem constant byte address 0x4 - core index']
  #allocation1 [shape = 'u32[144,128]{1,0:T(1,128)}', space=vmem, size = 0x12000, scoped, tag = 'internal scratch']
  #allocation2 [shape = 's32[1]{0}', space=sflag, size = 0x4, scoped, tag = 'scoped memory for tpu_custom_call.1']
  #allocation3 [shape = 'u8[512]{0}', space=smem, size = 0x200, scoped, tag = 'prefetched SMEM operand 0']
  %s0 = inlined_call_operand.vmem [shape: s32[8], index: 0, kind: input, shape index: {}]
  %s1 = inlined_call_operand.vmem [shape: s32[2,128,1], index: 1, kind: input, shape index: {}]
  %s2 = inlined_call_operand.vmem [shape: s32[2,128,1], index: 2, kind: input, shape index: {}]
  %s3 = inlined_call_operand.vmem [shape: bf16[128,128], index: 3, kind: input, shape index: {}]
  %s4 = inlined_call_operand.vmem [shape: f32[8,128], index: 4, kind: input, shape index: {}]
  %s5 = inlined_call_operand.hbm [shape: f32[2,16,128], index: 5, kind: output, shape index: {0}]
  %s6 = inlined_call_operand.vmem [shape: s32[2,16,8], index: 6, kind: output, shape index: {1}]
  %7 = xla_tuple %s5, %s6
  %s8 = sld [smem:[#allocation0]]
  $region121: #{tpu_custom_call.1} parent=0
    _
  %s10 = ssub.s32 1, %s8
  %s11 = scalar_select 0, %s10, %s8
  %s12 = sshll.u32 %s0, 4
  %s13 = int_to_ptr.vmem [resolvable:$true] %s12
  %15 = dma.vmem_to_smem %s13, 16, [#allocation3], [#allocation2]
  %16 = dma.done [#allocation2], 16
  %17 = sfence
  $region1: #{tpu_custom_call.1} parent=0
    #allocation4 [shape = 'u8[16384]{0}', space=vmem, size = 0x4000, scoped, tag = 'output window, operand 0']
    #allocation5 [shape = 's32[2]{0}', space=sflag, size = 0x8, scoped, tag = 'scoped memory for tpu_custom_call.1']
    %18 = vsyncpa [#allocation5], 0
    %s19 = scalar_lea.sflag [#allocation5], 1
    %20 = vsyncpa %s19, 0
    loop: start=0, step=1, limit=4
    $region2: #{tpu_custom_call.1} parent=1 // loop_pre_header
      _
    $region3: #{tpu_custom_call.1} parent=1 // loop_header
      %s22 = sphi 0, %s26
      %p23 = scmp.ge.s32.totalorder %s22, 4
      %s32 = sphi 0, %s34
      %s35 = sphi 0, %s32
      %s36 = sphi 0, %s35
      %s52 = sphi 0, %s36
      %s58 = sphi 0, %s60
      %s61 = sphi 0, %s58
      %s62 = sphi 0, %s61
      %s78 = sphi 0, %s62
      %s82 = sphi 0, %s82
      %s84 = sphi 0, %s82
      %s85 = sphi 0, %s84
      %s99 = sphi 0, %s85
      %s103 = sphi 0, %s103
      %s105 = sphi 0, %s103
      %s106 = sphi 0, %s105
      %s120 = sphi 0, %s106
      %s126 = sphi 0, %s128
      %s129 = sphi 0, %s126
      %s130 = sphi 0, %s129
      %s146 = sphi 0, %s130
      %s152 = sphi 0, %s154
      %s155 = sphi 0, %s152
      %s156 = sphi 0, %s155
      %s172 = sphi 0, %s156
    $region4: #{tpu_custom_call.1} parent=1 // loop_header_branch
      %25 = sbr.rel (%p23) target = $region8
    $region5: #{tpu_custom_call.1} parent=1 // loop_body
      %s27 = ssub.s32 %s22, 1
      %s28 = ssub.s32 %s22, 2
      %s29 = sadd.s32 %s22, 1
      %s30 = ssub.s32 %s22, %s29
      %p31 = scmp.eq.s32.totalorder %s30, 0
      %s33 = sadd.s32 %s32, 1
      %s34 = scalar_select %p31, %s32, %s33
      %p37 = pneg %p31
      %p38 = scmp.eq.s32.totalorder %s22, 1
      %p39 = por %p37, %p38
      %p40 = scmp.ne.s32.totalorder %s32, %s35
      %p41 = scmp.eq.s32.totalorder %s22, 0
      %p42 = por %p40, %p41
      %p43 = scmp.ne.s32.totalorder %s32, %s35
      %p44 = scmp.eq.s32.totalorder %s27, 1
      %p45 = por %p43, %p44
      %p46 = scmp.ne.s32.totalorder %s35, %s36
      %p47 = scmp.eq.s32.totalorder %s27, 0
      %p48 = por %p46, %p47
      %p49 = scmp.ne.s32.totalorder %s35, %s36
      %p50 = scmp.eq.s32.totalorder %s28, 1
      %p51 = por %p49, %p50
      %p53 = scmp.ne.s32.totalorder %s36, %s52
      %p54 = scmp.eq.s32.totalorder %s28, 0
      %p55 = por %p53, %p54
      %s56 = ssub.s32 %s22, %s29
      %p57 = scmp.eq.s32.totalorder %s56, 0
      %s59 = sadd.s32 %s58, 1
      %s60 = scalar_select %p57, %s58, %s59
      %p63 = pneg %p57
      %p64 = scmp.eq.s32.totalorder %s22, 1
      %p65 = por %p63, %p64
      %p66 = scmp.ne.s32.totalorder %s58, %s61
      %p67 = scmp.eq.s32.totalorder %s22, 0
      %p68 = por %p66, %p67
      %p69 = scmp.ne.s32.totalorder %s58, %s61
      %p70 = scmp.eq.s32.totalorder %s27, 1
      %p71 = por %p69, %p70
      %p72 = scmp.ne.s32.totalorder %s61, %s62
      %p73 = scmp.eq.s32.totalorder %s27, 0
      %p74 = por %p72, %p73
      %p75 = scmp.ne.s32.totalorder %s61, %s62
      %p76 = scmp.eq.s32.totalorder %s28, 1
      %p77 = por %p75, %p76
      %p79 = scmp.ne.s32.totalorder %s62, %s78
      %p80 = scmp.eq.s32.totalorder %s28, 0
      %p81 = por %p79, %p80
      %s83 = sadd.s32 %s82, 1
      %p86 = scmp.eq.s32.totalorder %s22, 1
      %p87 = scmp.ne.s32.totalorder %s82, %s84
      %p88 = scmp.eq.s32.totalorder %s22, 0
      %p89 = por %p87, %p88
      %p90 = scmp.ne.s32.totalorder %s82, %s84
      %p91 = scmp.eq.s32.totalorder %s27, 1
      %p92 = por %p90, %p91
      %p93 = scmp.ne.s32.totalorder %s84, %s85
      %p94 = scmp.eq.s32.totalorder %s27, 0
      %p95 = por %p93, %p94
      %p96 = scmp.ne.s32.totalorder %s84, %s85
      %p97 = scmp.eq.s32.totalorder %s28, 1
      %p98 = por %p96, %p97
      %p100 = scmp.ne.s32.totalorder %s85, %s99
      %p101 = scmp.eq.s32.totalorder %s28, 0
      %p102 = por %p100, %p101
      %s104 = sadd.s32 %s103, 1
      %p107 = scmp.eq.s32.totalorder %s22, 1
      %p108 = scmp.ne.s32.totalorder %s103, %s105
      %p109 = scmp.eq.s32.totalorder %s22, 0
      %p110 = por %p108, %p109
      %p111 = scmp.ne.s32.totalorder %s103, %s105
      %p112 = scmp.eq.s32.totalorder %s27, 1
      %p113 = por %p111, %p112
      %p114 = scmp.ne.s32.totalorder %s105, %s106
      %p115 = scmp.eq.s32.totalorder %s27, 0
      %p116 = por %p114, %p115
      %p117 = scmp.ne.s32.totalorder %s105, %s106
      %p118 = scmp.eq.s32.totalorder %s28, 1
      %p119 = por %p117, %p118
      %p121 = scmp.ne.s32.totalorder %s106, %s120
      %p122 = scmp.eq.s32.totalorder %s28, 0
      %p123 = por %p121, %p122
      %s124 = ssub.s32 %s22, %s29
      %p125 = scmp.eq.s32.totalorder %s124, 0
      %s127 = sadd.s32 %s126, 1
      %s128 = scalar_select %p125, %s126, %s127
      %p131 = pneg %p125
      %p132 = scmp.eq.s32.totalorder %s22, 1
      %p133 = por %p131, %p132
      %p134 = scmp.ne.s32.totalorder %s126, %s129
      %p135 = scmp.eq.s32.totalorder %s22, 0
      %p136 = por %p134, %p135
      %p137 = scmp.ne.s32.totalorder %s126, %s129
      %p138 = scmp.eq.s32.totalorder %s27, 1
      %p139 = por %p137, %p138
      %p140 = scmp.ne.s32.totalorder %s129, %s130
      %p141 = scmp.eq.s32.totalorder %s27, 0
      %p142 = por %p140, %p141
      %p143 = scmp.ne.s32.totalorder %s129, %s130
      %p144 = scmp.eq.s32.totalorder %s28, 1
      %p145 = por %p143, %p144
      %p147 = scmp.ne.s32.totalorder %s130, %s146
      %p148 = scmp.eq.s32.totalorder %s28, 0
      %p149 = por %p147, %p148
      %s150 = ssub.s32 %s22, %s29
      %p151 = scmp.eq.s32.totalorder %s150, 0
      %s153 = sadd.s32 %s152, 1
      %s154 = scalar_select %p151, %s152, %s153
      %p157 = pneg %p151
      %p158 = scmp.eq.s32.totalorder %s22, 1
      %p159 = por %p157, %p158
      %p160 = scmp.ne.s32.totalorder %s152, %s155
      %p161 = scmp.eq.s32.totalorder %s22, 0
      %p162 = por %p160, %p161
      %p163 = scmp.ne.s32.totalorder %s152, %s155
      %p164 = scmp.eq.s32.totalorder %s27, 1
      %p165 = por %p163, %p164
      %p166 = scmp.ne.s32.totalorder %s155, %s156
      %p167 = scmp.eq.s32.totalorder %s27, 0
      %p168 = por %p166, %p167
      %p169 = scmp.ne.s32.totalorder %s155, %s156
      %p170 = scmp.eq.s32.totalorder %s28, 1
      %p171 = por %p169, %p170
      %p173 = scmp.ne.s32.totalorder %s156, %s172
      %p174 = scmp.eq.s32.totalorder %s28, 0
      %p175 = por %p173, %p174
      %p176 = scmp.le.s32.totalorder 1, %s22
      %p177 = scmp.lt.s32.totalorder %s22, 3
      %p178 = pnand %p176, %p177
      %p179 = pneg %p178
      // Predicated region
      $region9: #{tpu_custom_call.1} parent=5 // pred_check
        _
      $region10: #{tpu_custom_call.1} parent=5 // pred_check_branch
        %181 = sbr.rel (%p178) target = $region12
      $region11: #{tpu_custom_call.1} parent=5 // pred_region
        %s182 = ssub.s32 %s22, 1
        // Predicated region
        $region13: #{tpu_custom_call.1} parent=11 // pred_check
          %p183 = pneg %p95
        $region14: #{tpu_custom_call.1} parent=11 // pred_check_branch
          %185 = sbr.rel (%p183) target = $region16
        $region15: #{tpu_custom_call.1} parent=11 // pred_region
          _
        $region16: #{tpu_custom_call.1} parent=11 // pred_fallthru
          _
        // Predicated region
        $region17: #{tpu_custom_call.1} parent=11 // pred_check
          %p186 = pneg %p116
        $region18: #{tpu_custom_call.1} parent=11 // pred_check_branch
          %188 = sbr.rel (%p186) target = $region20
        $region19: #{tpu_custom_call.1} parent=11 // pred_region
          _
        $region20: #{tpu_custom_call.1} parent=11 // pred_fallthru
          _
      $region12: #{tpu_custom_call.1} parent=5 // pred_fallthru
        _
      %p189 = scmp.lt.s32.totalorder %s22, 2
      // Predicated region
      $region21: #{tpu_custom_call.1} parent=5 // pred_check
        %p190 = pneg %p189
      $region22: #{tpu_custom_call.1} parent=5 // pred_check_branch
        %192 = sbr.rel (%p190) target = $region24
      $region23: #{tpu_custom_call.1} parent=5 // pred_region
        // Predicated region
        $region25: #{tpu_custom_call.1} parent=23 // pred_check
          %p193 = pneg %p42
        $region26: #{tpu_custom_call.1} parent=23 // pred_check_branch
          %195 = sbr.rel (%p193) target = $region28
        $region27: #{tpu_custom_call.1} parent=23 // pred_region
          %p196 = scmp.lt.s32.totalorder %s22, 1
          %s197 = scalar_select %p196, %s22, 1
          %s198 = smul.addr %s197, 16
          %s199 = smul.addr %s198, 8
          %s200 = scalar_lea.vmem %s1, %s199
        $region28: #{tpu_custom_call.1} parent=23 // pred_fallthru
          _
        // Predicated region
        $region29: #{tpu_custom_call.1} parent=23 // pred_check
          %p201 = pneg %p68
        $region30: #{tpu_custom_call.1} parent=23 // pred_check_branch
          %203 = sbr.rel (%p201) target = $region32
        $region31: #{tpu_custom_call.1} parent=23 // pred_region
          %p204 = scmp.lt.s32.totalorder %s22, 1
          %s205 = scalar_select %p204, %s22, 1
          %s206 = smul.addr %s205, 16
          %s207 = smul.addr %s206, 8
          %s208 = scalar_lea.vmem %s2, %s207
        $region32: #{tpu_custom_call.1} parent=23 // pred_fallthru
          _
      $region24: #{tpu_custom_call.1} parent=5 // pred_fallthru
        _
      %p209 = scmp.le.s32.totalorder 1, %s22
      %p210 = scmp.lt.s32.totalorder %s22, 3
      %p211 = pnand %p209, %p210
      %p212 = pneg %p211
      // Predicated region
      $region33: #{tpu_custom_call.1} parent=5 // pred_check
        _
      $region34: #{tpu_custom_call.1} parent=5 // pred_check_branch
        %214 = sbr.rel (%p211) target = $region36
      $region35: #{tpu_custom_call.1} parent=5 // pred_region
        %s215 = ssub.s32 %s22, 1
        %p216 = scmp.lt.s32.totalorder %s27, 1
        %s217 = scalar_select %p216, %s27, 1
        %s218 = smul.addr %s217, 16
        %s219 = smul.addr %s218, 8
        %s220 = scalar_lea.vmem %s1, %s219
        %p221 = pneg %p48
        %p222 = pneg %p45
        %p223 = scmp.lt.s32.totalorder %s27, 1
        %s224 = scalar_select %p223, %s27, 1
        %s225 = smul.addr %s224, 16
        %s226 = smul.addr %s225, 8
        %s227 = scalar_lea.vmem %s2, %s226
        %p228 = pneg %p74
        %p229 = pneg %p71
        %p230 = pneg %p95
        %p231 = pneg %p92
        %p232 = pneg %p116
        %p233 = pneg %p113
        %p234 = pneg %p142
        %p235 = pneg %p139
        %s236 = sand.u32 %s129, 1
        %s237 = scalar_lea.sflag [#allocation5], %s236
        %s238 = sand.u32 %s129, 1
        %s239 = smul.addr %s238, 16
        %s240 = scalar_lea.vmem [#allocation4], %s239
        %p241 = pneg %p168
        %p242 = pneg %p165
        %p243 = scmp.lt.s32.totalorder %s27, 1
        %s244 = scalar_select %p243, %s27, 1
        %s245 = smul.addr %s244, 2
        %s246 = smul.addr %s245, 8
        %s247 = scalar_lea.vmem %s6, %s246
        %p248 = scmp.lt.s32.totalorder %s27, 1
        %s249 = scalar_select %p248, %s27, 1
        %s250 = smul.addr %s249, 16
        %s251 = smul.addr %s250, 8
        %s252 = scalar_lea.vmem %s1, %s251
        %p253 = scmp.lt.s32.totalorder %s27, 1
        %s254 = scalar_select %p253, %s27, 1
        %s255 = smul.addr %s254, 16
        %s256 = smul.addr %s255, 8
        %s257 = scalar_lea.vmem %s2, %s256
        %p258 = scmp.lt.s32.totalorder %s27, 1
        %s259 = scalar_select %p258, %s27, 1
        %s260 = smul.addr %s259, 2
        %s261 = smul.addr %s260, 8
        %s262 = scalar_lea.vmem %s6, %s261
        %v264 = vld [vmem:[%s3] sm:$0xf]
        %v265 = vld [vmem:[%s3 + $0x4] sm:$0xf]
        %v266 = vld [vmem:[%s3 + $0x8] sm:$0xf]
        %v267 = vld [vmem:[%s3 + $0xc] sm:$0xf]
        %v268 = vld [vmem:[%s3 + $0x10] sm:$0xf]
        %v269 = vld [vmem:[%s3 + $0x14] sm:$0xf]
        %v270 = vld [vmem:[%s3 + $0x18] sm:$0xf]
        %v271 = vld [vmem:[%s3 + $0x1c] sm:$0xf]
        %v272 = vld [vmem:[%s3 + $0x20] sm:$0xf]
        %v273 = vld [vmem:[%s3 + $0x24] sm:$0xf]
        %v274 = vld [vmem:[%s3 + $0x28] sm:$0xf]
        %v275 = vld [vmem:[%s3 + $0x2c] sm:$0xf]
        %v276 = vld [vmem:[%s3 + $0x30] sm:$0xf]
        %v277 = vld [vmem:[%s3 + $0x34] sm:$0xf]
        %v278 = vld [vmem:[%s3 + $0x38] sm:$0xf]
        %v279 = vld [vmem:[%s3 + $0x3c] sm:$0xf]
        %v280 = vunpack.c.l.bf16 %v264
        %v281 = vunpack.c.l.bf16 %v265
        %v282 = vld [vmem:[%s4] sm:$0xff]
        %v283 = vlaneseq
        %v284 = vshrl.u32 %v283, 7
        %v285 = vsub.s32 0, %v284
        %v286 = vrot.slane %v282, %v285
        %v287 = vlaneseq
        %v288 = vshrl.u32 %v287, 7
        %v289 = vsub.s32 1, %v288
        %v290 = vrot.slane %v282, %v289
        %v291 = vlaneseq
        %v292 = vshrl.u32 %v291, 7
        %v293 = vsub.s32 2, %v292
        %v294 = vrot.slane %v282, %v293
        %v295 = vld [vmem:[%s252] sm:$0xff]
        %v296 = vld [vmem:[%s252 + $0x8] sm:$0xff]
        %v297 = vld [vmem:[%s252 + $0x10] sm:$0xff]
        %v298 = vld [vmem:[%s252 + $0x18] sm:$0xff]
        %v299 = vld [vmem:[%s252 + $0x20] sm:$0xff]
        %v300 = vld [vmem:[%s252 + $0x28] sm:$0xff]
        %v301 = vld [vmem:[%s252 + $0x30] sm:$0xff]
        %v302 = vld [vmem:[%s252 + $0x38] sm:$0xff]
        %v303 = vld [vmem:[%s252 + $0x40] sm:$0xff]
        %v304 = vld [vmem:[%s252 + $0x48] sm:$0xff]
        %v305 = vld [vmem:[%s252 + $0x50] sm:$0xff]
        %v306 = vld [vmem:[%s252 + $0x58] sm:$0xff]
        %v307 = vld [vmem:[%s252 + $0x60] sm:$0xff]
        %v308 = vld [vmem:[%s252 + $0x68] sm:$0xff]
        %v309 = vld [vmem:[%s252 + $0x70] sm:$0xff]
        %v310 = vld [vmem:[%s252 + $0x78] sm:$0xff]
        %v311 = vlaneseq
        %v312 = vand.u32 %v311, 127
        %313 = vset.pattern.permute.xlu0 0
        %314 = vperm.xlu0 %313, %v295
        %v315 = vpop.permute.xlu0 %314
        %316 = vset.pattern.permute.xlu0 0
        %317 = vperm.xlu0 %316, %v296
        %v318 = vpop.permute.xlu0 %317
        %319 = vset.pattern.permute.xlu0 0
        %320 = vperm.xlu0 %319, %v297
        %v321 = vpop.permute.xlu0 %320
        %322 = vset.pattern.permute.xlu0 0
        %323 = vperm.xlu0 %322, %v298
        %v324 = vpop.permute.xlu0 %323
        %325 = vset.pattern.permute.xlu0 0
        %326 = vperm.xlu0 %325, %v299
        %v327 = vpop.permute.xlu0 %326
        %328 = vset.pattern.permute.xlu0 0
        %329 = vperm.xlu0 %328, %v300
        %v330 = vpop.permute.xlu0 %329
        %331 = vset.pattern.permute.xlu0 0
        %332 = vperm.xlu0 %331, %v301
        %v333 = vpop.permute.xlu0 %332
        %334 = vset.pattern.permute.xlu0 0
        %335 = vperm.xlu0 %334, %v302
        %v336 = vpop.permute.xlu0 %335
        %337 = vset.pattern.permute.xlu0 0
        %338 = vperm.xlu0 %337, %v303
        %v339 = vpop.permute.xlu0 %338
        %340 = vset.pattern.permute.xlu0 0
        %341 = vperm.xlu0 %340, %v304
        %v342 = vpop.permute.xlu0 %341
        %343 = vset.pattern.permute.xlu0 0
        %344 = vperm.xlu0 %343, %v305
        %v345 = vpop.permute.xlu0 %344
        %346 = vset.pattern.permute.xlu0 0
        %347 = vperm.xlu0 %346, %v306
        %v348 = vpop.permute.xlu0 %347
        %349 = vset.pattern.permute.xlu0 0
        %350 = vperm.xlu0 %349, %v307
        %v351 = vpop.permute.xlu0 %350
        %352 = vset.pattern.permute.xlu0 0
        %353 = vperm.xlu0 %352, %v308
        %v354 = vpop.permute.xlu0 %353
        %355 = vset.pattern.permute.xlu0 0
        %356 = vperm.xlu0 %355, %v309
        %v357 = vpop.permute.xlu0 %356
        %358 = vset.pattern.permute.xlu0 0
        %359 = vperm.xlu0 %358, %v310
        %v360 = vpop.permute.xlu0 %359
        %vm361 = vcmp.eq.s32.totalorder %v315, %v312
        %vm362 = vcmp.eq.s32.totalorder %v318, %v312
        %vm363 = vcmp.eq.s32.totalorder %v321, %v312
        %vm364 = vcmp.eq.s32.totalorder %v324, %v312
        %vm365 = vcmp.eq.s32.totalorder %v327, %v312
        %vm366 = vcmp.eq.s32.totalorder %v330, %v312
        %vm367 = vcmp.eq.s32.totalorder %v333, %v312
        %vm368 = vcmp.eq.s32.totalorder %v336, %v312
        %vm369 = vcmp.eq.s32.totalorder %v339, %v312
        %vm370 = vcmp.eq.s32.totalorder %v342, %v312
        %vm371 = vcmp.eq.s32.totalorder %v345, %v312
        %vm372 = vcmp.eq.s32.totalorder %v348, %v312
        %vm373 = vcmp.eq.s32.totalorder %v351, %v312
        %vm374 = vcmp.eq.s32.totalorder %v354, %v312
        %vm375 = vcmp.eq.s32.totalorder %v357, %v312
        %vm376 = vcmp.eq.s32.totalorder %v360, %v312
        %v377 = vsel %vm361, 1, 0
        %v378 = vsel %vm362, 1, 0
        %v379 = vsel %vm363, 1, 0
        %v380 = vsel %vm364, 1, 0
        %v381 = vsel %vm365, 1, 0
        %v382 = vsel %vm366, 1, 0
        %v383 = vsel %vm367, 1, 0
        %v384 = vsel %vm368, 1, 0
        %v385 = vsel %vm369, 1, 0
        %v386 = vsel %vm370, 1, 0
        %v387 = vsel %vm371, 1, 0
        %v388 = vsel %vm372, 1, 0
        %v389 = vsel %vm373, 1, 0
        %v390 = vsel %vm374, 1, 0
        %v391 = vsel %vm375, 1, 0
        %v392 = vsel %vm376, 1, 0
        %v393 = vcvt.s32.f32 %v377
        %v394 = vcvt.s32.f32 %v378
        %v395 = vcvt.s32.f32 %v379
        %v396 = vcvt.s32.f32 %v380
        %v397 = vcvt.s32.f32 %v381
        %v398 = vcvt.s32.f32 %v382
        %v399 = vcvt.s32.f32 %v383
        %v400 = vcvt.s32.f32 %v384
        %v401 = vcvt.s32.f32 %v385
        %v402 = vcvt.s32.f32 %v386
        %v403 = vcvt.s32.f32 %v387
        %v404 = vcvt.s32.f32 %v388
        %v405 = vcvt.s32.f32 %v389
        %v406 = vcvt.s32.f32 %v390
        %v407 = vcvt.s32.f32 %v391
        %v408 = vcvt.s32.f32 %v392
        %v409 = vpack.c.bf16 %v394, %v393
        %v410 = vpack.c.bf16 %v396, %v395
        %v411 = vpack.c.bf16 %v398, %v397
        %v412 = vpack.c.bf16 %v400, %v399
        %v413 = vpack.c.bf16 %v402, %v401
        %v414 = vpack.c.bf16 %v404, %v403
        %v415 = vpack.c.bf16 %v406, %v405
        %v416 = vpack.c.bf16 %v408, %v407
        %v419 = vunpack.c.l.b16 %v266
        %v420 = vunpack.c.l.b16 %v267
        %v421 = vpack.c.b16 %v420, %v419
        %vm423 = vcmask 130048
        %v425 = vsel %vm423, %v409, 0
        %v428 = vsel %vm423, %v410, 0
        %v431 = vsel %vm423, %v411, 0
        %v434 = vsel %vm423, %v412, 0
        %v437 = vsel %vm423, %v413, 0
        %v440 = vsel %vm423, %v414, 0
        %v443 = vsel %vm423, %v415, 0
        %v446 = vsel %vm423, %v416, 0
        %448 = vmatprep.subr.bf16.mxu0 0
        %449 = vmatpush1.bf16.msra.mxu0 0
        %450 = vmatprep.subr.bf16.mxu0 0
        %451 = vmatpush1.bf16.msra.mxu0 0
        %452 = vmatprep.subr.bf16.mxu0 0
        %453 = vmatpush1.bf16.msra.mxu0 0
        %454 = vmatprep.subr.bf16.mxu0 0
        %455 = vmatpush1.bf16.msra.mxu0 0
        %456 = vmatprep.subr.bf16.mxu0 0
        %457 = vmatpush1.bf16.msra.mxu0 0
        %458 = vmatprep.subr.bf16.mxu0 0
        %459 = vmatpush1.bf16.msra.mxu0 0
        %460 = vmatprep.subr.bf16.mxu0 0
        %461 = vmatpush1.bf16.msra.mxu0 0
        %462 = vmatprep.subr.bf16.mxu0 0
        %463 = vmatpush1.bf16.msra.mxu0 %v421
        %464 = vmatprep.subr.bf16.mxu0 0
        %465 = vmatpush2.bf16.msra.mxu0 0
        %466 = vmatprep.subr.bf16.mxu0 0
        %467 = vmatpush2.bf16.msra.mxu0 0
        %468 = vmatprep.subr.bf16.mxu0 0
        %469 = vmatpush2.bf16.msra.mxu0 0
        %470 = vmatprep.subr.bf16.mxu0 0
        %471 = vmatpush2.bf16.msra.mxu0 0
        %472 = vmatprep.subr.bf16.mxu0 0
        %473 = vmatpush2.bf16.msra.mxu0 0
        %474 = vmatprep.subr.bf16.mxu0 0
        %475 = vmatpush2.bf16.msra.mxu0 0
        %476 = vmatprep.subr.bf16.mxu0 0
        %477 = vmatpush2.bf16.msra.mxu0 0
        %478 = vmatprep.subr.bf16.mxu0 0
        %479 = vmatpush2.bf16.msra.mxu0 0
        %480 = vmatprep.mubr.bf16.mxu0 0
        %481 = vmatmul.mubr.bf16.gmra.mxu0 %v425
        %v482 = vpop.f32.mrf.mxu0
        %v483 = vadd.f32 0.0, %v482
        %v484 = vpop.f32.mrf.mxu0
        %v485 = vpop.f32.mrf.mxu0
        %v486 = vadd.f32 0.0, %v485
        %v487 = vpop.f32.mrf.mxu0
        %488 = vmatprep.mubr.bf16.mxu0 0
        %489 = vmatmul.mubr.bf16.gmra.mxu0 %v428
        %v490 = vpop.f32.mrf.mxu0
        %v491 = vadd.f32 0.0, %v490
        %v492 = vpop.f32.mrf.mxu0
        %v493 = vpop.f32.mrf.mxu0
        %v494 = vadd.f32 0.0, %v493
        %v495 = vpop.f32.mrf.mxu0
        %496 = vmatprep.mubr.bf16.mxu0 0
        %497 = vmatmul.mubr.bf16.gmra.mxu0 %v431
        %v498 = vpop.f32.mrf.mxu0
        %v499 = vadd.f32 0.0, %v498
        %v500 = vpop.f32.mrf.mxu0
        %v501 = vpop.f32.mrf.mxu0
        %v502 = vadd.f32 0.0, %v501
        %v503 = vpop.f32.mrf.mxu0
        %504 = vmatprep.mubr.bf16.mxu0 0
        %505 = vmatmul.mubr.bf16.gmra.mxu0 %v434
        %v506 = vpop.f32.mrf.mxu0
        %v507 = vadd.f32 0.0, %v506
        %v508 = vpop.f32.mrf.mxu0
        %v509 = vpop.f32.mrf.mxu0
        %v510 = vadd.f32 0.0, %v509
        %v511 = vpop.f32.mrf.mxu0
        %512 = vmatprep.mubr.bf16.mxu0 0
        %513 = vmatmul.mubr.bf16.gmra.mxu0 %v437
        %v514 = vpop.f32.mrf.mxu0
        %v515 = vadd.f32 0.0, %v514
        %v516 = vpop.f32.mrf.mxu0
        %v517 = vpop.f32.mrf.mxu0
        %v518 = vadd.f32 0.0, %v517
        %v519 = vpop.f32.mrf.mxu0
        %520 = vmatprep.mubr.bf16.mxu0 0
        %521 = vmatmul.mubr.bf16.gmra.mxu0 %v440
        %v522 = vpop.f32.mrf.mxu0
        %v523 = vadd.f32 0.0, %v522
        %v524 = vpop.f32.mrf.mxu0
        %v525 = vpop.f32.mrf.mxu0
        %v526 = vadd.f32 0.0, %v525
        %v527 = vpop.f32.mrf.mxu0
        %528 = vmatprep.mubr.bf16.mxu0 0
        %529 = vmatmul.mubr.bf16.gmra.mxu0 %v443
        %v530 = vpop.f32.mrf.mxu0
        %v531 = vadd.f32 0.0, %v530
        %v532 = vpop.f32.mrf.mxu0
        %v533 = vpop.f32.mrf.mxu0
        %v534 = vadd.f32 0.0, %v533
        %v535 = vpop.f32.mrf.mxu0
        %536 = vmatprep.mubr.bf16.mxu0 0
        %537 = vmatmul.mubr.bf16.gmra.mxu0 %v446
        %v538 = vpop.f32.mrf.mxu0
        %v539 = vadd.f32 0.0, %v538
        %v540 = vpop.f32.mrf.mxu0
        %v541 = vpop.f32.mrf.mxu0
        %v542 = vadd.f32 0.0, %v541
        %v543 = vpop.f32.mrf.mxu0
        %544 = vdwg.mxu0
        %v545 = vld [vmem:[%s257] sm:$0xff]
        %v546 = vld [vmem:[%s257 + $0x8] sm:$0xff]
        %v547 = vld [vmem:[%s257 + $0x10] sm:$0xff]
        %v548 = vld [vmem:[%s257 + $0x18] sm:$0xff]
        %v549 = vld [vmem:[%s257 + $0x20] sm:$0xff]
        %v550 = vld [vmem:[%s257 + $0x28] sm:$0xff]
        %v551 = vld [vmem:[%s257 + $0x30] sm:$0xff]
        %v552 = vld [vmem:[%s257 + $0x38] sm:$0xff]
        %v553 = vld [vmem:[%s257 + $0x40] sm:$0xff]
        %v554 = vld [vmem:[%s257 + $0x48] sm:$0xff]
        %v555 = vld [vmem:[%s257 + $0x50] sm:$0xff]
        %v556 = vld [vmem:[%s257 + $0x58] sm:$0xff]
        %v557 = vld [vmem:[%s257 + $0x60] sm:$0xff]
        %v558 = vld [vmem:[%s257 + $0x68] sm:$0xff]
        %v559 = vld [vmem:[%s257 + $0x70] sm:$0xff]
        %v560 = vld [vmem:[%s257 + $0x78] sm:$0xff]
        %561 = vset.pattern.permute.xlu0 0
        %562 = vperm.xlu0 %561, %v545
        %v563 = vpop.permute.xlu0 %562
        %564 = vset.pattern.permute.xlu0 0
        %565 = vperm.xlu0 %564, %v546
        %v566 = vpop.permute.xlu0 %565
        %567 = vset.pattern.permute.xlu0 0
        %568 = vperm.xlu0 %567, %v547
        %v569 = vpop.permute.xlu0 %568
        %570 = vset.pattern.permute.xlu0 0
        %571 = vperm.xlu0 %570, %v548
        %v572 = vpop.permute.xlu0 %571
        %573 = vset.pattern.permute.xlu0 0
        %574 = vperm.xlu0 %573, %v549
        %v575 = vpop.permute.xlu0 %574
        %576 = vset.pattern.permute.xlu0 0
        %577 = vperm.xlu0 %576, %v550
        %v578 = vpop.permute.xlu0 %577
        %579 = vset.pattern.permute.xlu0 0
        %580 = vperm.xlu0 %579, %v551
        %v581 = vpop.permute.xlu0 %580
        %582 = vset.pattern.permute.xlu0 0
        %583 = vperm.xlu0 %582, %v552
        %v584 = vpop.permute.xlu0 %583
        %585 = vset.pattern.permute.xlu0 0
        %586 = vperm.xlu0 %585, %v553
        %v587 = vpop.permute.xlu0 %586
        %588 = vset.pattern.permute.xlu0 0
        %589 = vperm.xlu0 %588, %v554
        %v590 = vpop.permute.xlu0 %589
        %591 = vset.pattern.permute.xlu0 0
        %592 = vperm.xlu0 %591, %v555
        %v593 = vpop.permute.xlu0 %592
        %594 = vset.pattern.permute.xlu0 0
        %595 = vperm.xlu0 %594, %v556
        %v596 = vpop.permute.xlu0 %595
        %597 = vset.pattern.permute.xlu0 0
        %598 = vperm.xlu0 %597, %v557
        %v599 = vpop.permute.xlu0 %598
        %600 = vset.pattern.permute.xlu0 0
        %601 = vperm.xlu0 %600, %v558
        %v602 = vpop.permute.xlu0 %601
        %603 = vset.pattern.permute.xlu0 0
        %604 = vperm.xlu0 %603, %v559
        %v605 = vpop.permute.xlu0 %604
        %606 = vset.pattern.permute.xlu0 0
        %607 = vperm.xlu0 %606, %v560
        %v608 = vpop.permute.xlu0 %607
        %vm609 = vcmp.eq.s32.totalorder %v563, %v312
        %vm610 = vcmp.eq.s32.totalorder %v566, %v312
        %vm611 = vcmp.eq.s32.totalorder %v569, %v312
        %vm612 = vcmp.eq.s32.totalorder %v572, %v312
        %vm613 = vcmp.eq.s32.totalorder %v575, %v312
        %vm614 = vcmp.eq.s32.totalorder %v578, %v312
        %vm615 = vcmp.eq.s32.totalorder %v581, %v312
        %vm616 = vcmp.eq.s32.totalorder %v584, %v312
        %vm617 = vcmp.eq.s32.totalorder %v587, %v312
        %vm618 = vcmp.eq.s32.totalorder %v590, %v312
        %vm619 = vcmp.eq.s32.totalorder %v593, %v312
        %vm620 = vcmp.eq.s32.totalorder %v596, %v312
        %vm621 = vcmp.eq.s32.totalorder %v599, %v312
        %vm622 = vcmp.eq.s32.totalorder %v602, %v312
        %vm623 = vcmp.eq.s32.totalorder %v605, %v312
        %vm624 = vcmp.eq.s32.totalorder %v608, %v312
        %v625 = vsel %vm609, 1, 0
        %v626 = vsel %vm610, 1, 0
        %v627 = vsel %vm611, 1, 0
        %v628 = vsel %vm612, 1, 0
        %v629 = vsel %vm613, 1, 0
        %v630 = vsel %vm614, 1, 0
        %v631 = vsel %vm615, 1, 0
        %v632 = vsel %vm616, 1, 0
        %v633 = vsel %vm617, 1, 0
        %v634 = vsel %vm618, 1, 0
        %v635 = vsel %vm619, 1, 0
        %v636 = vsel %vm620, 1, 0
        %v637 = vsel %vm621, 1, 0
        %v638 = vsel %vm622, 1, 0
        %v639 = vsel %vm623, 1, 0
        %v640 = vsel %vm624, 1, 0
        %v641 = vcvt.s32.f32 %v625
        %v642 = vcvt.s32.f32 %v626
        %v643 = vcvt.s32.f32 %v627
        %v644 = vcvt.s32.f32 %v628
        %v645 = vcvt.s32.f32 %v629
        %v646 = vcvt.s32.f32 %v630
        %v647 = vcvt.s32.f32 %v631
        %v648 = vcvt.s32.f32 %v632
        %v649 = vcvt.s32.f32 %v633
        %v650 = vcvt.s32.f32 %v634
        %v651 = vcvt.s32.f32 %v635
        %v652 = vcvt.s32.f32 %v636
        %v653 = vcvt.s32.f32 %v637
        %v654 = vcvt.s32.f32 %v638
        %v655 = vcvt.s32.f32 %v639
        %v656 = vcvt.s32.f32 %v640
        %v657 = vpack.c.bf16 %v642, %v641
        %v658 = vpack.c.bf16 %v644, %v643
        %v659 = vpack.c.bf16 %v646, %v645
        %v660 = vpack.c.bf16 %v648, %v647
        %v661 = vpack.c.bf16 %v650, %v649
        %v662 = vpack.c.bf16 %v652, %v651
        %v663 = vpack.c.bf16 %v654, %v653
        %v664 = vpack.c.bf16 %v656, %v655
        %v667 = vunpack.c.l.b16 %v264
        %v668 = vunpack.c.l.b16 %v265
        %v669 = vpack.c.b16 %v668, %v667
        %v672 = vsel %vm423, %v657, 0
        %v675 = vsel %vm423, %v658, 0
        %v678 = vsel %vm423, %v659, 0
        %v681 = vsel %vm423, %v660, 0
        %v684 = vsel %vm423, %v661, 0
        %v687 = vsel %vm423, %v662, 0
        %v690 = vsel %vm423, %v663, 0
        %v693 = vsel %vm423, %v664, 0
        %695 = vmatprep.subr.bf16.mxu0 0
        %696 = vmatpush1.bf16.msra.mxu0 0
        %697 = vmatprep.subr.bf16.mxu0 0
        %698 = vmatpush1.bf16.msra.mxu0 0
        %699 = vmatprep.subr.bf16.mxu0 0
        %700 = vmatpush1.bf16.msra.mxu0 0
        %701 = vmatprep.subr.bf16.mxu0 0
        %702 = vmatpush1.bf16.msra.mxu0 0
        %703 = vmatprep.subr.bf16.mxu0 0
        %704 = vmatpush1.bf16.msra.mxu0 0
        %705 = vmatprep.subr.bf16.mxu0 0
        %706 = vmatpush1.bf16.msra.mxu0 0
        %707 = vmatprep.subr.bf16.mxu0 0
        %708 = vmatpush1.bf16.msra.mxu0 0
        %709 = vmatprep.subr.bf16.mxu0 0
        %710 = vmatpush1.bf16.msra.mxu0 %v669
        %711 = vmatprep.subr.bf16.mxu0 0
        %712 = vmatpush2.bf16.msra.mxu0 0
        %713 = vmatprep.subr.bf16.mxu0 0
        %714 = vmatpush2.bf16.msra.mxu0 0
        %715 = vmatprep.subr.bf16.mxu0 0
        %716 = vmatpush2.bf16.msra.mxu0 0
        %717 = vmatprep.subr.bf16.mxu0 0
        %718 = vmatpush2.bf16.msra.mxu0 0
        %719 = vmatprep.subr.bf16.mxu0 0
        %720 = vmatpush2.bf16.msra.mxu0 0
        %721 = vmatprep.subr.bf16.mxu0 0
        %722 = vmatpush2.bf16.msra.mxu0 0
        %723 = vmatprep.subr.bf16.mxu0 0
        %724 = vmatpush2.bf16.msra.mxu0 0
        %725 = vmatprep.subr.bf16.mxu0 0
        %726 = vmatpush2.bf16.msra.mxu0 0
        %727 = vmatprep.mubr.bf16.mxu0 0
        %728 = vmatmul.mubr.bf16.gmra.mxu0 %v672
        %v729 = vpop.f32.mrf.mxu0
        %v730 = vadd.f32 0.0, %v729
        %v731 = vpop.f32.mrf.mxu0
        %v732 = vpop.f32.mrf.mxu0
        %v733 = vadd.f32 0.0, %v732
        %v734 = vpop.f32.mrf.mxu0
        %735 = vmatprep.mubr.bf16.mxu0 0
        %736 = vmatmul.mubr.bf16.gmra.mxu0 %v675
        %v737 = vpop.f32.mrf.mxu0
        %v738 = vadd.f32 0.0, %v737
        %v739 = vpop.f32.mrf.mxu0
        %v740 = vpop.f32.mrf.mxu0
        %v741 = vadd.f32 0.0, %v740
        %v742 = vpop.f32.mrf.mxu0
        %743 = vmatprep.mubr.bf16.mxu0 0
        %744 = vmatmul.mubr.bf16.gmra.mxu0 %v678
        %v745 = vpop.f32.mrf.mxu0
        %v746 = vadd.f32 0.0, %v745
        %v747 = vpop.f32.mrf.mxu0
        %v748 = vpop.f32.mrf.mxu0
        %v749 = vadd.f32 0.0, %v748
        %v750 = vpop.f32.mrf.mxu0
        %751 = vmatprep.mubr.bf16.mxu0 0
        %752 = vmatmul.mubr.bf16.gmra.mxu0 %v681
        %v753 = vpop.f32.mrf.mxu0
        %v754 = vadd.f32 0.0, %v753
        %v755 = vpop.f32.mrf.mxu0
        %v756 = vpop.f32.mrf.mxu0
        %v757 = vadd.f32 0.0, %v756
        %v758 = vpop.f32.mrf.mxu0
        %759 = vmatprep.mubr.bf16.mxu0 0
        %760 = vmatmul.mubr.bf16.gmra.mxu0 %v684
        %v761 = vpop.f32.mrf.mxu0
        %v762 = vadd.f32 0.0, %v761
        %v763 = vpop.f32.mrf.mxu0
        %v764 = vpop.f32.mrf.mxu0
        %v765 = vadd.f32 0.0, %v764
        %v766 = vpop.f32.mrf.mxu0
        %767 = vmatprep.mubr.bf16.mxu0 0
        %768 = vmatmul.mubr.bf16.gmra.mxu0 %v687
        %v769 = vpop.f32.mrf.mxu0
        %v770 = vadd.f32 0.0, %v769
        %v771 = vpop.f32.mrf.mxu0
        %v772 = vpop.f32.mrf.mxu0
        %v773 = vadd.f32 0.0, %v772
        %v774 = vpop.f32.mrf.mxu0
        %775 = vmatprep.mubr.bf16.mxu0 0
        %776 = vmatmul.mubr.bf16.gmra.mxu0 %v690
        %v777 = vpop.f32.mrf.mxu0
        %v778 = vadd.f32 0.0, %v777
        %v779 = vpop.f32.mrf.mxu0
        %v780 = vpop.f32.mrf.mxu0
        %v781 = vadd.f32 0.0, %v780
        %v782 = vpop.f32.mrf.mxu0
        %783 = vmatprep.mubr.bf16.mxu0 0
        %784 = vmatmul.mubr.bf16.gmra.mxu0 %v693
        %v785 = vpop.f32.mrf.mxu0
        %v786 = vpop.f32.mrf.mxu0
        %v787 = vpop.f32.mrf.mxu0
        %v788 = vpop.f32.mrf.mxu0
        %789 = vdwg.mxu0
        %v794 = vunpack.c.l.b16 %v268
        %v795 = vunpack.c.l.b16 %v269
        %v796 = vunpack.c.l.b16 %v270
        %v797 = vunpack.c.l.b16 %v271
        %v798 = vpack.c.b16 %v795, %v794
        %v799 = vpack.c.b16 %v797, %v796
        %vm802 = vcmask 261120
        %v804 = vsel %vm802, 0, 0
        %806 = vmatprep.subr.bf16.mxu0 0
        %807 = vmatpush1.bf16.msra.mxu0 0
        %808 = vmatprep.subr.bf16.mxu0 0
        %809 = vmatpush1.bf16.msra.mxu0 0
        %810 = vmatprep.subr.bf16.mxu0 0
        %811 = vmatpush1.bf16.msra.mxu0 0
        %812 = vmatprep.subr.bf16.mxu0 0
        %813 = vmatpush1.bf16.msra.mxu0 0
        %814 = vmatprep.subr.bf16.mxu0 0
        %815 = vmatpush1.bf16.msra.mxu0 0
        %816 = vmatprep.subr.bf16.mxu0 0
        %817 = vmatpush1.bf16.msra.mxu0 0
        %818 = vmatprep.subr.bf16.mxu0 0
        %819 = vmatpush1.bf16.msra.mxu0 %v799
        %820 = vmatprep.subr.bf16.mxu0 0
        %821 = vmatpush1.bf16.msra.mxu0 %v798
        %822 = vmatprep.subr.bf16.mxu0 0
        %823 = vmatpush2.bf16.msra.mxu0 0
        %824 = vmatprep.subr.bf16.mxu0 0
        %825 = vmatpush2.bf16.msra.mxu0 0
        %826 = vmatprep.subr.bf16.mxu0 0
        %827 = vmatpush2.bf16.msra.mxu0 0
        %828 = vmatprep.subr.bf16.mxu0 0
        %829 = vmatpush2.bf16.msra.mxu0 0
        %830 = vmatprep.subr.bf16.mxu0 0
        %831 = vmatpush2.bf16.msra.mxu0 0
        %832 = vmatprep.subr.bf16.mxu0 0
        %833 = vmatpush2.bf16.msra.mxu0 0
        %834 = vmatprep.subr.bf16.mxu0 0
        %835 = vmatpush2.bf16.msra.mxu0 0
        %836 = vmatprep.subr.bf16.mxu0 0
        %837 = vmatpush2.bf16.msra.mxu0 0
        %838 = vmatprep.mubr.bf16.mxu0 0
        %839 = vmatmul.mubr.bf16.gmra.mxu0 %v804
        %v840 = vpop.f32.mrf.mxu0
        %v841 = vadd.f32 %v286, %v840
        %v842 = vpop.f32.mrf.mxu0
        %v843 = vpop.f32.mrf.mxu0
        %v844 = vadd.f32 %v286, %v843
        %v845 = vpop.f32.mrf.mxu0
        %846 = vdwg.mxu0
        %v847 = vadd.f32 %v483, %v841
        %v848 = vadd.f32 %v486, %v844
        %v849 = vxor.u32 %v847, 2147483648
        %v850 = vxor.u32 %v848, 2147483648
        %v851 = vmul.f32 %v849, 1.442695
        %v852 = vpow.pop %v851
        %v853 = vmul.f32 %v850, 1.442695
        %v854 = vpow.pop %v853
        %v855 = vadd.f32 %v852, 1.0
        %v856 = vadd.f32 %v854, 1.0
        %v857 = vrcp.pop %v855
        %v858 = vmul.f32 1.0, %v857
        %v859 = vrcp.pop %v856
        %v860 = vmul.f32 1.0, %v859
        %863 = vrot.lane.b32.xlu0 %v841, 64
        %v864 = vpop.permute.xlu0 %863
        %865 = vrot.lane.b32.xlu0 %v844, 64
        %v866 = vpop.permute.xlu0 %865
        %v869 = vmul.f32 %v858, %v864
        %v870 = vmul.f32 %v860, %v866
        %873 = vrot.lane.b32.xlu0 %v869, 64
        %v874 = vpop.permute.xlu0 %873
        %875 = vrot.lane.b32.xlu0 %v870, 64
        %v876 = vpop.permute.xlu0 %875
        %v879 = vadd.f32 %v483, %v874
        %v880 = vadd.f32 %v486, %v876
        %v881 = vtanh.pop %v879
        %v882 = vtanh.pop %v880
        %v883 = vsub.f32 1.0, %v858
        %v884 = vsub.f32 1.0, %v860
        %887 = vrot.lane.b32.xlu0 %v881, 96
        %v888 = vpop.permute.xlu0 %887
        %889 = vrot.lane.b32.xlu0 %v882, 96
        %v890 = vpop.permute.xlu0 %889
        %v893 = vmul.f32 %v883, %v888
        %v894 = vmul.f32 %v884, %v890
        %v895 = vmul.f32 %v858, 0.0
        %v896 = vmul.f32 %v860, 0.0
        %v897 = vadd.f32 %v893, %v895
        %v898 = vadd.f32 %v894, %v896
        %v899 = vpack.c.bf16 %v898, %v897
        %901 = vrot.lane.b32.xlu0 %v899, 96
        %v902 = vpop.permute.xlu0 %901
        %v904 = vsel %vm802, %v902, 0
        %906 = vmatprep.subr.bf16.mxu0 0
        %907 = vmatpush1.bf16.msra.mxu0 0
        %908 = vmatprep.subr.bf16.mxu0 0
        %909 = vmatpush1.bf16.msra.mxu0 0
        %910 = vmatprep.subr.bf16.mxu0 0
        %911 = vmatpush1.bf16.msra.mxu0 0
        %912 = vmatprep.subr.bf16.mxu0 0
        %913 = vmatpush1.bf16.msra.mxu0 0
        %914 = vmatprep.subr.bf16.mxu0 0
        %915 = vmatpush1.bf16.msra.mxu0 0
        %916 = vmatprep.subr.bf16.mxu0 0
        %917 = vmatpush1.bf16.msra.mxu0 0
        %918 = vmatprep.subr.bf16.mxu0 0
        %919 = vmatpush1.bf16.msra.mxu0 %v799
        %920 = vmatprep.subr.bf16.mxu0 0
        %921 = vmatpush1.bf16.msra.mxu0 %v798
        %922 = vmatprep.subr.bf16.mxu0 0
        %923 = vmatpush2.bf16.msra.mxu0 0
        %924 = vmatprep.subr.bf16.mxu0 0
        %925 = vmatpush2.bf16.msra.mxu0 0
        %926 = vmatprep.subr.bf16.mxu0 0
        %927 = vmatpush2.bf16.msra.mxu0 0
        %928 = vmatprep.subr.bf16.mxu0 0
        %929 = vmatpush2.bf16.msra.mxu0 0
        %930 = vmatprep.subr.bf16.mxu0 0
        %931 = vmatpush2.bf16.msra.mxu0 0
        %932 = vmatprep.subr.bf16.mxu0 0
        %933 = vmatpush2.bf16.msra.mxu0 0
        %934 = vmatprep.subr.bf16.mxu0 0
        %935 = vmatpush2.bf16.msra.mxu0 0
        %936 = vmatprep.subr.bf16.mxu0 0
        %937 = vmatpush2.bf16.msra.mxu0 0
        %938 = vmatprep.mubr.bf16.mxu0 0
        %939 = vmatmul.mubr.bf16.gmra.mxu0 %v904
        %v940 = vpop.f32.mrf.mxu0
        %v941 = vadd.f32 %v286, %v940
        %v942 = vpop.f32.mrf.mxu0
        %v943 = vpop.f32.mrf.mxu0
        %v944 = vadd.f32 %v286, %v943
        %v945 = vpop.f32.mrf.mxu0
        %946 = vdwg.mxu0
        %v947 = vadd.f32 %v491, %v941
        %v948 = vadd.f32 %v494, %v944
        %v949 = vxor.u32 %v947, 2147483648
        %v950 = vxor.u32 %v948, 2147483648
        %v951 = vmul.f32 %v949, 1.442695
        %v952 = vpow.pop %v951
        %v953 = vmul.f32 %v950, 1.442695
        %v954 = vpow.pop %v953
        %v955 = vadd.f32 %v952, 1.0
        %v956 = vadd.f32 %v954, 1.0
        %v957 = vrcp.pop %v955
        %v958 = vmul.f32 1.0, %v957
        %v959 = vrcp.pop %v956
        %v960 = vmul.f32 1.0, %v959
        %963 = vrot.lane.b32.xlu0 %v941, 64
        %v964 = vpop.permute.xlu0 %963
        %965 = vrot.lane.b32.xlu0 %v944, 64
        %v966 = vpop.permute.xlu0 %965
        %v969 = vmul.f32 %v958, %v964
        %v970 = vmul.f32 %v960, %v966
        %973 = vrot.lane.b32.xlu0 %v969, 64
        %v974 = vpop.permute.xlu0 %973
        %975 = vrot.lane.b32.xlu0 %v970, 64
        %v976 = vpop.permute.xlu0 %975
        %v979 = vadd.f32 %v491, %v974
        %v980 = vadd.f32 %v494, %v976
        %v981 = vtanh.pop %v979
        %v982 = vtanh.pop %v980
        %v983 = vsub.f32 1.0, %v958
        %v984 = vsub.f32 1.0, %v960
        %987 = vrot.lane.b32.xlu0 %v981, 96
        %v988 = vpop.permute.xlu0 %987
        %989 = vrot.lane.b32.xlu0 %v982, 96
        %v990 = vpop.permute.xlu0 %989
        %v993 = vmul.f32 %v983, %v988
        %v994 = vmul.f32 %v984, %v990
        %v995 = vmul.f32 %v958, %v897
        %v996 = vmul.f32 %v960, %v898
        %v997 = vadd.f32 %v993, %v995
        %v998 = vadd.f32 %v994, %v996
        %v999 = vpack.c.bf16 %v998, %v997
        %1001 = vrot.lane.b32.xlu0 %v999, 96
        %v1002 = vpop.permute.xlu0 %1001
        %v1004 = vsel %vm802, %v1002, 0
        %1006 = vmatprep.subr.bf16.mxu0 0
        %1007 = vmatpush1.bf16.msra.mxu0 0
        %1008 = vmatprep.subr.bf16.mxu0 0
        %1009 = vmatpush1.bf16.msra.mxu0 0
        %1010 = vmatprep.subr.bf16.mxu0 0
        %1011 = vmatpush1.bf16.msra.mxu0 0
        %1012 = vmatprep.subr.bf16.mxu0 0
        %1013 = vmatpush1.bf16.msra.mxu0 0
        %1014 = vmatprep.subr.bf16.mxu0 0
        %1015 = vmatpush1.bf16.msra.mxu0 0
        %1016 = vmatprep.subr.bf16.mxu0 0
        %1017 = vmatpush1.bf16.msra.mxu0 0
        %1018 = vmatprep.subr.bf16.mxu0 0
        %1019 = vmatpush1.bf16.msra.mxu0 %v799
        %1020 = vmatprep.subr.bf16.mxu0 0
        %1021 = vmatpush1.bf16.msra.mxu0 %v798
        %1022 = vmatprep.subr.bf16.mxu0 0
        %1023 = vmatpush2.bf16.msra.mxu0 0
        %1024 = vmatprep.subr.bf16.mxu0 0
        %1025 = vmatpush2.bf16.msra.mxu0 0
        %1026 = vmatprep.subr.bf16.mxu0 0
        %1027 = vmatpush2.bf16.msra.mxu0 0
        %1028 = vmatprep.subr.bf16.mxu0 0
        %1029 = vmatpush2.bf16.msra.mxu0 0
        %1030 = vmatprep.subr.bf16.mxu0 0
        %1031 = vmatpush2.bf16.msra.mxu0 0
        %1032 = vmatprep.subr.bf16.mxu0 0
        %1033 = vmatpush2.bf16.msra.mxu0 0
        %1034 = vmatprep.subr.bf16.mxu0 0
        %1035 = vmatpush2.bf16.msra.mxu0 0
        %1036 = vmatprep.subr.bf16.mxu0 0
        %1037 = vmatpush2.bf16.msra.mxu0 0
        %1038 = vmatprep.mubr.bf16.mxu0 0
        %1039 = vmatmul.mubr.bf16.gmra.mxu0 %v1004
        %v1040 = vpop.f32.mrf.mxu0
        %v1041 = vadd.f32 %v286, %v1040
        %v1042 = vpop.f32.mrf.mxu0
        %v1043 = vpop.f32.mrf.mxu0
        %v1044 = vadd.f32 %v286, %v1043
        %v1045 = vpop.f32.mrf.mxu0
        %1046 = vdwg.mxu0
        %v1047 = vadd.f32 %v499, %v1041
        %v1048 = vadd.f32 %v502, %v1044
        %v1049 = vxor.u32 %v1047, 2147483648
        %v1050 = vxor.u32 %v1048, 2147483648
        %v1051 = vmul.f32 %v1049, 1.442695
        %v1052 = vpow.pop %v1051
        %v1053 = vmul.f32 %v1050, 1.442695
        %v1054 = vpow.pop %v1053
        %v1055 = vadd.f32 %v1052, 1.0
        %v1056 = vadd.f32 %v1054, 1.0
        %v1057 = vrcp.pop %v1055
        %v1058 = vmul.f32 1.0, %v1057
        %v1059 = vrcp.pop %v1056
        %v1060 = vmul.f32 1.0, %v1059
        %1063 = vrot.lane.b32.xlu0 %v1041, 64
        %v1064 = vpop.permute.xlu0 %1063
        %1065 = vrot.lane.b32.xlu0 %v1044, 64
        %v1066 = vpop.permute.xlu0 %1065
        %v1069 = vmul.f32 %v1058, %v1064
        %v1070 = vmul.f32 %v1060, %v1066
        %1073 = vrot.lane.b32.xlu0 %v1069, 64
        %v1074 = vpop.permute.xlu0 %1073
        %1075 = vrot.lane.b32.xlu0 %v1070, 64
        %v1076 = vpop.permute.xlu0 %1075
        %v1079 = vadd.f32 %v499, %v1074
        %v1080 = vadd.f32 %v502, %v1076
        %v1081 = vtanh.pop %v1079
        %v1082 = vtanh.pop %v1080
        %v1083 = vsub.f32 1.0, %v1058
        %v1084 = vsub.f32 1.0, %v1060
        %1087 = vrot.lane.b32.xlu0 %v1081, 96
        %v1088 = vpop.permute.xlu0 %1087
        %1089 = vrot.lane.b32.xlu0 %v1082, 96
        %v1090 = vpop.permute.xlu0 %1089
        %v1093 = vmul.f32 %v1083, %v1088
        %v1094 = vmul.f32 %v1084, %v1090
        %v1095 = vmul.f32 %v1058, %v997
        %v1096 = vmul.f32 %v1060, %v998
        %v1097 = vadd.f32 %v1093, %v1095
        %v1098 = vadd.f32 %v1094, %v1096
        %v1099 = vpack.c.bf16 %v1098, %v1097
        %1101 = vrot.lane.b32.xlu0 %v1099, 96
        %v1102 = vpop.permute.xlu0 %1101
        %v1104 = vsel %vm802, %v1102, 0
        %1106 = vmatprep.subr.bf16.mxu0 0
        %1107 = vmatpush1.bf16.msra.mxu0 0
        %1108 = vmatprep.subr.bf16.mxu0 0
        %1109 = vmatpush1.bf16.msra.mxu0 0
        %1110 = vmatprep.subr.bf16.mxu0 0
        %1111 = vmatpush1.bf16.msra.mxu0 0
        %1112 = vmatprep.subr.bf16.mxu0 0
        %1113 = vmatpush1.bf16.msra.mxu0 0
        %1114 = vmatprep.subr.bf16.mxu0 0
        %1115 = vmatpush1.bf16.msra.mxu0 0
        %1116 = vmatprep.subr.bf16.mxu0 0
        %1117 = vmatpush1.bf16.msra.mxu0 0
        %1118 = vmatprep.subr.bf16.mxu0 0
        %1119 = vmatpush1.bf16.msra.mxu0 %v799
        %1120 = vmatprep.subr.bf16.mxu0 0
        %1121 = vmatpush1.bf16.msra.mxu0 %v798
        %1122 = vmatprep.subr.bf16.mxu0 0
        %1123 = vmatpush2.bf16.msra.mxu0 0
        %1124 = vmatprep.subr.bf16.mxu0 0
        %1125 = vmatpush2.bf16.msra.mxu0 0
        %1126 = vmatprep.subr.bf16.mxu0 0
        %1127 = vmatpush2.bf16.msra.mxu0 0
        %1128 = vmatprep.subr.bf16.mxu0 0
        %1129 = vmatpush2.bf16.msra.mxu0 0
        %1130 = vmatprep.subr.bf16.mxu0 0
        %1131 = vmatpush2.bf16.msra.mxu0 0
        %1132 = vmatprep.subr.bf16.mxu0 0
        %1133 = vmatpush2.bf16.msra.mxu0 0
        %1134 = vmatprep.subr.bf16.mxu0 0
        %1135 = vmatpush2.bf16.msra.mxu0 0
        %1136 = vmatprep.subr.bf16.mxu0 0
        %1137 = vmatpush2.bf16.msra.mxu0 0
        %1138 = vmatprep.mubr.bf16.mxu0 0
        %1139 = vmatmul.mubr.bf16.gmra.mxu0 %v1104
        %v1140 = vpop.f32.mrf.mxu0
        %v1141 = vadd.f32 %v286, %v1140
        %v1142 = vpop.f32.mrf.mxu0
        %v1143 = vpop.f32.mrf.mxu0
        %v1144 = vadd.f32 %v286, %v1143
        %v1145 = vpop.f32.mrf.mxu0
        %1146 = vdwg.mxu0
        %v1147 = vadd.f32 %v507, %v1141
        %v1148 = vadd.f32 %v510, %v1144
        %v1149 = vxor.u32 %v1147, 2147483648
        %v1150 = vxor.u32 %v1148, 2147483648
        %v1151 = vmul.f32 %v1149, 1.442695
        %v1152 = vpow.pop %v1151
        %v1153 = vmul.f32 %v1150, 1.442695
        %v1154 = vpow.pop %v1153
        %v1155 = vadd.f32 %v1152, 1.0
        %v1156 = vadd.f32 %v1154, 1.0
        %v1157 = vrcp.pop %v1155
        %v1158 = vmul.f32 1.0, %v1157
        %v1159 = vrcp.pop %v1156
        %v1160 = vmul.f32 1.0, %v1159
        %1163 = vrot.lane.b32.xlu0 %v1141, 64
        %v1164 = vpop.permute.xlu0 %1163
        %1165 = vrot.lane.b32.xlu0 %v1144, 64
        %v1166 = vpop.permute.xlu0 %1165
        %v1169 = vmul.f32 %v1158, %v1164
        %v1170 = vmul.f32 %v1160, %v1166
        %1173 = vrot.lane.b32.xlu0 %v1169, 64
        %v1174 = vpop.permute.xlu0 %1173
        %1175 = vrot.lane.b32.xlu0 %v1170, 64
        %v1176 = vpop.permute.xlu0 %1175
        %v1179 = vadd.f32 %v507, %v1174
        %v1180 = vadd.f32 %v510, %v1176
        %v1181 = vtanh.pop %v1179
        %v1182 = vtanh.pop %v1180
        %v1183 = vsub.f32 1.0, %v1158
        %v1184 = vsub.f32 1.0, %v1160
        %1187 = vrot.lane.b32.xlu0 %v1181, 96
        %v1188 = vpop.permute.xlu0 %1187
        %1189 = vrot.lane.b32.xlu0 %v1182, 96
        %v1190 = vpop.permute.xlu0 %1189
        %v1193 = vmul.f32 %v1183, %v1188
        %v1194 = vmul.f32 %v1184, %v1190
        %v1195 = vmul.f32 %v1158, %v1097
        %v1196 = vmul.f32 %v1160, %v1098
        %v1197 = vadd.f32 %v1193, %v1195
        %v1198 = vadd.f32 %v1194, %v1196
        %v1199 = vpack.c.bf16 %v1198, %v1197
        %1201 = vrot.lane.b32.xlu0 %v1199, 96
        %v1202 = vpop.permute.xlu0 %1201
        %v1204 = vsel %vm802, %v1202, 0
        %1206 = vmatprep.subr.bf16.mxu0 0
        %1207 = vmatpush1.bf16.msra.mxu0 0
        %1208 = vmatprep.subr.bf16.mxu0 0
        %1209 = vmatpush1.bf16.msra.mxu0 0
        %1210 = vmatprep.subr.bf16.mxu0 0
        %1211 = vmatpush1.bf16.msra.mxu0 0
        %1212 = vmatprep.subr.bf16.mxu0 0
        %1213 = vmatpush1.bf16.msra.mxu0 0
        %1214 = vmatprep.subr.bf16.mxu0 0
        %1215 = vmatpush1.bf16.msra.mxu0 0
        %1216 = vmatprep.subr.bf16.mxu0 0
        %1217 = vmatpush1.bf16.msra.mxu0 0
        %1218 = vmatprep.subr.bf16.mxu0 0
        %1219 = vmatpush1.bf16.msra.mxu0 %v799
        %1220 = vmatprep.subr.bf16.mxu0 0
        %1221 = vmatpush1.bf16.msra.mxu0 %v798
        %1222 = vmatprep.subr.bf16.mxu0 0
        %1223 = vmatpush2.bf16.msra.mxu0 0
        %1224 = vmatprep.subr.bf16.mxu0 0
        %1225 = vmatpush2.bf16.msra.mxu0 0
        %1226 = vmatprep.subr.bf16.mxu0 0
        %1227 = vmatpush2.bf16.msra.mxu0 0
        %1228 = vmatprep.subr.bf16.mxu0 0
        %1229 = vmatpush2.bf16.msra.mxu0 0
        %1230 = vmatprep.subr.bf16.mxu0 0
        %1231 = vmatpush2.bf16.msra.mxu0 0
        %1232 = vmatprep.subr.bf16.mxu0 0
        %1233 = vmatpush2.bf16.msra.mxu0 0
        %1234 = vmatprep.subr.bf16.mxu0 0
        %1235 = vmatpush2.bf16.msra.mxu0 0
        %1236 = vmatprep.subr.bf16.mxu0 0
        %1237 = vmatpush2.bf16.msra.mxu0 0
        %1238 = vmatprep.mubr.bf16.mxu0 0
        %1239 = vmatmul.mubr.bf16.gmra.mxu0 %v1204
        %v1240 = vpop.f32.mrf.mxu0
        %v1241 = vadd.f32 %v286, %v1240
        %v1242 = vpop.f32.mrf.mxu0
        %v1243 = vpop.f32.mrf.mxu0
        %v1244 = vadd.f32 %v286, %v1243
        %v1245 = vpop.f32.mrf.mxu0
        %1246 = vdwg.mxu0
        %v1247 = vadd.f32 %v515, %v1241
        %v1248 = vadd.f32 %v518, %v1244
        %v1249 = vxor.u32 %v1247, 2147483648
        %v1250 = vxor.u32 %v1248, 2147483648
        %v1251 = vmul.f32 %v1249, 1.442695
        %v1252 = vpow.pop %v1251
        %v1253 = vmul.f32 %v1250, 1.442695
        %v1254 = vpow.pop %v1253
        %v1255 = vadd.f32 %v1252, 1.0
        %v1256 = vadd.f32 %v1254, 1.0
        %v1257 = vrcp.pop %v1255
        %v1258 = vmul.f32 1.0, %v1257
        %v1259 = vrcp.pop %v1256
        %v1260 = vmul.f32 1.0, %v1259
        %1263 = vrot.lane.b32.xlu0 %v1241, 64
        %v1264 = vpop.permute.xlu0 %1263
        %1265 = vrot.lane.b32.xlu0 %v1244, 64
        %v1266 = vpop.permute.xlu0 %1265
        %v1269 = vmul.f32 %v1258, %v1264
        %v1270 = vmul.f32 %v1260, %v1266
        %1273 = vrot.lane.b32.xlu0 %v1269, 64
        %v1274 = vpop.permute.xlu0 %1273
        %1275 = vrot.lane.b32.xlu0 %v1270, 64
        %v1276 = vpop.permute.xlu0 %1275
        %v1279 = vadd.f32 %v515, %v1274
        %v1280 = vadd.f32 %v518, %v1276
        %v1281 = vtanh.pop %v1279
        %v1282 = vtanh.pop %v1280
        %v1283 = vsub.f32 1.0, %v1258
        %v1284 = vsub.f32 1.0, %v1260
        %1287 = vrot.lane.b32.xlu0 %v1281, 96
        %v1288 = vpop.permute.xlu0 %1287
        %1289 = vrot.lane.b32.xlu0 %v1282, 96
        %v1290 = vpop.permute.xlu0 %1289
        %v1293 = vmul.f32 %v1283, %v1288
        %v1294 = vmul.f32 %v1284, %v1290
        %v1295 = vmul.f32 %v1258, %v1197
        %v1296 = vmul.f32 %v1260, %v1198
        %v1297 = vadd.f32 %v1293, %v1295
        %v1298 = vadd.f32 %v1294, %v1296
        %v1299 = vpack.c.bf16 %v1298, %v1297
        %1301 = vrot.lane.b32.xlu0 %v1299, 96
        %v1302 = vpop.permute.xlu0 %1301
        %v1304 = vsel %vm802, %v1302, 0
        %1306 = vmatprep.subr.bf16.mxu0 0
        %1307 = vmatpush1.bf16.msra.mxu0 0
        %1308 = vmatprep.subr.bf16.mxu0 0
        %1309 = vmatpush1.bf16.msra.mxu0 0
        %1310 = vmatprep.subr.bf16.mxu0 0
        %1311 = vmatpush1.bf16.msra.mxu0 0
        %1312 = vmatprep.subr.bf16.mxu0 0
        %1313 = vmatpush1.bf16.msra.mxu0 0
        %1314 = vmatprep.subr.bf16.mxu0 0
        %1315 = vmatpush1.bf16.msra.mxu0 0
        %1316 = vmatprep.subr.bf16.mxu0 0
        %1317 = vmatpush1.bf16.msra.mxu0 0
        %1318 = vmatprep.subr.bf16.mxu0 0
        %1319 = vmatpush1.bf16.msra.mxu0 %v799
        %1320 = vmatprep.subr.bf16.mxu0 0
        %1321 = vmatpush1.bf16.msra.mxu0 %v798
        %1322 = vmatprep.subr.bf16.mxu0 0
        %1323 = vmatpush2.bf16.msra.mxu0 0
        %1324 = vmatprep.subr.bf16.mxu0 0
        %1325 = vmatpush2.bf16.msra.mxu0 0
        %1326 = vmatprep.subr.bf16.mxu0 0
        %1327 = vmatpush2.bf16.msra.mxu0 0
        %1328 = vmatprep.subr.bf16.mxu0 0
        %1329 = vmatpush2.bf16.msra.mxu0 0
        %1330 = vmatprep.subr.bf16.mxu0 0
        %1331 = vmatpush2.bf16.msra.mxu0 0
        %1332 = vmatprep.subr.bf16.mxu0 0
        %1333 = vmatpush2.bf16.msra.mxu0 0
        %1334 = vmatprep.subr.bf16.mxu0 0
        %1335 = vmatpush2.bf16.msra.mxu0 0
        %1336 = vmatprep.subr.bf16.mxu0 0
        %1337 = vmatpush2.bf16.msra.mxu0 0
        %1338 = vmatprep.mubr.bf16.mxu0 0
        %1339 = vmatmul.mubr.bf16.gmra.mxu0 %v1304
        %v1340 = vpop.f32.mrf.mxu0
        %v1341 = vadd.f32 %v286, %v1340
        %v1342 = vpop.f32.mrf.mxu0
        %v1343 = vpop.f32.mrf.mxu0
        %v1344 = vadd.f32 %v286, %v1343
        %v1345 = vpop.f32.mrf.mxu0
        %1346 = vdwg.mxu0
        %v1347 = vadd.f32 %v523, %v1341
        %v1348 = vadd.f32 %v526, %v1344
        %v1349 = vxor.u32 %v1347, 2147483648
        %v1350 = vxor.u32 %v1348, 2147483648
        %v1351 = vmul.f32 %v1349, 1.442695
        %v1352 = vpow.pop %v1351
        %v1353 = vmul.f32 %v1350, 1.442695
        %v1354 = vpow.pop %v1353
        %v1355 = vadd.f32 %v1352, 1.0
        %v1356 = vadd.f32 %v1354, 1.0
        %v1357 = vrcp.pop %v1355
        %v1358 = vmul.f32 1.0, %v1357
        %v1359 = vrcp.pop %v1356
        %v1360 = vmul.f32 1.0, %v1359
        %1363 = vrot.lane.b32.xlu0 %v1341, 64
        %v1364 = vpop.permute.xlu0 %1363
        %1365 = vrot.lane.b32.xlu0 %v1344, 64
        %v1366 = vpop.permute.xlu0 %1365
        %v1369 = vmul.f32 %v1358, %v1364
        %v1370 = vmul.f32 %v1360, %v1366
        %1373 = vrot.lane.b32.xlu0 %v1369, 64
        %v1374 = vpop.permute.xlu0 %1373
        %1375 = vrot.lane.b32.xlu0 %v1370, 64
        %v1376 = vpop.permute.xlu0 %1375
        %v1379 = vadd.f32 %v523, %v1374
        %v1380 = vadd.f32 %v526, %v1376
        %v1381 = vtanh.pop %v1379
        %v1382 = vtanh.pop %v1380
        %v1383 = vsub.f32 1.0, %v1358
        %v1384 = vsub.f32 1.0, %v1360
        %1387 = vrot.lane.b32.xlu0 %v1381, 96
        %v1388 = vpop.permute.xlu0 %1387
        %1389 = vrot.lane.b32.xlu0 %v1382, 96
        %v1390 = vpop.permute.xlu0 %1389
        %v1393 = vmul.f32 %v1383, %v1388
        %v1394 = vmul.f32 %v1384, %v1390
        %v1395 = vmul.f32 %v1358, %v1297
        %v1396 = vmul.f32 %v1360, %v1298
        %v1397 = vadd.f32 %v1393, %v1395
        %v1398 = vadd.f32 %v1394, %v1396
        %v1399 = vpack.c.bf16 %v1398, %v1397
        %1401 = vrot.lane.b32.xlu0 %v1399, 96
        %v1402 = vpop.permute.xlu0 %1401
        %v1404 = vsel %vm802, %v1402, 0
        %1406 = vmatprep.subr.bf16.mxu0 0
        %1407 = vmatpush1.bf16.msra.mxu0 0
        %1408 = vmatprep.subr.bf16.mxu0 0
        %1409 = vmatpush1.bf16.msra.mxu0 0
        %1410 = vmatprep.subr.bf16.mxu0 0
        %1411 = vmatpush1.bf16.msra.mxu0 0
        %1412 = vmatprep.subr.bf16.mxu0 0
        %1413 = vmatpush1.bf16.msra.mxu0 0
        %1414 = vmatprep.subr.bf16.mxu0 0
        %1415 = vmatpush1.bf16.msra.mxu0 0
        %1416 = vmatprep.subr.bf16.mxu0 0
        %1417 = vmatpush1.bf16.msra.mxu0 0
        %1418 = vmatprep.subr.bf16.mxu0 0
        %1419 = vmatpush1.bf16.msra.mxu0 %v799
        %1420 = vmatprep.subr.bf16.mxu0 0
        %1421 = vmatpush1.bf16.msra.mxu0 %v798
        %1422 = vmatprep.subr.bf16.mxu0 0
        %1423 = vmatpush2.bf16.msra.mxu0 0
        %1424 = vmatprep.subr.bf16.mxu0 0
        %1425 = vmatpush2.bf16.msra.mxu0 0
        %1426 = vmatprep.subr.bf16.mxu0 0
        %1427 = vmatpush2.bf16.msra.mxu0 0
        %1428 = vmatprep.subr.bf16.mxu0 0
        %1429 = vmatpush2.bf16.msra.mxu0 0
        %1430 = vmatprep.subr.bf16.mxu0 0
        %1431 = vmatpush2.bf16.msra.mxu0 0
        %1432 = vmatprep.subr.bf16.mxu0 0
        %1433 = vmatpush2.bf16.msra.mxu0 0
        %1434 = vmatprep.subr.bf16.mxu0 0
        %1435 = vmatpush2.bf16.msra.mxu0 0
        %1436 = vmatprep.subr.bf16.mxu0 0
        %1437 = vmatpush2.bf16.msra.mxu0 0
        %1438 = vmatprep.mubr.bf16.mxu0 0
        %1439 = vmatmul.mubr.bf16.gmra.mxu0 %v1404
        %v1440 = vpop.f32.mrf.mxu0
        %v1441 = vadd.f32 %v286, %v1440
        %v1442 = vpop.f32.mrf.mxu0
        %v1443 = vpop.f32.mrf.mxu0
        %v1444 = vadd.f32 %v286, %v1443
        %v1445 = vpop.f32.mrf.mxu0
        %1446 = vdwg.mxu0
        %v1447 = vadd.f32 %v531, %v1441
        %v1448 = vadd.f32 %v534, %v1444
        %v1449 = vxor.u32 %v1447, 2147483648
        %v1450 = vxor.u32 %v1448, 2147483648
        %v1451 = vmul.f32 %v1449, 1.442695
        %v1452 = vpow.pop %v1451
        %v1453 = vmul.f32 %v1450, 1.442695
        %v1454 = vpow.pop %v1453
        %v1455 = vadd.f32 %v1452, 1.0
        %v1456 = vadd.f32 %v1454, 1.0
        %v1457 = vrcp.pop %v1455
        %v1458 = vmul.f32 1.0, %v1457
        %v1459 = vrcp.pop %v1456
        %v1460 = vmul.f32 1.0, %v1459
        %1463 = vrot.lane.b32.xlu0 %v1441, 64
        %v1464 = vpop.permute.xlu0 %1463
        %1465 = vrot.lane.b32.xlu0 %v1444, 64
        %v1466 = vpop.permute.xlu0 %1465
        %v1469 = vmul.f32 %v1458, %v1464
        %v1470 = vmul.f32 %v1460, %v1466
        %1473 = vrot.lane.b32.xlu0 %v1469, 64
        %v1474 = vpop.permute.xlu0 %1473
        %1475 = vrot.lane.b32.xlu0 %v1470, 64
        %v1476 = vpop.permute.xlu0 %1475
        %v1479 = vadd.f32 %v531, %v1474
        %v1480 = vadd.f32 %v534, %v1476
        %v1481 = vtanh.pop %v1479
        %v1482 = vtanh.pop %v1480
        %v1483 = vsub.f32 1.0, %v1458
        %v1484 = vsub.f32 1.0, %v1460
        %1487 = vrot.lane.b32.xlu0 %v1481, 96
        %v1488 = vpop.permute.xlu0 %1487
        %1489 = vrot.lane.b32.xlu0 %v1482, 96
        %v1490 = vpop.permute.xlu0 %1489
        %v1493 = vmul.f32 %v1483, %v1488
        %v1494 = vmul.f32 %v1484, %v1490
        %v1495 = vmul.f32 %v1458, %v1397
        %v1496 = vmul.f32 %v1460, %v1398
        %v1497 = vadd.f32 %v1493, %v1495
        %v1498 = vadd.f32 %v1494, %v1496
        %v1499 = vpack.c.bf16 %v1498, %v1497
        %1501 = vrot.lane.b32.xlu0 %v1499, 96
        %v1502 = vpop.permute.xlu0 %1501
        %v1504 = vsel %vm802, %v1502, 0
        %1506 = vmatprep.subr.bf16.mxu0 0
        %1507 = vmatpush1.bf16.msra.mxu0 0
        %1508 = vmatprep.subr.bf16.mxu0 0
        %1509 = vmatpush1.bf16.msra.mxu0 0
        %1510 = vmatprep.subr.bf16.mxu0 0
        %1511 = vmatpush1.bf16.msra.mxu0 0
        %1512 = vmatprep.subr.bf16.mxu0 0
        %1513 = vmatpush1.bf16.msra.mxu0 0
        %1514 = vmatprep.subr.bf16.mxu0 0
        %1515 = vmatpush1.bf16.msra.mxu0 0
        %1516 = vmatprep.subr.bf16.mxu0 0
        %1517 = vmatpush1.bf16.msra.mxu0 0
        %1518 = vmatprep.subr.bf16.mxu0 0
        %1519 = vmatpush1.bf16.msra.mxu0 %v799
        %1520 = vmatprep.subr.bf16.mxu0 0
        %1521 = vmatpush1.bf16.msra.mxu0 %v798
        %1522 = vmatprep.subr.bf16.mxu0 0
        %1523 = vmatpush2.bf16.msra.mxu0 0
        %1524 = vmatprep.subr.bf16.mxu0 0
        %1525 = vmatpush2.bf16.msra.mxu0 0
        %1526 = vmatprep.subr.bf16.mxu0 0
        %1527 = vmatpush2.bf16.msra.mxu0 0
        %1528 = vmatprep.subr.bf16.mxu0 0
        %1529 = vmatpush2.bf16.msra.mxu0 0
        %1530 = vmatprep.subr.bf16.mxu0 0
        %1531 = vmatpush2.bf16.msra.mxu0 0
        %1532 = vmatprep.subr.bf16.mxu0 0
        %1533 = vmatpush2.bf16.msra.mxu0 0
        %1534 = vmatprep.subr.bf16.mxu0 0
        %1535 = vmatpush2.bf16.msra.mxu0 0
        %1536 = vmatprep.subr.bf16.mxu0 0
        %1537 = vmatpush2.bf16.msra.mxu0 0
        %1538 = vmatprep.mubr.bf16.mxu0 0
        %1539 = vmatmul.mubr.bf16.gmra.mxu0 %v1504
        %v1540 = vpop.f32.mrf.mxu0
        %v1541 = vadd.f32 %v286, %v1540
        %v1542 = vpop.f32.mrf.mxu0
        %v1543 = vpop.f32.mrf.mxu0
        %v1544 = vadd.f32 %v286, %v1543
        %v1545 = vpop.f32.mrf.mxu0
        %1546 = vdwg.mxu0
        %v1547 = vadd.f32 %v539, %v1541
        %v1548 = vadd.f32 %v542, %v1544
        %v1549 = vxor.u32 %v1547, 2147483648
        %v1550 = vxor.u32 %v1548, 2147483648
        %v1551 = vmul.f32 %v1549, 1.442695
        %v1552 = vpow.pop %v1551
        %v1553 = vmul.f32 %v1550, 1.442695
        %v1554 = vpow.pop %v1553
        %v1555 = vadd.f32 %v1552, 1.0
        %v1556 = vadd.f32 %v1554, 1.0
        %v1557 = vrcp.pop %v1555
        %v1558 = vmul.f32 1.0, %v1557
        %v1559 = vrcp.pop %v1556
        %v1560 = vmul.f32 1.0, %v1559
        %1563 = vrot.lane.b32.xlu0 %v1541, 64
        %v1564 = vpop.permute.xlu0 %1563
        %1565 = vrot.lane.b32.xlu0 %v1544, 64
        %v1566 = vpop.permute.xlu0 %1565
        %v1569 = vmul.f32 %v1558, %v1564
        %v1570 = vmul.f32 %v1560, %v1566
        %1573 = vrot.lane.b32.xlu0 %v1569, 64
        %v1574 = vpop.permute.xlu0 %1573
        %1575 = vrot.lane.b32.xlu0 %v1570, 64
        %v1576 = vpop.permute.xlu0 %1575
        %v1579 = vadd.f32 %v539, %v1574
        %v1580 = vadd.f32 %v542, %v1576
        %v1581 = vtanh.pop %v1579
        %v1582 = vtanh.pop %v1580
        %v1583 = vsub.f32 1.0, %v1558
        %v1584 = vsub.f32 1.0, %v1560
        %1587 = vrot.lane.b32.xlu0 %v1581, 96
        %v1588 = vpop.permute.xlu0 %1587
        %1589 = vrot.lane.b32.xlu0 %v1582, 96
        %v1590 = vpop.permute.xlu0 %1589
        %v1593 = vmul.f32 %v1583, %v1588
        %v1594 = vmul.f32 %v1584, %v1590
        %v1595 = vmul.f32 %v1558, %v1497
        %v1596 = vmul.f32 %v1560, %v1498
        %v1597 = vadd.f32 %v1593, %v1595
        %v1598 = vadd.f32 %v1594, %v1596
        %v1599 = vpack.c.bf16 %v1598, %v1597
        %1601 = vrot.lane.b32.xlu0 %v1599, 96
        %v1602 = vpop.permute.xlu0 %1601
        %v1607 = vunpack.c.l.b16 %v276
        %v1608 = vunpack.c.l.b16 %v277
        %v1609 = vunpack.c.l.b16 %v278
        %v1610 = vunpack.c.l.b16 %v279
        %v1611 = vpack.c.b16 %v1608, %v1607
        %v1612 = vpack.c.b16 %v1610, %v1609
        %v1616 = vsel %vm802, %v1602, 0
        %1618 = vmatprep.subr.bf16.mxu0 0
        %1619 = vmatpush1.bf16.msra.mxu0 0
        %1620 = vmatprep.subr.bf16.mxu0 0
        %1621 = vmatpush1.bf16.msra.mxu0 0
        %1622 = vmatprep.subr.bf16.mxu0 0
        %1623 = vmatpush1.bf16.msra.mxu0 0
        %1624 = vmatprep.subr.bf16.mxu0 0
        %1625 = vmatpush1.bf16.msra.mxu0 0
        %1626 = vmatprep.subr.bf16.mxu0 0
        %1627 = vmatpush1.bf16.msra.mxu0 0
        %1628 = vmatprep.subr.bf16.mxu0 0
        %1629 = vmatpush1.bf16.msra.mxu0 0
        %1630 = vmatprep.subr.bf16.mxu0 0
        %1631 = vmatpush1.bf16.msra.mxu0 %v1612
        %1632 = vmatprep.subr.bf16.mxu0 0
        %1633 = vmatpush1.bf16.msra.mxu0 %v1611
        %1634 = vmatprep.subr.bf16.mxu0 0
        %1635 = vmatpush2.bf16.msra.mxu0 0
        %1636 = vmatprep.subr.bf16.mxu0 0
        %1637 = vmatpush2.bf16.msra.mxu0 0
        %1638 = vmatprep.subr.bf16.mxu0 0
        %1639 = vmatpush2.bf16.msra.mxu0 0
        %1640 = vmatprep.subr.bf16.mxu0 0
        %1641 = vmatpush2.bf16.msra.mxu0 0
        %1642 = vmatprep.subr.bf16.mxu0 0
        %1643 = vmatpush2.bf16.msra.mxu0 0
        %1644 = vmatprep.subr.bf16.mxu0 0
        %1645 = vmatpush2.bf16.msra.mxu0 0
        %1646 = vmatprep.subr.bf16.mxu0 0
        %1647 = vmatpush2.bf16.msra.mxu0 0
        %1648 = vmatprep.subr.bf16.mxu0 0
        %1649 = vmatpush2.bf16.msra.mxu0 0
        %1650 = vmatprep.mubr.bf16.mxu0 0
        %1651 = vmatmul.mubr.bf16.gmra.mxu0 %v1616
        %v1652 = vpop.f32.mrf.mxu0
        %v1653 = vadd.f32 %v294, %v1652
        %v1654 = vpop.f32.mrf.mxu0
        %v1655 = vpop.f32.mrf.mxu0
        %v1656 = vadd.f32 %v294, %v1655
        %v1657 = vpop.f32.mrf.mxu0
        %1658 = vdwg.mxu0
        %v1663 = vunpack.c.l.b16 %v272
        %v1664 = vunpack.c.l.b16 %v273
        %v1665 = vunpack.c.l.b16 %v274
        %v1666 = vunpack.c.l.b16 %v275
        %v1667 = vpack.c.b16 %v1664, %v1663
        %v1668 = vpack.c.b16 %v1666, %v1665
        %1671 = vmatprep.subr.bf16.mxu0 0
        %1672 = vmatpush1.bf16.msra.mxu0 0
        %1673 = vmatprep.subr.bf16.mxu0 0
        %1674 = vmatpush1.bf16.msra.mxu0 0
        %1675 = vmatprep.subr.bf16.mxu0 0
        %1676 = vmatpush1.bf16.msra.mxu0 0
        %1677 = vmatprep.subr.bf16.mxu0 0
        %1678 = vmatpush1.bf16.msra.mxu0 0
        %1679 = vmatprep.subr.bf16.mxu0 0
        %1680 = vmatpush1.bf16.msra.mxu0 0
        %1681 = vmatprep.subr.bf16.mxu0 0
        %1682 = vmatpush1.bf16.msra.mxu0 0
        %1683 = vmatprep.subr.bf16.mxu0 0
        %1684 = vmatpush1.bf16.msra.mxu0 %v1668
        %1685 = vmatprep.subr.bf16.mxu0 0
        %1686 = vmatpush1.bf16.msra.mxu0 %v1667
        %1687 = vmatprep.subr.bf16.mxu0 0
        %1688 = vmatpush2.bf16.msra.mxu0 0
        %1689 = vmatprep.subr.bf16.mxu0 0
        %1690 = vmatpush2.bf16.msra.mxu0 0
        %1691 = vmatprep.subr.bf16.mxu0 0
        %1692 = vmatpush2.bf16.msra.mxu0 0
        %1693 = vmatprep.subr.bf16.mxu0 0
        %1694 = vmatpush2.bf16.msra.mxu0 0
        %1695 = vmatprep.subr.bf16.mxu0 0
        %1696 = vmatpush2.bf16.msra.mxu0 0
        %1697 = vmatprep.subr.bf16.mxu0 0
        %1698 = vmatpush2.bf16.msra.mxu0 0
        %1699 = vmatprep.subr.bf16.mxu0 0
        %1700 = vmatpush2.bf16.msra.mxu0 0
        %1701 = vmatprep.subr.bf16.mxu0 0
        %1702 = vmatpush2.bf16.msra.mxu0 0
        %1703 = vmatprep.mubr.bf16.mxu0 0
        %1704 = vmatmul.mubr.bf16.gmra.mxu0 %v1616
        %v1705 = vpop.f32.mrf.mxu0
        %v1706 = vadd.f32 %v290, %v1705
        %v1707 = vpop.f32.mrf.mxu0
        %v1708 = vpop.f32.mrf.mxu0
        %v1709 = vadd.f32 %v290, %v1708
        %v1710 = vpop.f32.mrf.mxu0
        %1711 = vdwg.mxu0
        %v1712 = vlaneseq
        %v1713 = vshrl.u32 %v1712, 7
        %v1714 = vsub.s32 0, %v1713
        %v1715 = vrot.slane %v280, %v1714
        %v1716 = vadd.f32 %v1715, %v1653
        %v1717 = vadd.f32 %v1715, %v1656
        %v1718 = vadd.f32 %v1716, %v1706
        %v1719 = vadd.f32 %v1717, %v1709
        %v1720 = vxor.u32 %v1718, 2147483648
        %v1721 = vxor.u32 %v1719, 2147483648
        %v1722 = vmul.f32 %v1720, 1.442695
        %v1723 = vpow.pop %v1722
        %v1724 = vmul.f32 %v1721, 1.442695
        %v1725 = vpow.pop %v1724
        %v1726 = vadd.f32 %v1723, 1.0
        %v1727 = vadd.f32 %v1725, 1.0
        %v1728 = vrcp.pop %v1726
        %v1729 = vmul.f32 1.0, %v1728
        %v1730 = vrcp.pop %v1727
        %v1731 = vmul.f32 1.0, %v1730
        %1734 = vrot.lane.b32.xlu0 %v1706, 64
        %v1735 = vpop.permute.xlu0 %1734
        %1736 = vrot.lane.b32.xlu0 %v1709, 64
        %v1737 = vpop.permute.xlu0 %1736
        %v1740 = vmul.f32 %v1729, %v1735
        %v1741 = vmul.f32 %v1731, %v1737
        %1744 = vrot.lane.b32.xlu0 %v1740, 64
        %v1745 = vpop.permute.xlu0 %1744
        %1746 = vrot.lane.b32.xlu0 %v1741, 64
        %v1747 = vpop.permute.xlu0 %1746
        %v1750 = vadd.f32 %v1716, %v1745
        %v1751 = vadd.f32 %v1717, %v1747
        %v1752 = vtanh.pop %v1750
        %v1753 = vtanh.pop %v1751
        %v1754 = vsub.f32 1.0, %v1729
        %v1755 = vsub.f32 1.0, %v1731
        %1758 = vrot.lane.b32.xlu0 %v1752, 96
        %v1759 = vpop.permute.xlu0 %1758
        %1760 = vrot.lane.b32.xlu0 %v1753, 96
        %v1761 = vpop.permute.xlu0 %1760
        %v1764 = vmul.f32 %v1754, %v1759
        %v1765 = vmul.f32 %v1755, %v1761
        %v1766 = vmul.f32 %v1729, %v1597
        %v1767 = vmul.f32 %v1731, %v1598
        %v1768 = vadd.f32 %v1764, %v1766
        %v1769 = vadd.f32 %v1765, %v1767
        %v1770 = vpack.c.bf16 %v1769, %v1768
        %1772 = vrot.lane.b32.xlu0 %v1770, 96
        %v1773 = vpop.permute.xlu0 %1772
        %v1775 = vsel %vm802, %v1773, 0
        %1777 = vmatprep.subr.bf16.mxu0 0
        %1778 = vmatpush1.bf16.msra.mxu0 0
        %1779 = vmatprep.subr.bf16.mxu0 0
        %1780 = vmatpush1.bf16.msra.mxu0 0
        %1781 = vmatprep.subr.bf16.mxu0 0
        %1782 = vmatpush1.bf16.msra.mxu0 0
        %1783 = vmatprep.subr.bf16.mxu0 0
        %1784 = vmatpush1.bf16.msra.mxu0 0
        %1785 = vmatprep.subr.bf16.mxu0 0
        %1786 = vmatpush1.bf16.msra.mxu0 0
        %1787 = vmatprep.subr.bf16.mxu0 0
        %1788 = vmatpush1.bf16.msra.mxu0 0
        %1789 = vmatprep.subr.bf16.mxu0 0
        %1790 = vmatpush1.bf16.msra.mxu0 %v1668
        %1791 = vmatprep.subr.bf16.mxu0 0
        %1792 = vmatpush1.bf16.msra.mxu0 %v1667
        %1793 = vmatprep.subr.bf16.mxu0 0
        %1794 = vmatpush2.bf16.msra.mxu0 0
        %1795 = vmatprep.subr.bf16.mxu0 0
        %1796 = vmatpush2.bf16.msra.mxu0 0
        %1797 = vmatprep.subr.bf16.mxu0 0
        %1798 = vmatpush2.bf16.msra.mxu0 0
        %1799 = vmatprep.subr.bf16.mxu0 0
        %1800 = vmatpush2.bf16.msra.mxu0 0
        %1801 = vmatprep.subr.bf16.mxu0 0
        %1802 = vmatpush2.bf16.msra.mxu0 0
        %1803 = vmatprep.subr.bf16.mxu0 0
        %1804 = vmatpush2.bf16.msra.mxu0 0
        %1805 = vmatprep.subr.bf16.mxu0 0
        %1806 = vmatpush2.bf16.msra.mxu0 0
        %1807 = vmatprep.subr.bf16.mxu0 0
        %1808 = vmatpush2.bf16.msra.mxu0 0
        %1809 = vmatprep.mubr.bf16.mxu0 0
        %1810 = vmatmul.mubr.bf16.gmra.mxu0 %v1775
        %v1811 = vpop.f32.mrf.mxu0
        %v1812 = vadd.f32 %v290, %v1811
        %v1813 = vpop.f32.mrf.mxu0
        %v1814 = vpop.f32.mrf.mxu0
        %v1815 = vadd.f32 %v290, %v1814
        %v1816 = vpop.f32.mrf.mxu0
        %1817 = vdwg.mxu0
        %v1818 = vadd.f32 %v1716, %v1812
        %v1819 = vadd.f32 %v1717, %v1815
        %s1820 = sld [smem:[#allocation3]]
        %p1821 = scmp.eq.s32.totalorder %s1820, 1
        // Predicated region
        $region37: #{tpu_custom_call.1} parent=35 // pred_check
          %p1822 = pneg %p1821
        $region38: #{tpu_custom_call.1} parent=35 // pred_check_branch
          %1824 = sbr.rel (%p1822) target = $region40
        $region39: #{tpu_custom_call.1} parent=35 // pred_region
          _
        $region40: #{tpu_custom_call.1} parent=35 // pred_fallthru
          _
        %p1825 = pneg %p1821
        // Predicated region
        $region41: #{tpu_custom_call.1} parent=35 // pred_check
          _
        $region42: #{tpu_custom_call.1} parent=35 // pred_check_branch
          %1827 = sbr.rel (%p1821) target = $region44
        $region43: #{tpu_custom_call.1} parent=35 // pred_region
          %vm1828 = vcmask 917248
          %v1829 = vsel %vm1828, %v1818, -inf
          %1830 = vmax.xlane.f32.xlu0 %v1829
          %v1831 = vpop.xlane.xlu0 %1830
          %v1832 = vsel %vm1828, %v1819, -inf
          %1833 = vmax.xlane.f32.xlu0 %v1832
          %v1834 = vpop.xlane.xlu0 %1833
          %vm1835 = vcmp.eq.f32.partialorder %v1818, %v1831
          %vm1836 = vcmp.eq.f32.partialorder %v1819, %v1834
          %1837 = vrot.lane.b32.xlu0 %v312, 96
          %v1838 = vpop.permute.xlu0 %1837
          %v1839 = vsel %vm1835, %v1838, 16
          %v1840 = vsel %vm1836, %v1838, 16
          %v1841 = vsel %vm1828, %v1839, 2147483647
          %v1842 = vand.u32 %v1841, 65535
          %v1843 = vshra.s32 %v1841, 16
          %v1844 = vcvt.s32.f32 %v1842
          %v1845 = vcvt.s32.f32 %v1843
          %1846 = vmin.xlane.f32.xlu0 %v1845
          %v1847 = vpop.xlane.xlu0 %1846
          %vm1848 = vcmp.eq.f32.partialorder %v1845, %v1847
          %v1849 = vsel %vm1848, %v1844, inf
          %1850 = vmin.xlane.f32.xlu0 %v1849
          %v1851 = vpop.xlane.xlu0 %1850
          %v1852 = vcvt.f32.s32 %v1851
          %v1853 = vcvt.f32.s32 %v1847
          %v1854 = vshll.u32 %v1853, 16
          %v1855 = vadd.s32 %v1854, %v1852
          %v1856 = vsel %vm1828, %v1840, 2147483647
          %v1857 = vand.u32 %v1856, 65535
          %v1858 = vshra.s32 %v1856, 16
          %v1859 = vcvt.s32.f32 %v1857
          %v1860 = vcvt.s32.f32 %v1858
          %1861 = vmin.xlane.f32.xlu0 %v1860
          %v1862 = vpop.xlane.xlu0 %1861
          %vm1863 = vcmp.eq.f32.partialorder %v1860, %v1862
          %v1864 = vsel %vm1863, %v1859, inf
          %1865 = vmin.xlane.f32.xlu0 %v1864
          %v1866 = vpop.xlane.xlu0 %1865
          %v1867 = vcvt.f32.s32 %v1866
          %v1868 = vcvt.f32.s32 %v1862
          %v1869 = vshll.u32 %v1868, 16
          %v1870 = vadd.s32 %v1869, %v1867
          %vm1871 = vcmp.eq.s32.totalorder %v1855, 0
          %vm1872 = vcmp.eq.s32.totalorder %v1870, 0
          %v1873 = vsel %vm1871, 1, 0
          %v1874 = vsel %vm1872, 1, 0
          %vm1875 = vcmp.eq.s32.totalorder %v1873, 1
          %vm1876 = vcmp.eq.s32.totalorder %v1874, 1
          %v1877 = vsel %vm1875, %v1715, 0.0
          %v1878 = vsel %vm1876, %v1715, 0.0
          %vm1879 = vcmp.eq.s32.totalorder %v1855, 1
          %vm1880 = vcmp.eq.s32.totalorder %v1870, 1
          %v1881 = vsel %vm1879, 1, 0
          %v1882 = vsel %vm1880, 1, 0
          %vm1883 = vcmp.eq.s32.totalorder %v1881, 1
          %vm1884 = vcmp.eq.s32.totalorder %v1882, 1
          %v1885 = vlaneseq
          %v1886 = vshrl.u32 %v1885, 7
          %v1887 = vsub.s32 1, %v1886
          %v1888 = vrot.slane %v280, %v1887
          %v1889 = vsel %vm1883, %v1888, 0.0
          %v1890 = vsel %vm1884, %v1888, 0.0
          %vm1891 = vcmp.eq.s32.totalorder %v1855, 2
          %vm1892 = vcmp.eq.s32.totalorder %v1870, 2
          %v1893 = vsel %vm1891, 1, 0
          %v1894 = vsel %vm1892, 1, 0
          %vm1895 = vcmp.eq.s32.totalorder %v1893, 1
          %vm1896 = vcmp.eq.s32.totalorder %v1894, 1
          %v1897 = vlaneseq
          %v1898 = vshrl.u32 %v1897, 7
          %v1899 = vsub.s32 2, %v1898
          %v1900 = vrot.slane %v280, %v1899
          %v1901 = vsel %vm1895, %v1900, 0.0
          %v1902 = vsel %vm1896, %v1900, 0.0
          %vm1903 = vcmp.eq.s32.totalorder %v1855, 3
          %vm1904 = vcmp.eq.s32.totalorder %v1870, 3
          %v1905 = vsel %vm1903, 1, 0
          %v1906 = vsel %vm1904, 1, 0
          %vm1907 = vcmp.eq.s32.totalorder %v1905, 1
          %vm1908 = vcmp.eq.s32.totalorder %v1906, 1
          %v1909 = vlaneseq
          %v1910 = vshrl.u32 %v1909, 7
          %v1911 = vsub.s32 3, %v1910
          %v1912 = vrot.slane %v280, %v1911
          %v1913 = vsel %vm1907, %v1912, 0.0
          %v1914 = vsel %vm1908, %v1912, 0.0
          %vm1915 = vcmp.eq.s32.totalorder %v1855, 4
          %vm1916 = vcmp.eq.s32.totalorder %v1870, 4
          %v1917 = vsel %vm1915, 1, 0
          %v1918 = vsel %vm1916, 1, 0
          %vm1919 = vcmp.eq.s32.totalorder %v1917, 1
          %vm1920 = vcmp.eq.s32.totalorder %v1918, 1
          %v1921 = vlaneseq
          %v1922 = vshrl.u32 %v1921, 7
          %v1923 = vsub.s32 4, %v1922
          %v1924 = vrot.slane %v280, %v1923
          %v1925 = vsel %vm1919, %v1924, 0.0
          %v1926 = vsel %vm1920, %v1924, 0.0
          %vm1927 = vcmp.eq.s32.totalorder %v1855, 5
          %vm1928 = vcmp.eq.s32.totalorder %v1870, 5
          %v1929 = vsel %vm1927, 1, 0
          %v1930 = vsel %vm1928, 1, 0
          %vm1931 = vcmp.eq.s32.totalorder %v1929, 1
          %vm1932 = vcmp.eq.s32.totalorder %v1930, 1
          %v1933 = vlaneseq
          %v1934 = vshrl.u32 %v1933, 7
          %v1935 = vsub.s32 5, %v1934
          %v1936 = vrot.slane %v280, %v1935
          %v1937 = vsel %vm1931, %v1936, 0.0
          %v1938 = vsel %vm1932, %v1936, 0.0
          %vm1939 = vcmp.eq.s32.totalorder %v1855, 6
          %vm1940 = vcmp.eq.s32.totalorder %v1870, 6
          %v1941 = vsel %vm1939, 1, 0
          %v1942 = vsel %vm1940, 1, 0
          %vm1943 = vcmp.eq.s32.totalorder %v1941, 1
          %vm1944 = vcmp.eq.s32.totalorder %v1942, 1
          %v1945 = vlaneseq
          %v1946 = vshrl.u32 %v1945, 7
          %v1947 = vsub.s32 6, %v1946
          %v1948 = vrot.slane %v280, %v1947
          %v1949 = vsel %vm1943, %v1948, 0.0
          %v1950 = vsel %vm1944, %v1948, 0.0
          %vm1951 = vcmp.eq.s32.totalorder %v1855, 7
          %vm1952 = vcmp.eq.s32.totalorder %v1870, 7
          %v1953 = vsel %vm1951, 1, 0
          %v1954 = vsel %vm1952, 1, 0
          %vm1955 = vcmp.eq.s32.totalorder %v1953, 1
          %vm1956 = vcmp.eq.s32.totalorder %v1954, 1
          %v1957 = vlaneseq
          %v1958 = vshrl.u32 %v1957, 7
          %v1959 = vsub.s32 7, %v1958
          %v1960 = vrot.slane %v280, %v1959
          %v1961 = vsel %vm1955, %v1960, 0.0
          %v1962 = vsel %vm1956, %v1960, 0.0
          %vm1963 = vcmp.eq.s32.totalorder %v1855, 8
          %vm1964 = vcmp.eq.s32.totalorder %v1870, 8
          %v1965 = vsel %vm1963, 1, 0
          %v1966 = vsel %vm1964, 1, 0
          %vm1967 = vcmp.eq.s32.totalorder %v1965, 1
          %vm1968 = vcmp.eq.s32.totalorder %v1966, 1
          %v1969 = vlaneseq
          %v1970 = vshrl.u32 %v1969, 7
          %v1971 = vsub.s32 0, %v1970
          %v1972 = vrot.slane %v281, %v1971
          %v1973 = vsel %vm1967, %v1972, 0.0
          %v1974 = vsel %vm1968, %v1972, 0.0
          %vm1975 = vcmp.eq.s32.totalorder %v1855, 9
          %vm1976 = vcmp.eq.s32.totalorder %v1870, 9
          %v1977 = vsel %vm1975, 1, 0
          %v1978 = vsel %vm1976, 1, 0
          %vm1979 = vcmp.eq.s32.totalorder %v1977, 1
          %vm1980 = vcmp.eq.s32.totalorder %v1978, 1
          %v1981 = vlaneseq
          %v1982 = vshrl.u32 %v1981, 7
          %v1983 = vsub.s32 1, %v1982
          %v1984 = vrot.slane %v281, %v1983
          %v1985 = vsel %vm1979, %v1984, 0.0
          %v1986 = vsel %vm1980, %v1984, 0.0
          %vm1987 = vcmp.eq.s32.totalorder %v1855, 10
          %vm1988 = vcmp.eq.s32.totalorder %v1870, 10
          %v1989 = vsel %vm1987, 1, 0
          %v1990 = vsel %vm1988, 1, 0
          %vm1991 = vcmp.eq.s32.totalorder %v1989, 1
          %vm1992 = vcmp.eq.s32.totalorder %v1990, 1
          %v1993 = vlaneseq
          %v1994 = vshrl.u32 %v1993, 7
          %v1995 = vsub.s32 2, %v1994
          %v1996 = vrot.slane %v281, %v1995
          %v1997 = vsel %vm1991, %v1996, 0.0
          %v1998 = vsel %vm1992, %v1996, 0.0
          %vm1999 = vcmp.eq.s32.totalorder %v1855, 11
          %vm2000 = vcmp.eq.s32.totalorder %v1870, 11
          %v2001 = vsel %vm1999, 1, 0
          %v2002 = vsel %vm2000, 1, 0
          %vm2003 = vcmp.eq.s32.totalorder %v2001, 1
          %vm2004 = vcmp.eq.s32.totalorder %v2002, 1
          %v2005 = vlaneseq
          %v2006 = vshrl.u32 %v2005, 7
          %v2007 = vsub.s32 3, %v2006
          %v2008 = vrot.slane %v281, %v2007
          %v2009 = vsel %vm2003, %v2008, 0.0
          %v2010 = vsel %vm2004, %v2008, 0.0
          %vm2011 = vcmp.eq.s32.totalorder %v1855, 12
          %vm2012 = vcmp.eq.s32.totalorder %v1870, 12
          %v2013 = vsel %vm2011, 1, 0
          %v2014 = vsel %vm2012, 1, 0
          %vm2015 = vcmp.eq.s32.totalorder %v2013, 1
          %vm2016 = vcmp.eq.s32.totalorder %v2014, 1
          %v2017 = vlaneseq
          %v2018 = vshrl.u32 %v2017, 7
          %v2019 = vsub.s32 4, %v2018
          %v2020 = vrot.slane %v281, %v2019
          %v2021 = vsel %vm2015, %v2020, 0.0
          %v2022 = vsel %vm2016, %v2020, 0.0
          %vm2023 = vcmp.eq.s32.totalorder %v1855, 13
          %vm2024 = vcmp.eq.s32.totalorder %v1870, 13
          %v2025 = vsel %vm2023, 1, 0
          %v2026 = vsel %vm2024, 1, 0
          %vm2027 = vcmp.eq.s32.totalorder %v2025, 1
          %vm2028 = vcmp.eq.s32.totalorder %v2026, 1
          %v2029 = vlaneseq
          %v2030 = vshrl.u32 %v2029, 7
          %v2031 = vsub.s32 5, %v2030
          %v2032 = vrot.slane %v281, %v2031
          %v2033 = vsel %vm2027, %v2032, 0.0
          %v2034 = vsel %vm2028, %v2032, 0.0
          %vm2035 = vcmp.eq.s32.totalorder %v1855, 14
          %vm2036 = vcmp.eq.s32.totalorder %v1870, 14
          %v2037 = vsel %vm2035, 1, 0
          %v2038 = vsel %vm2036, 1, 0
          %vm2039 = vcmp.eq.s32.totalorder %v2037, 1
          %vm2040 = vcmp.eq.s32.totalorder %v2038, 1
          %v2041 = vlaneseq
          %v2042 = vshrl.u32 %v2041, 7
          %v2043 = vsub.s32 6, %v2042
          %v2044 = vrot.slane %v281, %v2043
          %v2045 = vsel %vm2039, %v2044, 0.0
          %v2046 = vsel %vm2040, %v2044, 0.0
          %vm2047 = vcmp.eq.s32.totalorder %v1855, 15
          %vm2048 = vcmp.eq.s32.totalorder %v1870, 15
          %v2049 = vsel %vm2047, 1, 0
          %v2050 = vsel %vm2048, 1, 0
          %vm2051 = vcmp.eq.s32.totalorder %v2049, 1
          %vm2052 = vcmp.eq.s32.totalorder %v2050, 1
          %v2053 = vlaneseq
          %v2054 = vshrl.u32 %v2053, 7
          %v2055 = vsub.s32 7, %v2054
          %v2056 = vrot.slane %v281, %v2055
          %v2057 = vsel %vm2051, %v2056, 0.0
          %v2058 = vsel %vm2052, %v2056, 0.0
          %v2059 = vadd.f32 %v1877, %v1889
          %v2060 = vadd.f32 %v1878, %v1890
          %v2061 = vadd.f32 %v1901, %v1913
          %v2062 = vadd.f32 %v1902, %v1914
          %v2063 = vadd.f32 %v1925, %v1937
          %v2064 = vadd.f32 %v1926, %v1938
          %v2065 = vadd.f32 %v1949, %v1961
          %v2066 = vadd.f32 %v1950, %v1962
          %v2067 = vadd.f32 %v1973, %v1985
          %v2068 = vadd.f32 %v1974, %v1986
          %v2069 = vadd.f32 %v1997, %v2009
          %v2070 = vadd.f32 %v1998, %v2010
          %v2071 = vadd.f32 %v2021, %v2033
          %v2072 = vadd.f32 %v2022, %v2034
          %v2073 = vadd.f32 %v2045, %v2057
          %v2074 = vadd.f32 %v2046, %v2058
          %v2075 = vadd.f32 %v2059, %v2061
          %v2076 = vadd.f32 %v2060, %v2062
          %v2077 = vadd.f32 %v2063, %v2065
          %v2078 = vadd.f32 %v2064, %v2066
          %v2079 = vadd.f32 %v2067, %v2069
          %v2080 = vadd.f32 %v2068, %v2070
          %v2081 = vadd.f32 %v2071, %v2073
          %v2082 = vadd.f32 %v2072, %v2074
          %v2083 = vadd.f32 %v2075, %v2077
          %v2084 = vadd.f32 %v2076, %v2078
          %v2085 = vadd.f32 %v2079, %v2081
          %v2086 = vadd.f32 %v2080, %v2082
          %v2087 = vadd.f32 %v2083, %v2085
          %v2088 = vadd.f32 %v2084, %v2086
        $region44: #{tpu_custom_call.1} parent=35 // pred_fallthru
          %v2089 = vphi %v730, %v2087
          %v2090 = vphi %v733, %v2088
          %v2091 = vphi %v545, %v1855
          %v2092 = vphi %v546, %v1870
        %v2093 = vadd.f32 %v2089, %v1653
        %v2094 = vadd.f32 %v2090, %v1656
        %v2095 = vadd.f32 %v2093, %v1812
        %v2096 = vadd.f32 %v2094, %v1815
        %v2097 = vxor.u32 %v2095, 2147483648
        %v2098 = vxor.u32 %v2096, 2147483648
        %v2099 = vmul.f32 %v2097, 1.442695
        %v2100 = vpow.pop %v2099
        %v2101 = vmul.f32 %v2098, 1.442695
        %v2102 = vpow.pop %v2101
        %v2103 = vadd.f32 %v2100, 1.0
        %v2104 = vadd.f32 %v2102, 1.0
        %v2105 = vrcp.pop %v2103
        %v2106 = vmul.f32 1.0, %v2105
        %v2107 = vrcp.pop %v2104
        %v2108 = vmul.f32 1.0, %v2107
        %2111 = vrot.lane.b32.xlu0 %v1812, 64
        %v2112 = vpop.permute.xlu0 %2111
        %2113 = vrot.lane.b32.xlu0 %v1815, 64
        %v2114 = vpop.permute.xlu0 %2113
        %v2117 = vmul.f32 %v2106, %v2112
        %v2118 = vmul.f32 %v2108, %v2114
        %2121 = vrot.lane.b32.xlu0 %v2117, 64
        %v2122 = vpop.permute.xlu0 %2121
        %2123 = vrot.lane.b32.xlu0 %v2118, 64
        %v2124 = vpop.permute.xlu0 %2123
        %v2127 = vadd.f32 %v2093, %v2122
        %v2128 = vadd.f32 %v2094, %v2124
        %v2129 = vtanh.pop %v2127
        %v2130 = vtanh.pop %v2128
        %v2131 = vsub.f32 1.0, %v2106
        %v2132 = vsub.f32 1.0, %v2108
        %2135 = vrot.lane.b32.xlu0 %v2129, 96
        %v2136 = vpop.permute.xlu0 %2135
        %2137 = vrot.lane.b32.xlu0 %v2130, 96
        %v2138 = vpop.permute.xlu0 %2137
        %v2141 = vmul.f32 %v2131, %v2136
        %v2142 = vmul.f32 %v2132, %v2138
        %v2143 = vmul.f32 %v2106, %v1768
        %v2144 = vmul.f32 %v2108, %v1769
        %v2145 = vadd.f32 %v2141, %v2143
        %v2146 = vadd.f32 %v2142, %v2144
        %v2147 = vpack.c.bf16 %v2146, %v2145
        %2149 = vrot.lane.b32.xlu0 %v2147, 96
        %v2150 = vpop.permute.xlu0 %2149
        %v2152 = vsel %vm802, %v2150, 0
        %2154 = vmatprep.subr.bf16.mxu0 0
        %2155 = vmatpush1.bf16.msra.mxu0 0
        %2156 = vmatprep.subr.bf16.mxu0 0
        %2157 = vmatpush1.bf16.msra.mxu0 0
        %2158 = vmatprep.subr.bf16.mxu0 0
        %2159 = vmatpush1.bf16.msra.mxu0 0
        %2160 = vmatprep.subr.bf16.mxu0 0
        %2161 = vmatpush1.bf16.msra.mxu0 0
        %2162 = vmatprep.subr.bf16.mxu0 0
        %2163 = vmatpush1.bf16.msra.mxu0 0
        %2164 = vmatprep.subr.bf16.mxu0 0
        %2165 = vmatpush1.bf16.msra.mxu0 0
        %2166 = vmatprep.subr.bf16.mxu0 0
        %2167 = vmatpush1.bf16.msra.mxu0 %v1668
        %2168 = vmatprep.subr.bf16.mxu0 0
        %2169 = vmatpush1.bf16.msra.mxu0 %v1667
        %2170 = vmatprep.subr.bf16.mxu0 0
        %2171 = vmatpush2.bf16.msra.mxu0 0
        %2172 = vmatprep.subr.bf16.mxu0 0
        %2173 = vmatpush2.bf16.msra.mxu0 0
        %2174 = vmatprep.subr.bf16.mxu0 0
        %2175 = vmatpush2.bf16.msra.mxu0 0
        %2176 = vmatprep.subr.bf16.mxu0 0
        %2177 = vmatpush2.bf16.msra.mxu0 0
        %2178 = vmatprep.subr.bf16.mxu0 0
        %2179 = vmatpush2.bf16.msra.mxu0 0
        %2180 = vmatprep.subr.bf16.mxu0 0
        %2181 = vmatpush2.bf16.msra.mxu0 0
        %2182 = vmatprep.subr.bf16.mxu0 0
        %2183 = vmatpush2.bf16.msra.mxu0 0
        %2184 = vmatprep.subr.bf16.mxu0 0
        %2185 = vmatpush2.bf16.msra.mxu0 0
        %2186 = vmatprep.mubr.bf16.mxu0 0
        %2187 = vmatmul.mubr.bf16.gmra.mxu0 %v2152
        %v2188 = vpop.f32.mrf.mxu0
        %v2189 = vadd.f32 %v290, %v2188
        %v2190 = vpop.f32.mrf.mxu0
        %v2191 = vpop.f32.mrf.mxu0
        %v2192 = vadd.f32 %v290, %v2191
        %v2193 = vpop.f32.mrf.mxu0
        %2194 = vdwg.mxu0
        %v2195 = vadd.f32 %v2093, %v2189
        %v2196 = vadd.f32 %v2094, %v2192
        %s2197 = sld [smem:[#allocation3 + $0x1]]
        %p2198 = scmp.eq.s32.totalorder %s2197, 1
        // Predicated region
        $region45: #{tpu_custom_call.1} parent=35 // pred_check
          %p2199 = pneg %p2198
        $region46: #{tpu_custom_call.1} parent=35 // pred_check_branch
          %2201 = sbr.rel (%p2199) target = $region48
        $region47: #{tpu_custom_call.1} parent=35 // pred_region
          _
        $region48: #{tpu_custom_call.1} parent=35 // pred_fallthru
          _
        %p2202 = pneg %p2198
        // Predicated region
        $region49: #{tpu_custom_call.1} parent=35 // pred_check
          _
        $region50: #{tpu_custom_call.1} parent=35 // pred_check_branch
          %2204 = sbr.rel (%p2198) target = $region52
        $region51: #{tpu_custom_call.1} parent=35 // pred_region
          %vm2205 = vcmask 917248
          %v2206 = vsel %vm2205, %v2195, -inf
          %2207 = vmax.xlane.f32.xlu0 %v2206
          %v2208 = vpop.xlane.xlu0 %2207
          %v2209 = vsel %vm2205, %v2196, -inf
          %2210 = vmax.xlane.f32.xlu0 %v2209
          %v2211 = vpop.xlane.xlu0 %2210
          %vm2212 = vcmp.eq.f32.partialorder %v2195, %v2208
          %vm2213 = vcmp.eq.f32.partialorder %v2196, %v2211
          %2214 = vrot.lane.b32.xlu0 %v312, 96
          %v2215 = vpop.permute.xlu0 %2214
          %v2216 = vsel %vm2212, %v2215, 16
          %v2217 = vsel %vm2213, %v2215, 16
          %v2218 = vsel %vm2205, %v2216, 2147483647
          %v2219 = vand.u32 %v2218, 65535
          %v2220 = vshra.s32 %v2218, 16
          %v2221 = vcvt.s32.f32 %v2219
          %v2222 = vcvt.s32.f32 %v2220
          %2223 = vmin.xlane.f32.xlu0 %v2222
          %v2224 = vpop.xlane.xlu0 %2223
          %vm2225 = vcmp.eq.f32.partialorder %v2222, %v2224
          %v2226 = vsel %vm2225, %v2221, inf
          %2227 = vmin.xlane.f32.xlu0 %v2226
          %v2228 = vpop.xlane.xlu0 %2227
          %v2229 = vcvt.f32.s32 %v2228
          %v2230 = vcvt.f32.s32 %v2224
          %v2231 = vshll.u32 %v2230, 16
          %v2232 = vadd.s32 %v2231, %v2229
          %v2233 = vsel %vm2205, %v2217, 2147483647
          %v2234 = vand.u32 %v2233, 65535
          %v2235 = vshra.s32 %v2233, 16
          %v2236 = vcvt.s32.f32 %v2234
          %v2237 = vcvt.s32.f32 %v2235
          %2238 = vmin.xlane.f32.xlu0 %v2237
          %v2239 = vpop.xlane.xlu0 %2238
          %vm2240 = vcmp.eq.f32.partialorder %v2237, %v2239
          %v2241 = vsel %vm2240, %v2236, inf
          %2242 = vmin.xlane.f32.xlu0 %v2241
          %v2243 = vpop.xlane.xlu0 %2242
          %v2244 = vcvt.f32.s32 %v2243
          %v2245 = vcvt.f32.s32 %v2239
          %v2246 = vshll.u32 %v2245, 16
          %v2247 = vadd.s32 %v2246, %v2244
          %vm2248 = vcmp.eq.s32.totalorder %v2232, 0
          %vm2249 = vcmp.eq.s32.totalorder %v2247, 0
          %v2250 = vsel %vm2248, 1, 0
          %v2251 = vsel %vm2249, 1, 0
          %vm2252 = vcmp.eq.s32.totalorder %v2250, 1
          %vm2253 = vcmp.eq.s32.totalorder %v2251, 1
          %v2254 = vsel %vm2252, %v1715, 0.0
          %v2255 = vsel %vm2253, %v1715, 0.0
          %vm2256 = vcmp.eq.s32.totalorder %v2232, 1
          %vm2257 = vcmp.eq.s32.totalorder %v2247, 1
          %v2258 = vsel %vm2256, 1, 0
          %v2259 = vsel %vm2257, 1, 0
          %vm2260 = vcmp.eq.s32.totalorder %v2258, 1
          %vm2261 = vcmp.eq.s32.totalorder %v2259, 1
          %v2262 = vlaneseq
          %v2263 = vshrl.u32 %v2262, 7
          %v2264 = vsub.s32 1, %v2263
          %v2265 = vrot.slane %v280, %v2264
          %v2266 = vsel %vm2260, %v2265, 0.0
          %v2267 = vsel %vm2261, %v2265, 0.0
          %vm2268 = vcmp.eq.s32.totalorder %v2232, 2
          %vm2269 = vcmp.eq.s32.totalorder %v2247, 2
          %v2270 = vsel %vm2268, 1, 0
          %v2271 = vsel %vm2269, 1, 0
          %vm2272 = vcmp.eq.s32.totalorder %v2270, 1
          %vm2273 = vcmp.eq.s32.totalorder %v2271, 1
          %v2274 = vlaneseq
          %v2275 = vshrl.u32 %v2274, 7
          %v2276 = vsub.s32 2, %v2275
          %v2277 = vrot.slane %v280, %v2276
          %v2278 = vsel %vm2272, %v2277, 0.0
          %v2279 = vsel %vm2273, %v2277, 0.0
          %vm2280 = vcmp.eq.s32.totalorder %v2232, 3
          %vm2281 = vcmp.eq.s32.totalorder %v2247, 3
          %v2282 = vsel %vm2280, 1, 0
          %v2283 = vsel %vm2281, 1, 0
          %vm2284 = vcmp.eq.s32.totalorder %v2282, 1
          %vm2285 = vcmp.eq.s32.totalorder %v2283, 1
          %v2286 = vlaneseq
          %v2287 = vshrl.u32 %v2286, 7
          %v2288 = vsub.s32 3, %v2287
          %v2289 = vrot.slane %v280, %v2288
          %v2290 = vsel %vm2284, %v2289, 0.0
          %v2291 = vsel %vm2285, %v2289, 0.0
          %vm2292 = vcmp.eq.s32.totalorder %v2232, 4
          %vm2293 = vcmp.eq.s32.totalorder %v2247, 4
          %v2294 = vsel %vm2292, 1, 0
          %v2295 = vsel %vm2293, 1, 0
          %vm2296 = vcmp.eq.s32.totalorder %v2294, 1
          %vm2297 = vcmp.eq.s32.totalorder %v2295, 1
          %v2298 = vlaneseq
          %v2299 = vshrl.u32 %v2298, 7
          %v2300 = vsub.s32 4, %v2299
          %v2301 = vrot.slane %v280, %v2300
          %v2302 = vsel %vm2296, %v2301, 0.0
          %v2303 = vsel %vm2297, %v2301, 0.0
          %vm2304 = vcmp.eq.s32.totalorder %v2232, 5
          %vm2305 = vcmp.eq.s32.totalorder %v2247, 5
          %v2306 = vsel %vm2304, 1, 0
          %v2307 = vsel %vm2305, 1, 0
          %vm2308 = vcmp.eq.s32.totalorder %v2306, 1
          %vm2309 = vcmp.eq.s32.totalorder %v2307, 1
          %v2310 = vlaneseq
          %v2311 = vshrl.u32 %v2310, 7
          %v2312 = vsub.s32 5, %v2311
          %v2313 = vrot.slane %v280, %v2312
          %v2314 = vsel %vm2308, %v2313, 0.0
          %v2315 = vsel %vm2309, %v2313, 0.0
          %vm2316 = vcmp.eq.s32.totalorder %v2232, 6
          %vm2317 = vcmp.eq.s32.totalorder %v2247, 6
          %v2318 = vsel %vm2316, 1, 0
          %v2319 = vsel %vm2317, 1, 0
          %vm2320 = vcmp.eq.s32.totalorder %v2318, 1
          %vm2321 = vcmp.eq.s32.totalorder %v2319, 1
          %v2322 = vlaneseq
          %v2323 = vshrl.u32 %v2322, 7
          %v2324 = vsub.s32 6, %v2323
          %v2325 = vrot.slane %v280, %v2324
          %v2326 = vsel %vm2320, %v2325, 0.0
          %v2327 = vsel %vm2321, %v2325, 0.0
          %vm2328 = vcmp.eq.s32.totalorder %v2232, 7
          %vm2329 = vcmp.eq.s32.totalorder %v2247, 7
          %v2330 = vsel %vm2328, 1, 0
          %v2331 = vsel %vm2329, 1, 0
          %vm2332 = vcmp.eq.s32.totalorder %v2330, 1
          %vm2333 = vcmp.eq.s32.totalorder %v2331, 1
          %v2334 = vlaneseq
          %v2335 = vshrl.u32 %v2334, 7
          %v2336 = vsub.s32 7, %v2335
          %v2337 = vrot.slane %v280, %v2336
          %v2338 = vsel %vm2332, %v2337, 0.0
          %v2339 = vsel %vm2333, %v2337, 0.0
          %vm2340 = vcmp.eq.s32.totalorder %v2232, 8
          %vm2341 = vcmp.eq.s32.totalorder %v2247, 8
          %v2342 = vsel %vm2340, 1, 0
          %v2343 = vsel %vm2341, 1, 0
          %vm2344 = vcmp.eq.s32.totalorder %v2342, 1
          %vm2345 = vcmp.eq.s32.totalorder %v2343, 1
          %v2346 = vlaneseq
          %v2347 = vshrl.u32 %v2346, 7
          %v2348 = vsub.s32 0, %v2347
          %v2349 = vrot.slane %v281, %v2348
          %v2350 = vsel %vm2344, %v2349, 0.0
          %v2351 = vsel %vm2345, %v2349, 0.0
          %vm2352 = vcmp.eq.s32.totalorder %v2232, 9
          %vm2353 = vcmp.eq.s32.totalorder %v2247, 9
          %v2354 = vsel %vm2352, 1, 0
          %v2355 = vsel %vm2353, 1, 0
          %vm2356 = vcmp.eq.s32.totalorder %v2354, 1
          %vm2357 = vcmp.eq.s32.totalorder %v2355, 1
          %v2358 = vlaneseq
          %v2359 = vshrl.u32 %v2358, 7
          %v2360 = vsub.s32 1, %v2359
          %v2361 = vrot.slane %v281, %v2360
          %v2362 = vsel %vm2356, %v2361, 0.0
          %v2363 = vsel %vm2357, %v2361, 0.0
          %vm2364 = vcmp.eq.s32.totalorder %v2232, 10
          %vm2365 = vcmp.eq.s32.totalorder %v2247, 10
          %v2366 = vsel %vm2364, 1, 0
          %v2367 = vsel %vm2365, 1, 0
          %vm2368 = vcmp.eq.s32.totalorder %v2366, 1
          %vm2369 = vcmp.eq.s32.totalorder %v2367, 1
          %v2370 = vlaneseq
          %v2371 = vshrl.u32 %v2370, 7
          %v2372 = vsub.s32 2, %v2371
          %v2373 = vrot.slane %v281, %v2372
          %v2374 = vsel %vm2368, %v2373, 0.0
          %v2375 = vsel %vm2369, %v2373, 0.0
          %vm2376 = vcmp.eq.s32.totalorder %v2232, 11
          %vm2377 = vcmp.eq.s32.totalorder %v2247, 11
          %v2378 = vsel %vm2376, 1, 0
          %v2379 = vsel %vm2377, 1, 0
          %vm2380 = vcmp.eq.s32.totalorder %v2378, 1
          %vm2381 = vcmp.eq.s32.totalorder %v2379, 1
          %v2382 = vlaneseq
          %v2383 = vshrl.u32 %v2382, 7
          %v2384 = vsub.s32 3, %v2383
          %v2385 = vrot.slane %v281, %v2384
          %v2386 = vsel %vm2380, %v2385, 0.0
          %v2387 = vsel %vm2381, %v2385, 0.0
          %vm2388 = vcmp.eq.s32.totalorder %v2232, 12
          %vm2389 = vcmp.eq.s32.totalorder %v2247, 12
          %v2390 = vsel %vm2388, 1, 0
          %v2391 = vsel %vm2389, 1, 0
          %vm2392 = vcmp.eq.s32.totalorder %v2390, 1
          %vm2393 = vcmp.eq.s32.totalorder %v2391, 1
          %v2394 = vlaneseq
          %v2395 = vshrl.u32 %v2394, 7
          %v2396 = vsub.s32 4, %v2395
          %v2397 = vrot.slane %v281, %v2396
          %v2398 = vsel %vm2392, %v2397, 0.0
          %v2399 = vsel %vm2393, %v2397, 0.0
          %vm2400 = vcmp.eq.s32.totalorder %v2232, 13
          %vm2401 = vcmp.eq.s32.totalorder %v2247, 13
          %v2402 = vsel %vm2400, 1, 0
          %v2403 = vsel %vm2401, 1, 0
          %vm2404 = vcmp.eq.s32.totalorder %v2402, 1
          %vm2405 = vcmp.eq.s32.totalorder %v2403, 1
          %v2406 = vlaneseq
          %v2407 = vshrl.u32 %v2406, 7
          %v2408 = vsub.s32 5, %v2407
          %v2409 = vrot.slane %v281, %v2408
          %v2410 = vsel %vm2404, %v2409, 0.0
          %v2411 = vsel %vm2405, %v2409, 0.0
          %vm2412 = vcmp.eq.s32.totalorder %v2232, 14
          %vm2413 = vcmp.eq.s32.totalorder %v2247, 14
          %v2414 = vsel %vm2412, 1, 0
          %v2415 = vsel %vm2413, 1, 0
          %vm2416 = vcmp.eq.s32.totalorder %v2414, 1
          %vm2417 = vcmp.eq.s32.totalorder %v2415, 1
          %v2418 = vlaneseq
          %v2419 = vshrl.u32 %v2418, 7
          %v2420 = vsub.s32 6, %v2419
          %v2421 = vrot.slane %v281, %v2420
          %v2422 = vsel %vm2416, %v2421, 0.0
          %v2423 = vsel %vm2417, %v2421, 0.0
          %vm2424 = vcmp.eq.s32.totalorder %v2232, 15
          %vm2425 = vcmp.eq.s32.totalorder %v2247, 15
          %v2426 = vsel %vm2424, 1, 0
          %v2427 = vsel %vm2425, 1, 0
          %vm2428 = vcmp.eq.s32.totalorder %v2426, 1
          %vm2429 = vcmp.eq.s32.totalorder %v2427, 1
          %v2430 = vlaneseq
          %v2431 = vshrl.u32 %v2430, 7
          %v2432 = vsub.s32 7, %v2431
          %v2433 = vrot.slane %v281, %v2432
          %v2434 = vsel %vm2428, %v2433, 0.0
          %v2435 = vsel %vm2429, %v2433, 0.0
          %v2436 = vadd.f32 %v2254, %v2266
          %v2437 = vadd.f32 %v2255, %v2267
          %v2438 = vadd.f32 %v2278, %v2290
          %v2439 = vadd.f32 %v2279, %v2291
          %v2440 = vadd.f32 %v2302, %v2314
          %v2441 = vadd.f32 %v2303, %v2315
          %v2442 = vadd.f32 %v2326, %v2338
          %v2443 = vadd.f32 %v2327, %v2339
          %v2444 = vadd.f32 %v2350, %v2362
          %v2445 = vadd.f32 %v2351, %v2363
          %v2446 = vadd.f32 %v2374, %v2386
          %v2447 = vadd.f32 %v2375, %v2387
          %v2448 = vadd.f32 %v2398, %v2410
          %v2449 = vadd.f32 %v2399, %v2411
          %v2450 = vadd.f32 %v2422, %v2434
          %v2451 = vadd.f32 %v2423, %v2435
          %v2452 = vadd.f32 %v2436, %v2438
          %v2453 = vadd.f32 %v2437, %v2439
          %v2454 = vadd.f32 %v2440, %v2442
          %v2455 = vadd.f32 %v2441, %v2443
          %v2456 = vadd.f32 %v2444, %v2446
          %v2457 = vadd.f32 %v2445, %v2447
          %v2458 = vadd.f32 %v2448, %v2450
          %v2459 = vadd.f32 %v2449, %v2451
          %v2460 = vadd.f32 %v2452, %v2454
          %v2461 = vadd.f32 %v2453, %v2455
          %v2462 = vadd.f32 %v2456, %v2458
          %v2463 = vadd.f32 %v2457, %v2459
          %v2464 = vadd.f32 %v2460, %v2462
          %v2465 = vadd.f32 %v2461, %v2463
        $region52: #{tpu_custom_call.1} parent=35 // pred_fallthru
          %v2466 = vphi %v738, %v2464
          %v2467 = vphi %v741, %v2465
          %v2468 = vphi %v547, %v2232
          %v2469 = vphi %v548, %v2247
        %v2470 = vadd.f32 %v2466, %v1653
        %v2471 = vadd.f32 %v2467, %v1656
        %v2472 = vadd.f32 %v2470, %v2189
        %v2473 = vadd.f32 %v2471, %v2192
        %v2474 = vxor.u32 %v2472, 2147483648
        %v2475 = vxor.u32 %v2473, 2147483648
        %v2476 = vmul.f32 %v2474, 1.442695
        %v2477 = vpow.pop %v2476
        %v2478 = vmul.f32 %v2475, 1.442695
        %v2479 = vpow.pop %v2478
        %v2480 = vadd.f32 %v2477, 1.0
        %v2481 = vadd.f32 %v2479, 1.0
        %v2482 = vrcp.pop %v2480
        %v2483 = vmul.f32 1.0, %v2482
        %v2484 = vrcp.pop %v2481
        %v2485 = vmul.f32 1.0, %v2484
        %2488 = vrot.lane.b32.xlu0 %v2189, 64
        %v2489 = vpop.permute.xlu0 %2488
        %2490 = vrot.lane.b32.xlu0 %v2192, 64
        %v2491 = vpop.permute.xlu0 %2490
        %v2494 = vmul.f32 %v2483, %v2489
        %v2495 = vmul.f32 %v2485, %v2491
        %2498 = vrot.lane.b32.xlu0 %v2494, 64
        %v2499 = vpop.permute.xlu0 %2498
        %2500 = vrot.lane.b32.xlu0 %v2495, 64
        %v2501 = vpop.permute.xlu0 %2500
        %v2504 = vadd.f32 %v2470, %v2499
        %v2505 = vadd.f32 %v2471, %v2501
        %v2506 = vtanh.pop %v2504
        %v2507 = vtanh.pop %v2505
        %v2508 = vsub.f32 1.0, %v2483
        %v2509 = vsub.f32 1.0, %v2485
        %2512 = vrot.lane.b32.xlu0 %v2506, 96
        %v2513 = vpop.permute.xlu0 %2512
        %2514 = vrot.lane.b32.xlu0 %v2507, 96
        %v2515 = vpop.permute.xlu0 %2514
        %v2518 = vmul.f32 %v2508, %v2513
        %v2519 = vmul.f32 %v2509, %v2515
        %v2520 = vmul.f32 %v2483, %v2145
        %v2521 = vmul.f32 %v2485, %v2146
        %v2522 = vadd.f32 %v2518, %v2520
        %v2523 = vadd.f32 %v2519, %v2521
        %v2524 = vpack.c.bf16 %v2523, %v2522
        %2526 = vrot.lane.b32.xlu0 %v2524, 96
        %v2527 = vpop.permute.xlu0 %2526
        %v2529 = vsel %vm802, %v2527, 0
        %2531 = vmatprep.subr.bf16.mxu0 0
        %2532 = vmatpush1.bf16.msra.mxu0 0
        %2533 = vmatprep.subr.bf16.mxu0 0
        %2534 = vmatpush1.bf16.msra.mxu0 0
        %2535 = vmatprep.subr.bf16.mxu0 0
        %2536 = vmatpush1.bf16.msra.mxu0 0
        %2537 = vmatprep.subr.bf16.mxu0 0
        %2538 = vmatpush1.bf16.msra.mxu0 0
        %2539 = vmatprep.subr.bf16.mxu0 0
        %2540 = vmatpush1.bf16.msra.mxu0 0
        %2541 = vmatprep.subr.bf16.mxu0 0
        %2542 = vmatpush1.bf16.msra.mxu0 0
        %2543 = vmatprep.subr.bf16.mxu0 0
        %2544 = vmatpush1.bf16.msra.mxu0 %v1668
        %2545 = vmatprep.subr.bf16.mxu0 0
        %2546 = vmatpush1.bf16.msra.mxu0 %v1667
        %2547 = vmatprep.subr.bf16.mxu0 0
        %2548 = vmatpush2.bf16.msra.mxu0 0
        %2549 = vmatprep.subr.bf16.mxu0 0
        %2550 = vmatpush2.bf16.msra.mxu0 0
        %2551 = vmatprep.subr.bf16.mxu0 0
        %2552 = vmatpush2.bf16.msra.mxu0 0
        %2553 = vmatprep.subr.bf16.mxu0 0
        %2554 = vmatpush2.bf16.msra.mxu0 0
        %2555 = vmatprep.subr.bf16.mxu0 0
        %2556 = vmatpush2.bf16.msra.mxu0 0
        %2557 = vmatprep.subr.bf16.mxu0 0
        %2558 = vmatpush2.bf16.msra.mxu0 0
        %2559 = vmatprep.subr.bf16.mxu0 0
        %2560 = vmatpush2.bf16.msra.mxu0 0
        %2561 = vmatprep.subr.bf16.mxu0 0
        %2562 = vmatpush2.bf16.msra.mxu0 0
        %2563 = vmatprep.mubr.bf16.mxu0 0
        %2564 = vmatmul.mubr.bf16.gmra.mxu0 %v2529
        %v2565 = vpop.f32.mrf.mxu0
        %v2566 = vadd.f32 %v290, %v2565
        %v2567 = vpop.f32.mrf.mxu0
        %v2568 = vpop.f32.mrf.mxu0
        %v2569 = vadd.f32 %v290, %v2568
        %v2570 = vpop.f32.mrf.mxu0
        %2571 = vdwg.mxu0
        %v2572 = vadd.f32 %v2470, %v2566
        %v2573 = vadd.f32 %v2471, %v2569
        %s2574 = sld [smem:[#allocation3 + $0x2]]
        %p2575 = scmp.eq.s32.totalorder %s2574, 1
        // Predicated region
        $region53: #{tpu_custom_call.1} parent=35 // pred_check
          %p2576 = pneg %p2575
        $region54: #{tpu_custom_call.1} parent=35 // pred_check_branch
          %2578 = sbr.rel (%p2576) target = $region56
        $region55: #{tpu_custom_call.1} parent=35 // pred_region
          _
        $region56: #{tpu_custom_call.1} parent=35 // pred_fallthru
          _
        %p2579 = pneg %p2575
        // Predicated region
        $region57: #{tpu_custom_call.1} parent=35 // pred_check
          _
        $region58: #{tpu_custom_call.1} parent=35 // pred_check_branch
          %2581 = sbr.rel (%p2575) target = $region60
        $region59: #{tpu_custom_call.1} parent=35 // pred_region
          %vm2582 = vcmask 917248
          %v2583 = vsel %vm2582, %v2572, -inf
          %2584 = vmax.xlane.f32.xlu0 %v2583
          %v2585 = vpop.xlane.xlu0 %2584
          %v2586 = vsel %vm2582, %v2573, -inf
          %2587 = vmax.xlane.f32.xlu0 %v2586
          %v2588 = vpop.xlane.xlu0 %2587
          %vm2589 = vcmp.eq.f32.partialorder %v2572, %v2585
          %vm2590 = vcmp.eq.f32.partialorder %v2573, %v2588
          %2591 = vrot.lane.b32.xlu0 %v312, 96
          %v2592 = vpop.permute.xlu0 %2591
          %v2593 = vsel %vm2589, %v2592, 16
          %v2594 = vsel %vm2590, %v2592, 16
          %v2595 = vsel %vm2582, %v2593, 2147483647
          %v2596 = vand.u32 %v2595, 65535
          %v2597 = vshra.s32 %v2595, 16
          %v2598 = vcvt.s32.f32 %v2596
          %v2599 = vcvt.s32.f32 %v2597
          %2600 = vmin.xlane.f32.xlu0 %v2599
          %v2601 = vpop.xlane.xlu0 %2600
          %vm2602 = vcmp.eq.f32.partialorder %v2599, %v2601
          %v2603 = vsel %vm2602, %v2598, inf
          %2604 = vmin.xlane.f32.xlu0 %v2603
          %v2605 = vpop.xlane.xlu0 %2604
          %v2606 = vcvt.f32.s32 %v2605
          %v2607 = vcvt.f32.s32 %v2601
          %v2608 = vshll.u32 %v2607, 16
          %v2609 = vadd.s32 %v2608, %v2606
          %v2610 = vsel %vm2582, %v2594, 2147483647
          %v2611 = vand.u32 %v2610, 65535
          %v2612 = vshra.s32 %v2610, 16
          %v2613 = vcvt.s32.f32 %v2611
          %v2614 = vcvt.s32.f32 %v2612
          %2615 = vmin.xlane.f32.xlu0 %v2614
          %v2616 = vpop.xlane.xlu0 %2615
          %vm2617 = vcmp.eq.f32.partialorder %v2614, %v2616
          %v2618 = vsel %vm2617, %v2613, inf
          %2619 = vmin.xlane.f32.xlu0 %v2618
          %v2620 = vpop.xlane.xlu0 %2619
          %v2621 = vcvt.f32.s32 %v2620
          %v2622 = vcvt.f32.s32 %v2616
          %v2623 = vshll.u32 %v2622, 16
          %v2624 = vadd.s32 %v2623, %v2621
          %vm2625 = vcmp.eq.s32.totalorder %v2609, 0
          %vm2626 = vcmp.eq.s32.totalorder %v2624, 0
          %v2627 = vsel %vm2625, 1, 0
          %v2628 = vsel %vm2626, 1, 0
          %vm2629 = vcmp.eq.s32.totalorder %v2627, 1
          %vm2630 = vcmp.eq.s32.totalorder %v2628, 1
          %v2631 = vsel %vm2629, %v1715, 0.0
          %v2632 = vsel %vm2630, %v1715, 0.0
          %vm2633 = vcmp.eq.s32.totalorder %v2609, 1
          %vm2634 = vcmp.eq.s32.totalorder %v2624, 1
          %v2635 = vsel %vm2633, 1, 0
          %v2636 = vsel %vm2634, 1, 0
          %vm2637 = vcmp.eq.s32.totalorder %v2635, 1
          %vm2638 = vcmp.eq.s32.totalorder %v2636, 1
          %v2639 = vlaneseq
          %v2640 = vshrl.u32 %v2639, 7
          %v2641 = vsub.s32 1, %v2640
          %v2642 = vrot.slane %v280, %v2641
          %v2643 = vsel %vm2637, %v2642, 0.0
          %v2644 = vsel %vm2638, %v2642, 0.0
          %vm2645 = vcmp.eq.s32.totalorder %v2609, 2
          %vm2646 = vcmp.eq.s32.totalorder %v2624, 2
          %v2647 = vsel %vm2645, 1, 0
          %v2648 = vsel %vm2646, 1, 0
          %vm2649 = vcmp.eq.s32.totalorder %v2647, 1
          %vm2650 = vcmp.eq.s32.totalorder %v2648, 1
          %v2651 = vlaneseq
          %v2652 = vshrl.u32 %v2651, 7
          %v2653 = vsub.s32 2, %v2652
          %v2654 = vrot.slane %v280, %v2653
          %v2655 = vsel %vm2649, %v2654, 0.0
          %v2656 = vsel %vm2650, %v2654, 0.0
          %vm2657 = vcmp.eq.s32.totalorder %v2609, 3
          %vm2658 = vcmp.eq.s32.totalorder %v2624, 3
          %v2659 = vsel %vm2657, 1, 0
          %v2660 = vsel %vm2658, 1, 0
          %vm2661 = vcmp.eq.s32.totalorder %v2659, 1
          %vm2662 = vcmp.eq.s32.totalorder %v2660, 1
          %v2663 = vlaneseq
          %v2664 = vshrl.u32 %v2663, 7
          %v2665 = vsub.s32 3, %v2664
          %v2666 = vrot.slane %v280, %v2665
          %v2667 = vsel %vm2661, %v2666, 0.0
          %v2668 = vsel %vm2662, %v2666, 0.0
          %vm2669 = vcmp.eq.s32.totalorder %v2609, 4
          %vm2670 = vcmp.eq.s32.totalorder %v2624, 4
          %v2671 = vsel %vm2669, 1, 0
          %v2672 = vsel %vm2670, 1, 0
          %vm2673 = vcmp.eq.s32.totalorder %v2671, 1
          %vm2674 = vcmp.eq.s32.totalorder %v2672, 1
          %v2675 = vlaneseq
          %v2676 = vshrl.u32 %v2675, 7
          %v2677 = vsub.s32 4, %v2676
          %v2678 = vrot.slane %v280, %v2677
          %v2679 = vsel %vm2673, %v2678, 0.0
          %v2680 = vsel %vm2674, %v2678, 0.0
          %vm2681 = vcmp.eq.s32.totalorder %v2609, 5
          %vm2682 = vcmp.eq.s32.totalorder %v2624, 5
          %v2683 = vsel %vm2681, 1, 0
          %v2684 = vsel %vm2682, 1, 0
          %vm2685 = vcmp.eq.s32.totalorder %v2683, 1
          %vm2686 = vcmp.eq.s32.totalorder %v2684, 1
          %v2687 = vlaneseq
          %v2688 = vshrl.u32 %v2687, 7
          %v2689 = vsub.s32 5, %v2688
          %v2690 = vrot.slane %v280, %v2689
          %v2691 = vsel %vm2685, %v2690, 0.0
          %v2692 = vsel %vm2686, %v2690, 0.0
          %vm2693 = vcmp.eq.s32.totalorder %v2609, 6
          %vm2694 = vcmp.eq.s32.totalorder %v2624, 6
          %v2695 = vsel %vm2693, 1, 0
          %v2696 = vsel %vm2694, 1, 0
          %vm2697 = vcmp.eq.s32.totalorder %v2695, 1
          %vm2698 = vcmp.eq.s32.totalorder %v2696, 1
          %v2699 = vlaneseq
          %v2700 = vshrl.u32 %v2699, 7
          %v2701 = vsub.s32 6, %v2700
          %v2702 = vrot.slane %v280, %v2701
          %v2703 = vsel %vm2697, %v2702, 0.0
          %v2704 = vsel %vm2698, %v2702, 0.0
          %vm2705 = vcmp.eq.s32.totalorder %v2609, 7
          %vm2706 = vcmp.eq.s32.totalorder %v2624, 7
          %v2707 = vsel %vm2705, 1, 0
          %v2708 = vsel %vm2706, 1, 0
          %vm2709 = vcmp.eq.s32.totalorder %v2707, 1
          %vm2710 = vcmp.eq.s32.totalorder %v2708, 1
          %v2711 = vlaneseq
          %v2712 = vshrl.u32 %v2711, 7
          %v2713 = vsub.s32 7, %v2712
          %v2714 = vrot.slane %v280, %v2713
          %v2715 = vsel %vm2709, %v2714, 0.0
          %v2716 = vsel %vm2710, %v2714, 0.0
          %vm2717 = vcmp.eq.s32.totalorder %v2609, 8
          %vm2718 = vcmp.eq.s32.totalorder %v2624, 8
          %v2719 = vsel %vm2717, 1, 0
          %v2720 = vsel %vm2718, 1, 0
          %vm2721 = vcmp.eq.s32.totalorder %v2719, 1
          %vm2722 = vcmp.eq.s32.totalorder %v2720, 1
          %v2723 = vlaneseq
          %v2724 = vshrl.u32 %v2723, 7
          %v2725 = vsub.s32 0, %v2724
          %v2726 = vrot.slane %v281, %v2725
          %v2727 = vsel %vm2721, %v2726, 0.0
          %v2728 = vsel %vm2722, %v2726, 0.0
          %vm2729 = vcmp.eq.s32.totalorder %v2609, 9
          %vm2730 = vcmp.eq.s32.totalorder %v2624, 9
          %v2731 = vsel %vm2729, 1, 0
          %v2732 = vsel %vm2730, 1, 0
          %vm2733 = vcmp.eq.s32.totalorder %v2731, 1
          %vm2734 = vcmp.eq.s32.totalorder %v2732, 1
          %v2735 = vlaneseq
          %v2736 = vshrl.u32 %v2735, 7
          %v2737 = vsub.s32 1, %v2736
          %v2738 = vrot.slane %v281, %v2737
          %v2739 = vsel %vm2733, %v2738, 0.0
          %v2740 = vsel %vm2734, %v2738, 0.0
          %vm2741 = vcmp.eq.s32.totalorder %v2609, 10
          %vm2742 = vcmp.eq.s32.totalorder %v2624, 10
          %v2743 = vsel %vm2741, 1, 0
          %v2744 = vsel %vm2742, 1, 0
          %vm2745 = vcmp.eq.s32.totalorder %v2743, 1
          %vm2746 = vcmp.eq.s32.totalorder %v2744, 1
          %v2747 = vlaneseq
          %v2748 = vshrl.u32 %v2747, 7
          %v2749 = vsub.s32 2, %v2748
          %v2750 = vrot.slane %v281, %v2749
          %v2751 = vsel %vm2745, %v2750, 0.0
          %v2752 = vsel %vm2746, %v2750, 0.0
          %vm2753 = vcmp.eq.s32.totalorder %v2609, 11
          %vm2754 = vcmp.eq.s32.totalorder %v2624, 11
          %v2755 = vsel %vm2753, 1, 0
          %v2756 = vsel %vm2754, 1, 0
          %vm2757 = vcmp.eq.s32.totalorder %v2755, 1
          %vm2758 = vcmp.eq.s32.totalorder %v2756, 1
          %v2759 = vlaneseq
          %v2760 = vshrl.u32 %v2759, 7
          %v2761 = vsub.s32 3, %v2760
          %v2762 = vrot.slane %v281, %v2761
          %v2763 = vsel %vm2757, %v2762, 0.0
          %v2764 = vsel %vm2758, %v2762, 0.0
          %vm2765 = vcmp.eq.s32.totalorder %v2609, 12
          %vm2766 = vcmp.eq.s32.totalorder %v2624, 12
          %v2767 = vsel %vm2765, 1, 0
          %v2768 = vsel %vm2766, 1, 0
          %vm2769 = vcmp.eq.s32.totalorder %v2767, 1
          %vm2770 = vcmp.eq.s32.totalorder %v2768, 1
          %v2771 = vlaneseq
          %v2772 = vshrl.u32 %v2771, 7
          %v2773 = vsub.s32 4, %v2772
          %v2774 = vrot.slane %v281, %v2773
          %v2775 = vsel %vm2769, %v2774, 0.0
          %v2776 = vsel %vm2770, %v2774, 0.0
          %vm2777 = vcmp.eq.s32.totalorder %v2609, 13
          %vm2778 = vcmp.eq.s32.totalorder %v2624, 13
          %v2779 = vsel %vm2777, 1, 0
          %v2780 = vsel %vm2778, 1, 0
          %vm2781 = vcmp.eq.s32.totalorder %v2779, 1
          %vm2782 = vcmp.eq.s32.totalorder %v2780, 1
          %v2783 = vlaneseq
          %v2784 = vshrl.u32 %v2783, 7
          %v2785 = vsub.s32 5, %v2784
          %v2786 = vrot.slane %v281, %v2785
          %v2787 = vsel %vm2781, %v2786, 0.0
          %v2788 = vsel %vm2782, %v2786, 0.0
          %vm2789 = vcmp.eq.s32.totalorder %v2609, 14
          %vm2790 = vcmp.eq.s32.totalorder %v2624, 14
          %v2791 = vsel %vm2789, 1, 0
          %v2792 = vsel %vm2790, 1, 0
          %vm2793 = vcmp.eq.s32.totalorder %v2791, 1
          %vm2794 = vcmp.eq.s32.totalorder %v2792, 1
          %v2795 = vlaneseq
          %v2796 = vshrl.u32 %v2795, 7
          %v2797 = vsub.s32 6, %v2796
          %v2798 = vrot.slane %v281, %v2797
          %v2799 = vsel %vm2793, %v2798, 0.0
          %v2800 = vsel %vm2794, %v2798, 0.0
          %vm2801 = vcmp.eq.s32.totalorder %v2609, 15
          %vm2802 = vcmp.eq.s32.totalorder %v2624, 15
          %v2803 = vsel %vm2801, 1, 0
          %v2804 = vsel %vm2802, 1, 0
          %vm2805 = vcmp.eq.s32.totalorder %v2803, 1
          %vm2806 = vcmp.eq.s32.totalorder %v2804, 1
          %v2807 = vlaneseq
          %v2808 = vshrl.u32 %v2807, 7
          %v2809 = vsub.s32 7, %v2808
          %v2810 = vrot.slane %v281, %v2809
          %v2811 = vsel %vm2805, %v2810, 0.0
          %v2812 = vsel %vm2806, %v2810, 0.0
          %v2813 = vadd.f32 %v2631, %v2643
          %v2814 = vadd.f32 %v2632, %v2644
          %v2815 = vadd.f32 %v2655, %v2667
          %v2816 = vadd.f32 %v2656, %v2668
          %v2817 = vadd.f32 %v2679, %v2691
          %v2818 = vadd.f32 %v2680, %v2692
          %v2819 = vadd.f32 %v2703, %v2715
          %v2820 = vadd.f32 %v2704, %v2716
          %v2821 = vadd.f32 %v2727, %v2739
          %v2822 = vadd.f32 %v2728, %v2740
          %v2823 = vadd.f32 %v2751, %v2763
          %v2824 = vadd.f32 %v2752, %v2764
          %v2825 = vadd.f32 %v2775, %v2787
          %v2826 = vadd.f32 %v2776, %v2788
          %v2827 = vadd.f32 %v2799, %v2811
          %v2828 = vadd.f32 %v2800, %v2812
          %v2829 = vadd.f32 %v2813, %v2815
          %v2830 = vadd.f32 %v2814, %v2816
          %v2831 = vadd.f32 %v2817, %v2819
          %v2832 = vadd.f32 %v2818, %v2820
          %v2833 = vadd.f32 %v2821, %v2823
          %v2834 = vadd.f32 %v2822, %v2824
          %v2835 = vadd.f32 %v2825, %v2827
          %v2836 = vadd.f32 %v2826, %v2828
          %v2837 = vadd.f32 %v2829, %v2831
          %v2838 = vadd.f32 %v2830, %v2832
          %v2839 = vadd.f32 %v2833, %v2835
          %v2840 = vadd.f32 %v2834, %v2836
          %v2841 = vadd.f32 %v2837, %v2839
          %v2842 = vadd.f32 %v2838, %v2840
        $region60: #{tpu_custom_call.1} parent=35 // pred_fallthru
          %v2843 = vphi %v746, %v2841
          %v2844 = vphi %v749, %v2842
          %v2845 = vphi %v549, %v2609
          %v2846 = vphi %v550, %v2624
        %v2847 = vadd.f32 %v2843, %v1653
        %v2848 = vadd.f32 %v2844, %v1656
        %v2849 = vadd.f32 %v2847, %v2566
        %v2850 = vadd.f32 %v2848, %v2569
        %v2851 = vxor.u32 %v2849, 2147483648
        %v2852 = vxor.u32 %v2850, 2147483648
        %v2853 = vmul.f32 %v2851, 1.442695
        %v2854 = vpow.pop %v2853
        %v2855 = vmul.f32 %v2852, 1.442695
        %v2856 = vpow.pop %v2855
        %v2857 = vadd.f32 %v2854, 1.0
        %v2858 = vadd.f32 %v2856, 1.0
        %v2859 = vrcp.pop %v2857
        %v2860 = vmul.f32 1.0, %v2859
        %v2861 = vrcp.pop %v2858
        %v2862 = vmul.f32 1.0, %v2861
        %2865 = vrot.lane.b32.xlu0 %v2566, 64
        %v2866 = vpop.permute.xlu0 %2865
        %2867 = vrot.lane.b32.xlu0 %v2569, 64
        %v2868 = vpop.permute.xlu0 %2867
        %v2871 = vmul.f32 %v2860, %v2866
        %v2872 = vmul.f32 %v2862, %v2868
        %2875 = vrot.lane.b32.xlu0 %v2871, 64
        %v2876 = vpop.permute.xlu0 %2875
        %2877 = vrot.lane.b32.xlu0 %v2872, 64
        %v2878 = vpop.permute.xlu0 %2877
        %v2881 = vadd.f32 %v2847, %v2876
        %v2882 = vadd.f32 %v2848, %v2878
        %v2883 = vtanh.pop %v2881
        %v2884 = vtanh.pop %v2882
        %v2885 = vsub.f32 1.0, %v2860
        %v2886 = vsub.f32 1.0, %v2862
        %2889 = vrot.lane.b32.xlu0 %v2883, 96
        %v2890 = vpop.permute.xlu0 %2889
        %2891 = vrot.lane.b32.xlu0 %v2884, 96
        %v2892 = vpop.permute.xlu0 %2891
        %v2895 = vmul.f32 %v2885, %v2890
        %v2896 = vmul.f32 %v2886, %v2892
        %v2897 = vmul.f32 %v2860, %v2522
        %v2898 = vmul.f32 %v2862, %v2523
        %v2899 = vadd.f32 %v2895, %v2897
        %v2900 = vadd.f32 %v2896, %v2898
        %v2901 = vpack.c.bf16 %v2900, %v2899
        %2903 = vrot.lane.b32.xlu0 %v2901, 96
        %v2904 = vpop.permute.xlu0 %2903
        %v2906 = vsel %vm802, %v2904, 0
        %2908 = vmatprep.subr.bf16.mxu0 0
        %2909 = vmatpush1.bf16.msra.mxu0 0
        %2910 = vmatprep.subr.bf16.mxu0 0
        %2911 = vmatpush1.bf16.msra.mxu0 0
        %2912 = vmatprep.subr.bf16.mxu0 0
        %2913 = vmatpush1.bf16.msra.mxu0 0
        %2914 = vmatprep.subr.bf16.mxu0 0
        %2915 = vmatpush1.bf16.msra.mxu0 0
        %2916 = vmatprep.subr.bf16.mxu0 0
        %2917 = vmatpush1.bf16.msra.mxu0 0
        %2918 = vmatprep.subr.bf16.mxu0 0
        %2919 = vmatpush1.bf16.msra.mxu0 0
        %2920 = vmatprep.subr.bf16.mxu0 0
        %2921 = vmatpush1.bf16.msra.mxu0 %v1668
        %2922 = vmatprep.subr.bf16.mxu0 0
        %2923 = vmatpush1.bf16.msra.mxu0 %v1667
        %2924 = vmatprep.subr.bf16.mxu0 0
        %2925 = vmatpush2.bf16.msra.mxu0 0
        %2926 = vmatprep.subr.bf16.mxu0 0
        %2927 = vmatpush2.bf16.msra.mxu0 0
        %2928 = vmatprep.subr.bf16.mxu0 0
        %2929 = vmatpush2.bf16.msra.mxu0 0
        %2930 = vmatprep.subr.bf16.mxu0 0
        %2931 = vmatpush2.bf16.msra.mxu0 0
        %2932 = vmatprep.subr.bf16.mxu0 0
        %2933 = vmatpush2.bf16.msra.mxu0 0
        %2934 = vmatprep.subr.bf16.mxu0 0
        %2935 = vmatpush2.bf16.msra.mxu0 0
        %2936 = vmatprep.subr.bf16.mxu0 0
        %2937 = vmatpush2.bf16.msra.mxu0 0
        %2938 = vmatprep.subr.bf16.mxu0 0
        %2939 = vmatpush2.bf16.msra.mxu0 0
        %2940 = vmatprep.mubr.bf16.mxu0 0
        %2941 = vmatmul.mubr.bf16.gmra.mxu0 %v2906
        %v2942 = vpop.f32.mrf.mxu0
        %v2943 = vadd.f32 %v290, %v2942
        %v2944 = vpop.f32.mrf.mxu0
        %v2945 = vpop.f32.mrf.mxu0
        %v2946 = vadd.f32 %v290, %v2945
        %v2947 = vpop.f32.mrf.mxu0
        %2948 = vdwg.mxu0
        %v2949 = vadd.f32 %v2847, %v2943
        %v2950 = vadd.f32 %v2848, %v2946
        %s2951 = sld [smem:[#allocation3 + $0x3]]
        %p2952 = scmp.eq.s32.totalorder %s2951, 1
        // Predicated region
        $region61: #{tpu_custom_call.1} parent=35 // pred_check
          %p2953 = pneg %p2952
        $region62: #{tpu_custom_call.1} parent=35 // pred_check_branch
          %2955 = sbr.rel (%p2953) target = $region64
        $region63: #{tpu_custom_call.1} parent=35 // pred_region
          _
        $region64: #{tpu_custom_call.1} parent=35 // pred_fallthru
          _
        %p2956 = pneg %p2952
        // Predicated region
        $region65: #{tpu_custom_call.1} parent=35 // pred_check
          _
        $region66: #{tpu_custom_call.1} parent=35 // pred_check_branch
          %2958 = sbr.rel (%p2952) target = $region68
        $region67: #{tpu_custom_call.1} parent=35 // pred_region
          %vm2959 = vcmask 917248
          %v2960 = vsel %vm2959, %v2949, -inf
          %2961 = vmax.xlane.f32.xlu0 %v2960
          %v2962 = vpop.xlane.xlu0 %2961
          %v2963 = vsel %vm2959, %v2950, -inf
          %2964 = vmax.xlane.f32.xlu0 %v2963
          %v2965 = vpop.xlane.xlu0 %2964
          %vm2966 = vcmp.eq.f32.partialorder %v2949, %v2962
          %vm2967 = vcmp.eq.f32.partialorder %v2950, %v2965
          %2968 = vrot.lane.b32.xlu0 %v312, 96
          %v2969 = vpop.permute.xlu0 %2968
          %v2970 = vsel %vm2966, %v2969, 16
          %v2971 = vsel %vm2967, %v2969, 16
          %v2972 = vsel %vm2959, %v2970, 2147483647
          %v2973 = vand.u32 %v2972, 65535
          %v2974 = vshra.s32 %v2972, 16
          %v2975 = vcvt.s32.f32 %v2973
          %v2976 = vcvt.s32.f32 %v2974
          %2977 = vmin.xlane.f32.xlu0 %v2976
          %v2978 = vpop.xlane.xlu0 %2977
          %vm2979 = vcmp.eq.f32.partialorder %v2976, %v2978
          %v2980 = vsel %vm2979, %v2975, inf
          %2981 = vmin.xlane.f32.xlu0 %v2980
          %v2982 = vpop.xlane.xlu0 %2981
          %v2983 = vcvt.f32.s32 %v2982
          %v2984 = vcvt.f32.s32 %v2978
          %v2985 = vshll.u32 %v2984, 16
          %v2986 = vadd.s32 %v2985, %v2983
          %v2987 = vsel %vm2959, %v2971, 2147483647
          %v2988 = vand.u32 %v2987, 65535
          %v2989 = vshra.s32 %v2987, 16
          %v2990 = vcvt.s32.f32 %v2988
          %v2991 = vcvt.s32.f32 %v2989
          %2992 = vmin.xlane.f32.xlu0 %v2991
          %v2993 = vpop.xlane.xlu0 %2992
          %vm2994 = vcmp.eq.f32.partialorder %v2991, %v2993
          %v2995 = vsel %vm2994, %v2990, inf
          %2996 = vmin.xlane.f32.xlu0 %v2995
          %v2997 = vpop.xlane.xlu0 %2996
          %v2998 = vcvt.f32.s32 %v2997
          %v2999 = vcvt.f32.s32 %v2993
          %v3000 = vshll.u32 %v2999, 16
          %v3001 = vadd.s32 %v3000, %v2998
          %vm3002 = vcmp.eq.s32.totalorder %v2986, 0
          %vm3003 = vcmp.eq.s32.totalorder %v3001, 0
          %v3004 = vsel %vm3002, 1, 0
          %v3005 = vsel %vm3003, 1, 0
          %vm3006 = vcmp.eq.s32.totalorder %v3004, 1
          %vm3007 = vcmp.eq.s32.totalorder %v3005, 1
          %v3008 = vsel %vm3006, %v1715, 0.0
          %v3009 = vsel %vm3007, %v1715, 0.0
          %vm3010 = vcmp.eq.s32.totalorder %v2986, 1
          %vm3011 = vcmp.eq.s32.totalorder %v3001, 1
          %v3012 = vsel %vm3010, 1, 0
          %v3013 = vsel %vm3011, 1, 0
          %vm3014 = vcmp.eq.s32.totalorder %v3012, 1
          %vm3015 = vcmp.eq.s32.totalorder %v3013, 1
          %v3016 = vlaneseq
          %v3017 = vshrl.u32 %v3016, 7
          %v3018 = vsub.s32 1, %v3017
          %v3019 = vrot.slane %v280, %v3018
          %v3020 = vsel %vm3014, %v3019, 0.0
          %v3021 = vsel %vm3015, %v3019, 0.0
          %vm3022 = vcmp.eq.s32.totalorder %v2986, 2
          %vm3023 = vcmp.eq.s32.totalorder %v3001, 2
          %v3024 = vsel %vm3022, 1, 0
          %v3025 = vsel %vm3023, 1, 0
          %vm3026 = vcmp.eq.s32.totalorder %v3024, 1
          %vm3027 = vcmp.eq.s32.totalorder %v3025, 1
          %v3028 = vlaneseq
          %v3029 = vshrl.u32 %v3028, 7
          %v3030 = vsub.s32 2, %v3029
          %v3031 = vrot.slane %v280, %v3030
          %v3032 = vsel %vm3026, %v3031, 0.0
          %v3033 = vsel %vm3027, %v3031, 0.0
          %vm3034 = vcmp.eq.s32.totalorder %v2986, 3
          %vm3035 = vcmp.eq.s32.totalorder %v3001, 3
          %v3036 = vsel %vm3034, 1, 0
          %v3037 = vsel %vm3035, 1, 0
          %vm3038 = vcmp.eq.s32.totalorder %v3036, 1
          %vm3039 = vcmp.eq.s32.totalorder %v3037, 1
          %v3040 = vlaneseq
          %v3041 = vshrl.u32 %v3040, 7
          %v3042 = vsub.s32 3, %v3041
          %v3043 = vrot.slane %v280, %v3042
          %v3044 = vsel %vm3038, %v3043, 0.0
          %v3045 = vsel %vm3039, %v3043, 0.0
          %vm3046 = vcmp.eq.s32.totalorder %v2986, 4
          %vm3047 = vcmp.eq.s32.totalorder %v3001, 4
          %v3048 = vsel %vm3046, 1, 0
          %v3049 = vsel %vm3047, 1, 0
          %vm3050 = vcmp.eq.s32.totalorder %v3048, 1
          %vm3051 = vcmp.eq.s32.totalorder %v3049, 1
          %v3052 = vlaneseq
          %v3053 = vshrl.u32 %v3052, 7
          %v3054 = vsub.s32 4, %v3053
          %v3055 = vrot.slane %v280, %v3054
          %v3056 = vsel %vm3050, %v3055, 0.0
          %v3057 = vsel %vm3051, %v3055, 0.0
          %vm3058 = vcmp.eq.s32.totalorder %v2986, 5
          %vm3059 = vcmp.eq.s32.totalorder %v3001, 5
          %v3060 = vsel %vm3058, 1, 0
          %v3061 = vsel %vm3059, 1, 0
          %vm3062 = vcmp.eq.s32.totalorder %v3060, 1
          %vm3063 = vcmp.eq.s32.totalorder %v3061, 1
          %v3064 = vlaneseq
          %v3065 = vshrl.u32 %v3064, 7
          %v3066 = vsub.s32 5, %v3065
          %v3067 = vrot.slane %v280, %v3066
          %v3068 = vsel %vm3062, %v3067, 0.0
          %v3069 = vsel %vm3063, %v3067, 0.0
          %vm3070 = vcmp.eq.s32.totalorder %v2986, 6
          %vm3071 = vcmp.eq.s32.totalorder %v3001, 6
          %v3072 = vsel %vm3070, 1, 0
          %v3073 = vsel %vm3071, 1, 0
          %vm3074 = vcmp.eq.s32.totalorder %v3072, 1
          %vm3075 = vcmp.eq.s32.totalorder %v3073, 1
          %v3076 = vlaneseq
          %v3077 = vshrl.u32 %v3076, 7
          %v3078 = vsub.s32 6, %v3077
          %v3079 = vrot.slane %v280, %v3078
          %v3080 = vsel %vm3074, %v3079, 0.0
          %v3081 = vsel %vm3075, %v3079, 0.0
          %vm3082 = vcmp.eq.s32.totalorder %v2986, 7
          %vm3083 = vcmp.eq.s32.totalorder %v3001, 7
          %v3084 = vsel %vm3082, 1, 0
          %v3085 = vsel %vm3083, 1, 0
          %vm3086 = vcmp.eq.s32.totalorder %v3084, 1
          %vm3087 = vcmp.eq.s32.totalorder %v3085, 1
          %v3088 = vlaneseq
          %v3089 = vshrl.u32 %v3088, 7
          %v3090 = vsub.s32 7, %v3089
          %v3091 = vrot.slane %v280, %v3090
          %v3092 = vsel %vm3086, %v3091, 0.0
          %v3093 = vsel %vm3087, %v3091, 0.0
          %vm3094 = vcmp.eq.s32.totalorder %v2986, 8
          %vm3095 = vcmp.eq.s32.totalorder %v3001, 8
          %v3096 = vsel %vm3094, 1, 0
          %v3097 = vsel %vm3095, 1, 0
          %vm3098 = vcmp.eq.s32.totalorder %v3096, 1
          %vm3099 = vcmp.eq.s32.totalorder %v3097, 1
          %v3100 = vlaneseq
          %v3101 = vshrl.u32 %v3100, 7
          %v3102 = vsub.s32 0, %v3101
          %v3103 = vrot.slane %v281, %v3102
          %v3104 = vsel %vm3098, %v3103, 0.0
          %v3105 = vsel %vm3099, %v3103, 0.0
          %vm3106 = vcmp.eq.s32.totalorder %v2986, 9
          %vm3107 = vcmp.eq.s32.totalorder %v3001, 9
          %v3108 = vsel %vm3106, 1, 0
          %v3109 = vsel %vm3107, 1, 0
          %vm3110 = vcmp.eq.s32.totalorder %v3108, 1
          %vm3111 = vcmp.eq.s32.totalorder %v3109, 1
          %v3112 = vlaneseq
          %v3113 = vshrl.u32 %v3112, 7
          %v3114 = vsub.s32 1, %v3113
          %v3115 = vrot.slane %v281, %v3114
          %v3116 = vsel %vm3110, %v3115, 0.0
          %v3117 = vsel %vm3111, %v3115, 0.0
          %vm3118 = vcmp.eq.s32.totalorder %v2986, 10
          %vm3119 = vcmp.eq.s32.totalorder %v3001, 10
          %v3120 = vsel %vm3118, 1, 0
          %v3121 = vsel %vm3119, 1, 0
          %vm3122 = vcmp.eq.s32.totalorder %v3120, 1
          %vm3123 = vcmp.eq.s32.totalorder %v3121, 1
          %v3124 = vlaneseq
          %v3125 = vshrl.u32 %v3124, 7
          %v3126 = vsub.s32 2, %v3125
          %v3127 = vrot.slane %v281, %v3126
          %v3128 = vsel %vm3122, %v3127, 0.0
          %v3129 = vsel %vm3123, %v3127, 0.0
          %vm3130 = vcmp.eq.s32.totalorder %v2986, 11
          %vm3131 = vcmp.eq.s32.totalorder %v3001, 11
          %v3132 = vsel %vm3130, 1, 0
          %v3133 = vsel %vm3131, 1, 0
          %vm3134 = vcmp.eq.s32.totalorder %v3132, 1
          %vm3135 = vcmp.eq.s32.totalorder %v3133, 1
          %v3136 = vlaneseq
          %v3137 = vshrl.u32 %v3136, 7
          %v3138 = vsub.s32 3, %v3137
          %v3139 = vrot.slane %v281, %v3138
          %v3140 = vsel %vm3134, %v3139, 0.0
          %v3141 = vsel %vm3135, %v3139, 0.0
          %vm3142 = vcmp.eq.s32.totalorder %v2986, 12
          %vm3143 = vcmp.eq.s32.totalorder %v3001, 12
          %v3144 = vsel %vm3142, 1, 0
          %v3145 = vsel %vm3143, 1, 0
          %vm3146 = vcmp.eq.s32.totalorder %v3144, 1
          %vm3147 = vcmp.eq.s32.totalorder %v3145, 1
          %v3148 = vlaneseq
          %v3149 = vshrl.u32 %v3148, 7
          %v3150 = vsub.s32 4, %v3149
          %v3151 = vrot.slane %v281, %v3150
          %v3152 = vsel %vm3146, %v3151, 0.0
          %v3153 = vsel %vm3147, %v3151, 0.0
          %vm3154 = vcmp.eq.s32.totalorder %v2986, 13
          %vm3155 = vcmp.eq.s32.totalorder %v3001, 13
          %v3156 = vsel %vm3154, 1, 0
          %v3157 = vsel %vm3155, 1, 0
          %vm3158 = vcmp.eq.s32.totalorder %v3156, 1
          %vm3159 = vcmp.eq.s32.totalorder %v3157, 1
          %v3160 = vlaneseq
          %v3161 = vshrl.u32 %v3160, 7
          %v3162 = vsub.s32 5, %v3161
          %v3163 = vrot.slane %v281, %v3162
          %v3164 = vsel %vm3158, %v3163, 0.0
          %v3165 = vsel %vm3159, %v3163, 0.0
          %vm3166 = vcmp.eq.s32.totalorder %v2986, 14
          %vm3167 = vcmp.eq.s32.totalorder %v3001, 14
          %v3168 = vsel %vm3166, 1, 0
          %v3169 = vsel %vm3167, 1, 0
          %vm3170 = vcmp.eq.s32.totalorder %v3168, 1
          %vm3171 = vcmp.eq.s32.totalorder %v3169, 1
          %v3172 = vlaneseq
          %v3173 = vshrl.u32 %v3172, 7
          %v3174 = vsub.s32 6, %v3173
          %v3175 = vrot.slane %v281, %v3174
          %v3176 = vsel %vm3170, %v3175, 0.0
          %v3177 = vsel %vm3171, %v3175, 0.0
          %vm3178 = vcmp.eq.s32.totalorder %v2986, 15
          %vm3179 = vcmp.eq.s32.totalorder %v3001, 15
          %v3180 = vsel %vm3178, 1, 0
          %v3181 = vsel %vm3179, 1, 0
          %vm3182 = vcmp.eq.s32.totalorder %v3180, 1
          %vm3183 = vcmp.eq.s32.totalorder %v3181, 1
          %v3184 = vlaneseq
          %v3185 = vshrl.u32 %v3184, 7
          %v3186 = vsub.s32 7, %v3185
          %v3187 = vrot.slane %v281, %v3186
          %v3188 = vsel %vm3182, %v3187, 0.0
          %v3189 = vsel %vm3183, %v3187, 0.0
          %v3190 = vadd.f32 %v3008, %v3020
          %v3191 = vadd.f32 %v3009, %v3021
          %v3192 = vadd.f32 %v3032, %v3044
          %v3193 = vadd.f32 %v3033, %v3045
          %v3194 = vadd.f32 %v3056, %v3068
          %v3195 = vadd.f32 %v3057, %v3069
          %v3196 = vadd.f32 %v3080, %v3092
          %v3197 = vadd.f32 %v3081, %v3093
          %v3198 = vadd.f32 %v3104, %v3116
          %v3199 = vadd.f32 %v3105, %v3117
          %v3200 = vadd.f32 %v3128, %v3140
          %v3201 = vadd.f32 %v3129, %v3141
          %v3202 = vadd.f32 %v3152, %v3164
          %v3203 = vadd.f32 %v3153, %v3165
          %v3204 = vadd.f32 %v3176, %v3188
          %v3205 = vadd.f32 %v3177, %v3189
          %v3206 = vadd.f32 %v3190, %v3192
          %v3207 = vadd.f32 %v3191, %v3193
          %v3208 = vadd.f32 %v3194, %v3196
          %v3209 = vadd.f32 %v3195, %v3197
          %v3210 = vadd.f32 %v3198, %v3200
          %v3211 = vadd.f32 %v3199, %v3201
          %v3212 = vadd.f32 %v3202, %v3204
          %v3213 = vadd.f32 %v3203, %v3205
          %v3214 = vadd.f32 %v3206, %v3208
          %v3215 = vadd.f32 %v3207, %v3209
          %v3216 = vadd.f32 %v3210, %v3212
          %v3217 = vadd.f32 %v3211, %v3213
          %v3218 = vadd.f32 %v3214, %v3216
          %v3219 = vadd.f32 %v3215, %v3217
        $region68: #{tpu_custom_call.1} parent=35 // pred_fallthru
          %v3220 = vphi %v754, %v3218
          %v3221 = vphi %v757, %v3219
          %v3222 = vphi %v551, %v2986
          %v3223 = vphi %v552, %v3001
        %v3224 = vadd.f32 %v3220, %v1653
        %v3225 = vadd.f32 %v3221, %v1656
        %v3226 = vadd.f32 %v3224, %v2943
        %v3227 = vadd.f32 %v3225, %v2946
        %v3228 = vxor.u32 %v3226, 2147483648
        %v3229 = vxor.u32 %v3227, 2147483648
        %v3230 = vmul.f32 %v3228, 1.442695
        %v3231 = vpow.pop %v3230
        %v3232 = vmul.f32 %v3229, 1.442695
        %v3233 = vpow.pop %v3232
        %v3234 = vadd.f32 %v3231, 1.0
        %v3235 = vadd.f32 %v3233, 1.0
        %v3236 = vrcp.pop %v3234
        %v3237 = vmul.f32 1.0, %v3236
        %v3238 = vrcp.pop %v3235
        %v3239 = vmul.f32 1.0, %v3238
        %3242 = vrot.lane.b32.xlu0 %v2943, 64
        %v3243 = vpop.permute.xlu0 %3242
        %3244 = vrot.lane.b32.xlu0 %v2946, 64
        %v3245 = vpop.permute.xlu0 %3244
        %v3248 = vmul.f32 %v3237, %v3243
        %v3249 = vmul.f32 %v3239, %v3245
        %3252 = vrot.lane.b32.xlu0 %v3248, 64
        %v3253 = vpop.permute.xlu0 %3252
        %3254 = vrot.lane.b32.xlu0 %v3249, 64
        %v3255 = vpop.permute.xlu0 %3254
        %v3258 = vadd.f32 %v3224, %v3253
        %v3259 = vadd.f32 %v3225, %v3255
        %v3260 = vtanh.pop %v3258
        %v3261 = vtanh.pop %v3259
        %v3262 = vsub.f32 1.0, %v3237
        %v3263 = vsub.f32 1.0, %v3239
        %3266 = vrot.lane.b32.xlu0 %v3260, 96
        %v3267 = vpop.permute.xlu0 %3266
        %3268 = vrot.lane.b32.xlu0 %v3261, 96
        %v3269 = vpop.permute.xlu0 %3268
        %v3272 = vmul.f32 %v3262, %v3267
        %v3273 = vmul.f32 %v3263, %v3269
        %v3274 = vmul.f32 %v3237, %v2899
        %v3275 = vmul.f32 %v3239, %v2900
        %v3276 = vadd.f32 %v3272, %v3274
        %v3277 = vadd.f32 %v3273, %v3275
        %v3278 = vpack.c.bf16 %v3277, %v3276
        %3280 = vrot.lane.b32.xlu0 %v3278, 96
        %v3281 = vpop.permute.xlu0 %3280
        %v3283 = vsel %vm802, %v3281, 0
        %3285 = vmatprep.subr.bf16.mxu0 0
        %3286 = vmatpush1.bf16.msra.mxu0 0
        %3287 = vmatprep.subr.bf16.mxu0 0
        %3288 = vmatpush1.bf16.msra.mxu0 0
        %3289 = vmatprep.subr.bf16.mxu0 0
        %3290 = vmatpush1.bf16.msra.mxu0 0
        %3291 = vmatprep.subr.bf16.mxu0 0
        %3292 = vmatpush1.bf16.msra.mxu0 0
        %3293 = vmatprep.subr.bf16.mxu0 0
        %3294 = vmatpush1.bf16.msra.mxu0 0
        %3295 = vmatprep.subr.bf16.mxu0 0
        %3296 = vmatpush1.bf16.msra.mxu0 0
        %3297 = vmatprep.subr.bf16.mxu0 0
        %3298 = vmatpush1.bf16.msra.mxu0 %v1668
        %3299 = vmatprep.subr.bf16.mxu0 0
        %3300 = vmatpush1.bf16.msra.mxu0 %v1667
        %3301 = vmatprep.subr.bf16.mxu0 0
        %3302 = vmatpush2.bf16.msra.mxu0 0
        %3303 = vmatprep.subr.bf16.mxu0 0
        %3304 = vmatpush2.bf16.msra.mxu0 0
        %3305 = vmatprep.subr.bf16.mxu0 0
        %3306 = vmatpush2.bf16.msra.mxu0 0
        %3307 = vmatprep.subr.bf16.mxu0 0
        %3308 = vmatpush2.bf16.msra.mxu0 0
        %3309 = vmatprep.subr.bf16.mxu0 0
        %3310 = vmatpush2.bf16.msra.mxu0 0
        %3311 = vmatprep.subr.bf16.mxu0 0
        %3312 = vmatpush2.bf16.msra.mxu0 0
        %3313 = vmatprep.subr.bf16.mxu0 0
        %3314 = vmatpush2.bf16.msra.mxu0 0
        %3315 = vmatprep.subr.bf16.mxu0 0
        %3316 = vmatpush2.bf16.msra.mxu0 0
        %3317 = vmatprep.mubr.bf16.mxu0 0
        %3318 = vmatmul.mubr.bf16.gmra.mxu0 %v3283
        %v3319 = vpop.f32.mrf.mxu0
        %v3320 = vadd.f32 %v290, %v3319
        %v3321 = vpop.f32.mrf.mxu0
        %v3322 = vpop.f32.mrf.mxu0
        %v3323 = vadd.f32 %v290, %v3322
        %v3324 = vpop.f32.mrf.mxu0
        %3325 = vdwg.mxu0
        %v3326 = vadd.f32 %v3224, %v3320
        %v3327 = vadd.f32 %v3225, %v3323
        %s3328 = sld [smem:[#allocation3 + $0x4]]
        %p3329 = scmp.eq.s32.totalorder %s3328, 1
        // Predicated region
        $region69: #{tpu_custom_call.1} parent=35 // pred_check
          %p3330 = pneg %p3329
        $region70: #{tpu_custom_call.1} parent=35 // pred_check_branch
          %3332 = sbr.rel (%p3330) target = $region72
        $region71: #{tpu_custom_call.1} parent=35 // pred_region
          _
        $region72: #{tpu_custom_call.1} parent=35 // pred_fallthru
          _
        %p3333 = pneg %p3329
        // Predicated region
        $region73: #{tpu_custom_call.1} parent=35 // pred_check
          _
        $region74: #{tpu_custom_call.1} parent=35 // pred_check_branch
          %3335 = sbr.rel (%p3329) target = $region76
        $region75: #{tpu_custom_call.1} parent=35 // pred_region
          %vm3336 = vcmask 917248
          %v3337 = vsel %vm3336, %v3326, -inf
          %3338 = vmax.xlane.f32.xlu0 %v3337
          %v3339 = vpop.xlane.xlu0 %3338
          %v3340 = vsel %vm3336, %v3327, -inf
          %3341 = vmax.xlane.f32.xlu0 %v3340
          %v3342 = vpop.xlane.xlu0 %3341
          %vm3343 = vcmp.eq.f32.partialorder %v3326, %v3339
          %vm3344 = vcmp.eq.f32.partialorder %v3327, %v3342
          %3345 = vrot.lane.b32.xlu0 %v312, 96
          %v3346 = vpop.permute.xlu0 %3345
          %v3347 = vsel %vm3343, %v3346, 16
          %v3348 = vsel %vm3344, %v3346, 16
          %v3349 = vsel %vm3336, %v3347, 2147483647
          %v3350 = vand.u32 %v3349, 65535
          %v3351 = vshra.s32 %v3349, 16
          %v3352 = vcvt.s32.f32 %v3350
          %v3353 = vcvt.s32.f32 %v3351
          %3354 = vmin.xlane.f32.xlu0 %v3353
          %v3355 = vpop.xlane.xlu0 %3354
          %vm3356 = vcmp.eq.f32.partialorder %v3353, %v3355
          %v3357 = vsel %vm3356, %v3352, inf
          %3358 = vmin.xlane.f32.xlu0 %v3357
          %v3359 = vpop.xlane.xlu0 %3358
          %v3360 = vcvt.f32.s32 %v3359
          %v3361 = vcvt.f32.s32 %v3355
          %v3362 = vshll.u32 %v3361, 16
          %v3363 = vadd.s32 %v3362, %v3360
          %v3364 = vsel %vm3336, %v3348, 2147483647
          %v3365 = vand.u32 %v3364, 65535
          %v3366 = vshra.s32 %v3364, 16
          %v3367 = vcvt.s32.f32 %v3365
          %v3368 = vcvt.s32.f32 %v3366
          %3369 = vmin.xlane.f32.xlu0 %v3368
          %v3370 = vpop.xlane.xlu0 %3369
          %vm3371 = vcmp.eq.f32.partialorder %v3368, %v3370
          %v3372 = vsel %vm3371, %v3367, inf
          %3373 = vmin.xlane.f32.xlu0 %v3372
          %v3374 = vpop.xlane.xlu0 %3373
          %v3375 = vcvt.f32.s32 %v3374
          %v3376 = vcvt.f32.s32 %v3370
          %v3377 = vshll.u32 %v3376, 16
          %v3378 = vadd.s32 %v3377, %v3375
          %vm3379 = vcmp.eq.s32.totalorder %v3363, 0
          %vm3380 = vcmp.eq.s32.totalorder %v3378, 0
          %v3381 = vsel %vm3379, 1, 0
          %v3382 = vsel %vm3380, 1, 0
          %vm3383 = vcmp.eq.s32.totalorder %v3381, 1
          %vm3384 = vcmp.eq.s32.totalorder %v3382, 1
          %v3385 = vsel %vm3383, %v1715, 0.0
          %v3386 = vsel %vm3384, %v1715, 0.0
          %vm3387 = vcmp.eq.s32.totalorder %v3363, 1
          %vm3388 = vcmp.eq.s32.totalorder %v3378, 1
          %v3389 = vsel %vm3387, 1, 0
          %v3390 = vsel %vm3388, 1, 0
          %vm3391 = vcmp.eq.s32.totalorder %v3389, 1
          %vm3392 = vcmp.eq.s32.totalorder %v3390, 1
          %v3393 = vlaneseq
          %v3394 = vshrl.u32 %v3393, 7
          %v3395 = vsub.s32 1, %v3394
          %v3396 = vrot.slane %v280, %v3395
          %v3397 = vsel %vm3391, %v3396, 0.0
          %v3398 = vsel %vm3392, %v3396, 0.0
          %vm3399 = vcmp.eq.s32.totalorder %v3363, 2
          %vm3400 = vcmp.eq.s32.totalorder %v3378, 2
          %v3401 = vsel %vm3399, 1, 0
          %v3402 = vsel %vm3400, 1, 0
          %vm3403 = vcmp.eq.s32.totalorder %v3401, 1
          %vm3404 = vcmp.eq.s32.totalorder %v3402, 1
          %v3405 = vlaneseq
          %v3406 = vshrl.u32 %v3405, 7
          %v3407 = vsub.s32 2, %v3406
          %v3408 = vrot.slane %v280, %v3407
          %v3409 = vsel %vm3403, %v3408, 0.0
          %v3410 = vsel %vm3404, %v3408, 0.0
          %vm3411 = vcmp.eq.s32.totalorder %v3363, 3
          %vm3412 = vcmp.eq.s32.totalorder %v3378, 3
          %v3413 = vsel %vm3411, 1, 0
          %v3414 = vsel %vm3412, 1, 0
          %vm3415 = vcmp.eq.s32.totalorder %v3413, 1
          %vm3416 = vcmp.eq.s32.totalorder %v3414, 1
          %v3417 = vlaneseq
          %v3418 = vshrl.u32 %v3417, 7
          %v3419 = vsub.s32 3, %v3418
          %v3420 = vrot.slane %v280, %v3419
          %v3421 = vsel %vm3415, %v3420, 0.0
          %v3422 = vsel %vm3416, %v3420, 0.0
          %vm3423 = vcmp.eq.s32.totalorder %v3363, 4
          %vm3424 = vcmp.eq.s32.totalorder %v3378, 4
          %v3425 = vsel %vm3423, 1, 0
          %v3426 = vsel %vm3424, 1, 0
          %vm3427 = vcmp.eq.s32.totalorder %v3425, 1
          %vm3428 = vcmp.eq.s32.totalorder %v3426, 1
          %v3429 = vlaneseq
          %v3430 = vshrl.u32 %v3429, 7
          %v3431 = vsub.s32 4, %v3430
          %v3432 = vrot.slane %v280, %v3431
          %v3433 = vsel %vm3427, %v3432, 0.0
          %v3434 = vsel %vm3428, %v3432, 0.0
          %vm3435 = vcmp.eq.s32.totalorder %v3363, 5
          %vm3436 = vcmp.eq.s32.totalorder %v3378, 5
          %v3437 = vsel %vm3435, 1, 0
          %v3438 = vsel %vm3436, 1, 0
          %vm3439 = vcmp.eq.s32.totalorder %v3437, 1
          %vm3440 = vcmp.eq.s32.totalorder %v3438, 1
          %v3441 = vlaneseq
          %v3442 = vshrl.u32 %v3441, 7
          %v3443 = vsub.s32 5, %v3442
          %v3444 = vrot.slane %v280, %v3443
          %v3445 = vsel %vm3439, %v3444, 0.0
          %v3446 = vsel %vm3440, %v3444, 0.0
          %vm3447 = vcmp.eq.s32.totalorder %v3363, 6
          %vm3448 = vcmp.eq.s32.totalorder %v3378, 6
          %v3449 = vsel %vm3447, 1, 0
          %v3450 = vsel %vm3448, 1, 0
          %vm3451 = vcmp.eq.s32.totalorder %v3449, 1
          %vm3452 = vcmp.eq.s32.totalorder %v3450, 1
          %v3453 = vlaneseq
          %v3454 = vshrl.u32 %v3453, 7
          %v3455 = vsub.s32 6, %v3454
          %v3456 = vrot.slane %v280, %v3455
          %v3457 = vsel %vm3451, %v3456, 0.0
          %v3458 = vsel %vm3452, %v3456, 0.0
          %vm3459 = vcmp.eq.s32.totalorder %v3363, 7
          %vm3460 = vcmp.eq.s32.totalorder %v3378, 7
          %v3461 = vsel %vm3459, 1, 0
          %v3462 = vsel %vm3460, 1, 0
          %vm3463 = vcmp.eq.s32.totalorder %v3461, 1
          %vm3464 = vcmp.eq.s32.totalorder %v3462, 1
          %v3465 = vlaneseq
          %v3466 = vshrl.u32 %v3465, 7
          %v3467 = vsub.s32 7, %v3466
          %v3468 = vrot.slane %v280, %v3467
          %v3469 = vsel %vm3463, %v3468, 0.0
          %v3470 = vsel %vm3464, %v3468, 0.0
          %vm3471 = vcmp.eq.s32.totalorder %v3363, 8
          %vm3472 = vcmp.eq.s32.totalorder %v3378, 8
          %v3473 = vsel %vm3471, 1, 0
          %v3474 = vsel %vm3472, 1, 0
          %vm3475 = vcmp.eq.s32.totalorder %v3473, 1
          %vm3476 = vcmp.eq.s32.totalorder %v3474, 1
          %v3477 = vlaneseq
          %v3478 = vshrl.u32 %v3477, 7
          %v3479 = vsub.s32 0, %v3478
          %v3480 = vrot.slane %v281, %v3479
          %v3481 = vsel %vm3475, %v3480, 0.0
          %v3482 = vsel %vm3476, %v3480, 0.0
          %vm3483 = vcmp.eq.s32.totalorder %v3363, 9
          %vm3484 = vcmp.eq.s32.totalorder %v3378, 9
          %v3485 = vsel %vm3483, 1, 0
          %v3486 = vsel %vm3484, 1, 0
          %vm3487 = vcmp.eq.s32.totalorder %v3485, 1
          %vm3488 = vcmp.eq.s32.totalorder %v3486, 1
          %v3489 = vlaneseq
          %v3490 = vshrl.u32 %v3489, 7
          %v3491 = vsub.s32 1, %v3490
          %v3492 = vrot.slane %v281, %v3491
          %v3493 = vsel %vm3487, %v3492, 0.0
          %v3494 = vsel %vm3488, %v3492, 0.0
          %vm3495 = vcmp.eq.s32.totalorder %v3363, 10
          %vm3496 = vcmp.eq.s32.totalorder %v3378, 10
          %v3497 = vsel %vm3495, 1, 0
          %v3498 = vsel %vm3496, 1, 0
          %vm3499 = vcmp.eq.s32.totalorder %v3497, 1
          %vm3500 = vcmp.eq.s32.totalorder %v3498, 1
          %v3501 = vlaneseq
          %v3502 = vshrl.u32 %v3501, 7
          %v3503 = vsub.s32 2, %v3502
          %v3504 = vrot.slane %v281, %v3503
          %v3505 = vsel %vm3499, %v3504, 0.0
          %v3506 = vsel %vm3500, %v3504, 0.0
          %vm3507 = vcmp.eq.s32.totalorder %v3363, 11
          %vm3508 = vcmp.eq.s32.totalorder %v3378, 11
          %v3509 = vsel %vm3507, 1, 0
          %v3510 = vsel %vm3508, 1, 0
          %vm3511 = vcmp.eq.s32.totalorder %v3509, 1
          %vm3512 = vcmp.eq.s32.totalorder %v3510, 1
          %v3513 = vlaneseq
          %v3514 = vshrl.u32 %v3513, 7
          %v3515 = vsub.s32 3, %v3514
          %v3516 = vrot.slane %v281, %v3515
          %v3517 = vsel %vm3511, %v3516, 0.0
          %v3518 = vsel %vm3512, %v3516, 0.0
          %vm3519 = vcmp.eq.s32.totalorder %v3363, 12
          %vm3520 = vcmp.eq.s32.totalorder %v3378, 12
          %v3521 = vsel %vm3519, 1, 0
          %v3522 = vsel %vm3520, 1, 0
          %vm3523 = vcmp.eq.s32.totalorder %v3521, 1
          %vm3524 = vcmp.eq.s32.totalorder %v3522, 1
          %v3525 = vlaneseq
          %v3526 = vshrl.u32 %v3525, 7
          %v3527 = vsub.s32 4, %v3526
          %v3528 = vrot.slane %v281, %v3527
          %v3529 = vsel %vm3523, %v3528, 0.0
          %v3530 = vsel %vm3524, %v3528, 0.0
          %vm3531 = vcmp.eq.s32.totalorder %v3363, 13
          %vm3532 = vcmp.eq.s32.totalorder %v3378, 13
          %v3533 = vsel %vm3531, 1, 0
          %v3534 = vsel %vm3532, 1, 0
          %vm3535 = vcmp.eq.s32.totalorder %v3533, 1
          %vm3536 = vcmp.eq.s32.totalorder %v3534, 1
          %v3537 = vlaneseq
          %v3538 = vshrl.u32 %v3537, 7
          %v3539 = vsub.s32 5, %v3538
          %v3540 = vrot.slane %v281, %v3539
          %v3541 = vsel %vm3535, %v3540, 0.0
          %v3542 = vsel %vm3536, %v3540, 0.0
          %vm3543 = vcmp.eq.s32.totalorder %v3363, 14
          %vm3544 = vcmp.eq.s32.totalorder %v3378, 14
          %v3545 = vsel %vm3543, 1, 0
          %v3546 = vsel %vm3544, 1, 0
          %vm3547 = vcmp.eq.s32.totalorder %v3545, 1
          %vm3548 = vcmp.eq.s32.totalorder %v3546, 1
          %v3549 = vlaneseq
          %v3550 = vshrl.u32 %v3549, 7
          %v3551 = vsub.s32 6, %v3550
          %v3552 = vrot.slane %v281, %v3551
          %v3553 = vsel %vm3547, %v3552, 0.0
          %v3554 = vsel %vm3548, %v3552, 0.0
          %vm3555 = vcmp.eq.s32.totalorder %v3363, 15
          %vm3556 = vcmp.eq.s32.totalorder %v3378, 15
          %v3557 = vsel %vm3555, 1, 0
          %v3558 = vsel %vm3556, 1, 0
          %vm3559 = vcmp.eq.s32.totalorder %v3557, 1
          %vm3560 = vcmp.eq.s32.totalorder %v3558, 1
          %v3561 = vlaneseq
          %v3562 = vshrl.u32 %v3561, 7
          %v3563 = vsub.s32 7, %v3562
          %v3564 = vrot.slane %v281, %v3563
          %v3565 = vsel %vm3559, %v3564, 0.0
          %v3566 = vsel %vm3560, %v3564, 0.0
          %v3567 = vadd.f32 %v3385, %v3397
          %v3568 = vadd.f32 %v3386, %v3398
          %v3569 = vadd.f32 %v3409, %v3421
          %v3570 = vadd.f32 %v3410, %v3422
          %v3571 = vadd.f32 %v3433, %v3445
          %v3572 = vadd.f32 %v3434, %v3446
          %v3573 = vadd.f32 %v3457, %v3469
          %v3574 = vadd.f32 %v3458, %v3470
          %v3575 = vadd.f32 %v3481, %v3493
          %v3576 = vadd.f32 %v3482, %v3494
          %v3577 = vadd.f32 %v3505, %v3517
          %v3578 = vadd.f32 %v3506, %v3518
          %v3579 = vadd.f32 %v3529, %v3541
          %v3580 = vadd.f32 %v3530, %v3542
          %v3581 = vadd.f32 %v3553, %v3565
          %v3582 = vadd.f32 %v3554, %v3566
          %v3583 = vadd.f32 %v3567, %v3569
          %v3584 = vadd.f32 %v3568, %v3570
          %v3585 = vadd.f32 %v3571, %v3573
          %v3586 = vadd.f32 %v3572, %v3574
          %v3587 = vadd.f32 %v3575, %v3577
          %v3588 = vadd.f32 %v3576, %v3578
          %v3589 = vadd.f32 %v3579, %v3581
          %v3590 = vadd.f32 %v3580, %v3582
          %v3591 = vadd.f32 %v3583, %v3585
          %v3592 = vadd.f32 %v3584, %v3586
          %v3593 = vadd.f32 %v3587, %v3589
          %v3594 = vadd.f32 %v3588, %v3590
          %v3595 = vadd.f32 %v3591, %v3593
          %v3596 = vadd.f32 %v3592, %v3594
        $region76: #{tpu_custom_call.1} parent=35 // pred_fallthru
          %v3597 = vphi %v762, %v3595
          %v3598 = vphi %v765, %v3596
          %v3599 = vphi %v553, %v3363
          %v3600 = vphi %v554, %v3378
        %v3601 = vadd.f32 %v3597, %v1653
        %v3602 = vadd.f32 %v3598, %v1656
        %v3603 = vadd.f32 %v3601, %v3320
        %v3604 = vadd.f32 %v3602, %v3323
        %v3605 = vxor.u32 %v3603, 2147483648
        %v3606 = vxor.u32 %v3604, 2147483648
        %v3607 = vmul.f32 %v3605, 1.442695
        %v3608 = vpow.pop %v3607
        %v3609 = vmul.f32 %v3606, 1.442695
        %v3610 = vpow.pop %v3609
        %v3611 = vadd.f32 %v3608, 1.0
        %v3612 = vadd.f32 %v3610, 1.0
        %v3613 = vrcp.pop %v3611
        %v3614 = vmul.f32 1.0, %v3613
        %v3615 = vrcp.pop %v3612
        %v3616 = vmul.f32 1.0, %v3615
        %3619 = vrot.lane.b32.xlu0 %v3320, 64
        %v3620 = vpop.permute.xlu0 %3619
        %3621 = vrot.lane.b32.xlu0 %v3323, 64
        %v3622 = vpop.permute.xlu0 %3621
        %v3625 = vmul.f32 %v3614, %v3620
        %v3626 = vmul.f32 %v3616, %v3622
        %3629 = vrot.lane.b32.xlu0 %v3625, 64
        %v3630 = vpop.permute.xlu0 %3629
        %3631 = vrot.lane.b32.xlu0 %v3626, 64
        %v3632 = vpop.permute.xlu0 %3631
        %v3635 = vadd.f32 %v3601, %v3630
        %v3636 = vadd.f32 %v3602, %v3632
        %v3637 = vtanh.pop %v3635
        %v3638 = vtanh.pop %v3636
        %v3639 = vsub.f32 1.0, %v3614
        %v3640 = vsub.f32 1.0, %v3616
        %3643 = vrot.lane.b32.xlu0 %v3637, 96
        %v3644 = vpop.permute.xlu0 %3643
        %3645 = vrot.lane.b32.xlu0 %v3638, 96
        %v3646 = vpop.permute.xlu0 %3645
        %v3649 = vmul.f32 %v3639, %v3644
        %v3650 = vmul.f32 %v3640, %v3646
        %v3651 = vmul.f32 %v3614, %v3276
        %v3652 = vmul.f32 %v3616, %v3277
        %v3653 = vadd.f32 %v3649, %v3651
        %v3654 = vadd.f32 %v3650, %v3652
        %v3655 = vpack.c.bf16 %v3654, %v3653
        %3657 = vrot.lane.b32.xlu0 %v3655, 96
        %v3658 = vpop.permute.xlu0 %3657
        %v3660 = vsel %vm802, %v3658, 0
        %3662 = vmatprep.subr.bf16.mxu0 0
        %3663 = vmatpush1.bf16.msra.mxu0 0
        %3664 = vmatprep.subr.bf16.mxu0 0
        %3665 = vmatpush1.bf16.msra.mxu0 0
        %3666 = vmatprep.subr.bf16.mxu0 0
        %3667 = vmatpush1.bf16.msra.mxu0 0
        %3668 = vmatprep.subr.bf16.mxu0 0
        %3669 = vmatpush1.bf16.msra.mxu0 0
        %3670 = vmatprep.subr.bf16.mxu0 0
        %3671 = vmatpush1.bf16.msra.mxu0 0
        %3672 = vmatprep.subr.bf16.mxu0 0
        %3673 = vmatpush1.bf16.msra.mxu0 0
        %3674 = vmatprep.subr.bf16.mxu0 0
        %3675 = vmatpush1.bf16.msra.mxu0 %v1668
        %3676 = vmatprep.subr.bf16.mxu0 0
        %3677 = vmatpush1.bf16.msra.mxu0 %v1667
        %3678 = vmatprep.subr.bf16.mxu0 0
        %3679 = vmatpush2.bf16.msra.mxu0 0
        %3680 = vmatprep.subr.bf16.mxu0 0
        %3681 = vmatpush2.bf16.msra.mxu0 0
        %3682 = vmatprep.subr.bf16.mxu0 0
        %3683 = vmatpush2.bf16.msra.mxu0 0
        %3684 = vmatprep.subr.bf16.mxu0 0
        %3685 = vmatpush2.bf16.msra.mxu0 0
        %3686 = vmatprep.subr.bf16.mxu0 0
        %3687 = vmatpush2.bf16.msra.mxu0 0
        %3688 = vmatprep.subr.bf16.mxu0 0
        %3689 = vmatpush2.bf16.msra.mxu0 0
        %3690 = vmatprep.subr.bf16.mxu0 0
        %3691 = vmatpush2.bf16.msra.mxu0 0
        %3692 = vmatprep.subr.bf16.mxu0 0
        %3693 = vmatpush2.bf16.msra.mxu0 0
        %3694 = vmatprep.mubr.bf16.mxu0 0
        %3695 = vmatmul.mubr.bf16.gmra.mxu0 %v3660
        %v3696 = vpop.f32.mrf.mxu0
        %v3697 = vadd.f32 %v290, %v3696
        %v3698 = vpop.f32.mrf.mxu0
        %v3699 = vpop.f32.mrf.mxu0
        %v3700 = vadd.f32 %v290, %v3699
        %v3701 = vpop.f32.mrf.mxu0
        %3702 = vdwg.mxu0
        %v3703 = vadd.f32 %v3601, %v3697
        %v3704 = vadd.f32 %v3602, %v3700
        %s3705 = sld [smem:[#allocation3 + $0x5]]
        %p3706 = scmp.eq.s32.totalorder %s3705, 1
        // Predicated region
        $region77: #{tpu_custom_call.1} parent=35 // pred_check
          %p3707 = pneg %p3706
        $region78: #{tpu_custom_call.1} parent=35 // pred_check_branch
          %3709 = sbr.rel (%p3707) target = $region80
        $region79: #{tpu_custom_call.1} parent=35 // pred_region
          _
        $region80: #{tpu_custom_call.1} parent=35 // pred_fallthru
          _
        %p3710 = pneg %p3706
        // Predicated region
        $region81: #{tpu_custom_call.1} parent=35 // pred_check
          _
        $region82: #{tpu_custom_call.1} parent=35 // pred_check_branch
          %3712 = sbr.rel (%p3706) target = $region84
        $region83: #{tpu_custom_call.1} parent=35 // pred_region
          %vm3713 = vcmask 917248
          %v3714 = vsel %vm3713, %v3703, -inf
          %3715 = vmax.xlane.f32.xlu0 %v3714
          %v3716 = vpop.xlane.xlu0 %3715
          %v3717 = vsel %vm3713, %v3704, -inf
          %3718 = vmax.xlane.f32.xlu0 %v3717
          %v3719 = vpop.xlane.xlu0 %3718
          %vm3720 = vcmp.eq.f32.partialorder %v3703, %v3716
          %vm3721 = vcmp.eq.f32.partialorder %v3704, %v3719
          %3722 = vrot.lane.b32.xlu0 %v312, 96
          %v3723 = vpop.permute.xlu0 %3722
          %v3724 = vsel %vm3720, %v3723, 16
          %v3725 = vsel %vm3721, %v3723, 16
          %v3726 = vsel %vm3713, %v3724, 2147483647
          %v3727 = vand.u32 %v3726, 65535
          %v3728 = vshra.s32 %v3726, 16
          %v3729 = vcvt.s32.f32 %v3727
          %v3730 = vcvt.s32.f32 %v3728
          %3731 = vmin.xlane.f32.xlu0 %v3730
          %v3732 = vpop.xlane.xlu0 %3731
          %vm3733 = vcmp.eq.f32.partialorder %v3730, %v3732
          %v3734 = vsel %vm3733, %v3729, inf
          %3735 = vmin.xlane.f32.xlu0 %v3734
          %v3736 = vpop.xlane.xlu0 %3735
          %v3737 = vcvt.f32.s32 %v3736
          %v3738 = vcvt.f32.s32 %v3732
          %v3739 = vshll.u32 %v3738, 16
          %v3740 = vadd.s32 %v3739, %v3737
          %v3741 = vsel %vm3713, %v3725, 2147483647
          %v3742 = vand.u32 %v3741, 65535
          %v3743 = vshra.s32 %v3741, 16
          %v3744 = vcvt.s32.f32 %v3742
          %v3745 = vcvt.s32.f32 %v3743
          %3746 = vmin.xlane.f32.xlu0 %v3745
          %v3747 = vpop.xlane.xlu0 %3746
          %vm3748 = vcmp.eq.f32.partialorder %v3745, %v3747
          %v3749 = vsel %vm3748, %v3744, inf
          %3750 = vmin.xlane.f32.xlu0 %v3749
          %v3751 = vpop.xlane.xlu0 %3750
          %v3752 = vcvt.f32.s32 %v3751
          %v3753 = vcvt.f32.s32 %v3747
          %v3754 = vshll.u32 %v3753, 16
          %v3755 = vadd.s32 %v3754, %v3752
          %vm3756 = vcmp.eq.s32.totalorder %v3740, 0
          %vm3757 = vcmp.eq.s32.totalorder %v3755, 0
          %v3758 = vsel %vm3756, 1, 0
          %v3759 = vsel %vm3757, 1, 0
          %vm3760 = vcmp.eq.s32.totalorder %v3758, 1
          %vm3761 = vcmp.eq.s32.totalorder %v3759, 1
          %v3762 = vsel %vm3760, %v1715, 0.0
          %v3763 = vsel %vm3761, %v1715, 0.0
          %vm3764 = vcmp.eq.s32.totalorder %v3740, 1
          %vm3765 = vcmp.eq.s32.totalorder %v3755, 1
          %v3766 = vsel %vm3764, 1, 0
          %v3767 = vsel %vm3765, 1, 0
          %vm3768 = vcmp.eq.s32.totalorder %v3766, 1
          %vm3769 = vcmp.eq.s32.totalorder %v3767, 1
          %v3770 = vlaneseq
          %v3771 = vshrl.u32 %v3770, 7
          %v3772 = vsub.s32 1, %v3771
          %v3773 = vrot.slane %v280, %v3772
          %v3774 = vsel %vm3768, %v3773, 0.0
          %v3775 = vsel %vm3769, %v3773, 0.0
          %vm3776 = vcmp.eq.s32.totalorder %v3740, 2
          %vm3777 = vcmp.eq.s32.totalorder %v3755, 2
          %v3778 = vsel %vm3776, 1, 0
          %v3779 = vsel %vm3777, 1, 0
          %vm3780 = vcmp.eq.s32.totalorder %v3778, 1
          %vm3781 = vcmp.eq.s32.totalorder %v3779, 1
          %v3782 = vlaneseq
          %v3783 = vshrl.u32 %v3782, 7
          %v3784 = vsub.s32 2, %v3783
          %v3785 = vrot.slane %v280, %v3784
          %v3786 = vsel %vm3780, %v3785, 0.0
          %v3787 = vsel %vm3781, %v3785, 0.0
          %vm3788 = vcmp.eq.s32.totalorder %v3740, 3
          %vm3789 = vcmp.eq.s32.totalorder %v3755, 3
          %v3790 = vsel %vm3788, 1, 0
          %v3791 = vsel %vm3789, 1, 0
          %vm3792 = vcmp.eq.s32.totalorder %v3790, 1
          %vm3793 = vcmp.eq.s32.totalorder %v3791, 1
          %v3794 = vlaneseq
          %v3795 = vshrl.u32 %v3794, 7
          %v3796 = vsub.s32 3, %v3795
          %v3797 = vrot.slane %v280, %v3796
          %v3798 = vsel %vm3792, %v3797, 0.0
          %v3799 = vsel %vm3793, %v3797, 0.0
          %vm3800 = vcmp.eq.s32.totalorder %v3740, 4
          %vm3801 = vcmp.eq.s32.totalorder %v3755, 4
          %v3802 = vsel %vm3800, 1, 0
          %v3803 = vsel %vm3801, 1, 0
          %vm3804 = vcmp.eq.s32.totalorder %v3802, 1
          %vm3805 = vcmp.eq.s32.totalorder %v3803, 1
          %v3806 = vlaneseq
          %v3807 = vshrl.u32 %v3806, 7
          %v3808 = vsub.s32 4, %v3807
          %v3809 = vrot.slane %v280, %v3808
          %v3810 = vsel %vm3804, %v3809, 0.0
          %v3811 = vsel %vm3805, %v3809, 0.0
          %vm3812 = vcmp.eq.s32.totalorder %v3740, 5
          %vm3813 = vcmp.eq.s32.totalorder %v3755, 5
          %v3814 = vsel %vm3812, 1, 0
          %v3815 = vsel %vm3813, 1, 0
          %vm3816 = vcmp.eq.s32.totalorder %v3814, 1
          %vm3817 = vcmp.eq.s32.totalorder %v3815, 1
          %v3818 = vlaneseq
          %v3819 = vshrl.u32 %v3818, 7
          %v3820 = vsub.s32 5, %v3819
          %v3821 = vrot.slane %v280, %v3820
          %v3822 = vsel %vm3816, %v3821, 0.0
          %v3823 = vsel %vm3817, %v3821, 0.0
          %vm3824 = vcmp.eq.s32.totalorder %v3740, 6
          %vm3825 = vcmp.eq.s32.totalorder %v3755, 6
          %v3826 = vsel %vm3824, 1, 0
          %v3827 = vsel %vm3825, 1, 0
          %vm3828 = vcmp.eq.s32.totalorder %v3826, 1
          %vm3829 = vcmp.eq.s32.totalorder %v3827, 1
          %v3830 = vlaneseq
          %v3831 = vshrl.u32 %v3830, 7
          %v3832 = vsub.s32 6, %v3831
          %v3833 = vrot.slane %v280, %v3832
          %v3834 = vsel %vm3828, %v3833, 0.0
          %v3835 = vsel %vm3829, %v3833, 0.0
          %vm3836 = vcmp.eq.s32.totalorder %v3740, 7
          %vm3837 = vcmp.eq.s32.totalorder %v3755, 7
          %v3838 = vsel %vm3836, 1, 0
          %v3839 = vsel %vm3837, 1, 0
          %vm3840 = vcmp.eq.s32.totalorder %v3838, 1
          %vm3841 = vcmp.eq.s32.totalorder %v3839, 1
          %v3842 = vlaneseq
          %v3843 = vshrl.u32 %v3842, 7
          %v3844 = vsub.s32 7, %v3843
          %v3845 = vrot.slane %v280, %v3844
          %v3846 = vsel %vm3840, %v3845, 0.0
          %v3847 = vsel %vm3841, %v3845, 0.0
          %vm3848 = vcmp.eq.s32.totalorder %v3740, 8
          %vm3849 = vcmp.eq.s32.totalorder %v3755, 8
          %v3850 = vsel %vm3848, 1, 0
          %v3851 = vsel %vm3849, 1, 0
          %vm3852 = vcmp.eq.s32.totalorder %v3850, 1
          %vm3853 = vcmp.eq.s32.totalorder %v3851, 1
          %v3854 = vlaneseq
          %v3855 = vshrl.u32 %v3854, 7
          %v3856 = vsub.s32 0, %v3855
          %v3857 = vrot.slane %v281, %v3856
          %v3858 = vsel %vm3852, %v3857, 0.0
          %v3859 = vsel %vm3853, %v3857, 0.0
          %vm3860 = vcmp.eq.s32.totalorder %v3740, 9
          %vm3861 = vcmp.eq.s32.totalorder %v3755, 9
          %v3862 = vsel %vm3860, 1, 0
          %v3863 = vsel %vm3861, 1, 0
          %vm3864 = vcmp.eq.s32.totalorder %v3862, 1
          %vm3865 = vcmp.eq.s32.totalorder %v3863, 1
          %v3866 = vlaneseq
          %v3867 = vshrl.u32 %v3866, 7
          %v3868 = vsub.s32 1, %v3867
          %v3869 = vrot.slane %v281, %v3868
          %v3870 = vsel %vm3864, %v3869, 0.0
          %v3871 = vsel %vm3865, %v3869, 0.0
          %vm3872 = vcmp.eq.s32.totalorder %v3740, 10
          %vm3873 = vcmp.eq.s32.totalorder %v3755, 10
          %v3874 = vsel %vm3872, 1, 0
          %v3875 = vsel %vm3873, 1, 0
          %vm3876 = vcmp.eq.s32.totalorder %v3874, 1
          %vm3877 = vcmp.eq.s32.totalorder %v3875, 1
          %v3878 = vlaneseq
          %v3879 = vshrl.u32 %v3878, 7
          %v3880 = vsub.s32 2, %v3879
          %v3881 = vrot.slane %v281, %v3880
          %v3882 = vsel %vm3876, %v3881, 0.0
          %v3883 = vsel %vm3877, %v3881, 0.0
          %vm3884 = vcmp.eq.s32.totalorder %v3740, 11
          %vm3885 = vcmp.eq.s32.totalorder %v3755, 11
          %v3886 = vsel %vm3884, 1, 0
          %v3887 = vsel %vm3885, 1, 0
          %vm3888 = vcmp.eq.s32.totalorder %v3886, 1
          %vm3889 = vcmp.eq.s32.totalorder %v3887, 1
          %v3890 = vlaneseq
          %v3891 = vshrl.u32 %v3890, 7
          %v3892 = vsub.s32 3, %v3891
          %v3893 = vrot.slane %v281, %v3892
          %v3894 = vsel %vm3888, %v3893, 0.0
          %v3895 = vsel %vm3889, %v3893, 0.0
          %vm3896 = vcmp.eq.s32.totalorder %v3740, 12
          %vm3897 = vcmp.eq.s32.totalorder %v3755, 12
          %v3898 = vsel %vm3896, 1, 0
          %v3899 = vsel %vm3897, 1, 0
          %vm3900 = vcmp.eq.s32.totalorder %v3898, 1
          %vm3901 = vcmp.eq.s32.totalorder %v3899, 1
          %v3902 = vlaneseq
          %v3903 = vshrl.u32 %v3902, 7
          %v3904 = vsub.s32 4, %v3903
          %v3905 = vrot.slane %v281, %v3904
          %v3906 = vsel %vm3900, %v3905, 0.0
          %v3907 = vsel %vm3901, %v3905, 0.0
          %vm3908 = vcmp.eq.s32.totalorder %v3740, 13
          %vm3909 = vcmp.eq.s32.totalorder %v3755, 13
          %v3910 = vsel %vm3908, 1, 0
          %v3911 = vsel %vm3909, 1, 0
          %vm3912 = vcmp.eq.s32.totalorder %v3910, 1
          %vm3913 = vcmp.eq.s32.totalorder %v3911, 1
          %v3914 = vlaneseq
          %v3915 = vshrl.u32 %v3914, 7
          %v3916 = vsub.s32 5, %v3915
          %v3917 = vrot.slane %v281, %v3916
          %v3918 = vsel %vm3912, %v3917, 0.0
          %v3919 = vsel %vm3913, %v3917, 0.0
          %vm3920 = vcmp.eq.s32.totalorder %v3740, 14
          %vm3921 = vcmp.eq.s32.totalorder %v3755, 14
          %v3922 = vsel %vm3920, 1, 0
          %v3923 = vsel %vm3921, 1, 0
          %vm3924 = vcmp.eq.s32.totalorder %v3922, 1
          %vm3925 = vcmp.eq.s32.totalorder %v3923, 1
          %v3926 = vlaneseq
          %v3927 = vshrl.u32 %v3926, 7
          %v3928 = vsub.s32 6, %v3927
          %v3929 = vrot.slane %v281, %v3928
          %v3930 = vsel %vm3924, %v3929, 0.0
          %v3931 = vsel %vm3925, %v3929, 0.0
          %vm3932 = vcmp.eq.s32.totalorder %v3740, 15
          %vm3933 = vcmp.eq.s32.totalorder %v3755, 15
          %v3934 = vsel %vm3932, 1, 0
          %v3935 = vsel %vm3933, 1, 0
          %vm3936 = vcmp.eq.s32.totalorder %v3934, 1
          %vm3937 = vcmp.eq.s32.totalorder %v3935, 1
          %v3938 = vlaneseq
          %v3939 = vshrl.u32 %v3938, 7
          %v3940 = vsub.s32 7, %v3939
          %v3941 = vrot.slane %v281, %v3940
          %v3942 = vsel %vm3936, %v3941, 0.0
          %v3943 = vsel %vm3937, %v3941, 0.0
          %v3944 = vadd.f32 %v3762, %v3774
          %v3945 = vadd.f32 %v3763, %v3775
          %v3946 = vadd.f32 %v3786, %v3798
          %v3947 = vadd.f32 %v3787, %v3799
          %v3948 = vadd.f32 %v3810, %v3822
          %v3949 = vadd.f32 %v3811, %v3823
          %v3950 = vadd.f32 %v3834, %v3846
          %v3951 = vadd.f32 %v3835, %v3847
          %v3952 = vadd.f32 %v3858, %v3870
          %v3953 = vadd.f32 %v3859, %v3871
          %v3954 = vadd.f32 %v3882, %v3894
          %v3955 = vadd.f32 %v3883, %v3895
          %v3956 = vadd.f32 %v3906, %v3918
          %v3957 = vadd.f32 %v3907, %v3919
          %v3958 = vadd.f32 %v3930, %v3942
          %v3959 = vadd.f32 %v3931, %v3943
          %v3960 = vadd.f32 %v3944, %v3946
          %v3961 = vadd.f32 %v3945, %v3947
          %v3962 = vadd.f32 %v3948, %v3950
          %v3963 = vadd.f32 %v3949, %v3951
          %v3964 = vadd.f32 %v3952, %v3954
          %v3965 = vadd.f32 %v3953, %v3955
          %v3966 = vadd.f32 %v3956, %v3958
          %v3967 = vadd.f32 %v3957, %v3959
          %v3968 = vadd.f32 %v3960, %v3962
          %v3969 = vadd.f32 %v3961, %v3963
          %v3970 = vadd.f32 %v3964, %v3966
          %v3971 = vadd.f32 %v3965, %v3967
          %v3972 = vadd.f32 %v3968, %v3970
          %v3973 = vadd.f32 %v3969, %v3971
        $region84: #{tpu_custom_call.1} parent=35 // pred_fallthru
          %v3974 = vphi %v770, %v3972
          %v3975 = vphi %v773, %v3973
          %v3976 = vphi %v555, %v3740
          %v3977 = vphi %v556, %v3755
        %v3978 = vadd.f32 %v3974, %v1653
        %v3979 = vadd.f32 %v3975, %v1656
        %v3980 = vadd.f32 %v3978, %v3697
        %v3981 = vadd.f32 %v3979, %v3700
        %v3982 = vxor.u32 %v3980, 2147483648
        %v3983 = vxor.u32 %v3981, 2147483648
        %v3984 = vmul.f32 %v3982, 1.442695
        %v3985 = vpow.pop %v3984
        %v3986 = vmul.f32 %v3983, 1.442695
        %v3987 = vpow.pop %v3986
        %v3988 = vadd.f32 %v3985, 1.0
        %v3989 = vadd.f32 %v3987, 1.0
        %v3990 = vrcp.pop %v3988
        %v3991 = vmul.f32 1.0, %v3990
        %v3992 = vrcp.pop %v3989
        %v3993 = vmul.f32 1.0, %v3992
        %3996 = vrot.lane.b32.xlu0 %v3697, 64
        %v3997 = vpop.permute.xlu0 %3996
        %3998 = vrot.lane.b32.xlu0 %v3700, 64
        %v3999 = vpop.permute.xlu0 %3998
        %v4002 = vmul.f32 %v3991, %v3997
        %v4003 = vmul.f32 %v3993, %v3999
        %4006 = vrot.lane.b32.xlu0 %v4002, 64
        %v4007 = vpop.permute.xlu0 %4006
        %4008 = vrot.lane.b32.xlu0 %v4003, 64
        %v4009 = vpop.permute.xlu0 %4008
        %v4012 = vadd.f32 %v3978, %v4007
        %v4013 = vadd.f32 %v3979, %v4009
        %v4014 = vtanh.pop %v4012
        %v4015 = vtanh.pop %v4013
        %v4016 = vsub.f32 1.0, %v3991
        %v4017 = vsub.f32 1.0, %v3993
        %4020 = vrot.lane.b32.xlu0 %v4014, 96
        %v4021 = vpop.permute.xlu0 %4020
        %4022 = vrot.lane.b32.xlu0 %v4015, 96
        %v4023 = vpop.permute.xlu0 %4022
        %v4026 = vmul.f32 %v4016, %v4021
        %v4027 = vmul.f32 %v4017, %v4023
        %v4028 = vmul.f32 %v3991, %v3653
        %v4029 = vmul.f32 %v3993, %v3654
        %v4030 = vadd.f32 %v4026, %v4028
        %v4031 = vadd.f32 %v4027, %v4029
        %v4032 = vpack.c.bf16 %v4031, %v4030
        %4034 = vrot.lane.b32.xlu0 %v4032, 96
        %v4035 = vpop.permute.xlu0 %4034
        %v4037 = vsel %vm802, %v4035, 0
        %4039 = vmatprep.subr.bf16.mxu0 0
        %4040 = vmatpush1.bf16.msra.mxu0 0
        %4041 = vmatprep.subr.bf16.mxu0 0
        %4042 = vmatpush1.bf16.msra.mxu0 0
        %4043 = vmatprep.subr.bf16.mxu0 0
        %4044 = vmatpush1.bf16.msra.mxu0 0
        %4045 = vmatprep.subr.bf16.mxu0 0
        %4046 = vmatpush1.bf16.msra.mxu0 0
        %4047 = vmatprep.subr.bf16.mxu0 0
        %4048 = vmatpush1.bf16.msra.mxu0 0
        %4049 = vmatprep.subr.bf16.mxu0 0
        %4050 = vmatpush1.bf16.msra.mxu0 0
        %4051 = vmatprep.subr.bf16.mxu0 0
        %4052 = vmatpush1.bf16.msra.mxu0 %v1668
        %4053 = vmatprep.subr.bf16.mxu0 0
        %4054 = vmatpush1.bf16.msra.mxu0 %v1667
        %4055 = vmatprep.subr.bf16.mxu0 0
        %4056 = vmatpush2.bf16.msra.mxu0 0
        %4057 = vmatprep.subr.bf16.mxu0 0
        %4058 = vmatpush2.bf16.msra.mxu0 0
        %4059 = vmatprep.subr.bf16.mxu0 0
        %4060 = vmatpush2.bf16.msra.mxu0 0
        %4061 = vmatprep.subr.bf16.mxu0 0
        %4062 = vmatpush2.bf16.msra.mxu0 0
        %4063 = vmatprep.subr.bf16.mxu0 0
        %4064 = vmatpush2.bf16.msra.mxu0 0
        %4065 = vmatprep.subr.bf16.mxu0 0
        %4066 = vmatpush2.bf16.msra.mxu0 0
        %4067 = vmatprep.subr.bf16.mxu0 0
        %4068 = vmatpush2.bf16.msra.mxu0 0
        %4069 = vmatprep.subr.bf16.mxu0 0
        %4070 = vmatpush2.bf16.msra.mxu0 0
        %4071 = vmatprep.mubr.bf16.mxu0 0
        %4072 = vmatmul.mubr.bf16.gmra.mxu0 %v4037
        %v4073 = vpop.f32.mrf.mxu0
        %v4074 = vadd.f32 %v290, %v4073
        %v4075 = vpop.f32.mrf.mxu0
        %v4076 = vpop.f32.mrf.mxu0
        %v4077 = vadd.f32 %v290, %v4076
        %v4078 = vpop.f32.mrf.mxu0
        %4079 = vdwg.mxu0
        %v4080 = vadd.f32 %v3978, %v4074
        %v4081 = vadd.f32 %v3979, %v4077
        %s4082 = sld [smem:[#allocation3 + $0x6]]
        %p4083 = scmp.eq.s32.totalorder %s4082, 1
        // Predicated region
        $region85: #{tpu_custom_call.1} parent=35 // pred_check
          %p4084 = pneg %p4083
        $region86: #{tpu_custom_call.1} parent=35 // pred_check_branch
          %4086 = sbr.rel (%p4084) target = $region88
        $region87: #{tpu_custom_call.1} parent=35 // pred_region
          _
        $region88: #{tpu_custom_call.1} parent=35 // pred_fallthru
          _
        %p4087 = pneg %p4083
        // Predicated region
        $region89: #{tpu_custom_call.1} parent=35 // pred_check
          _
        $region90: #{tpu_custom_call.1} parent=35 // pred_check_branch
          %4089 = sbr.rel (%p4083) target = $region92
        $region91: #{tpu_custom_call.1} parent=35 // pred_region
          %vm4090 = vcmask 917248
          %v4091 = vsel %vm4090, %v4080, -inf
          %4092 = vmax.xlane.f32.xlu0 %v4091
          %v4093 = vpop.xlane.xlu0 %4092
          %v4094 = vsel %vm4090, %v4081, -inf
          %4095 = vmax.xlane.f32.xlu0 %v4094
          %v4096 = vpop.xlane.xlu0 %4095
          %vm4097 = vcmp.eq.f32.partialorder %v4080, %v4093
          %vm4098 = vcmp.eq.f32.partialorder %v4081, %v4096
          %4099 = vrot.lane.b32.xlu0 %v312, 96
          %v4100 = vpop.permute.xlu0 %4099
          %v4101 = vsel %vm4097, %v4100, 16
          %v4102 = vsel %vm4098, %v4100, 16
          %v4103 = vsel %vm4090, %v4101, 2147483647
          %v4104 = vand.u32 %v4103, 65535
          %v4105 = vshra.s32 %v4103, 16
          %v4106 = vcvt.s32.f32 %v4104
          %v4107 = vcvt.s32.f32 %v4105
          %4108 = vmin.xlane.f32.xlu0 %v4107
          %v4109 = vpop.xlane.xlu0 %4108
          %vm4110 = vcmp.eq.f32.partialorder %v4107, %v4109
          %v4111 = vsel %vm4110, %v4106, inf
          %4112 = vmin.xlane.f32.xlu0 %v4111
          %v4113 = vpop.xlane.xlu0 %4112
          %v4114 = vcvt.f32.s32 %v4113
          %v4115 = vcvt.f32.s32 %v4109
          %v4116 = vshll.u32 %v4115, 16
          %v4117 = vadd.s32 %v4116, %v4114
          %v4118 = vsel %vm4090, %v4102, 2147483647
          %v4119 = vand.u32 %v4118, 65535
          %v4120 = vshra.s32 %v4118, 16
          %v4121 = vcvt.s32.f32 %v4119
          %v4122 = vcvt.s32.f32 %v4120
          %4123 = vmin.xlane.f32.xlu0 %v4122
          %v4124 = vpop.xlane.xlu0 %4123
          %vm4125 = vcmp.eq.f32.partialorder %v4122, %v4124
          %v4126 = vsel %vm4125, %v4121, inf
          %4127 = vmin.xlane.f32.xlu0 %v4126
          %v4128 = vpop.xlane.xlu0 %4127
          %v4129 = vcvt.f32.s32 %v4128
          %v4130 = vcvt.f32.s32 %v4124
          %v4131 = vshll.u32 %v4130, 16
          %v4132 = vadd.s32 %v4131, %v4129
          %vm4133 = vcmp.eq.s32.totalorder %v4117, 0
          %vm4134 = vcmp.eq.s32.totalorder %v4132, 0
          %v4135 = vsel %vm4133, 1, 0
          %v4136 = vsel %vm4134, 1, 0
          %vm4137 = vcmp.eq.s32.totalorder %v4135, 1
          %vm4138 = vcmp.eq.s32.totalorder %v4136, 1
          %v4139 = vsel %vm4137, %v1715, 0.0
          %v4140 = vsel %vm4138, %v1715, 0.0
          %vm4141 = vcmp.eq.s32.totalorder %v4117, 1
          %vm4142 = vcmp.eq.s32.totalorder %v4132, 1
          %v4143 = vsel %vm4141, 1, 0
          %v4144 = vsel %vm4142, 1, 0
          %vm4145 = vcmp.eq.s32.totalorder %v4143, 1
          %vm4146 = vcmp.eq.s32.totalorder %v4144, 1
          %v4147 = vlaneseq
          %v4148 = vshrl.u32 %v4147, 7
          %v4149 = vsub.s32 1, %v4148
          %v4150 = vrot.slane %v280, %v4149
          %v4151 = vsel %vm4145, %v4150, 0.0
          %v4152 = vsel %vm4146, %v4150, 0.0
          %vm4153 = vcmp.eq.s32.totalorder %v4117, 2
          %vm4154 = vcmp.eq.s32.totalorder %v4132, 2
          %v4155 = vsel %vm4153, 1, 0
          %v4156 = vsel %vm4154, 1, 0
          %vm4157 = vcmp.eq.s32.totalorder %v4155, 1
          %vm4158 = vcmp.eq.s32.totalorder %v4156, 1
          %v4159 = vlaneseq
          %v4160 = vshrl.u32 %v4159, 7
          %v4161 = vsub.s32 2, %v4160
          %v4162 = vrot.slane %v280, %v4161
          %v4163 = vsel %vm4157, %v4162, 0.0
          %v4164 = vsel %vm4158, %v4162, 0.0
          %vm4165 = vcmp.eq.s32.totalorder %v4117, 3
          %vm4166 = vcmp.eq.s32.totalorder %v4132, 3
          %v4167 = vsel %vm4165, 1, 0
          %v4168 = vsel %vm4166, 1, 0
          %vm4169 = vcmp.eq.s32.totalorder %v4167, 1
          %vm4170 = vcmp.eq.s32.totalorder %v4168, 1
          %v4171 = vlaneseq
          %v4172 = vshrl.u32 %v4171, 7
          %v4173 = vsub.s32 3, %v4172
          %v4174 = vrot.slane %v280, %v4173
          %v4175 = vsel %vm4169, %v4174, 0.0
          %v4176 = vsel %vm4170, %v4174, 0.0
          %vm4177 = vcmp.eq.s32.totalorder %v4117, 4
          %vm4178 = vcmp.eq.s32.totalorder %v4132, 4
          %v4179 = vsel %vm4177, 1, 0
          %v4180 = vsel %vm4178, 1, 0
          %vm4181 = vcmp.eq.s32.totalorder %v4179, 1
          %vm4182 = vcmp.eq.s32.totalorder %v4180, 1
          %v4183 = vlaneseq
          %v4184 = vshrl.u32 %v4183, 7
          %v4185 = vsub.s32 4, %v4184
          %v4186 = vrot.slane %v280, %v4185
          %v4187 = vsel %vm4181, %v4186, 0.0
          %v4188 = vsel %vm4182, %v4186, 0.0
          %vm4189 = vcmp.eq.s32.totalorder %v4117, 5
          %vm4190 = vcmp.eq.s32.totalorder %v4132, 5
          %v4191 = vsel %vm4189, 1, 0
          %v4192 = vsel %vm4190, 1, 0
          %vm4193 = vcmp.eq.s32.totalorder %v4191, 1
          %vm4194 = vcmp.eq.s32.totalorder %v4192, 1
          %v4195 = vlaneseq
          %v4196 = vshrl.u32 %v4195, 7
          %v4197 = vsub.s32 5, %v4196
          %v4198 = vrot.slane %v280, %v4197
          %v4199 = vsel %vm4193, %v4198, 0.0
          %v4200 = vsel %vm4194, %v4198, 0.0
          %vm4201 = vcmp.eq.s32.totalorder %v4117, 6
          %vm4202 = vcmp.eq.s32.totalorder %v4132, 6
          %v4203 = vsel %vm4201, 1, 0
          %v4204 = vsel %vm4202, 1, 0
          %vm4205 = vcmp.eq.s32.totalorder %v4203, 1
          %vm4206 = vcmp.eq.s32.totalorder %v4204, 1
          %v4207 = vlaneseq
          %v4208 = vshrl.u32 %v4207, 7
          %v4209 = vsub.s32 6, %v4208
          %v4210 = vrot.slane %v280, %v4209
          %v4211 = vsel %vm4205, %v4210, 0.0
          %v4212 = vsel %vm4206, %v4210, 0.0
          %vm4213 = vcmp.eq.s32.totalorder %v4117, 7
          %vm4214 = vcmp.eq.s32.totalorder %v4132, 7
          %v4215 = vsel %vm4213, 1, 0
          %v4216 = vsel %vm4214, 1, 0
          %vm4217 = vcmp.eq.s32.totalorder %v4215, 1
          %vm4218 = vcmp.eq.s32.totalorder %v4216, 1
          %v4219 = vlaneseq
          %v4220 = vshrl.u32 %v4219, 7
          %v4221 = vsub.s32 7, %v4220
          %v4222 = vrot.slane %v280, %v4221
          %v4223 = vsel %vm4217, %v4222, 0.0
          %v4224 = vsel %vm4218, %v4222, 0.0
          %vm4225 = vcmp.eq.s32.totalorder %v4117, 8
          %vm4226 = vcmp.eq.s32.totalorder %v4132, 8
          %v4227 = vsel %vm4225, 1, 0
          %v4228 = vsel %vm4226, 1, 0
          %vm4229 = vcmp.eq.s32.totalorder %v4227, 1
          %vm4230 = vcmp.eq.s32.totalorder %v4228, 1
          %v4231 = vlaneseq
          %v4232 = vshrl.u32 %v4231, 7
          %v4233 = vsub.s32 0, %v4232
          %v4234 = vrot.slane %v281, %v4233
          %v4235 = vsel %vm4229, %v4234, 0.0
          %v4236 = vsel %vm4230, %v4234, 0.0
          %vm4237 = vcmp.eq.s32.totalorder %v4117, 9
          %vm4238 = vcmp.eq.s32.totalorder %v4132, 9
          %v4239 = vsel %vm4237, 1, 0
          %v4240 = vsel %vm4238, 1, 0
          %vm4241 = vcmp.eq.s32.totalorder %v4239, 1
          %vm4242 = vcmp.eq.s32.totalorder %v4240, 1
          %v4243 = vlaneseq
          %v4244 = vshrl.u32 %v4243, 7
          %v4245 = vsub.s32 1, %v4244
          %v4246 = vrot.slane %v281, %v4245
          %v4247 = vsel %vm4241, %v4246, 0.0
          %v4248 = vsel %vm4242, %v4246, 0.0
          %vm4249 = vcmp.eq.s32.totalorder %v4117, 10
          %vm4250 = vcmp.eq.s32.totalorder %v4132, 10
          %v4251 = vsel %vm4249, 1, 0
          %v4252 = vsel %vm4250, 1, 0
          %vm4253 = vcmp.eq.s32.totalorder %v4251, 1
          %vm4254 = vcmp.eq.s32.totalorder %v4252, 1
          %v4255 = vlaneseq
          %v4256 = vshrl.u32 %v4255, 7
          %v4257 = vsub.s32 2, %v4256
          %v4258 = vrot.slane %v281, %v4257
          %v4259 = vsel %vm4253, %v4258, 0.0
          %v4260 = vsel %vm4254, %v4258, 0.0
          %vm4261 = vcmp.eq.s32.totalorder %v4117, 11
          %vm4262 = vcmp.eq.s32.totalorder %v4132, 11
          %v4263 = vsel %vm4261, 1, 0
          %v4264 = vsel %vm4262, 1, 0
          %vm4265 = vcmp.eq.s32.totalorder %v4263, 1
          %vm4266 = vcmp.eq.s32.totalorder %v4264, 1
          %v4267 = vlaneseq
          %v4268 = vshrl.u32 %v4267, 7
          %v4269 = vsub.s32 3, %v4268
          %v4270 = vrot.slane %v281, %v4269
          %v4271 = vsel %vm4265, %v4270, 0.0
          %v4272 = vsel %vm4266, %v4270, 0.0
          %vm4273 = vcmp.eq.s32.totalorder %v4117, 12
          %vm4274 = vcmp.eq.s32.totalorder %v4132, 12
          %v4275 = vsel %vm4273, 1, 0
          %v4276 = vsel %vm4274, 1, 0
          %vm4277 = vcmp.eq.s32.totalorder %v4275, 1
          %vm4278 = vcmp.eq.s32.totalorder %v4276, 1
          %v4279 = vlaneseq
          %v4280 = vshrl.u32 %v4279, 7
          %v4281 = vsub.s32 4, %v4280
          %v4282 = vrot.slane %v281, %v4281
          %v4283 = vsel %vm4277, %v4282, 0.0
          %v4284 = vsel %vm4278, %v4282, 0.0
          %vm4285 = vcmp.eq.s32.totalorder %v4117, 13
          %vm4286 = vcmp.eq.s32.totalorder %v4132, 13
          %v4287 = vsel %vm4285, 1, 0
          %v4288 = vsel %vm4286, 1, 0
          %vm4289 = vcmp.eq.s32.totalorder %v4287, 1
          %vm4290 = vcmp.eq.s32.totalorder %v4288, 1
          %v4291 = vlaneseq
          %v4292 = vshrl.u32 %v4291, 7
          %v4293 = vsub.s32 5, %v4292
          %v4294 = vrot.slane %v281, %v4293
          %v4295 = vsel %vm4289, %v4294, 0.0
          %v4296 = vsel %vm4290, %v4294, 0.0
          %vm4297 = vcmp.eq.s32.totalorder %v4117, 14
          %vm4298 = vcmp.eq.s32.totalorder %v4132, 14
          %v4299 = vsel %vm4297, 1, 0
          %v4300 = vsel %vm4298, 1, 0
          %vm4301 = vcmp.eq.s32.totalorder %v4299, 1
          %vm4302 = vcmp.eq.s32.totalorder %v4300, 1
          %v4303 = vlaneseq
          %v4304 = vshrl.u32 %v4303, 7
          %v4305 = vsub.s32 6, %v4304
          %v4306 = vrot.slane %v281, %v4305
          %v4307 = vsel %vm4301, %v4306, 0.0
          %v4308 = vsel %vm4302, %v4306, 0.0
          %vm4309 = vcmp.eq.s32.totalorder %v4117, 15
          %vm4310 = vcmp.eq.s32.totalorder %v4132, 15
          %v4311 = vsel %vm4309, 1, 0
          %v4312 = vsel %vm4310, 1, 0
          %vm4313 = vcmp.eq.s32.totalorder %v4311, 1
          %vm4314 = vcmp.eq.s32.totalorder %v4312, 1
          %v4315 = vlaneseq
          %v4316 = vshrl.u32 %v4315, 7
          %v4317 = vsub.s32 7, %v4316
          %v4318 = vrot.slane %v281, %v4317
          %v4319 = vsel %vm4313, %v4318, 0.0
          %v4320 = vsel %vm4314, %v4318, 0.0
          %v4321 = vadd.f32 %v4139, %v4151
          %v4322 = vadd.f32 %v4140, %v4152
          %v4323 = vadd.f32 %v4163, %v4175
          %v4324 = vadd.f32 %v4164, %v4176
          %v4325 = vadd.f32 %v4187, %v4199
          %v4326 = vadd.f32 %v4188, %v4200
          %v4327 = vadd.f32 %v4211, %v4223
          %v4328 = vadd.f32 %v4212, %v4224
          %v4329 = vadd.f32 %v4235, %v4247
          %v4330 = vadd.f32 %v4236, %v4248
          %v4331 = vadd.f32 %v4259, %v4271
          %v4332 = vadd.f32 %v4260, %v4272
          %v4333 = vadd.f32 %v4283, %v4295
          %v4334 = vadd.f32 %v4284, %v4296
          %v4335 = vadd.f32 %v4307, %v4319
          %v4336 = vadd.f32 %v4308, %v4320
          %v4337 = vadd.f32 %v4321, %v4323
          %v4338 = vadd.f32 %v4322, %v4324
          %v4339 = vadd.f32 %v4325, %v4327
          %v4340 = vadd.f32 %v4326, %v4328
          %v4341 = vadd.f32 %v4329, %v4331
          %v4342 = vadd.f32 %v4330, %v4332
          %v4343 = vadd.f32 %v4333, %v4335
          %v4344 = vadd.f32 %v4334, %v4336
          %v4345 = vadd.f32 %v4337, %v4339
          %v4346 = vadd.f32 %v4338, %v4340
          %v4347 = vadd.f32 %v4341, %v4343
          %v4348 = vadd.f32 %v4342, %v4344
          %v4349 = vadd.f32 %v4345, %v4347
          %v4350 = vadd.f32 %v4346, %v4348
        $region92: #{tpu_custom_call.1} parent=35 // pred_fallthru
          %v4351 = vphi %v778, %v4349
          %v4352 = vphi %v781, %v4350
          %v4353 = vphi %v557, %v4117
          %v4354 = vphi %v558, %v4132
        %v4355 = vadd.f32 %v4351, %v1653
        %v4356 = vadd.f32 %v4352, %v1656
        %v4357 = vadd.f32 %v4355, %v4074
        %v4358 = vadd.f32 %v4356, %v4077
        %v4359 = vxor.u32 %v4357, 2147483648
        %v4360 = vxor.u32 %v4358, 2147483648
        %v4361 = vmul.f32 %v4359, 1.442695
        %v4362 = vpow.pop %v4361
        %v4363 = vmul.f32 %v4360, 1.442695
        %v4364 = vpow.pop %v4363
        %v4365 = vadd.f32 %v4362, 1.0
        %v4366 = vadd.f32 %v4364, 1.0
        %v4367 = vrcp.pop %v4365
        %v4368 = vmul.f32 1.0, %v4367
        %v4369 = vrcp.pop %v4366
        %v4370 = vmul.f32 1.0, %v4369
        %4373 = vrot.lane.b32.xlu0 %v4074, 64
        %v4374 = vpop.permute.xlu0 %4373
        %4375 = vrot.lane.b32.xlu0 %v4077, 64
        %v4376 = vpop.permute.xlu0 %4375
        %v4379 = vmul.f32 %v4368, %v4374
        %v4380 = vmul.f32 %v4370, %v4376
        %4383 = vrot.lane.b32.xlu0 %v4379, 64
        %v4384 = vpop.permute.xlu0 %4383
        %4385 = vrot.lane.b32.xlu0 %v4380, 64
        %v4386 = vpop.permute.xlu0 %4385
        %v4389 = vadd.f32 %v4355, %v4384
        %v4390 = vadd.f32 %v4356, %v4386
        %v4391 = vtanh.pop %v4389
        %v4392 = vtanh.pop %v4390
        %v4393 = vsub.f32 1.0, %v4368
        %v4394 = vsub.f32 1.0, %v4370
        %4397 = vrot.lane.b32.xlu0 %v4391, 96
        %v4398 = vpop.permute.xlu0 %4397
        %4399 = vrot.lane.b32.xlu0 %v4392, 96
        %v4400 = vpop.permute.xlu0 %4399
        %v4403 = vmul.f32 %v4393, %v4398
        %v4404 = vmul.f32 %v4394, %v4400
        %v4405 = vmul.f32 %v4368, %v4030
        %v4406 = vmul.f32 %v4370, %v4031
        %v4407 = vadd.f32 %v4403, %v4405
        %v4408 = vadd.f32 %v4404, %v4406
        %v4409 = vpack.c.bf16 %v4408, %v4407
        %4411 = vrot.lane.b32.xlu0 %v4409, 96
        %v4412 = vpop.permute.xlu0 %4411
        %v4414 = vsel %vm802, %v4412, 0
        %4416 = vmatprep.subr.bf16.mxu0 0
        %4417 = vmatpush1.bf16.msra.mxu0 0
        %4418 = vmatprep.subr.bf16.mxu0 0
        %4419 = vmatpush1.bf16.msra.mxu0 0
        %4420 = vmatprep.subr.bf16.mxu0 0
        %4421 = vmatpush1.bf16.msra.mxu0 0
        %4422 = vmatprep.subr.bf16.mxu0 0
        %4423 = vmatpush1.bf16.msra.mxu0 0
        %4424 = vmatprep.subr.bf16.mxu0 0
        %4425 = vmatpush1.bf16.msra.mxu0 0
        %4426 = vmatprep.subr.bf16.mxu0 0
        %4427 = vmatpush1.bf16.msra.mxu0 0
        %4428 = vmatprep.subr.bf16.mxu0 0
        %4429 = vmatpush1.bf16.msra.mxu0 %v1668
        %4430 = vmatprep.subr.bf16.mxu0 0
        %4431 = vmatpush1.bf16.msra.mxu0 %v1667
        %4432 = vmatprep.subr.bf16.mxu0 0
        %4433 = vmatpush2.bf16.msra.mxu0 0
        %4434 = vmatprep.subr.bf16.mxu0 0
        %4435 = vmatpush2.bf16.msra.mxu0 0
        %4436 = vmatprep.subr.bf16.mxu0 0
        %4437 = vmatpush2.bf16.msra.mxu0 0
        %4438 = vmatprep.subr.bf16.mxu0 0
        %4439 = vmatpush2.bf16.msra.mxu0 0
        %4440 = vmatprep.subr.bf16.mxu0 0
        %4441 = vmatpush2.bf16.msra.mxu0 0
        %4442 = vmatprep.subr.bf16.mxu0 0
        %4443 = vmatpush2.bf16.msra.mxu0 0
        %4444 = vmatprep.subr.bf16.mxu0 0
        %4445 = vmatpush2.bf16.msra.mxu0 0
        %4446 = vmatprep.subr.bf16.mxu0 0
        %4447 = vmatpush2.bf16.msra.mxu0 0
        %4448 = vmatprep.mubr.bf16.mxu0 0
        %4449 = vmatmul.mubr.bf16.gmra.mxu0 %v4414
        %v4450 = vpop.f32.mrf.mxu0
        %v4451 = vadd.f32 %v290, %v4450
        %v4452 = vpop.f32.mrf.mxu0
        %v4453 = vpop.f32.mrf.mxu0
        %v4454 = vadd.f32 %v290, %v4453
        %v4455 = vpop.f32.mrf.mxu0
        %4456 = vdwg.mxu0
        %v4457 = vadd.f32 %v4355, %v4451
        %v4458 = vadd.f32 %v4356, %v4454
        %s4459 = sld [smem:[#allocation3 + $0x7]]
        %p4460 = scmp.eq.s32.totalorder %s4459, 1
        // Predicated region
        $region93: #{tpu_custom_call.1} parent=35 // pred_check
          %p4461 = pneg %p4460
        $region94: #{tpu_custom_call.1} parent=35 // pred_check_branch
          %4463 = sbr.rel (%p4461) target = $region96
        $region95: #{tpu_custom_call.1} parent=35 // pred_region
          _
        $region96: #{tpu_custom_call.1} parent=35 // pred_fallthru
          _
        %p4464 = pneg %p4460
        // Predicated region
        $region97: #{tpu_custom_call.1} parent=35 // pred_check
          _
        $region98: #{tpu_custom_call.1} parent=35 // pred_check_branch
          %4466 = sbr.rel (%p4460) target = $region100
        $region99: #{tpu_custom_call.1} parent=35 // pred_region
          %vm4467 = vcmask 917248
          %v4468 = vsel %vm4467, %v4457, -inf
          %4469 = vmax.xlane.f32.xlu0 %v4468
          %v4470 = vpop.xlane.xlu0 %4469
          %v4471 = vsel %vm4467, %v4458, -inf
          %4472 = vmax.xlane.f32.xlu0 %v4471
          %v4473 = vpop.xlane.xlu0 %4472
          %vm4474 = vcmp.eq.f32.partialorder %v4457, %v4470
          %vm4475 = vcmp.eq.f32.partialorder %v4458, %v4473
          %4476 = vrot.lane.b32.xlu0 %v312, 96
          %v4477 = vpop.permute.xlu0 %4476
          %v4478 = vsel %vm4474, %v4477, 16
          %v4479 = vsel %vm4475, %v4477, 16
          %v4480 = vsel %vm4467, %v4478, 2147483647
          %v4481 = vand.u32 %v4480, 65535
          %v4482 = vshra.s32 %v4480, 16
          %v4483 = vcvt.s32.f32 %v4481
          %v4484 = vcvt.s32.f32 %v4482
          %4485 = vmin.xlane.f32.xlu0 %v4484
          %v4486 = vpop.xlane.xlu0 %4485
          %vm4487 = vcmp.eq.f32.partialorder %v4484, %v4486
          %v4488 = vsel %vm4487, %v4483, inf
          %4489 = vmin.xlane.f32.xlu0 %v4488
          %v4490 = vpop.xlane.xlu0 %4489
          %v4491 = vcvt.f32.s32 %v4490
          %v4492 = vcvt.f32.s32 %v4486
          %v4493 = vshll.u32 %v4492, 16
          %v4494 = vadd.s32 %v4493, %v4491
          %v4495 = vsel %vm4467, %v4479, 2147483647
          %v4496 = vand.u32 %v4495, 65535
          %v4497 = vshra.s32 %v4495, 16
          %v4498 = vcvt.s32.f32 %v4496
          %v4499 = vcvt.s32.f32 %v4497
          %4500 = vmin.xlane.f32.xlu0 %v4499
          %v4501 = vpop.xlane.xlu0 %4500
          %vm4502 = vcmp.eq.f32.partialorder %v4499, %v4501
          %v4503 = vsel %vm4502, %v4498, inf
          %4504 = vmin.xlane.f32.xlu0 %v4503
          %v4505 = vpop.xlane.xlu0 %4504
          %v4506 = vcvt.f32.s32 %v4505
          %v4507 = vcvt.f32.s32 %v4501
          %v4508 = vshll.u32 %v4507, 16
          %v4509 = vadd.s32 %v4508, %v4506
        $region100: #{tpu_custom_call.1} parent=35 // pred_fallthru
          %v4510 = vphi %v559, %v4494
          %v4511 = vphi %v560, %v4509
        %4514 = vrot.lane.b32.xlu0 %v1818, 32
        %v4515 = vpop.permute.xlu0 %4514
        %4516 = vrot.lane.b32.xlu0 %v1819, 32
        %v4517 = vpop.permute.xlu0 %4516
        %4522 = vrot.lane.b32.xlu0 %v2195, 48
        %v4523 = vpop.permute.xlu0 %4522
        %4524 = vrot.lane.b32.xlu0 %v2196, 48
        %v4525 = vpop.permute.xlu0 %4524
        %4530 = vrot.lane.b32.xlu0 %v2572, 64
        %v4531 = vpop.permute.xlu0 %4530
        %4532 = vrot.lane.b32.xlu0 %v2573, 64
        %v4533 = vpop.permute.xlu0 %4532
        %4538 = vrot.lane.b32.xlu0 %v2949, 80
        %v4539 = vpop.permute.xlu0 %4538
        %4540 = vrot.lane.b32.xlu0 %v2950, 80
        %v4541 = vpop.permute.xlu0 %4540
        %4546 = vrot.lane.b32.xlu0 %v3326, 96
        %v4547 = vpop.permute.xlu0 %4546
        %4548 = vrot.lane.b32.xlu0 %v3327, 96
        %v4549 = vpop.permute.xlu0 %4548
        %4554 = vrot.lane.b32.xlu0 %v3703, 112
        %v4555 = vpop.permute.xlu0 %4554
        %4556 = vrot.lane.b32.xlu0 %v3704, 112
        %v4557 = vpop.permute.xlu0 %4556
        %4562 = vrot.lane.b32.xlu0 %v4457, 16
        %v4563 = vpop.permute.xlu0 %4562
        %4564 = vrot.lane.b32.xlu0 %v4458, 16
        %v4565 = vpop.permute.xlu0 %4564
        %v4568 = vsel %vm423, %v4515, %v4523
        %v4569 = vsel %vm423, %v4517, %v4525
        %v4570 = vsel %vm802, %v4568, %v4531
        %v4571 = vsel %vm802, %v4569, %v4533
        %vm4572 = vcmask 392192
        %v4573 = vsel %vm4572, %v4570, %v4539
        %v4574 = vsel %vm4572, %v4571, %v4541
        %vm4575 = vcmask 523264
        %v4576 = vsel %vm4575, %v4573, %v4547
        %v4577 = vsel %vm4575, %v4574, %v4549
        %vm4578 = vcmask 654336
        %v4579 = vsel %vm4578, %v4576, %v4555
        %v4580 = vsel %vm4578, %v4577, %v4557
        %vm4581 = vcmask 785408
        %v4582 = vsel %vm4581, %v4579, %v4080
        %v4583 = vsel %vm4581, %v4580, %v4081
        %vm4584 = vcmask 916480
        %v4585 = vsel %vm4584, %v4582, %v4563
        %v4586 = vsel %vm4584, %v4583, %v4565
        %4587 = vst [vmem:[%s240] sm:$0xff] %v4585
        %4588 = vst [vmem:[%s240 + $0x8] sm:$0xff] %v4586
        %4589 = vrot.lane.b32.xlu0 %v2468, 1
        %v4590 = vpop.permute.xlu0 %4589
        %4591 = vrot.lane.b32.xlu0 %v2469, 1
        %v4592 = vpop.permute.xlu0 %4591
        %4593 = vrot.lane.b32.xlu0 %v2845, 2
        %v4594 = vpop.permute.xlu0 %4593
        %4595 = vrot.lane.b32.xlu0 %v2846, 2
        %v4596 = vpop.permute.xlu0 %4595
        %4597 = vrot.lane.b32.xlu0 %v3222, 3
        %v4598 = vpop.permute.xlu0 %4597
        %4599 = vrot.lane.b32.xlu0 %v3223, 3
        %v4600 = vpop.permute.xlu0 %4599
        %4601 = vrot.lane.b32.xlu0 %v3599, 4
        %v4602 = vpop.permute.xlu0 %4601
        %4603 = vrot.lane.b32.xlu0 %v3600, 4
        %v4604 = vpop.permute.xlu0 %4603
        %4605 = vrot.lane.b32.xlu0 %v3976, 5
        %v4606 = vpop.permute.xlu0 %4605
        %4607 = vrot.lane.b32.xlu0 %v3977, 5
        %v4608 = vpop.permute.xlu0 %4607
        %4609 = vrot.lane.b32.xlu0 %v4353, 6
        %v4610 = vpop.permute.xlu0 %4609
        %4611 = vrot.lane.b32.xlu0 %v4354, 6
        %v4612 = vpop.permute.xlu0 %4611
        %4613 = vrot.lane.b32.xlu0 %v4510, 7
        %v4614 = vpop.permute.xlu0 %4613
        %4615 = vrot.lane.b32.xlu0 %v4511, 7
        %v4616 = vpop.permute.xlu0 %4615
        %vm4617 = vcmask 7168
        %v4618 = vsel %vm4617, %v2091, %v4590
        %v4619 = vsel %vm4617, %v2092, %v4592
        %vm4620 = vcmask 15360
        %v4621 = vsel %vm4620, %v4618, %v4594
        %v4622 = vsel %vm4620, %v4619, %v4596
        %vm4623 = vcmask 23552
        %v4624 = vsel %vm4623, %v4621, %v4598
        %v4625 = vsel %vm4623, %v4622, %v4600
        %vm4626 = vcmask 31744
        %v4627 = vsel %vm4626, %v4624, %v4602
        %v4628 = vsel %vm4626, %v4625, %v4604
        %vm4629 = vcmask 39936
        %v4630 = vsel %vm4629, %v4627, %v4606
        %v4631 = vsel %vm4629, %v4628, %v4608
        %vm4632 = vcmask 48128
        %v4633 = vsel %vm4632, %v4630, %v4610
        %v4634 = vsel %vm4632, %v4631, %v4612
        %vm4635 = vcmask 56320
        %v4636 = vsel %vm4635, %v4633, %v4614
        %v4637 = vsel %vm4635, %v4634, %v4616
        %vm4638 = vcmask 64512
        %4639 = vst.msk [vmem:[%s262] sm:$0xff] %vm4638, %v4636
        %4640 = vst.msk [vmem:[%s262 + $0x8] sm:$0xff] %vm4638, %v4637
        %s4641 = sand.u32 %s129, 1
        %s4642 = scalar_lea.sflag [#allocation5], %s4641
        %s4643 = sand.u32 %s129, 1
        %s4644 = smul.addr %s4643, 16
        %s4645 = scalar_lea.vmem [#allocation4], %s4644
        %p4646 = scmp.lt.s32.totalorder %s27, 1
        %s4647 = scalar_select %p4646, %s27, 1
        %s4648 = smul.addr %s4647, 2
        %s4649 = smul.addr %s4648, 8
        %s4650 = scalar_lea.vmem %s6, %s4649
        // Predicated region
        $region101: #{tpu_custom_call.1} parent=35 // pred_check
          %p4651 = pneg %p139
        $region102: #{tpu_custom_call.1} parent=35 // pred_check_branch
          %4653 = sbr.rel (%p4651) target = $region104
        $region103: #{tpu_custom_call.1} parent=35 // pred_region
          %s4655 = ssub.s32 256, 256
          %4656 = vsyncadd %s4642, %s4655
          %s4657 = smul.addr %s27, 2
          %s4658 = smul.addr %s4657, 128
          %s4659 = scalar_lea.hbm %s5, %s4658
          %s4660 = sshll.u32 %s4645, 4
          %s4661 = int_to_ptr.vmem [resolvable:$true] %s4660
          %4666 = dma.vmem_to_hbm [thread:$0]  %s4661, 256, %s4659, %s4642, 128, 128, 8
        $region104: #{tpu_custom_call.1} parent=35 // pred_fallthru
          _
        // Predicated region
        $region105: #{tpu_custom_call.1} parent=35 // pred_check
          %p4667 = pneg %p165
        $region106: #{tpu_custom_call.1} parent=35 // pred_check_branch
          %4669 = sbr.rel (%p4667) target = $region108
        $region107: #{tpu_custom_call.1} parent=35 // pred_region
          _
        $region108: #{tpu_custom_call.1} parent=35 // pred_fallthru
          _
      $region36: #{tpu_custom_call.1} parent=5 // pred_fallthru
        _
      %p4670 = scmp.le.s32.totalorder 2, %s22
      // Predicated region
      $region109: #{tpu_custom_call.1} parent=5 // pred_check
        %p4671 = pneg %p4670
      $region110: #{tpu_custom_call.1} parent=5 // pred_check_branch
        %4673 = sbr.rel (%p4671) target = $region112
      $region111: #{tpu_custom_call.1} parent=5 // pred_region
        %s4674 = ssub.s32 %s22, 2
        // Predicated region
        $region113: #{tpu_custom_call.1} parent=111 // pred_check
          %p4675 = pneg %p145
        $region114: #{tpu_custom_call.1} parent=111 // pred_check_branch
          %4677 = sbr.rel (%p4675) target = $region116
        $region115: #{tpu_custom_call.1} parent=111 // pred_region
          %s4678 = sand.u32 %s130, 1
          %s4679 = scalar_lea.sflag [#allocation5], %s4678
          %s4680 = sand.u32 %s130, 1
          %s4681 = smul.addr %s4680, 16
          %s4682 = scalar_lea.vmem [#allocation4], %s4681
          %4683 = dma.done %s4679, 256
        $region116: #{tpu_custom_call.1} parent=111 // pred_fallthru
          _
        // Predicated region
        $region117: #{tpu_custom_call.1} parent=111 // pred_check
          %p4684 = pneg %p171
        $region118: #{tpu_custom_call.1} parent=111 // pred_check_branch
          %4686 = sbr.rel (%p4684) target = $region120
        $region119: #{tpu_custom_call.1} parent=111 // pred_region
          %p4687 = scmp.lt.s32.totalorder %s28, 1
          %s4688 = scalar_select %p4687, %s28, 1
          %s4689 = smul.addr %s4688, 2
          %s4690 = smul.addr %s4689, 8
          %s4691 = scalar_lea.vmem %s6, %s4690
        $region120: #{tpu_custom_call.1} parent=111 // pred_fallthru
          _
      $region112: #{tpu_custom_call.1} parent=5 // pred_fallthru
        _
    $region6: #{tpu_custom_call.1} parent=1 // loop_footer
      %s26 = sadd.s32 1, %s22
    $region7: #{tpu_custom_call.1} parent=1 // loop_footer_branch
      %21 = sbr.rel target = $region3
    $region8: #{tpu_custom_call.1} parent=1 // loop_exit
      _
    %4692 = vsyncpa [#allocation5], 1
    %s4693 = scalar_lea.sflag [#allocation5], 1
    %4694 = vsyncpa %s4693, 1

</llo_original>
